<compile_context>
chip_gen: v5e
topology: v5e:2x2
jax: 0.10.0
libtpu: 0.0.40
codegen_flags: <defaults>
</compile_context>

<pallas_src>
from functools import partial

import jax
import jax.numpy as jnp
from jax.experimental import pallas as pl
from jax.experimental.pallas import tpu as pltpu

NC = 4         # number of classes (synthetic)
REG_MAX = 4    # DFL bins (synthetic; 16 in real YOLOv8)
NO = NC + 4 * REG_MAX
LANE = 128
VMEM_LIMIT = 32 * 1024 * 1024   # explicit scoped-VMEM bound (v7x-safe)


def _round_up(n, m):
    return ((n + m - 1) // m) * m


# ----------------------------------------------------------------------------
# Kernel 1: row-tiled matmul + bias (+ optional SiLU) — 1x1-conv hot path
#   rows  = B*H*W pixels (tiled, "parallel" grid axis, pipelined by BlockSpec)
#   lanes = output channels padded to a multiple of 128 (lane-dense stores)
# ----------------------------------------------------------------------------
def _mm_bias_act_kernel(x_ref, w_ref, b_ref, o_ref, *, act):
    acc = jnp.dot(x_ref[...], w_ref[...], preferred_element_type=jnp.float32)
    acc = acc + b_ref[...]
    if act:  # SiLU: x * sigmoid(x); reciprocal/exp run on the EUP slot
        acc = acc * pl.reciprocal(1.0 + jnp.exp(-acc), approx=True)
    o_ref[...] = acc.astype(o_ref.dtype)


def pallas_matmul_bias_act(x, w, b, act, tm=512):
    # x: (N, K) bf16   w: (K, Cp) bf16   b: (1, Cp) f32   -> (N, Cp) f32
    N, K = x.shape
    Cp = w.shape[1]
    tm = min(tm, _round_up(N, 8))          # row tile (multiple of 8 sublanes)
    Np = _round_up(N, tm)
    if Np != N:
        x = jnp.pad(x, ((0, Np - N), (0, 0)))
    out = pl.pallas_call(
        partial(_mm_bias_act_kernel, act=act),
        out_shape=jax.ShapeDtypeStruct((Np, Cp), jnp.float32),
        grid=(Np // tm,),
        in_specs=[
            pl.BlockSpec((tm, K), lambda i: (i, 0)),
            pl.BlockSpec((K, Cp), lambda i: (0, 0)),
            pl.BlockSpec((1, Cp), lambda i: (0, 0)),
        ],
        out_specs=pl.BlockSpec((tm, Cp), lambda i: (i, 0)),
        compiler_params=pltpu.CompilerParams(
            dimension_semantics=("parallel",),
            vmem_limit_bytes=VMEM_LIMIT),
    )(x, w, b)
    return out[:N]


# ----------------------------------------------------------------------------
# Kernel 2: fused 3x3/stride-2 Conv + bias + SiLU on a space-to-depth input.
# The stride is folded into a cheap s2d reshape outside the kernel, so inside
# we only need contiguous 2x2 shifted windows -> 4 MXU matmuls per output row.
# ----------------------------------------------------------------------------
def _s2d_conv_kernel(y_ref, w_ref, b_ref, o_ref, *, ho, wo):
    b = b_ref[...]                                       # (1, Cp) f32
    for r in range(ho):                                  # static unroll (ho <= 16 here)
        acc = None
        for du in range(2):
            row = y_ref[0, r + du]                       # (Ws, 4*Cin) bf16
            for dv in range(2):
                patch = row[dv:dv + wo, :]               # contiguous slice
                d = jnp.dot(patch, w_ref[2 * du + dv],
                            preferred_element_type=jnp.float32)
                acc = d if acc is None else acc + d
        acc = acc + b
        acc = acc * pl.reciprocal(1.0 + jnp.exp(-acc), approx=True)   # SiLU
        o_ref[0, r] = acc.astype(o_ref.dtype)


def conv3x3_s2_silu(x, w, b):
    # x: (B, H, W, Cin) NHWC f32;  w: (Cout, Cin, 3, 3) torch layout;  b: (Cout,)
    B, H, W, Cin = x.shape
    Cout = w.shape[0]
    Cp = _round_up(Cout, LANE)
    Ho, Wo = H // 2, W // 2
    Hs, Ws = Ho + 1, Wo + 1
    K = 4 * Cin

    # space-to-depth of the padded input: 3x3/s2 conv == 2x2/s1 conv over it.
    # (no k^2 im2col expansion in HBM, no NCHW transposes between layers)
    xp = jnp.pad(x, ((0, 0), (1, 1), (1, 1), (0, 0)))
    y = xp.reshape(B, Hs, 2, Ws, 2, Cin).transpose(0, 1, 3, 2, 4, 5)
    y = y.reshape(B, Hs, Ws, K).astype(jnp.bfloat16)

    # effective 2x2 tap weights; row order (p, q, cin) matches the s2d layout.
    w4 = jnp.zeros((Cout, Cin, 4, 4), jnp.float32).at[:, :, :3, :3].set(w)
    taps = []
    for du in range(2):
        for dv in range(2):
            blk = w4[:, :, 2 * du:2 * du + 2, 2 * dv:2 * dv + 2]  # (Cout,Cin,2,2)
            taps.append(blk.transpose(2, 3, 1, 0).reshape(K, Cout))
    w2 = jnp.pad(jnp.stack(taps, 0), ((0, 0), (0, 0), (0, Cp - Cout)))
    w2 = w2.astype(jnp.bfloat16)                                   # (4, K, Cp)
    b2 = jnp.pad(b, (0, Cp - Cout)).reshape(1, Cp).astype(jnp.float32)

    out = pl.pallas_call(
        partial(_s2d_conv_kernel, ho=Ho, wo=Wo),
        out_shape=jax.ShapeDtypeStruct((B, Ho, Wo, Cp), jnp.float32),
        grid=(B,),
        in_specs=[
            pl.BlockSpec((1, Hs, Ws, K), lambda i: (i, 0, 0, 0)),
            pl.BlockSpec((4, K, Cp), lambda i: (0, 0, 0)),
            pl.BlockSpec((1, Cp), lambda i: (0, 0)),
        ],
        out_specs=pl.BlockSpec((1, Ho, Wo, Cp), lambda i: (i, 0, 0, 0)),
        compiler_params=pltpu.CompilerParams(
            dimension_semantics=("parallel",),
            vmem_limit_bytes=VMEM_LIMIT),
    )(y, w2, b2)
    return out[..., :Cout]          # drop lane padding before the next layer


# ----------------------------------------------------------------------------
# Kernel 3: Detect decode — DFL softmax/expectation (unrolled over bins),
# dist2bbox, sigmoid.  Anchor axis on lanes (padded to 128); sliced stores.
# ----------------------------------------------------------------------------
def _decode_kernel(box_ref, cls_ref, anc_ref, str_ref, y_ref, *, reg_max):
    bx = box_ref[0]                      # (4*reg_max, TA) f32
    nc = cls_ref.shape[1]
    strd = str_ref[...]                  # (1, TA)
    anc_x = anc_ref[0:1, :]
    anc_y = anc_ref[1:2, :]

    dists = []
    for side in range(4):                # l, t, r, b
        logits = bx[side * reg_max:(side + 1) * reg_max, :]      # (reg_max, TA)
        m = logits[0:1, :]
        for r in range(1, reg_max):
            m = jnp.maximum(m, logits[r:r + 1, :])
        den = None
        num = None
        for r in range(reg_max):
            e = jnp.exp(logits[r:r + 1, :] - m)
            den = e if den is None else den + e
            we = e * float(r)
            num = we if num is None else num + we
        dists.append(num * pl.reciprocal(den, approx=True))      # (1, TA)
    lt_x, lt_y, rb_x, rb_y = dists

    x1 = anc_x - lt_x
    y1 = anc_y - lt_y
    x2 = anc_x + rb_x
    y2 = anc_y + rb_y
    y_ref[0, 0:1, :] = (x1 + x2) * 0.5 * strd
    y_ref[0, 1:2, :] = (y1 + y2) * 0.5 * strd
    y_ref[0, 2:3, :] = (x2 - x1) * strd
    y_ref[0, 3:4, :] = (y2 - y1) * strd

    cls = cls_ref[0]                                             # (nc, TA)
    y_ref[0, 4:4 + nc, :] = pl.reciprocal(1.0 + jnp.exp(-cls), approx=True)


def pallas_decode(box, cls, anchors, strides):
    # box: (B, 4*reg_max, A)  cls: (B, nc, A)  anchors: (2, A)  strides: (1, A)
    B, _, A = box.shape
    nc = cls.shape[1]
    Ap = _round_up(A, LANE)
    pad = Ap - A
    if pad:
        box = jnp.pad(box, ((0, 0), (0, 0), (0, pad)))
        cls = jnp.pad(cls, ((0, 0), (0, 0), (0, pad)))
        anchors = jnp.pad(anchors, ((0, 0), (0, pad)))
        strides = jnp.pad(strides, ((0, 0), (0, pad)))
    TA = LANE
    out = pl.pallas_call(
        partial(_decode_kernel, reg_max=REG_MAX),
        out_shape=jax.ShapeDtypeStruct((B, 4 + nc, Ap), jnp.float32),
        grid=(B, Ap // TA),
        in_specs=[
            pl.BlockSpec((1, 4 * REG_MAX, TA), lambda b, a: (b, 0, a)),
            pl.BlockSpec((1, nc, TA), lambda b, a: (b, 0, a)),
            pl.BlockSpec((2, TA), lambda b, a: (0, a)),
            pl.BlockSpec((1, TA), lambda b, a: (0, a)),
        ],
        out_specs=pl.BlockSpec((1, 4 + nc, TA), lambda b, a: (b, 0, a)),
        compiler_params=pltpu.CompilerParams(
            dimension_semantics=("parallel", "parallel"),
            vmem_limit_bytes=VMEM_LIMIT),
    )(box, cls, anchors, strides)
    return out[:, :, :A]


# ----------------------------------------------------------------------------
# Detect head: cv2 (box) and cv3 (cls) 1x1 convs fused into one matmul / scale
# ----------------------------------------------------------------------------
def fused_head_1x1(f, w_box, b_box, w_cls, b_cls):
    # f: (B, H, W, Cin) NHWC f32
    B, H, W, Cin = f.shape
    wm = jnp.concatenate([w_box.reshape(w_box.shape[0], Cin),
                          w_cls.reshape(w_cls.shape[0], Cin)], axis=0).T  # (Cin, NO)
    bm = jnp.concatenate([b_box, b_cls], axis=0)
    no = wm.shape[1]
    Cp = _round_up(no, LANE)
    wm = jnp.pad(wm, ((0, 0), (0, Cp - no))).astype(jnp.bfloat16)
    bm = jnp.pad(bm, (0, Cp - no)).reshape(1, Cp).astype(jnp.float32)

    x = f.reshape(B * H * W, Cin).astype(jnp.bfloat16)
    out = pallas_matmul_bias_act(x, wm, bm, act=False)          # (B*H*W, Cp)
    raw_nhwc = out[:, :no].reshape(B, H, W, no)
    return raw_nhwc.transpose(0, 3, 1, 2)                       # NCHW at boundary


# ----------------------------------------------------------------------------
# Plain-JAX glue: anchors, parameter init, forward
# ----------------------------------------------------------------------------
def make_anchors(feat_shapes, offset=0.5):
    pts, strs = [], []
    for (h, w, s) in feat_shapes:
        sx = jnp.arange(w, dtype=jnp.float32) + offset
        sy = jnp.arange(h, dtype=jnp.float32) + offset
        syy, sxx = jnp.meshgrid(sy, sx, indexing="ij")
        pts.append(jnp.stack([sxx.reshape(-1), syy.reshape(-1)], axis=0))  # (2, h*w)
        strs.append(jnp.full((1, h * w), float(s), dtype=jnp.float32))
    return jnp.concatenate(pts, axis=1), jnp.concatenate(strs, axis=1)


def init_params(key):
    def conv_init(k, cout, cin, ksz):
        kw, kb = jax.random.split(k)
        w = 0.1 * jax.random.normal(kw, (cout, cin, ksz, ksz), dtype=jnp.float32)
        b = 0.05 * jax.random.normal(kb, (cout,), dtype=jnp.float32)
        return w, b

    keys = jax.random.split(key, 8)
    p = {}
    p["c1_w"], p["c1_b"] = conv_init(keys[0], 16, 3, 3)
    p["c2_w"], p["c2_b"] = conv_init(keys[1], 32, 16, 3)
    p["c3_w"], p["c3_b"] = conv_init(keys[2], 64, 32, 3)
    head_ch = [32, 64]
    for i, ch in enumerate(head_ch):
        p[f"cv2_{i}_w"], p[f"cv2_{i}_b"] = conv_init(keys[3 + 2 * i], 4 * REG_MAX, ch, 1)
        p[f"cv3_{i}_w"], p[f"cv3_{i}_b"] = conv_init(keys[4 + 2 * i], NC, ch, 1)
    return p


@jax.jit
def yolo_wrapper_forward(params, image):
    # YoloWrapper.forward: y, x = model(image); return (y.to(image.dtype), *x)
    xin = image.transpose(0, 2, 3, 1)                            # NCHW -> NHWC once

    # Backbone (Conv+SiLU, stride-2 each), channels-last throughout
    t = conv3x3_s2_silu(xin, params["c1_w"], params["c1_b"])     # /2
    p3 = conv3x3_s2_silu(t, params["c2_w"], params["c2_b"])      # /4
    p4 = conv3x3_s2_silu(p3, params["c3_w"], params["c3_b"])     # /8
    feats = [(p3, 4), (p4, 8)]

    # Detect head: raw per-scale outputs x (NCHW at the API boundary)
    raw = []
    for i, (f, _) in enumerate(feats):
        raw.append(fused_head_1x1(f, params[f"cv2_{i}_w"], params[f"cv2_{i}_b"],
                                  params[f"cv3_{i}_w"], params[f"cv3_{i}_b"]))

    # Decode (Detect non-end2end inference path)
    B = image.shape[0]
    x_cat = jnp.concatenate([r.reshape(B, NO, -1) for r in raw], axis=2)  # (B,NO,A)
    box = x_cat[:, :4 * REG_MAX, :]
    cls = x_cat[:, 4 * REG_MAX:, :]
    anchors, strides = make_anchors([(f.shape[1], f.shape[2], s) for (f, s) in feats])
    y = pallas_decode(box, cls, anchors, strides)                # (B, 4+NC, A)

    return (y.astype(image.dtype), *raw)


if __name__ == "__main__":
    key = jax.random.PRNGKey(0)
    params = init_params(key)
    image = jax.random.normal(jax.random.fold_in(key, 123), (2, 3, 32, 32),
                              dtype=jnp.float32)

    outs = yolo_wrapper_forward(params, image)
    outs = jax.block_until_ready(outs)

    y, x0, x1 = outs
    assert y.shape == (2, 4 + NC, 8 * 8 + 4 * 4), y.shape
    assert x0.shape == (2, NO, 8, 8), x0.shape
    assert x1.shape == (2, NO, 4, 4), x1.shape
    assert y.dtype == image.dtype
    print("KERNEL_OK")
</pallas_src>

<mosaic_0001>
module attributes {stable_mosaic.version = 11 : i64} {
  func.func @_s2d_conv_kernel(%arg0: i32, %arg1: memref<1x17x17x12xbf16, #tpu.memory_space<vmem>>, %arg2: memref<4x12x128xbf16, #tpu.memory_space<vmem>>, %arg3: memref<1x128xf32, #tpu.memory_space<vmem>>, %arg4: memref<1x16x16x128xf32, #tpu.memory_space<vmem>>) attributes {dimension_semantics = [#tpu.dimension_semantics<parallel>], iteration_bounds = array<i64: 2>, scalar_prefetch = 0 : i64, scratch_operands = 0 : i64, tpu.core_type = #tpu.core_type<tc>, window_params = [{transform_indices = @transform_0, window_bounds = array<i64: 1, 17, 17, 12>}, {pipeline_mode = #tpu.pipeline_mode<synchronous>, transform_indices = @transform_1, window_bounds = array<i64: 4, 12, 128>}, {pipeline_mode = #tpu.pipeline_mode<synchronous>, transform_indices = @transform_2, window_bounds = array<i64: 1, 128>}, {transform_indices = @transform_3, window_bounds = array<i64: 1, 16, 16, 128>}]} {
    %c0 = arith.constant 0 : index
    %c0_0 = arith.constant 0 : index
    %0 = vector.load %arg3[%c0, %c0_0] : memref<1x128xf32, #tpu.memory_space<vmem>>, vector<1x128xf32>
    %c0_1 = arith.constant 0 : index
    %c0_2 = arith.constant 0 : index
    %c0_3 = arith.constant 0 : index
    %c0_4 = arith.constant 0 : index
    %1 = vector.load %arg1[%c0_1, %c0_2, %c0_3, %c0_4] : memref<1x17x17x12xbf16, #tpu.memory_space<vmem>>, vector<1x1x17x12xbf16>
    %2 = vector.shape_cast %1 : vector<1x1x17x12xbf16> to vector<17x12xbf16>
    %3 = vector.extract_strided_slice %2 {offsets = [0, 0], sizes = [16, 12], strides = [1, 1]} : vector<17x12xbf16> to vector<16x12xbf16>
    %c0_5 = arith.constant 0 : index
    %c0_6 = arith.constant 0 : index
    %c0_7 = arith.constant 0 : index
    %4 = vector.load %arg2[%c0_5, %c0_6, %c0_7] : memref<4x12x128xbf16, #tpu.memory_space<vmem>>, vector<1x12x128xbf16>
    %5 = vector.shape_cast %4 : vector<1x12x128xbf16> to vector<12x128xbf16>
    %cst = arith.constant dense<0.000000e+00> : vector<16x128xf32>
    %6 = tpu.matmul %3, %5, %cst {dimension_numbers = #tpu.dot_dimension_numbers<[1], [0], [0], [1], [0, 0, 1, 1], [], []>} : vector<16x12xbf16>, vector<12x128xbf16>, vector<16x128xf32> -> vector<16x128xf32>
    %7 = vector.extract_strided_slice %2 {offsets = [1, 0], sizes = [16, 12], strides = [1, 1]} : vector<17x12xbf16> to vector<16x12xbf16>
    %c1 = arith.constant 1 : index
    %c0_8 = arith.constant 0 : index
    %c0_9 = arith.constant 0 : index
    %8 = vector.load %arg2[%c1, %c0_8, %c0_9] : memref<4x12x128xbf16, #tpu.memory_space<vmem>>, vector<1x12x128xbf16>
    %9 = vector.shape_cast %8 : vector<1x12x128xbf16> to vector<12x128xbf16>
    %cst_10 = arith.constant dense<0.000000e+00> : vector<16x128xf32>
    %10 = tpu.matmul %7, %9, %cst_10 {dimension_numbers = #tpu.dot_dimension_numbers<[1], [0], [0], [1], [0, 0, 1, 1], [], []>} : vector<16x12xbf16>, vector<12x128xbf16>, vector<16x128xf32> -> vector<16x128xf32>
    %11 = arith.addf %6, %10 : vector<16x128xf32>
    %c0_11 = arith.constant 0 : index
    %c1_12 = arith.constant 1 : index
    %c0_13 = arith.constant 0 : index
    %c0_14 = arith.constant 0 : index
    %12 = vector.load %arg1[%c0_11, %c1_12, %c0_13, %c0_14] : memref<1x17x17x12xbf16, #tpu.memory_space<vmem>>, vector<1x1x17x12xbf16>
    %13 = vector.shape_cast %12 : vector<1x1x17x12xbf16> to vector<17x12xbf16>
    %14 = vector.extract_strided_slice %13 {offsets = [0, 0], sizes = [16, 12], strides = [1, 1]} : vector<17x12xbf16> to vector<16x12xbf16>
    %c2 = arith.constant 2 : index
    %c0_15 = arith.constant 0 : index
    %c0_16 = arith.constant 0 : index
    %15 = vector.load %arg2[%c2, %c0_15, %c0_16] : memref<4x12x128xbf16, #tpu.memory_space<vmem>>, vector<1x12x128xbf16>
    %16 = vector.shape_cast %15 : vector<1x12x128xbf16> to vector<12x128xbf16>
    %cst_17 = arith.constant dense<0.000000e+00> : vector<16x128xf32>
    %17 = tpu.matmul %14, %16, %cst_17 {dimension_numbers = #tpu.dot_dimension_numbers<[1], [0], [0], [1], [0, 0, 1, 1], [], []>} : vector<16x12xbf16>, vector<12x128xbf16>, vector<16x128xf32> -> vector<16x128xf32>
    %18 = arith.addf %11, %17 : vector<16x128xf32>
    %19 = vector.extract_strided_slice %13 {offsets = [1, 0], sizes = [16, 12], strides = [1, 1]} : vector<17x12xbf16> to vector<16x12xbf16>
    %c3 = arith.constant 3 : index
    %c0_18 = arith.constant 0 : index
    %c0_19 = arith.constant 0 : index
    %20 = vector.load %arg2[%c3, %c0_18, %c0_19] : memref<4x12x128xbf16, #tpu.memory_space<vmem>>, vector<1x12x128xbf16>
    %21 = vector.shape_cast %20 : vector<1x12x128xbf16> to vector<12x128xbf16>
    %cst_20 = arith.constant dense<0.000000e+00> : vector<16x128xf32>
    %22 = tpu.matmul %19, %21, %cst_20 {dimension_numbers = #tpu.dot_dimension_numbers<[1], [0], [0], [1], [0, 0, 1, 1], [], []>} : vector<16x12xbf16>, vector<12x128xbf16>, vector<16x128xf32> -> vector<16x128xf32>
    %23 = arith.addf %18, %22 : vector<16x128xf32>
    %24 = vector.broadcast %0 : vector<1x128xf32> to vector<16x128xf32>
    %25 = arith.addf %23, %24 : vector<16x128xf32>
    %cst_21 = arith.constant 0.000000e+00 : f32
    %26 = vector.broadcast %cst_21 : f32 to vector<16x128xf32>
    %27 = arith.subf %26, %25 : vector<16x128xf32>
    %28 = math.exp %27 : vector<16x128xf32>
    %cst_22 = arith.constant 1.000000e+00 : f32
    %29 = vector.broadcast %cst_22 : f32 to vector<16x128xf32>
    %30 = arith.addf %29, %28 : vector<16x128xf32>
    %31 = tpu.reciprocal %30 {approx = true} : vector<16x128xf32> -> vector<16x128xf32>
    %32 = arith.mulf %25, %31 : vector<16x128xf32>
    %c0_23 = arith.constant 0 : index
    %c0_24 = arith.constant 0 : index
    %c0_25 = arith.constant 0 : index
    %c0_26 = arith.constant 0 : index
    %33 = vector.load %arg4[%c0_23, %c0_24, %c0_25, %c0_26] : memref<1x16x16x128xf32, #tpu.memory_space<vmem>>, vector<1x1x16x128xf32>
    %34 = vector.shape_cast %33 : vector<1x1x16x128xf32> to vector<16x128xf32>
    %35 = vector.shape_cast %32 : vector<16x128xf32> to vector<1x1x16x128xf32>
    tpu.vector_store %arg4[%c0_23, %c0_24, %c0_25, %c0_26], %35 {strides = array<i32>} : memref<1x16x16x128xf32, #tpu.memory_space<vmem>>, vector<1x1x16x128xf32>,
    %c0_27 = arith.constant 0 : index
    %c1_28 = arith.constant 1 : index
    %c0_29 = arith.constant 0 : index
    %c0_30 = arith.constant 0 : index
    %36 = vector.load %arg1[%c0_27, %c1_28, %c0_29, %c0_30] : memref<1x17x17x12xbf16, #tpu.memory_space<vmem>>, vector<1x1x17x12xbf16>
    %37 = vector.shape_cast %36 : vector<1x1x17x12xbf16> to vector<17x12xbf16>
    %38 = vector.extract_strided_slice %37 {offsets = [0, 0], sizes = [16, 12], strides = [1, 1]} : vector<17x12xbf16> to vector<16x12xbf16>
    %c0_31 = arith.constant 0 : index
    %c0_32 = arith.constant 0 : index
    %c0_33 = arith.constant 0 : index
    %39 = vector.load %arg2[%c0_31, %c0_32, %c0_33] : memref<4x12x128xbf16, #tpu.memory_space<vmem>>, vector<1x12x128xbf16>
    %40 = vector.shape_cast %39 : vector<1x12x128xbf16> to vector<12x128xbf16>
    %cst_34 = arith.constant dense<0.000000e+00> : vector<16x128xf32>
    %41 = tpu.matmul %38, %40, %cst_34 {dimension_numbers = #tpu.dot_dimension_numbers<[1], [0], [0], [1], [0, 0, 1, 1], [], []>} : vector<16x12xbf16>, vector<12x128xbf16>, vector<16x128xf32> -> vector<16x128xf32>
    %42 = vector.extract_strided_slice %37 {offsets = [1, 0], sizes = [16, 12], strides = [1, 1]} : vector<17x12xbf16> to vector<16x12xbf16>
    %c1_35 = arith.constant 1 : index
    %c0_36 = arith.constant 0 : index
    %c0_37 = arith.constant 0 : index
    %43 = vector.load %arg2[%c1_35, %c0_36, %c0_37] : memref<4x12x128xbf16, #tpu.memory_space<vmem>>, vector<1x12x128xbf16>
    %44 = vector.shape_cast %43 : vector<1x12x128xbf16> to vector<12x128xbf16>
    %cst_38 = arith.constant dense<0.000000e+00> : vector<16x128xf32>
    %45 = tpu.matmul %42, %44, %cst_38 {dimension_numbers = #tpu.dot_dimension_numbers<[1], [0], [0], [1], [0, 0, 1, 1], [], []>} : vector<16x12xbf16>, vector<12x128xbf16>, vector<16x128xf32> -> vector<16x128xf32>
    %46 = arith.addf %41, %45 : vector<16x128xf32>
    %c0_39 = arith.constant 0 : index
    %c2_40 = arith.constant 2 : index
    %c0_41 = arith.constant 0 : index
    %c0_42 = arith.constant 0 : index
    %47 = vector.load %arg1[%c0_39, %c2_40, %c0_41, %c0_42] : memref<1x17x17x12xbf16, #tpu.memory_space<vmem>>, vector<1x1x17x12xbf16>
    %48 = vector.shape_cast %47 : vector<1x1x17x12xbf16> to vector<17x12xbf16>
    %49 = vector.extract_strided_slice %48 {offsets = [0, 0], sizes = [16, 12], strides = [1, 1]} : vector<17x12xbf16> to vector<16x12xbf16>
    %c2_43 = arith.constant 2 : index
    %c0_44 = arith.constant 0 : index
    %c0_45 = arith.constant 0 : index
    %50 = vector.load %arg2[%c2_43, %c0_44, %c0_45] : memref<4x12x128xbf16, #tpu.memory_space<vmem>>, vector<1x12x128xbf16>
    %51 = vector.shape_cast %50 : vector<1x12x128xbf16> to vector<12x128xbf16>
    %cst_46 = arith.constant dense<0.000000e+00> : vector<16x128xf32>
    %52 = tpu.matmul %49, %51, %cst_46 {dimension_numbers = #tpu.dot_dimension_numbers<[1], [0], [0], [1], [0, 0, 1, 1], [], []>} : vector<16x12xbf16>, vector<12x128xbf16>, vector<16x128xf32> -> vector<16x128xf32>
    %53 = arith.addf %46, %52 : vector<16x128xf32>
    %54 = vector.extract_strided_slice %48 {offsets = [1, 0], sizes = [16, 12], strides = [1, 1]} : vector<17x12xbf16> to vector<16x12xbf16>
    %c3_47 = arith.constant 3 : index
    %c0_48 = arith.constant 0 : index
    %c0_49 = arith.constant 0 : index
    %55 = vector.load %arg2[%c3_47, %c0_48, %c0_49] : memref<4x12x128xbf16, #tpu.memory_space<vmem>>, vector<1x12x128xbf16>
    %56 = vector.shape_cast %55 : vector<1x12x128xbf16> to vector<12x128xbf16>
    %cst_50 = arith.constant dense<0.000000e+00> : vector<16x128xf32>
    %57 = tpu.matmul %54, %56, %cst_50 {dimension_numbers = #tpu.dot_dimension_numbers<[1], [0], [0], [1], [0, 0, 1, 1], [], []>} : vector<16x12xbf16>, vector<12x128xbf16>, vector<16x128xf32> -> vector<16x128xf32>
    %58 = arith.addf %53, %57 : vector<16x128xf32>
    %59 = vector.broadcast %0 : vector<1x128xf32> to vector<16x128xf32>
    %60 = arith.addf %58, %59 : vector<16x128xf32>
    %cst_51 = arith.constant 0.000000e+00 : f32
    %61 = vector.broadcast %cst_51 : f32 to vector<16x128xf32>
    %62 = arith.subf %61, %60 : vector<16x128xf32>
    %63 = math.exp %62 : vector<16x128xf32>
    %cst_52 = arith.constant 1.000000e+00 : f32
    %64 = vector.broadcast %cst_52 : f32 to vector<16x128xf32>
    %65 = arith.addf %64, %63 : vector<16x128xf32>
    %66 = tpu.reciprocal %65 {approx = true} : vector<16x128xf32> -> vector<16x128xf32>
    %67 = arith.mulf %60, %66 : vector<16x128xf32>
    %c0_53 = arith.constant 0 : index
    %c1_54 = arith.constant 1 : index
    %c0_55 = arith.constant 0 : index
    %c0_56 = arith.constant 0 : index
    %68 = vector.load %arg4[%c0_53, %c1_54, %c0_55, %c0_56] : memref<1x16x16x128xf32, #tpu.memory_space<vmem>>, vector<1x1x16x128xf32>
    %69 = vector.shape_cast %68 : vector<1x1x16x128xf32> to vector<16x128xf32>
    %70 = vector.shape_cast %67 : vector<16x128xf32> to vector<1x1x16x128xf32>
    tpu.vector_store %arg4[%c0_53, %c1_54, %c0_55, %c0_56], %70 {strides = array<i32>} : memref<1x16x16x128xf32, #tpu.memory_space<vmem>>, vector<1x1x16x128xf32>,
    %c0_57 = arith.constant 0 : index
    %c2_58 = arith.constant 2 : index
    %c0_59 = arith.constant 0 : index
    %c0_60 = arith.constant 0 : index
    %71 = vector.load %arg1[%c0_57, %c2_58, %c0_59, %c0_60] : memref<1x17x17x12xbf16, #tpu.memory_space<vmem>>, vector<1x1x17x12xbf16>
    %72 = vector.shape_cast %71 : vector<1x1x17x12xbf16> to vector<17x12xbf16>
    %73 = vector.extract_strided_slice %72 {offsets = [0, 0], sizes = [16, 12], strides = [1, 1]} : vector<17x12xbf16> to vector<16x12xbf16>
    %c0_61 = arith.constant 0 : index
    %c0_62 = arith.constant 0 : index
    %c0_63 = arith.constant 0 : index
    %74 = vector.load %arg2[%c0_61, %c0_62, %c0_63] : memref<4x12x128xbf16, #tpu.memory_space<vmem>>, vector<1x12x128xbf16>
    %75 = vector.shape_cast %74 : vector<1x12x128xbf16> to vector<12x128xbf16>
    %cst_64 = arith.constant dense<0.000000e+00> : vector<16x128xf32>
    %76 = tpu.matmul %73, %75, %cst_64 {dimension_numbers = #tpu.dot_dimension_numbers<[1], [0], [0], [1], [0, 0, 1, 1], [], []>} : vector<16x12xbf16>, vector<12x128xbf16>, vector<16x128xf32> -> vector<16x128xf32>
    %77 = vector.extract_strided_slice %72 {offsets = [1, 0], sizes = [16, 12], strides = [1, 1]} : vector<17x12xbf16> to vector<16x12xbf16>
    %c1_65 = arith.constant 1 : index
    %c0_66 = arith.constant 0 : index
    %c0_67 = arith.constant 0 : index
    %78 = vector.load %arg2[%c1_65, %c0_66, %c0_67] : memref<4x12x128xbf16, #tpu.memory_space<vmem>>, vector<1x12x128xbf16>
    %79 = vector.shape_cast %78 : vector<1x12x128xbf16> to vector<12x128xbf16>
    %cst_68 = arith.constant dense<0.000000e+00> : vector<16x128xf32>
    %80 = tpu.matmul %77, %79, %cst_68 {dimension_numbers = #tpu.dot_dimension_numbers<[1], [0], [0], [1], [0, 0, 1, 1], [], []>} : vector<16x12xbf16>, vector<12x128xbf16>, vector<16x128xf32> -> vector<16x128xf32>
    %81 = arith.addf %76, %80 : vector<16x128xf32>
    %c0_69 = arith.constant 0 : index
    %c3_70 = arith.constant 3 : index
    %c0_71 = arith.constant 0 : index
    %c0_72 = arith.constant 0 : index
    %82 = vector.load %arg1[%c0_69, %c3_70, %c0_71, %c0_72] : memref<1x17x17x12xbf16, #tpu.memory_space<vmem>>, vector<1x1x17x12xbf16>
    %83 = vector.shape_cast %82 : vector<1x1x17x12xbf16> to vector<17x12xbf16>
    %84 = vector.extract_strided_slice %83 {offsets = [0, 0], sizes = [16, 12], strides = [1, 1]} : vector<17x12xbf16> to vector<16x12xbf16>
    %c2_73 = arith.constant 2 : index
    %c0_74 = arith.constant 0 : index
    %c0_75 = arith.constant 0 : index
    %85 = vector.load %arg2[%c2_73, %c0_74, %c0_75] : memref<4x12x128xbf16, #tpu.memory_space<vmem>>, vector<1x12x128xbf16>
    %86 = vector.shape_cast %85 : vector<1x12x128xbf16> to vector<12x128xbf16>
    %cst_76 = arith.constant dense<0.000000e+00> : vector<16x128xf32>
    %87 = tpu.matmul %84, %86, %cst_76 {dimension_numbers = #tpu.dot_dimension_numbers<[1], [0], [0], [1], [0, 0, 1, 1], [], []>} : vector<16x12xbf16>, vector<12x128xbf16>, vector<16x128xf32> -> vector<16x128xf32>
    %88 = arith.addf %81, %87 : vector<16x128xf32>
    %89 = vector.extract_strided_slice %83 {offsets = [1, 0], sizes = [16, 12], strides = [1, 1]} : vector<17x12xbf16> to vector<16x12xbf16>
    %c3_77 = arith.constant 3 : index
    %c0_78 = arith.constant 0 : index
    %c0_79 = arith.constant 0 : index
    %90 = vector.load %arg2[%c3_77, %c0_78, %c0_79] : memref<4x12x128xbf16, #tpu.memory_space<vmem>>, vector<1x12x128xbf16>
    %91 = vector.shape_cast %90 : vector<1x12x128xbf16> to vector<12x128xbf16>
    %cst_80 = arith.constant dense<0.000000e+00> : vector<16x128xf32>
    %92 = tpu.matmul %89, %91, %cst_80 {dimension_numbers = #tpu.dot_dimension_numbers<[1], [0], [0], [1], [0, 0, 1, 1], [], []>} : vector<16x12xbf16>, vector<12x128xbf16>, vector<16x128xf32> -> vector<16x128xf32>
    %93 = arith.addf %88, %92 : vector<16x128xf32>
    %94 = vector.broadcast %0 : vector<1x128xf32> to vector<16x128xf32>
    %95 = arith.addf %93, %94 : vector<16x128xf32>
    %cst_81 = arith.constant 0.000000e+00 : f32
    %96 = vector.broadcast %cst_81 : f32 to vector<16x128xf32>
    %97 = arith.subf %96, %95 : vector<16x128xf32>
    %98 = math.exp %97 : vector<16x128xf32>
    %cst_82 = arith.constant 1.000000e+00 : f32
    %99 = vector.broadcast %cst_82 : f32 to vector<16x128xf32>
    %100 = arith.addf %99, %98 : vector<16x128xf32>
    %101 = tpu.reciprocal %100 {approx = true} : vector<16x128xf32> -> vector<16x128xf32>
    %102 = arith.mulf %95, %101 : vector<16x128xf32>
    %c0_83 = arith.constant 0 : index
    %c2_84 = arith.constant 2 : index
    %c0_85 = arith.constant 0 : index
    %c0_86 = arith.constant 0 : index
    %103 = vector.load %arg4[%c0_83, %c2_84, %c0_85, %c0_86] : memref<1x16x16x128xf32, #tpu.memory_space<vmem>>, vector<1x1x16x128xf32>
    %104 = vector.shape_cast %103 : vector<1x1x16x128xf32> to vector<16x128xf32>
    %105 = vector.shape_cast %102 : vector<16x128xf32> to vector<1x1x16x128xf32>
    tpu.vector_store %arg4[%c0_83, %c2_84, %c0_85, %c0_86], %105 {strides = array<i32>} : memref<1x16x16x128xf32, #tpu.memory_space<vmem>>, vector<1x1x16x128xf32>,
    %c0_87 = arith.constant 0 : index
    %c3_88 = arith.constant 3 : index
    %c0_89 = arith.constant 0 : index
    %c0_90 = arith.constant 0 : index
    %106 = vector.load %arg1[%c0_87, %c3_88, %c0_89, %c0_90] : memref<1x17x17x12xbf16, #tpu.memory_space<vmem>>, vector<1x1x17x12xbf16>
    %107 = vector.shape_cast %106 : vector<1x1x17x12xbf16> to vector<17x12xbf16>
    %108 = vector.extract_strided_slice %107 {offsets = [0, 0], sizes = [16, 12], strides = [1, 1]} : vector<17x12xbf16> to vector<16x12xbf16>
    %c0_91 = arith.constant 0 : index
    %c0_92 = arith.constant 0 : index
    %c0_93 = arith.constant 0 : index
    %109 = vector.load %arg2[%c0_91, %c0_92, %c0_93] : memref<4x12x128xbf16, #tpu.memory_space<vmem>>, vector<1x12x128xbf16>
    %110 = vector.shape_cast %109 : vector<1x12x128xbf16> to vector<12x128xbf16>
    %cst_94 = arith.constant dense<0.000000e+00> : vector<16x128xf32>
    %111 = tpu.matmul %108, %110, %cst_94 {dimension_numbers = #tpu.dot_dimension_numbers<[1], [0], [0], [1], [0, 0, 1, 1], [], []>} : vector<16x12xbf16>, vector<12x128xbf16>, vector<16x128xf32> -> vector<16x128xf32>
    %112 = vector.extract_strided_slice %107 {offsets = [1, 0], sizes = [16, 12], strides = [1, 1]} : vector<17x12xbf16> to vector<16x12xbf16>
    %c1_95 = arith.constant 1 : index
    %c0_96 = arith.constant 0 : index
    %c0_97 = arith.constant 0 : index
    %113 = vector.load %arg2[%c1_95, %c0_96, %c0_97] : memref<4x12x128xbf16, #tpu.memory_space<vmem>>, vector<1x12x128xbf16>
    %114 = vector.shape_cast %113 : vector<1x12x128xbf16> to vector<12x128xbf16>
    %cst_98 = arith.constant dense<0.000000e+00> : vector<16x128xf32>
    %115 = tpu.matmul %112, %114, %cst_98 {dimension_numbers = #tpu.dot_dimension_numbers<[1], [0], [0], [1], [0, 0, 1, 1], [], []>} : vector<16x12xbf16>, vector<12x128xbf16>, vector<16x128xf32> -> vector<16x128xf32>
    %116 = arith.addf %111, %115 : vector<16x128xf32>
    %c0_99 = arith.constant 0 : index
    %c4 = arith.constant 4 : index
    %c0_100 = arith.constant 0 : index
    %c0_101 = arith.constant 0 : index
    %117 = vector.load %arg1[%c0_99, %c4, %c0_100, %c0_101] : memref<1x17x17x12xbf16, #tpu.memory_space<vmem>>, vector<1x1x17x12xbf16>
    %118 = vector.shape_cast %117 : vector<1x1x17x12xbf16> to vector<17x12xbf16>
    %119 = vector.extract_strided_slice %118 {offsets = [0, 0], sizes = [16, 12], strides = [1, 1]} : vector<17x12xbf16> to vector<16x12xbf16>
    %c2_102 = arith.constant 2 : index
    %c0_103 = arith.constant 0 : index
    %c0_104 = arith.constant 0 : index
    %120 = vector.load %arg2[%c2_102, %c0_103, %c0_104] : memref<4x12x128xbf16, #tpu.memory_space<vmem>>, vector<1x12x128xbf16>
    %121 = vector.shape_cast %120 : vector<1x12x128xbf16> to vector<12x128xbf16>
    %cst_105 = arith.constant dense<0.000000e+00> : vector<16x128xf32>
    %122 = tpu.matmul %119, %121, %cst_105 {dimension_numbers = #tpu.dot_dimension_numbers<[1], [0], [0], [1], [0, 0, 1, 1], [], []>} : vector<16x12xbf16>, vector<12x128xbf16>, vector<16x128xf32> -> vector<16x128xf32>
    %123 = arith.addf %116, %122 : vector<16x128xf32>
    %124 = vector.extract_strided_slice %118 {offsets = [1, 0], sizes = [16, 12], strides = [1, 1]} : vector<17x12xbf16> to vector<16x12xbf16>
    %c3_106 = arith.constant 3 : index
    %c0_107 = arith.constant 0 : index
    %c0_108 = arith.constant 0 : index
    %125 = vector.load %arg2[%c3_106, %c0_107, %c0_108] : memref<4x12x128xbf16, #tpu.memory_space<vmem>>, vector<1x12x128xbf16>
    %126 = vector.shape_cast %125 : vector<1x12x128xbf16> to vector<12x128xbf16>
    %cst_109 = arith.constant dense<0.000000e+00> : vector<16x128xf32>
    %127 = tpu.matmul %124, %126, %cst_109 {dimension_numbers = #tpu.dot_dimension_numbers<[1], [0], [0], [1], [0, 0, 1, 1], [], []>} : vector<16x12xbf16>, vector<12x128xbf16>, vector<16x128xf32> -> vector<16x128xf32>
    %128 = arith.addf %123, %127 : vector<16x128xf32>
    %129 = vector.broadcast %0 : vector<1x128xf32> to vector<16x128xf32>
    %130 = arith.addf %128, %129 : vector<16x128xf32>
    %cst_110 = arith.constant 0.000000e+00 : f32
    %131 = vector.broadcast %cst_110 : f32 to vector<16x128xf32>
    %132 = arith.subf %131, %130 : vector<16x128xf32>
    %133 = math.exp %132 : vector<16x128xf32>
    %cst_111 = arith.constant 1.000000e+00 : f32
    %134 = vector.broadcast %cst_111 : f32 to vector<16x128xf32>
    %135 = arith.addf %134, %133 : vector<16x128xf32>
    %136 = tpu.reciprocal %135 {approx = true} : vector<16x128xf32> -> vector<16x128xf32>
    %137 = arith.mulf %130, %136 : vector<16x128xf32>
    %c0_112 = arith.constant 0 : index
    %c3_113 = arith.constant 3 : index
    %c0_114 = arith.constant 0 : index
    %c0_115 = arith.constant 0 : index
    %138 = vector.load %arg4[%c0_112, %c3_113, %c0_114, %c0_115] : memref<1x16x16x128xf32, #tpu.memory_space<vmem>>, vector<1x1x16x128xf32>
    %139 = vector.shape_cast %138 : vector<1x1x16x128xf32> to vector<16x128xf32>
    %140 = vector.shape_cast %137 : vector<16x128xf32> to vector<1x1x16x128xf32>
    tpu.vector_store %arg4[%c0_112, %c3_113, %c0_114, %c0_115], %140 {strides = array<i32>} : memref<1x16x16x128xf32, #tpu.memory_space<vmem>>, vector<1x1x16x128xf32>,
    %c0_116 = arith.constant 0 : index
    %c4_117 = arith.constant 4 : index
    %c0_118 = arith.constant 0 : index
    %c0_119 = arith.constant 0 : index
    %141 = vector.load %arg1[%c0_116, %c4_117, %c0_118, %c0_119] : memref<1x17x17x12xbf16, #tpu.memory_space<vmem>>, vector<1x1x17x12xbf16>
    %142 = vector.shape_cast %141 : vector<1x1x17x12xbf16> to vector<17x12xbf16>
    %143 = vector.extract_strided_slice %142 {offsets = [0, 0], sizes = [16, 12], strides = [1, 1]} : vector<17x12xbf16> to vector<16x12xbf16>
    %c0_120 = arith.constant 0 : index
    %c0_121 = arith.constant 0 : index
    %c0_122 = arith.constant 0 : index
    %144 = vector.load %arg2[%c0_120, %c0_121, %c0_122] : memref<4x12x128xbf16, #tpu.memory_space<vmem>>, vector<1x12x128xbf16>
    %145 = vector.shape_cast %144 : vector<1x12x128xbf16> to vector<12x128xbf16>
    %cst_123 = arith.constant dense<0.000000e+00> : vector<16x128xf32>
    %146 = tpu.matmul %143, %145, %cst_123 {dimension_numbers = #tpu.dot_dimension_numbers<[1], [0], [0], [1], [0, 0, 1, 1], [], []>} : vector<16x12xbf16>, vector<12x128xbf16>, vector<16x128xf32> -> vector<16x128xf32>
    %147 = vector.extract_strided_slice %142 {offsets = [1, 0], sizes = [16, 12], strides = [1, 1]} : vector<17x12xbf16> to vector<16x12xbf16>
    %c1_124 = arith.constant 1 : index
    %c0_125 = arith.constant 0 : index
    %c0_126 = arith.constant 0 : index
    %148 = vector.load %arg2[%c1_124, %c0_125, %c0_126] : memref<4x12x128xbf16, #tpu.memory_space<vmem>>, vector<1x12x128xbf16>
    %149 = vector.shape_cast %148 : vector<1x12x128xbf16> to vector<12x128xbf16>
    %cst_127 = arith.constant dense<0.000000e+00> : vector<16x128xf32>
    %150 = tpu.matmul %147, %149, %cst_127 {dimension_numbers = #tpu.dot_dimension_numbers<[1], [0], [0], [1], [0, 0, 1, 1], [], []>} : vector<16x12xbf16>, vector<12x128xbf16>, vector<16x128xf32> -> vector<16x128xf32>
    %151 = arith.addf %146, %150 : vector<16x128xf32>
    %c0_128 = arith.constant 0 : index
    %c5 = arith.constant 5 : index
    %c0_129 = arith.constant 0 : index
    %c0_130 = arith.constant 0 : index
    %152 = vector.load %arg1[%c0_128, %c5, %c0_129, %c0_130] : memref<1x17x17x12xbf16, #tpu.memory_space<vmem>>, vector<1x1x17x12xbf16>
    %153 = vector.shape_cast %152 : vector<1x1x17x12xbf16> to vector<17x12xbf16>
    %154 = vector.extract_strided_slice %153 {offsets = [0, 0], sizes = [16, 12], strides = [1, 1]} : vector<17x12xbf16> to vector<16x12xbf16>
    %c2_131 = arith.constant 2 : index
    %c0_132 = arith.constant 0 : index
    %c0_133 = arith.constant 0 : index
    %155 = vector.load %arg2[%c2_131, %c0_132, %c0_133] : memref<4x12x128xbf16, #tpu.memory_space<vmem>>, vector<1x12x128xbf16>
    %156 = vector.shape_cast %155 : vector<1x12x128xbf16> to vector<12x128xbf16>
    %cst_134 = arith.constant dense<0.000000e+00> : vector<16x128xf32>
    %157 = tpu.matmul %154, %156, %cst_134 {dimension_numbers = #tpu.dot_dimension_numbers<[1], [0], [0], [1], [0, 0, 1, 1], [], []>} : vector<16x12xbf16>, vector<12x128xbf16>, vector<16x128xf32> -> vector<16x128xf32>
    %158 = arith.addf %151, %157 : vector<16x128xf32>
    %159 = vector.extract_strided_slice %153 {offsets = [1, 0], sizes = [16, 12], strides = [1, 1]} : vector<17x12xbf16> to vector<16x12xbf16>
    %c3_135 = arith.constant 3 : index
    %c0_136 = arith.constant 0 : index
    %c0_137 = arith.constant 0 : index
    %160 = vector.load %arg2[%c3_135, %c0_136, %c0_137] : memref<4x12x128xbf16, #tpu.memory_space<vmem>>, vector<1x12x128xbf16>
    %161 = vector.shape_cast %160 : vector<1x12x128xbf16> to vector<12x128xbf16>
    %cst_138 = arith.constant dense<0.000000e+00> : vector<16x128xf32>
    %162 = tpu.matmul %159, %161, %cst_138 {dimension_numbers = #tpu.dot_dimension_numbers<[1], [0], [0], [1], [0, 0, 1, 1], [], []>} : vector<16x12xbf16>, vector<12x128xbf16>, vector<16x128xf32> -> vector<16x128xf32>
    %163 = arith.addf %158, %162 : vector<16x128xf32>
    %164 = vector.broadcast %0 : vector<1x128xf32> to vector<16x128xf32>
    %165 = arith.addf %163, %164 : vector<16x128xf32>
    %cst_139 = arith.constant 0.000000e+00 : f32
    %166 = vector.broadcast %cst_139 : f32 to vector<16x128xf32>
    %167 = arith.subf %166, %165 : vector<16x128xf32>
    %168 = math.exp %167 : vector<16x128xf32>
    %cst_140 = arith.constant 1.000000e+00 : f32
    %169 = vector.broadcast %cst_140 : f32 to vector<16x128xf32>
    %170 = arith.addf %169, %168 : vector<16x128xf32>
    %171 = tpu.reciprocal %170 {approx = true} : vector<16x128xf32> -> vector<16x128xf32>
    %172 = arith.mulf %165, %171 : vector<16x128xf32>
    %c0_141 = arith.constant 0 : index
    %c4_142 = arith.constant 4 : index
    %c0_143 = arith.constant 0 : index
    %c0_144 = arith.constant 0 : index
    %173 = vector.load %arg4[%c0_141, %c4_142, %c0_143, %c0_144] : memref<1x16x16x128xf32, #tpu.memory_space<vmem>>, vector<1x1x16x128xf32>
    %174 = vector.shape_cast %173 : vector<1x1x16x128xf32> to vector<16x128xf32>
    %175 = vector.shape_cast %172 : vector<16x128xf32> to vector<1x1x16x128xf32>
    tpu.vector_store %arg4[%c0_141, %c4_142, %c0_143, %c0_144], %175 {strides = array<i32>} : memref<1x16x16x128xf32, #tpu.memory_space<vmem>>, vector<1x1x16x128xf32>,
    %c0_145 = arith.constant 0 : index
    %c5_146 = arith.constant 5 : index
    %c0_147 = arith.constant 0 : index
    %c0_148 = arith.constant 0 : index
    %176 = vector.load %arg1[%c0_145, %c5_146, %c0_147, %c0_148] : memref<1x17x17x12xbf16, #tpu.memory_space<vmem>>, vector<1x1x17x12xbf16>
    %177 = vector.shape_cast %176 : vector<1x1x17x12xbf16> to vector<17x12xbf16>
    %178 = vector.extract_strided_slice %177 {offsets = [0, 0], sizes = [16, 12], strides = [1, 1]} : vector<17x12xbf16> to vector<16x12xbf16>
    %c0_149 = arith.constant 0 : index
    %c0_150 = arith.constant 0 : index
    %c0_151 = arith.constant 0 : index
    %179 = vector.load %arg2[%c0_149, %c0_150, %c0_151] : memref<4x12x128xbf16, #tpu.memory_space<vmem>>, vector<1x12x128xbf16>
    %180 = vector.shape_cast %179 : vector<1x12x128xbf16> to vector<12x128xbf16>
    %cst_152 = arith.constant dense<0.000000e+00> : vector<16x128xf32>
    %181 = tpu.matmul %178, %180, %cst_152 {dimension_numbers = #tpu.dot_dimension_numbers<[1], [0], [0], [1], [0, 0, 1, 1], [], []>} : vector<16x12xbf16>, vector<12x128xbf16>, vector<16x128xf32> -> vector<16x128xf32>
    %182 = vector.extract_strided_slice %177 {offsets = [1, 0], sizes = [16, 12], strides = [1, 1]} : vector<17x12xbf16> to vector<16x12xbf16>
    %c1_153 = arith.constant 1 : index
    %c0_154 = arith.constant 0 : index
    %c0_155 = arith.constant 0 : index
    %183 = vector.load %arg2[%c1_153, %c0_154, %c0_155] : memref<4x12x128xbf16, #tpu.memory_space<vmem>>, vector<1x12x128xbf16>
    %184 = vector.shape_cast %183 : vector<1x12x128xbf16> to vector<12x128xbf16>
    %cst_156 = arith.constant dense<0.000000e+00> : vector<16x128xf32>
    %185 = tpu.matmul %182, %184, %cst_156 {dimension_numbers = #tpu.dot_dimension_numbers<[1], [0], [0], [1], [0, 0, 1, 1], [], []>} : vector<16x12xbf16>, vector<12x128xbf16>, vector<16x128xf32> -> vector<16x128xf32>
    %186 = arith.addf %181, %185 : vector<16x128xf32>
    %c0_157 = arith.constant 0 : index
    %c6 = arith.constant 6 : index
    %c0_158 = arith.constant 0 : index
    %c0_159 = arith.constant 0 : index
    %187 = vector.load %arg1[%c0_157, %c6, %c0_158, %c0_159] : memref<1x17x17x12xbf16, #tpu.memory_space<vmem>>, vector<1x1x17x12xbf16>
    %188 = vector.shape_cast %187 : vector<1x1x17x12xbf16> to vector<17x12xbf16>
    %189 = vector.extract_strided_slice %188 {offsets = [0, 0], sizes = [16, 12], strides = [1, 1]} : vector<17x12xbf16> to vector<16x12xbf16>
    %c2_160 = arith.constant 2 : index
    %c0_161 = arith.constant 0 : index
    %c0_162 = arith.constant 0 : index
    %190 = vector.load %arg2[%c2_160, %c0_161, %c0_162] : memref<4x12x128xbf16, #tpu.memory_space<vmem>>, vector<1x12x128xbf16>
    %191 = vector.shape_cast %190 : vector<1x12x128xbf16> to vector<12x128xbf16>
    %cst_163 = arith.constant dense<0.000000e+00> : vector<16x128xf32>
    %192 = tpu.matmul %189, %191, %cst_163 {dimension_numbers = #tpu.dot_dimension_numbers<[1], [0], [0], [1], [0, 0, 1, 1], [], []>} : vector<16x12xbf16>, vector<12x128xbf16>, vector<16x128xf32> -> vector<16x128xf32>
    %193 = arith.addf %186, %192 : vector<16x128xf32>
    %194 = vector.extract_strided_slice %188 {offsets = [1, 0], sizes = [16, 12], strides = [1, 1]} : vector<17x12xbf16> to vector<16x12xbf16>
    %c3_164 = arith.constant 3 : index
    %c0_165 = arith.constant 0 : index
    %c0_166 = arith.constant 0 : index
    %195 = vector.load %arg2[%c3_164, %c0_165, %c0_166] : memref<4x12x128xbf16, #tpu.memory_space<vmem>>, vector<1x12x128xbf16>
    %196 = vector.shape_cast %195 : vector<1x12x128xbf16> to vector<12x128xbf16>
    %cst_167 = arith.constant dense<0.000000e+00> : vector<16x128xf32>
    %197 = tpu.matmul %194, %196, %cst_167 {dimension_numbers = #tpu.dot_dimension_numbers<[1], [0], [0], [1], [0, 0, 1, 1], [], []>} : vector<16x12xbf16>, vector<12x128xbf16>, vector<16x128xf32> -> vector<16x128xf32>
    %198 = arith.addf %193, %197 : vector<16x128xf32>
    %199 = vector.broadcast %0 : vector<1x128xf32> to vector<16x128xf32>
    %200 = arith.addf %198, %199 : vector<16x128xf32>
    %cst_168 = arith.constant 0.000000e+00 : f32
    %201 = vector.broadcast %cst_168 : f32 to vector<16x128xf32>
    %202 = arith.subf %201, %200 : vector<16x128xf32>
    %203 = math.exp %202 : vector<16x128xf32>
    %cst_169 = arith.constant 1.000000e+00 : f32
    %204 = vector.broadcast %cst_169 : f32 to vector<16x128xf32>
    %205 = arith.addf %204, %203 : vector<16x128xf32>
    %206 = tpu.reciprocal %205 {approx = true} : vector<16x128xf32> -> vector<16x128xf32>
    %207 = arith.mulf %200, %206 : vector<16x128xf32>
    %c0_170 = arith.constant 0 : index
    %c5_171 = arith.constant 5 : index
    %c0_172 = arith.constant 0 : index
    %c0_173 = arith.constant 0 : index
    %208 = vector.load %arg4[%c0_170, %c5_171, %c0_172, %c0_173] : memref<1x16x16x128xf32, #tpu.memory_space<vmem>>, vector<1x1x16x128xf32>
    %209 = vector.shape_cast %208 : vector<1x1x16x128xf32> to vector<16x128xf32>
    %210 = vector.shape_cast %207 : vector<16x128xf32> to vector<1x1x16x128xf32>
    tpu.vector_store %arg4[%c0_170, %c5_171, %c0_172, %c0_173], %210 {strides = array<i32>} : memref<1x16x16x128xf32, #tpu.memory_space<vmem>>, vector<1x1x16x128xf32>,
    %c0_174 = arith.constant 0 : index
    %c6_175 = arith.constant 6 : index
    %c0_176 = arith.constant 0 : index
    %c0_177 = arith.constant 0 : index
    %211 = vector.load %arg1[%c0_174, %c6_175, %c0_176, %c0_177] : memref<1x17x17x12xbf16, #tpu.memory_space<vmem>>, vector<1x1x17x12xbf16>
    %212 = vector.shape_cast %211 : vector<1x1x17x12xbf16> to vector<17x12xbf16>
    %213 = vector.extract_strided_slice %212 {offsets = [0, 0], sizes = [16, 12], strides = [1, 1]} : vector<17x12xbf16> to vector<16x12xbf16>
    %c0_178 = arith.constant 0 : index
    %c0_179 = arith.constant 0 : index
    %c0_180 = arith.constant 0 : index
    %214 = vector.load %arg2[%c0_178, %c0_179, %c0_180] : memref<4x12x128xbf16, #tpu.memory_space<vmem>>, vector<1x12x128xbf16>
    %215 = vector.shape_cast %214 : vector<1x12x128xbf16> to vector<12x128xbf16>
    %cst_181 = arith.constant dense<0.000000e+00> : vector<16x128xf32>
    %216 = tpu.matmul %213, %215, %cst_181 {dimension_numbers = #tpu.dot_dimension_numbers<[1], [0], [0], [1], [0, 0, 1, 1], [], []>} : vector<16x12xbf16>, vector<12x128xbf16>, vector<16x128xf32> -> vector<16x128xf32>
    %217 = vector.extract_strided_slice %212 {offsets = [1, 0], sizes = [16, 12], strides = [1, 1]} : vector<17x12xbf16> to vector<16x12xbf16>
    %c1_182 = arith.constant 1 : index
    %c0_183 = arith.constant 0 : index
    %c0_184 = arith.constant 0 : index
    %218 = vector.load %arg2[%c1_182, %c0_183, %c0_184] : memref<4x12x128xbf16, #tpu.memory_space<vmem>>, vector<1x12x128xbf16>
    %219 = vector.shape_cast %218 : vector<1x12x128xbf16> to vector<12x128xbf16>
    %cst_185 = arith.constant dense<0.000000e+00> : vector<16x128xf32>
    %220 = tpu.matmul %217, %219, %cst_185 {dimension_numbers = #tpu.dot_dimension_numbers<[1], [0], [0], [1], [0, 0, 1, 1], [], []>} : vector<16x12xbf16>, vector<12x128xbf16>, vector<16x128xf32> -> vector<16x128xf32>
    %221 = arith.addf %216, %220 : vector<16x128xf32>
    %c0_186 = arith.constant 0 : index
    %c7 = arith.constant 7 : index
    %c0_187 = arith.constant 0 : index
    %c0_188 = arith.constant 0 : index
    %222 = vector.load %arg1[%c0_186, %c7, %c0_187, %c0_188] : memref<1x17x17x12xbf16, #tpu.memory_space<vmem>>, vector<1x1x17x12xbf16>
    %223 = vector.shape_cast %222 : vector<1x1x17x12xbf16> to vector<17x12xbf16>
    %224 = vector.extract_strided_slice %223 {offsets = [0, 0], sizes = [16, 12], strides = [1, 1]} : vector<17x12xbf16> to vector<16x12xbf16>
    %c2_189 = arith.constant 2 : index
    %c0_190 = arith.constant 0 : index
    %c0_191 = arith.constant 0 : index
    %225 = vector.load %arg2[%c2_189, %c0_190, %c0_191] : memref<4x12x128xbf16, #tpu.memory_space<vmem>>, vector<1x12x128xbf16>
    %226 = vector.shape_cast %225 : vector<1x12x128xbf16> to vector<12x128xbf16>
    %cst_192 = arith.constant dense<0.000000e+00> : vector<16x128xf32>
    %227 = tpu.matmul %224, %226, %cst_192 {dimension_numbers = #tpu.dot_dimension_numbers<[1], [0], [0], [1], [0, 0, 1, 1], [], []>} : vector<16x12xbf16>, vector<12x128xbf16>, vector<16x128xf32> -> vector<16x128xf32>
    %228 = arith.addf %221, %227 : vector<16x128xf32>
    %229 = vector.extract_strided_slice %223 {offsets = [1, 0], sizes = [16, 12], strides = [1, 1]} : vector<17x12xbf16> to vector<16x12xbf16>
    %c3_193 = arith.constant 3 : index
    %c0_194 = arith.constant 0 : index
    %c0_195 = arith.constant 0 : index
    %230 = vector.load %arg2[%c3_193, %c0_194, %c0_195] : memref<4x12x128xbf16, #tpu.memory_space<vmem>>, vector<1x12x128xbf16>
    %231 = vector.shape_cast %230 : vector<1x12x128xbf16> to vector<12x128xbf16>
    %cst_196 = arith.constant dense<0.000000e+00> : vector<16x128xf32>
    %232 = tpu.matmul %229, %231, %cst_196 {dimension_numbers = #tpu.dot_dimension_numbers<[1], [0], [0], [1], [0, 0, 1, 1], [], []>} : vector<16x12xbf16>, vector<12x128xbf16>, vector<16x128xf32> -> vector<16x128xf32>
    %233 = arith.addf %228, %232 : vector<16x128xf32>
    %234 = vector.broadcast %0 : vector<1x128xf32> to vector<16x128xf32>
    %235 = arith.addf %233, %234 : vector<16x128xf32>
    %cst_197 = arith.constant 0.000000e+00 : f32
    %236 = vector.broadcast %cst_197 : f32 to vector<16x128xf32>
    %237 = arith.subf %236, %235 : vector<16x128xf32>
    %238 = math.exp %237 : vector<16x128xf32>
    %cst_198 = arith.constant 1.000000e+00 : f32
    %239 = vector.broadcast %cst_198 : f32 to vector<16x128xf32>
    %240 = arith.addf %239, %238 : vector<16x128xf32>
    %241 = tpu.reciprocal %240 {approx = true} : vector<16x128xf32> -> vector<16x128xf32>
    %242 = arith.mulf %235, %241 : vector<16x128xf32>
    %c0_199 = arith.constant 0 : index
    %c6_200 = arith.constant 6 : index
    %c0_201 = arith.constant 0 : index
    %c0_202 = arith.constant 0 : index
    %243 = vector.load %arg4[%c0_199, %c6_200, %c0_201, %c0_202] : memref<1x16x16x128xf32, #tpu.memory_space<vmem>>, vector<1x1x16x128xf32>
    %244 = vector.shape_cast %243 : vector<1x1x16x128xf32> to vector<16x128xf32>
    %245 = vector.shape_cast %242 : vector<16x128xf32> to vector<1x1x16x128xf32>
    tpu.vector_store %arg4[%c0_199, %c6_200, %c0_201, %c0_202], %245 {strides = array<i32>} : memref<1x16x16x128xf32, #tpu.memory_space<vmem>>, vector<1x1x16x128xf32>,
    %c0_203 = arith.constant 0 : index
    %c7_204 = arith.constant 7 : index
    %c0_205 = arith.constant 0 : index
    %c0_206 = arith.constant 0 : index
    %246 = vector.load %arg1[%c0_203, %c7_204, %c0_205, %c0_206] : memref<1x17x17x12xbf16, #tpu.memory_space<vmem>>, vector<1x1x17x12xbf16>
    %247 = vector.shape_cast %246 : vector<1x1x17x12xbf16> to vector<17x12xbf16>
    %248 = vector.extract_strided_slice %247 {offsets = [0, 0], sizes = [16, 12], strides = [1, 1]} : vector<17x12xbf16> to vector<16x12xbf16>
    %c0_207 = arith.constant 0 : index
    %c0_208 = arith.constant 0 : index
    %c0_209 = arith.constant 0 : index
    %249 = vector.load %arg2[%c0_207, %c0_208, %c0_209] : memref<4x12x128xbf16, #tpu.memory_space<vmem>>, vector<1x12x128xbf16>
    %250 = vector.shape_cast %249 : vector<1x12x128xbf16> to vector<12x128xbf16>
    %cst_210 = arith.constant dense<0.000000e+00> : vector<16x128xf32>
    %251 = tpu.matmul %248, %250, %cst_210 {dimension_numbers = #tpu.dot_dimension_numbers<[1], [0], [0], [1], [0, 0, 1, 1], [], []>} : vector<16x12xbf16>, vector<12x128xbf16>, vector<16x128xf32> -> vector<16x128xf32>
    %252 = vector.extract_strided_slice %247 {offsets = [1, 0], sizes = [16, 12], strides = [1, 1]} : vector<17x12xbf16> to vector<16x12xbf16>
    %c1_211 = arith.constant 1 : index
    %c0_212 = arith.constant 0 : index
    %c0_213 = arith.constant 0 : index
    %253 = vector.load %arg2[%c1_211, %c0_212, %c0_213] : memref<4x12x128xbf16, #tpu.memory_space<vmem>>, vector<1x12x128xbf16>
    %254 = vector.shape_cast %253 : vector<1x12x128xbf16> to vector<12x128xbf16>
    %cst_214 = arith.constant dense<0.000000e+00> : vector<16x128xf32>
    %255 = tpu.matmul %252, %254, %cst_214 {dimension_numbers = #tpu.dot_dimension_numbers<[1], [0], [0], [1], [0, 0, 1, 1], [], []>} : vector<16x12xbf16>, vector<12x128xbf16>, vector<16x128xf32> -> vector<16x128xf32>
    %256 = arith.addf %251, %255 : vector<16x128xf32>
    %c0_215 = arith.constant 0 : index
    %c8 = arith.constant 8 : index
    %c0_216 = arith.constant 0 : index
    %c0_217 = arith.constant 0 : index
    %257 = vector.load %arg1[%c0_215, %c8, %c0_216, %c0_217] : memref<1x17x17x12xbf16, #tpu.memory_space<vmem>>, vector<1x1x17x12xbf16>
    %258 = vector.shape_cast %257 : vector<1x1x17x12xbf16> to vector<17x12xbf16>
    %259 = vector.extract_strided_slice %258 {offsets = [0, 0], sizes = [16, 12], strides = [1, 1]} : vector<17x12xbf16> to vector<16x12xbf16>
    %c2_218 = arith.constant 2 : index
    %c0_219 = arith.constant 0 : index
    %c0_220 = arith.constant 0 : index
    %260 = vector.load %arg2[%c2_218, %c0_219, %c0_220] : memref<4x12x128xbf16, #tpu.memory_space<vmem>>, vector<1x12x128xbf16>
    %261 = vector.shape_cast %260 : vector<1x12x128xbf16> to vector<12x128xbf16>
    %cst_221 = arith.constant dense<0.000000e+00> : vector<16x128xf32>
    %262 = tpu.matmul %259, %261, %cst_221 {dimension_numbers = #tpu.dot_dimension_numbers<[1], [0], [0], [1], [0, 0, 1, 1], [], []>} : vector<16x12xbf16>, vector<12x128xbf16>, vector<16x128xf32> -> vector<16x128xf32>
    %263 = arith.addf %256, %262 : vector<16x128xf32>
    %264 = vector.extract_strided_slice %258 {offsets = [1, 0], sizes = [16, 12], strides = [1, 1]} : vector<17x12xbf16> to vector<16x12xbf16>
    %c3_222 = arith.constant 3 : index
    %c0_223 = arith.constant 0 : index
    %c0_224 = arith.constant 0 : index
    %265 = vector.load %arg2[%c3_222, %c0_223, %c0_224] : memref<4x12x128xbf16, #tpu.memory_space<vmem>>, vector<1x12x128xbf16>
    %266 = vector.shape_cast %265 : vector<1x12x128xbf16> to vector<12x128xbf16>
    %cst_225 = arith.constant dense<0.000000e+00> : vector<16x128xf32>
    %267 = tpu.matmul %264, %266, %cst_225 {dimension_numbers = #tpu.dot_dimension_numbers<[1], [0], [0], [1], [0, 0, 1, 1], [], []>} : vector<16x12xbf16>, vector<12x128xbf16>, vector<16x128xf32> -> vector<16x128xf32>
    %268 = arith.addf %263, %267 : vector<16x128xf32>
    %269 = vector.broadcast %0 : vector<1x128xf32> to vector<16x128xf32>
    %270 = arith.addf %268, %269 : vector<16x128xf32>
    %cst_226 = arith.constant 0.000000e+00 : f32
    %271 = vector.broadcast %cst_226 : f32 to vector<16x128xf32>
    %272 = arith.subf %271, %270 : vector<16x128xf32>
    %273 = math.exp %272 : vector<16x128xf32>
    %cst_227 = arith.constant 1.000000e+00 : f32
    %274 = vector.broadcast %cst_227 : f32 to vector<16x128xf32>
    %275 = arith.addf %274, %273 : vector<16x128xf32>
    %276 = tpu.reciprocal %275 {approx = true} : vector<16x128xf32> -> vector<16x128xf32>
    %277 = arith.mulf %270, %276 : vector<16x128xf32>
    %c0_228 = arith.constant 0 : index
    %c7_229 = arith.constant 7 : index
    %c0_230 = arith.constant 0 : index
    %c0_231 = arith.constant 0 : index
    %278 = vector.load %arg4[%c0_228, %c7_229, %c0_230, %c0_231] : memref<1x16x16x128xf32, #tpu.memory_space<vmem>>, vector<1x1x16x128xf32>
    %279 = vector.shape_cast %278 : vector<1x1x16x128xf32> to vector<16x128xf32>
    %280 = vector.shape_cast %277 : vector<16x128xf32> to vector<1x1x16x128xf32>
    tpu.vector_store %arg4[%c0_228, %c7_229, %c0_230, %c0_231], %280 {strides = array<i32>} : memref<1x16x16x128xf32, #tpu.memory_space<vmem>>, vector<1x1x16x128xf32>,
    %c0_232 = arith.constant 0 : index
    %c8_233 = arith.constant 8 : index
    %c0_234 = arith.constant 0 : index
    %c0_235 = arith.constant 0 : index
    %281 = vector.load %arg1[%c0_232, %c8_233, %c0_234, %c0_235] : memref<1x17x17x12xbf16, #tpu.memory_space<vmem>>, vector<1x1x17x12xbf16>
    %282 = vector.shape_cast %281 : vector<1x1x17x12xbf16> to vector<17x12xbf16>
    %283 = vector.extract_strided_slice %282 {offsets = [0, 0], sizes = [16, 12], strides = [1, 1]} : vector<17x12xbf16> to vector<16x12xbf16>
    %c0_236 = arith.constant 0 : index
    %c0_237 = arith.constant 0 : index
    %c0_238 = arith.constant 0 : index
    %284 = vector.load %arg2[%c0_236, %c0_237, %c0_238] : memref<4x12x128xbf16, #tpu.memory_space<vmem>>, vector<1x12x128xbf16>
    %285 = vector.shape_cast %284 : vector<1x12x128xbf16> to vector<12x128xbf16>
    %cst_239 = arith.constant dense<0.000000e+00> : vector<16x128xf32>
    %286 = tpu.matmul %283, %285, %cst_239 {dimension_numbers = #tpu.dot_dimension_numbers<[1], [0], [0], [1], [0, 0, 1, 1], [], []>} : vector<16x12xbf16>, vector<12x128xbf16>, vector<16x128xf32> -> vector<16x128xf32>
    %287 = vector.extract_strided_slice %282 {offsets = [1, 0], sizes = [16, 12], strides = [1, 1]} : vector<17x12xbf16> to vector<16x12xbf16>
    %c1_240 = arith.constant 1 : index
    %c0_241 = arith.constant 0 : index
    %c0_242 = arith.constant 0 : index
    %288 = vector.load %arg2[%c1_240, %c0_241, %c0_242] : memref<4x12x128xbf16, #tpu.memory_space<vmem>>, vector<1x12x128xbf16>
    %289 = vector.shape_cast %288 : vector<1x12x128xbf16> to vector<12x128xbf16>
    %cst_243 = arith.constant dense<0.000000e+00> : vector<16x128xf32>
    %290 = tpu.matmul %287, %289, %cst_243 {dimension_numbers = #tpu.dot_dimension_numbers<[1], [0], [0], [1], [0, 0, 1, 1], [], []>} : vector<16x12xbf16>, vector<12x128xbf16>, vector<16x128xf32> -> vector<16x128xf32>
    %291 = arith.addf %286, %290 : vector<16x128xf32>
    %c0_244 = arith.constant 0 : index
    %c9 = arith.constant 9 : index
    %c0_245 = arith.constant 0 : index
    %c0_246 = arith.constant 0 : index
    %292 = vector.load %arg1[%c0_244, %c9, %c0_245, %c0_246] : memref<1x17x17x12xbf16, #tpu.memory_space<vmem>>, vector<1x1x17x12xbf16>
    %293 = vector.shape_cast %292 : vector<1x1x17x12xbf16> to vector<17x12xbf16>
    %294 = vector.extract_strided_slice %293 {offsets = [0, 0], sizes = [16, 12], strides = [1, 1]} : vector<17x12xbf16> to vector<16x12xbf16>
    %c2_247 = arith.constant 2 : index
    %c0_248 = arith.constant 0 : index
    %c0_249 = arith.constant 0 : index
    %295 = vector.load %arg2[%c2_247, %c0_248, %c0_249] : memref<4x12x128xbf16, #tpu.memory_space<vmem>>, vector<1x12x128xbf16>
    %296 = vector.shape_cast %295 : vector<1x12x128xbf16> to vector<12x128xbf16>
    %cst_250 = arith.constant dense<0.000000e+00> : vector<16x128xf32>
    %297 = tpu.matmul %294, %296, %cst_250 {dimension_numbers = #tpu.dot_dimension_numbers<[1], [0], [0], [1], [0, 0, 1, 1], [], []>} : vector<16x12xbf16>, vector<12x128xbf16>, vector<16x128xf32> -> vector<16x128xf32>
    %298 = arith.addf %291, %297 : vector<16x128xf32>
    %299 = vector.extract_strided_slice %293 {offsets = [1, 0], sizes = [16, 12], strides = [1, 1]} : vector<17x12xbf16> to vector<16x12xbf16>
    %c3_251 = arith.constant 3 : index
    %c0_252 = arith.constant 0 : index
    %c0_253 = arith.constant 0 : index
    %300 = vector.load %arg2[%c3_251, %c0_252, %c0_253] : memref<4x12x128xbf16, #tpu.memory_space<vmem>>, vector<1x12x128xbf16>
    %301 = vector.shape_cast %300 : vector<1x12x128xbf16> to vector<12x128xbf16>
    %cst_254 = arith.constant dense<0.000000e+00> : vector<16x128xf32>
    %302 = tpu.matmul %299, %301, %cst_254 {dimension_numbers = #tpu.dot_dimension_numbers<[1], [0], [0], [1], [0, 0, 1, 1], [], []>} : vector<16x12xbf16>, vector<12x128xbf16>, vector<16x128xf32> -> vector<16x128xf32>
    %303 = arith.addf %298, %302 : vector<16x128xf32>
    %304 = vector.broadcast %0 : vector<1x128xf32> to vector<16x128xf32>
    %305 = arith.addf %303, %304 : vector<16x128xf32>
    %cst_255 = arith.constant 0.000000e+00 : f32
    %306 = vector.broadcast %cst_255 : f32 to vector<16x128xf32>
    %307 = arith.subf %306, %305 : vector<16x128xf32>
    %308 = math.exp %307 : vector<16x128xf32>
    %cst_256 = arith.constant 1.000000e+00 : f32
    %309 = vector.broadcast %cst_256 : f32 to vector<16x128xf32>
    %310 = arith.addf %309, %308 : vector<16x128xf32>
    %311 = tpu.reciprocal %310 {approx = true} : vector<16x128xf32> -> vector<16x128xf32>
    %312 = arith.mulf %305, %311 : vector<16x128xf32>
    %c0_257 = arith.constant 0 : index
    %c8_258 = arith.constant 8 : index
    %c0_259 = arith.constant 0 : index
    %c0_260 = arith.constant 0 : index
    %313 = vector.load %arg4[%c0_257, %c8_258, %c0_259, %c0_260] : memref<1x16x16x128xf32, #tpu.memory_space<vmem>>, vector<1x1x16x128xf32>
    %314 = vector.shape_cast %313 : vector<1x1x16x128xf32> to vector<16x128xf32>
    %315 = vector.shape_cast %312 : vector<16x128xf32> to vector<1x1x16x128xf32>
    tpu.vector_store %arg4[%c0_257, %c8_258, %c0_259, %c0_260], %315 {strides = array<i32>} : memref<1x16x16x128xf32, #tpu.memory_space<vmem>>, vector<1x1x16x128xf32>,
    %c0_261 = arith.constant 0 : index
    %c9_262 = arith.constant 9 : index
    %c0_263 = arith.constant 0 : index
    %c0_264 = arith.constant 0 : index
    %316 = vector.load %arg1[%c0_261, %c9_262, %c0_263, %c0_264] : memref<1x17x17x12xbf16, #tpu.memory_space<vmem>>, vector<1x1x17x12xbf16>
    %317 = vector.shape_cast %316 : vector<1x1x17x12xbf16> to vector<17x12xbf16>
    %318 = vector.extract_strided_slice %317 {offsets = [0, 0], sizes = [16, 12], strides = [1, 1]} : vector<17x12xbf16> to vector<16x12xbf16>
    %c0_265 = arith.constant 0 : index
    %c0_266 = arith.constant 0 : index
    %c0_267 = arith.constant 0 : index
    %319 = vector.load %arg2[%c0_265, %c0_266, %c0_267] : memref<4x12x128xbf16, #tpu.memory_space<vmem>>, vector<1x12x128xbf16>
    %320 = vector.shape_cast %319 : vector<1x12x128xbf16> to vector<12x128xbf16>
    %cst_268 = arith.constant dense<0.000000e+00> : vector<16x128xf32>
    %321 = tpu.matmul %318, %320, %cst_268 {dimension_numbers = #tpu.dot_dimension_numbers<[1], [0], [0], [1], [0, 0, 1, 1], [], []>} : vector<16x12xbf16>, vector<12x128xbf16>, vector<16x128xf32> -> vector<16x128xf32>
    %322 = vector.extract_strided_slice %317 {offsets = [1, 0], sizes = [16, 12], strides = [1, 1]} : vector<17x12xbf16> to vector<16x12xbf16>
    %c1_269 = arith.constant 1 : index
    %c0_270 = arith.constant 0 : index
    %c0_271 = arith.constant 0 : index
    %323 = vector.load %arg2[%c1_269, %c0_270, %c0_271] : memref<4x12x128xbf16, #tpu.memory_space<vmem>>, vector<1x12x128xbf16>
    %324 = vector.shape_cast %323 : vector<1x12x128xbf16> to vector<12x128xbf16>
    %cst_272 = arith.constant dense<0.000000e+00> : vector<16x128xf32>
    %325 = tpu.matmul %322, %324, %cst_272 {dimension_numbers = #tpu.dot_dimension_numbers<[1], [0], [0], [1], [0, 0, 1, 1], [], []>} : vector<16x12xbf16>, vector<12x128xbf16>, vector<16x128xf32> -> vector<16x128xf32>
    %326 = arith.addf %321, %325 : vector<16x128xf32>
    %c0_273 = arith.constant 0 : index
    %c10 = arith.constant 10 : index
    %c0_274 = arith.constant 0 : index
    %c0_275 = arith.constant 0 : index
    %327 = vector.load %arg1[%c0_273, %c10, %c0_274, %c0_275] : memref<1x17x17x12xbf16, #tpu.memory_space<vmem>>, vector<1x1x17x12xbf16>
    %328 = vector.shape_cast %327 : vector<1x1x17x12xbf16> to vector<17x12xbf16>
    %329 = vector.extract_strided_slice %328 {offsets = [0, 0], sizes = [16, 12], strides = [1, 1]} : vector<17x12xbf16> to vector<16x12xbf16>
    %c2_276 = arith.constant 2 : index
    %c0_277 = arith.constant 0 : index
    %c0_278 = arith.constant 0 : index
    %330 = vector.load %arg2[%c2_276, %c0_277, %c0_278] : memref<4x12x128xbf16, #tpu.memory_space<vmem>>, vector<1x12x128xbf16>
    %331 = vector.shape_cast %330 : vector<1x12x128xbf16> to vector<12x128xbf16>
    %cst_279 = arith.constant dense<0.000000e+00> : vector<16x128xf32>
    %332 = tpu.matmul %329, %331, %cst_279 {dimension_numbers = #tpu.dot_dimension_numbers<[1], [0], [0], [1], [0, 0, 1, 1], [], []>} : vector<16x12xbf16>, vector<12x128xbf16>, vector<16x128xf32> -> vector<16x128xf32>
    %333 = arith.addf %326, %332 : vector<16x128xf32>
    %334 = vector.extract_strided_slice %328 {offsets = [1, 0], sizes = [16, 12], strides = [1, 1]} : vector<17x12xbf16> to vector<16x12xbf16>
    %c3_280 = arith.constant 3 : index
    %c0_281 = arith.constant 0 : index
    %c0_282 = arith.constant 0 : index
    %335 = vector.load %arg2[%c3_280, %c0_281, %c0_282] : memref<4x12x128xbf16, #tpu.memory_space<vmem>>, vector<1x12x128xbf16>
    %336 = vector.shape_cast %335 : vector<1x12x128xbf16> to vector<12x128xbf16>
    %cst_283 = arith.constant dense<0.000000e+00> : vector<16x128xf32>
    %337 = tpu.matmul %334, %336, %cst_283 {dimension_numbers = #tpu.dot_dimension_numbers<[1], [0], [0], [1], [0, 0, 1, 1], [], []>} : vector<16x12xbf16>, vector<12x128xbf16>, vector<16x128xf32> -> vector<16x128xf32>
    %338 = arith.addf %333, %337 : vector<16x128xf32>
    %339 = vector.broadcast %0 : vector<1x128xf32> to vector<16x128xf32>
    %340 = arith.addf %338, %339 : vector<16x128xf32>
    %cst_284 = arith.constant 0.000000e+00 : f32
    %341 = vector.broadcast %cst_284 : f32 to vector<16x128xf32>
    %342 = arith.subf %341, %340 : vector<16x128xf32>
    %343 = math.exp %342 : vector<16x128xf32>
    %cst_285 = arith.constant 1.000000e+00 : f32
    %344 = vector.broadcast %cst_285 : f32 to vector<16x128xf32>
    %345 = arith.addf %344, %343 : vector<16x128xf32>
    %346 = tpu.reciprocal %345 {approx = true} : vector<16x128xf32> -> vector<16x128xf32>
    %347 = arith.mulf %340, %346 : vector<16x128xf32>
    %c0_286 = arith.constant 0 : index
    %c9_287 = arith.constant 9 : index
    %c0_288 = arith.constant 0 : index
    %c0_289 = arith.constant 0 : index
    %348 = vector.load %arg4[%c0_286, %c9_287, %c0_288, %c0_289] : memref<1x16x16x128xf32, #tpu.memory_space<vmem>>, vector<1x1x16x128xf32>
    %349 = vector.shape_cast %348 : vector<1x1x16x128xf32> to vector<16x128xf32>
    %350 = vector.shape_cast %347 : vector<16x128xf32> to vector<1x1x16x128xf32>
    tpu.vector_store %arg4[%c0_286, %c9_287, %c0_288, %c0_289], %350 {strides = array<i32>} : memref<1x16x16x128xf32, #tpu.memory_space<vmem>>, vector<1x1x16x128xf32>,
    %c0_290 = arith.constant 0 : index
    %c10_291 = arith.constant 10 : index
    %c0_292 = arith.constant 0 : index
    %c0_293 = arith.constant 0 : index
    %351 = vector.load %arg1[%c0_290, %c10_291, %c0_292, %c0_293] : memref<1x17x17x12xbf16, #tpu.memory_space<vmem>>, vector<1x1x17x12xbf16>
    %352 = vector.shape_cast %351 : vector<1x1x17x12xbf16> to vector<17x12xbf16>
    %353 = vector.extract_strided_slice %352 {offsets = [0, 0], sizes = [16, 12], strides = [1, 1]} : vector<17x12xbf16> to vector<16x12xbf16>
    %c0_294 = arith.constant 0 : index
    %c0_295 = arith.constant 0 : index
    %c0_296 = arith.constant 0 : index
    %354 = vector.load %arg2[%c0_294, %c0_295, %c0_296] : memref<4x12x128xbf16, #tpu.memory_space<vmem>>, vector<1x12x128xbf16>
    %355 = vector.shape_cast %354 : vector<1x12x128xbf16> to vector<12x128xbf16>
    %cst_297 = arith.constant dense<0.000000e+00> : vector<16x128xf32>
    %356 = tpu.matmul %353, %355, %cst_297 {dimension_numbers = #tpu.dot_dimension_numbers<[1], [0], [0], [1], [0, 0, 1, 1], [], []>} : vector<16x12xbf16>, vector<12x128xbf16>, vector<16x128xf32> -> vector<16x128xf32>
    %357 = vector.extract_strided_slice %352 {offsets = [1, 0], sizes = [16, 12], strides = [1, 1]} : vector<17x12xbf16> to vector<16x12xbf16>
    %c1_298 = arith.constant 1 : index
    %c0_299 = arith.constant 0 : index
    %c0_300 = arith.constant 0 : index
    %358 = vector.load %arg2[%c1_298, %c0_299, %c0_300] : memref<4x12x128xbf16, #tpu.memory_space<vmem>>, vector<1x12x128xbf16>
    %359 = vector.shape_cast %358 : vector<1x12x128xbf16> to vector<12x128xbf16>
    %cst_301 = arith.constant dense<0.000000e+00> : vector<16x128xf32>
    %360 = tpu.matmul %357, %359, %cst_301 {dimension_numbers = #tpu.dot_dimension_numbers<[1], [0], [0], [1], [0, 0, 1, 1], [], []>} : vector<16x12xbf16>, vector<12x128xbf16>, vector<16x128xf32> -> vector<16x128xf32>
    %361 = arith.addf %356, %360 : vector<16x128xf32>
    %c0_302 = arith.constant 0 : index
    %c11 = arith.constant 11 : index
    %c0_303 = arith.constant 0 : index
    %c0_304 = arith.constant 0 : index
    %362 = vector.load %arg1[%c0_302, %c11, %c0_303, %c0_304] : memref<1x17x17x12xbf16, #tpu.memory_space<vmem>>, vector<1x1x17x12xbf16>
    %363 = vector.shape_cast %362 : vector<1x1x17x12xbf16> to vector<17x12xbf16>
    %364 = vector.extract_strided_slice %363 {offsets = [0, 0], sizes = [16, 12], strides = [1, 1]} : vector<17x12xbf16> to vector<16x12xbf16>
    %c2_305 = arith.constant 2 : index
    %c0_306 = arith.constant 0 : index
    %c0_307 = arith.constant 0 : index
    %365 = vector.load %arg2[%c2_305, %c0_306, %c0_307] : memref<4x12x128xbf16, #tpu.memory_space<vmem>>, vector<1x12x128xbf16>
    %366 = vector.shape_cast %365 : vector<1x12x128xbf16> to vector<12x128xbf16>
    %cst_308 = arith.constant dense<0.000000e+00> : vector<16x128xf32>
    %367 = tpu.matmul %364, %366, %cst_308 {dimension_numbers = #tpu.dot_dimension_numbers<[1], [0], [0], [1], [0, 0, 1, 1], [], []>} : vector<16x12xbf16>, vector<12x128xbf16>, vector<16x128xf32> -> vector<16x128xf32>
    %368 = arith.addf %361, %367 : vector<16x128xf32>
    %369 = vector.extract_strided_slice %363 {offsets = [1, 0], sizes = [16, 12], strides = [1, 1]} : vector<17x12xbf16> to vector<16x12xbf16>
    %c3_309 = arith.constant 3 : index
    %c0_310 = arith.constant 0 : index
    %c0_311 = arith.constant 0 : index
    %370 = vector.load %arg2[%c3_309, %c0_310, %c0_311] : memref<4x12x128xbf16, #tpu.memory_space<vmem>>, vector<1x12x128xbf16>
    %371 = vector.shape_cast %370 : vector<1x12x128xbf16> to vector<12x128xbf16>
    %cst_312 = arith.constant dense<0.000000e+00> : vector<16x128xf32>
    %372 = tpu.matmul %369, %371, %cst_312 {dimension_numbers = #tpu.dot_dimension_numbers<[1], [0], [0], [1], [0, 0, 1, 1], [], []>} : vector<16x12xbf16>, vector<12x128xbf16>, vector<16x128xf32> -> vector<16x128xf32>
    %373 = arith.addf %368, %372 : vector<16x128xf32>
    %374 = vector.broadcast %0 : vector<1x128xf32> to vector<16x128xf32>
    %375 = arith.addf %373, %374 : vector<16x128xf32>
    %cst_313 = arith.constant 0.000000e+00 : f32
    %376 = vector.broadcast %cst_313 : f32 to vector<16x128xf32>
    %377 = arith.subf %376, %375 : vector<16x128xf32>
    %378 = math.exp %377 : vector<16x128xf32>
    %cst_314 = arith.constant 1.000000e+00 : f32
    %379 = vector.broadcast %cst_314 : f32 to vector<16x128xf32>
    %380 = arith.addf %379, %378 : vector<16x128xf32>
    %381 = tpu.reciprocal %380 {approx = true} : vector<16x128xf32> -> vector<16x128xf32>
    %382 = arith.mulf %375, %381 : vector<16x128xf32>
    %c0_315 = arith.constant 0 : index
    %c10_316 = arith.constant 10 : index
    %c0_317 = arith.constant 0 : index
    %c0_318 = arith.constant 0 : index
    %383 = vector.load %arg4[%c0_315, %c10_316, %c0_317, %c0_318] : memref<1x16x16x128xf32, #tpu.memory_space<vmem>>, vector<1x1x16x128xf32>
    %384 = vector.shape_cast %383 : vector<1x1x16x128xf32> to vector<16x128xf32>
    %385 = vector.shape_cast %382 : vector<16x128xf32> to vector<1x1x16x128xf32>
    tpu.vector_store %arg4[%c0_315, %c10_316, %c0_317, %c0_318], %385 {strides = array<i32>} : memref<1x16x16x128xf32, #tpu.memory_space<vmem>>, vector<1x1x16x128xf32>,
    %c0_319 = arith.constant 0 : index
    %c11_320 = arith.constant 11 : index
    %c0_321 = arith.constant 0 : index
    %c0_322 = arith.constant 0 : index
    %386 = vector.load %arg1[%c0_319, %c11_320, %c0_321, %c0_322] : memref<1x17x17x12xbf16, #tpu.memory_space<vmem>>, vector<1x1x17x12xbf16>
    %387 = vector.shape_cast %386 : vector<1x1x17x12xbf16> to vector<17x12xbf16>
    %388 = vector.extract_strided_slice %387 {offsets = [0, 0], sizes = [16, 12], strides = [1, 1]} : vector<17x12xbf16> to vector<16x12xbf16>
    %c0_323 = arith.constant 0 : index
    %c0_324 = arith.constant 0 : index
    %c0_325 = arith.constant 0 : index
    %389 = vector.load %arg2[%c0_323, %c0_324, %c0_325] : memref<4x12x128xbf16, #tpu.memory_space<vmem>>, vector<1x12x128xbf16>
    %390 = vector.shape_cast %389 : vector<1x12x128xbf16> to vector<12x128xbf16>
    %cst_326 = arith.constant dense<0.000000e+00> : vector<16x128xf32>
    %391 = tpu.matmul %388, %390, %cst_326 {dimension_numbers = #tpu.dot_dimension_numbers<[1], [0], [0], [1], [0, 0, 1, 1], [], []>} : vector<16x12xbf16>, vector<12x128xbf16>, vector<16x128xf32> -> vector<16x128xf32>
    %392 = vector.extract_strided_slice %387 {offsets = [1, 0], sizes = [16, 12], strides = [1, 1]} : vector<17x12xbf16> to vector<16x12xbf16>
    %c1_327 = arith.constant 1 : index
    %c0_328 = arith.constant 0 : index
    %c0_329 = arith.constant 0 : index
    %393 = vector.load %arg2[%c1_327, %c0_328, %c0_329] : memref<4x12x128xbf16, #tpu.memory_space<vmem>>, vector<1x12x128xbf16>
    %394 = vector.shape_cast %393 : vector<1x12x128xbf16> to vector<12x128xbf16>
    %cst_330 = arith.constant dense<0.000000e+00> : vector<16x128xf32>
    %395 = tpu.matmul %392, %394, %cst_330 {dimension_numbers = #tpu.dot_dimension_numbers<[1], [0], [0], [1], [0, 0, 1, 1], [], []>} : vector<16x12xbf16>, vector<12x128xbf16>, vector<16x128xf32> -> vector<16x128xf32>
    %396 = arith.addf %391, %395 : vector<16x128xf32>
    %c0_331 = arith.constant 0 : index
    %c12 = arith.constant 12 : index
    %c0_332 = arith.constant 0 : index
    %c0_333 = arith.constant 0 : index
    %397 = vector.load %arg1[%c0_331, %c12, %c0_332, %c0_333] : memref<1x17x17x12xbf16, #tpu.memory_space<vmem>>, vector<1x1x17x12xbf16>
    %398 = vector.shape_cast %397 : vector<1x1x17x12xbf16> to vector<17x12xbf16>
    %399 = vector.extract_strided_slice %398 {offsets = [0, 0], sizes = [16, 12], strides = [1, 1]} : vector<17x12xbf16> to vector<16x12xbf16>
    %c2_334 = arith.constant 2 : index
    %c0_335 = arith.constant 0 : index
    %c0_336 = arith.constant 0 : index
    %400 = vector.load %arg2[%c2_334, %c0_335, %c0_336] : memref<4x12x128xbf16, #tpu.memory_space<vmem>>, vector<1x12x128xbf16>
    %401 = vector.shape_cast %400 : vector<1x12x128xbf16> to vector<12x128xbf16>
    %cst_337 = arith.constant dense<0.000000e+00> : vector<16x128xf32>
    %402 = tpu.matmul %399, %401, %cst_337 {dimension_numbers = #tpu.dot_dimension_numbers<[1], [0], [0], [1], [0, 0, 1, 1], [], []>} : vector<16x12xbf16>, vector<12x128xbf16>, vector<16x128xf32> -> vector<16x128xf32>
    %403 = arith.addf %396, %402 : vector<16x128xf32>
    %404 = vector.extract_strided_slice %398 {offsets = [1, 0], sizes = [16, 12], strides = [1, 1]} : vector<17x12xbf16> to vector<16x12xbf16>
    %c3_338 = arith.constant 3 : index
    %c0_339 = arith.constant 0 : index
    %c0_340 = arith.constant 0 : index
    %405 = vector.load %arg2[%c3_338, %c0_339, %c0_340] : memref<4x12x128xbf16, #tpu.memory_space<vmem>>, vector<1x12x128xbf16>
    %406 = vector.shape_cast %405 : vector<1x12x128xbf16> to vector<12x128xbf16>
    %cst_341 = arith.constant dense<0.000000e+00> : vector<16x128xf32>
    %407 = tpu.matmul %404, %406, %cst_341 {dimension_numbers = #tpu.dot_dimension_numbers<[1], [0], [0], [1], [0, 0, 1, 1], [], []>} : vector<16x12xbf16>, vector<12x128xbf16>, vector<16x128xf32> -> vector<16x128xf32>
    %408 = arith.addf %403, %407 : vector<16x128xf32>
    %409 = vector.broadcast %0 : vector<1x128xf32> to vector<16x128xf32>
    %410 = arith.addf %408, %409 : vector<16x128xf32>
    %cst_342 = arith.constant 0.000000e+00 : f32
    %411 = vector.broadcast %cst_342 : f32 to vector<16x128xf32>
    %412 = arith.subf %411, %410 : vector<16x128xf32>
    %413 = math.exp %412 : vector<16x128xf32>
    %cst_343 = arith.constant 1.000000e+00 : f32
    %414 = vector.broadcast %cst_343 : f32 to vector<16x128xf32>
    %415 = arith.addf %414, %413 : vector<16x128xf32>
    %416 = tpu.reciprocal %415 {approx = true} : vector<16x128xf32> -> vector<16x128xf32>
    %417 = arith.mulf %410, %416 : vector<16x128xf32>
    %c0_344 = arith.constant 0 : index
    %c11_345 = arith.constant 11 : index
    %c0_346 = arith.constant 0 : index
    %c0_347 = arith.constant 0 : index
    %418 = vector.load %arg4[%c0_344, %c11_345, %c0_346, %c0_347] : memref<1x16x16x128xf32, #tpu.memory_space<vmem>>, vector<1x1x16x128xf32>
    %419 = vector.shape_cast %418 : vector<1x1x16x128xf32> to vector<16x128xf32>
    %420 = vector.shape_cast %417 : vector<16x128xf32> to vector<1x1x16x128xf32>
    tpu.vector_store %arg4[%c0_344, %c11_345, %c0_346, %c0_347], %420 {strides = array<i32>} : memref<1x16x16x128xf32, #tpu.memory_space<vmem>>, vector<1x1x16x128xf32>,
    %c0_348 = arith.constant 0 : index
    %c12_349 = arith.constant 12 : index
    %c0_350 = arith.constant 0 : index
    %c0_351 = arith.constant 0 : index
    %421 = vector.load %arg1[%c0_348, %c12_349, %c0_350, %c0_351] : memref<1x17x17x12xbf16, #tpu.memory_space<vmem>>, vector<1x1x17x12xbf16>
    %422 = vector.shape_cast %421 : vector<1x1x17x12xbf16> to vector<17x12xbf16>
    %423 = vector.extract_strided_slice %422 {offsets = [0, 0], sizes = [16, 12], strides = [1, 1]} : vector<17x12xbf16> to vector<16x12xbf16>
    %c0_352 = arith.constant 0 : index
    %c0_353 = arith.constant 0 : index
    %c0_354 = arith.constant 0 : index
    %424 = vector.load %arg2[%c0_352, %c0_353, %c0_354] : memref<4x12x128xbf16, #tpu.memory_space<vmem>>, vector<1x12x128xbf16>
    %425 = vector.shape_cast %424 : vector<1x12x128xbf16> to vector<12x128xbf16>
    %cst_355 = arith.constant dense<0.000000e+00> : vector<16x128xf32>
    %426 = tpu.matmul %423, %425, %cst_355 {dimension_numbers = #tpu.dot_dimension_numbers<[1], [0], [0], [1], [0, 0, 1, 1], [], []>} : vector<16x12xbf16>, vector<12x128xbf16>, vector<16x128xf32> -> vector<16x128xf32>
    %427 = vector.extract_strided_slice %422 {offsets = [1, 0], sizes = [16, 12], strides = [1, 1]} : vector<17x12xbf16> to vector<16x12xbf16>
    %c1_356 = arith.constant 1 : index
    %c0_357 = arith.constant 0 : index
    %c0_358 = arith.constant 0 : index
    %428 = vector.load %arg2[%c1_356, %c0_357, %c0_358] : memref<4x12x128xbf16, #tpu.memory_space<vmem>>, vector<1x12x128xbf16>
    %429 = vector.shape_cast %428 : vector<1x12x128xbf16> to vector<12x128xbf16>
    %cst_359 = arith.constant dense<0.000000e+00> : vector<16x128xf32>
    %430 = tpu.matmul %427, %429, %cst_359 {dimension_numbers = #tpu.dot_dimension_numbers<[1], [0], [0], [1], [0, 0, 1, 1], [], []>} : vector<16x12xbf16>, vector<12x128xbf16>, vector<16x128xf32> -> vector<16x128xf32>
    %431 = arith.addf %426, %430 : vector<16x128xf32>
    %c0_360 = arith.constant 0 : index
    %c13 = arith.constant 13 : index
    %c0_361 = arith.constant 0 : index
    %c0_362 = arith.constant 0 : index
    %432 = vector.load %arg1[%c0_360, %c13, %c0_361, %c0_362] : memref<1x17x17x12xbf16, #tpu.memory_space<vmem>>, vector<1x1x17x12xbf16>
    %433 = vector.shape_cast %432 : vector<1x1x17x12xbf16> to vector<17x12xbf16>
    %434 = vector.extract_strided_slice %433 {offsets = [0, 0], sizes = [16, 12], strides = [1, 1]} : vector<17x12xbf16> to vector<16x12xbf16>
    %c2_363 = arith.constant 2 : index
    %c0_364 = arith.constant 0 : index
    %c0_365 = arith.constant 0 : index
    %435 = vector.load %arg2[%c2_363, %c0_364, %c0_365] : memref<4x12x128xbf16, #tpu.memory_space<vmem>>, vector<1x12x128xbf16>
    %436 = vector.shape_cast %435 : vector<1x12x128xbf16> to vector<12x128xbf16>
    %cst_366 = arith.constant dense<0.000000e+00> : vector<16x128xf32>
    %437 = tpu.matmul %434, %436, %cst_366 {dimension_numbers = #tpu.dot_dimension_numbers<[1], [0], [0], [1], [0, 0, 1, 1], [], []>} : vector<16x12xbf16>, vector<12x128xbf16>, vector<16x128xf32> -> vector<16x128xf32>
    %438 = arith.addf %431, %437 : vector<16x128xf32>
    %439 = vector.extract_strided_slice %433 {offsets = [1, 0], sizes = [16, 12], strides = [1, 1]} : vector<17x12xbf16> to vector<16x12xbf16>
    %c3_367 = arith.constant 3 : index
    %c0_368 = arith.constant 0 : index
    %c0_369 = arith.constant 0 : index
    %440 = vector.load %arg2[%c3_367, %c0_368, %c0_369] : memref<4x12x128xbf16, #tpu.memory_space<vmem>>, vector<1x12x128xbf16>
    %441 = vector.shape_cast %440 : vector<1x12x128xbf16> to vector<12x128xbf16>
    %cst_370 = arith.constant dense<0.000000e+00> : vector<16x128xf32>
    %442 = tpu.matmul %439, %441, %cst_370 {dimension_numbers = #tpu.dot_dimension_numbers<[1], [0], [0], [1], [0, 0, 1, 1], [], []>} : vector<16x12xbf16>, vector<12x128xbf16>, vector<16x128xf32> -> vector<16x128xf32>
    %443 = arith.addf %438, %442 : vector<16x128xf32>
    %444 = vector.broadcast %0 : vector<1x128xf32> to vector<16x128xf32>
    %445 = arith.addf %443, %444 : vector<16x128xf32>
    %cst_371 = arith.constant 0.000000e+00 : f32
    %446 = vector.broadcast %cst_371 : f32 to vector<16x128xf32>
    %447 = arith.subf %446, %445 : vector<16x128xf32>
    %448 = math.exp %447 : vector<16x128xf32>
    %cst_372 = arith.constant 1.000000e+00 : f32
    %449 = vector.broadcast %cst_372 : f32 to vector<16x128xf32>
    %450 = arith.addf %449, %448 : vector<16x128xf32>
    %451 = tpu.reciprocal %450 {approx = true} : vector<16x128xf32> -> vector<16x128xf32>
    %452 = arith.mulf %445, %451 : vector<16x128xf32>
    %c0_373 = arith.constant 0 : index
    %c12_374 = arith.constant 12 : index
    %c0_375 = arith.constant 0 : index
    %c0_376 = arith.constant 0 : index
    %453 = vector.load %arg4[%c0_373, %c12_374, %c0_375, %c0_376] : memref<1x16x16x128xf32, #tpu.memory_space<vmem>>, vector<1x1x16x128xf32>
    %454 = vector.shape_cast %453 : vector<1x1x16x128xf32> to vector<16x128xf32>
    %455 = vector.shape_cast %452 : vector<16x128xf32> to vector<1x1x16x128xf32>
    tpu.vector_store %arg4[%c0_373, %c12_374, %c0_375, %c0_376], %455 {strides = array<i32>} : memref<1x16x16x128xf32, #tpu.memory_space<vmem>>, vector<1x1x16x128xf32>,
    %c0_377 = arith.constant 0 : index
    %c13_378 = arith.constant 13 : index
    %c0_379 = arith.constant 0 : index
    %c0_380 = arith.constant 0 : index
    %456 = vector.load %arg1[%c0_377, %c13_378, %c0_379, %c0_380] : memref<1x17x17x12xbf16, #tpu.memory_space<vmem>>, vector<1x1x17x12xbf16>
    %457 = vector.shape_cast %456 : vector<1x1x17x12xbf16> to vector<17x12xbf16>
    %458 = vector.extract_strided_slice %457 {offsets = [0, 0], sizes = [16, 12], strides = [1, 1]} : vector<17x12xbf16> to vector<16x12xbf16>
    %c0_381 = arith.constant 0 : index
    %c0_382 = arith.constant 0 : index
    %c0_383 = arith.constant 0 : index
    %459 = vector.load %arg2[%c0_381, %c0_382, %c0_383] : memref<4x12x128xbf16, #tpu.memory_space<vmem>>, vector<1x12x128xbf16>
    %460 = vector.shape_cast %459 : vector<1x12x128xbf16> to vector<12x128xbf16>
    %cst_384 = arith.constant dense<0.000000e+00> : vector<16x128xf32>
    %461 = tpu.matmul %458, %460, %cst_384 {dimension_numbers = #tpu.dot_dimension_numbers<[1], [0], [0], [1], [0, 0, 1, 1], [], []>} : vector<16x12xbf16>, vector<12x128xbf16>, vector<16x128xf32> -> vector<16x128xf32>
    %462 = vector.extract_strided_slice %457 {offsets = [1, 0], sizes = [16, 12], strides = [1, 1]} : vector<17x12xbf16> to vector<16x12xbf16>
    %c1_385 = arith.constant 1 : index
    %c0_386 = arith.constant 0 : index
    %c0_387 = arith.constant 0 : index
    %463 = vector.load %arg2[%c1_385, %c0_386, %c0_387] : memref<4x12x128xbf16, #tpu.memory_space<vmem>>, vector<1x12x128xbf16>
    %464 = vector.shape_cast %463 : vector<1x12x128xbf16> to vector<12x128xbf16>
    %cst_388 = arith.constant dense<0.000000e+00> : vector<16x128xf32>
    %465 = tpu.matmul %462, %464, %cst_388 {dimension_numbers = #tpu.dot_dimension_numbers<[1], [0], [0], [1], [0, 0, 1, 1], [], []>} : vector<16x12xbf16>, vector<12x128xbf16>, vector<16x128xf32> -> vector<16x128xf32>
    %466 = arith.addf %461, %465 : vector<16x128xf32>
    %c0_389 = arith.constant 0 : index
    %c14 = arith.constant 14 : index
    %c0_390 = arith.constant 0 : index
    %c0_391 = arith.constant 0 : index
    %467 = vector.load %arg1[%c0_389, %c14, %c0_390, %c0_391] : memref<1x17x17x12xbf16, #tpu.memory_space<vmem>>, vector<1x1x17x12xbf16>
    %468 = vector.shape_cast %467 : vector<1x1x17x12xbf16> to vector<17x12xbf16>
    %469 = vector.extract_strided_slice %468 {offsets = [0, 0], sizes = [16, 12], strides = [1, 1]} : vector<17x12xbf16> to vector<16x12xbf16>
    %c2_392 = arith.constant 2 : index
    %c0_393 = arith.constant 0 : index
    %c0_394 = arith.constant 0 : index
    %470 = vector.load %arg2[%c2_392, %c0_393, %c0_394] : memref<4x12x128xbf16, #tpu.memory_space<vmem>>, vector<1x12x128xbf16>
    %471 = vector.shape_cast %470 : vector<1x12x128xbf16> to vector<12x128xbf16>
    %cst_395 = arith.constant dense<0.000000e+00> : vector<16x128xf32>
    %472 = tpu.matmul %469, %471, %cst_395 {dimension_numbers = #tpu.dot_dimension_numbers<[1], [0], [0], [1], [0, 0, 1, 1], [], []>} : vector<16x12xbf16>, vector<12x128xbf16>, vector<16x128xf32> -> vector<16x128xf32>
    %473 = arith.addf %466, %472 : vector<16x128xf32>
    %474 = vector.extract_strided_slice %468 {offsets = [1, 0], sizes = [16, 12], strides = [1, 1]} : vector<17x12xbf16> to vector<16x12xbf16>
    %c3_396 = arith.constant 3 : index
    %c0_397 = arith.constant 0 : index
    %c0_398 = arith.constant 0 : index
    %475 = vector.load %arg2[%c3_396, %c0_397, %c0_398] : memref<4x12x128xbf16, #tpu.memory_space<vmem>>, vector<1x12x128xbf16>
    %476 = vector.shape_cast %475 : vector<1x12x128xbf16> to vector<12x128xbf16>
    %cst_399 = arith.constant dense<0.000000e+00> : vector<16x128xf32>
    %477 = tpu.matmul %474, %476, %cst_399 {dimension_numbers = #tpu.dot_dimension_numbers<[1], [0], [0], [1], [0, 0, 1, 1], [], []>} : vector<16x12xbf16>, vector<12x128xbf16>, vector<16x128xf32> -> vector<16x128xf32>
    %478 = arith.addf %473, %477 : vector<16x128xf32>
    %479 = vector.broadcast %0 : vector<1x128xf32> to vector<16x128xf32>
    %480 = arith.addf %478, %479 : vector<16x128xf32>
    %cst_400 = arith.constant 0.000000e+00 : f32
    %481 = vector.broadcast %cst_400 : f32 to vector<16x128xf32>
    %482 = arith.subf %481, %480 : vector<16x128xf32>
    %483 = math.exp %482 : vector<16x128xf32>
    %cst_401 = arith.constant 1.000000e+00 : f32
    %484 = vector.broadcast %cst_401 : f32 to vector<16x128xf32>
    %485 = arith.addf %484, %483 : vector<16x128xf32>
    %486 = tpu.reciprocal %485 {approx = true} : vector<16x128xf32> -> vector<16x128xf32>
    %487 = arith.mulf %480, %486 : vector<16x128xf32>
    %c0_402 = arith.constant 0 : index
    %c13_403 = arith.constant 13 : index
    %c0_404 = arith.constant 0 : index
    %c0_405 = arith.constant 0 : index
    %488 = vector.load %arg4[%c0_402, %c13_403, %c0_404, %c0_405] : memref<1x16x16x128xf32, #tpu.memory_space<vmem>>, vector<1x1x16x128xf32>
    %489 = vector.shape_cast %488 : vector<1x1x16x128xf32> to vector<16x128xf32>
    %490 = vector.shape_cast %487 : vector<16x128xf32> to vector<1x1x16x128xf32>
    tpu.vector_store %arg4[%c0_402, %c13_403, %c0_404, %c0_405], %490 {strides = array<i32>} : memref<1x16x16x128xf32, #tpu.memory_space<vmem>>, vector<1x1x16x128xf32>,
    %c0_406 = arith.constant 0 : index
    %c14_407 = arith.constant 14 : index
    %c0_408 = arith.constant 0 : index
    %c0_409 = arith.constant 0 : index
    %491 = vector.load %arg1[%c0_406, %c14_407, %c0_408, %c0_409] : memref<1x17x17x12xbf16, #tpu.memory_space<vmem>>, vector<1x1x17x12xbf16>
    %492 = vector.shape_cast %491 : vector<1x1x17x12xbf16> to vector<17x12xbf16>
    %493 = vector.extract_strided_slice %492 {offsets = [0, 0], sizes = [16, 12], strides = [1, 1]} : vector<17x12xbf16> to vector<16x12xbf16>
    %c0_410 = arith.constant 0 : index
    %c0_411 = arith.constant 0 : index
    %c0_412 = arith.constant 0 : index
    %494 = vector.load %arg2[%c0_410, %c0_411, %c0_412] : memref<4x12x128xbf16, #tpu.memory_space<vmem>>, vector<1x12x128xbf16>
    %495 = vector.shape_cast %494 : vector<1x12x128xbf16> to vector<12x128xbf16>
    %cst_413 = arith.constant dense<0.000000e+00> : vector<16x128xf32>
    %496 = tpu.matmul %493, %495, %cst_413 {dimension_numbers = #tpu.dot_dimension_numbers<[1], [0], [0], [1], [0, 0, 1, 1], [], []>} : vector<16x12xbf16>, vector<12x128xbf16>, vector<16x128xf32> -> vector<16x128xf32>
    %497 = vector.extract_strided_slice %492 {offsets = [1, 0], sizes = [16, 12], strides = [1, 1]} : vector<17x12xbf16> to vector<16x12xbf16>
    %c1_414 = arith.constant 1 : index
    %c0_415 = arith.constant 0 : index
    %c0_416 = arith.constant 0 : index
    %498 = vector.load %arg2[%c1_414, %c0_415, %c0_416] : memref<4x12x128xbf16, #tpu.memory_space<vmem>>, vector<1x12x128xbf16>
    %499 = vector.shape_cast %498 : vector<1x12x128xbf16> to vector<12x128xbf16>
    %cst_417 = arith.constant dense<0.000000e+00> : vector<16x128xf32>
    %500 = tpu.matmul %497, %499, %cst_417 {dimension_numbers = #tpu.dot_dimension_numbers<[1], [0], [0], [1], [0, 0, 1, 1], [], []>} : vector<16x12xbf16>, vector<12x128xbf16>, vector<16x128xf32> -> vector<16x128xf32>
    %501 = arith.addf %496, %500 : vector<16x128xf32>
    %c0_418 = arith.constant 0 : index
    %c15 = arith.constant 15 : index
    %c0_419 = arith.constant 0 : index
    %c0_420 = arith.constant 0 : index
    %502 = vector.load %arg1[%c0_418, %c15, %c0_419, %c0_420] : memref<1x17x17x12xbf16, #tpu.memory_space<vmem>>, vector<1x1x17x12xbf16>
    %503 = vector.shape_cast %502 : vector<1x1x17x12xbf16> to vector<17x12xbf16>
    %504 = vector.extract_strided_slice %503 {offsets = [0, 0], sizes = [16, 12], strides = [1, 1]} : vector<17x12xbf16> to vector<16x12xbf16>
    %c2_421 = arith.constant 2 : index
    %c0_422 = arith.constant 0 : index
    %c0_423 = arith.constant 0 : index
    %505 = vector.load %arg2[%c2_421, %c0_422, %c0_423] : memref<4x12x128xbf16, #tpu.memory_space<vmem>>, vector<1x12x128xbf16>
    %506 = vector.shape_cast %505 : vector<1x12x128xbf16> to vector<12x128xbf16>
    %cst_424 = arith.constant dense<0.000000e+00> : vector<16x128xf32>
    %507 = tpu.matmul %504, %506, %cst_424 {dimension_numbers = #tpu.dot_dimension_numbers<[1], [0], [0], [1], [0, 0, 1, 1], [], []>} : vector<16x12xbf16>, vector<12x128xbf16>, vector<16x128xf32> -> vector<16x128xf32>
    %508 = arith.addf %501, %507 : vector<16x128xf32>
    %509 = vector.extract_strided_slice %503 {offsets = [1, 0], sizes = [16, 12], strides = [1, 1]} : vector<17x12xbf16> to vector<16x12xbf16>
    %c3_425 = arith.constant 3 : index
    %c0_426 = arith.constant 0 : index
    %c0_427 = arith.constant 0 : index
    %510 = vector.load %arg2[%c3_425, %c0_426, %c0_427] : memref<4x12x128xbf16, #tpu.memory_space<vmem>>, vector<1x12x128xbf16>
    %511 = vector.shape_cast %510 : vector<1x12x128xbf16> to vector<12x128xbf16>
    %cst_428 = arith.constant dense<0.000000e+00> : vector<16x128xf32>
    %512 = tpu.matmul %509, %511, %cst_428 {dimension_numbers = #tpu.dot_dimension_numbers<[1], [0], [0], [1], [0, 0, 1, 1], [], []>} : vector<16x12xbf16>, vector<12x128xbf16>, vector<16x128xf32> -> vector<16x128xf32>
    %513 = arith.addf %508, %512 : vector<16x128xf32>
    %514 = vector.broadcast %0 : vector<1x128xf32> to vector<16x128xf32>
    %515 = arith.addf %513, %514 : vector<16x128xf32>
    %cst_429 = arith.constant 0.000000e+00 : f32
    %516 = vector.broadcast %cst_429 : f32 to vector<16x128xf32>
    %517 = arith.subf %516, %515 : vector<16x128xf32>
    %518 = math.exp %517 : vector<16x128xf32>
    %cst_430 = arith.constant 1.000000e+00 : f32
    %519 = vector.broadcast %cst_430 : f32 to vector<16x128xf32>
    %520 = arith.addf %519, %518 : vector<16x128xf32>
    %521 = tpu.reciprocal %520 {approx = true} : vector<16x128xf32> -> vector<16x128xf32>
    %522 = arith.mulf %515, %521 : vector<16x128xf32>
    %c0_431 = arith.constant 0 : index
    %c14_432 = arith.constant 14 : index
    %c0_433 = arith.constant 0 : index
    %c0_434 = arith.constant 0 : index
    %523 = vector.load %arg4[%c0_431, %c14_432, %c0_433, %c0_434] : memref<1x16x16x128xf32, #tpu.memory_space<vmem>>, vector<1x1x16x128xf32>
    %524 = vector.shape_cast %523 : vector<1x1x16x128xf32> to vector<16x128xf32>
    %525 = vector.shape_cast %522 : vector<16x128xf32> to vector<1x1x16x128xf32>
    tpu.vector_store %arg4[%c0_431, %c14_432, %c0_433, %c0_434], %525 {strides = array<i32>} : memref<1x16x16x128xf32, #tpu.memory_space<vmem>>, vector<1x1x16x128xf32>,
    %c0_435 = arith.constant 0 : index
    %c15_436 = arith.constant 15 : index
    %c0_437 = arith.constant 0 : index
    %c0_438 = arith.constant 0 : index
    %526 = vector.load %arg1[%c0_435, %c15_436, %c0_437, %c0_438] : memref<1x17x17x12xbf16, #tpu.memory_space<vmem>>, vector<1x1x17x12xbf16>
    %527 = vector.shape_cast %526 : vector<1x1x17x12xbf16> to vector<17x12xbf16>
    %528 = vector.extract_strided_slice %527 {offsets = [0, 0], sizes = [16, 12], strides = [1, 1]} : vector<17x12xbf16> to vector<16x12xbf16>
    %c0_439 = arith.constant 0 : index
    %c0_440 = arith.constant 0 : index
    %c0_441 = arith.constant 0 : index
    %529 = vector.load %arg2[%c0_439, %c0_440, %c0_441] : memref<4x12x128xbf16, #tpu.memory_space<vmem>>, vector<1x12x128xbf16>
    %530 = vector.shape_cast %529 : vector<1x12x128xbf16> to vector<12x128xbf16>
    %cst_442 = arith.constant dense<0.000000e+00> : vector<16x128xf32>
    %531 = tpu.matmul %528, %530, %cst_442 {dimension_numbers = #tpu.dot_dimension_numbers<[1], [0], [0], [1], [0, 0, 1, 1], [], []>} : vector<16x12xbf16>, vector<12x128xbf16>, vector<16x128xf32> -> vector<16x128xf32>
    %532 = vector.extract_strided_slice %527 {offsets = [1, 0], sizes = [16, 12], strides = [1, 1]} : vector<17x12xbf16> to vector<16x12xbf16>
    %c1_443 = arith.constant 1 : index
    %c0_444 = arith.constant 0 : index
    %c0_445 = arith.constant 0 : index
    %533 = vector.load %arg2[%c1_443, %c0_444, %c0_445] : memref<4x12x128xbf16, #tpu.memory_space<vmem>>, vector<1x12x128xbf16>
    %534 = vector.shape_cast %533 : vector<1x12x128xbf16> to vector<12x128xbf16>
    %cst_446 = arith.constant dense<0.000000e+00> : vector<16x128xf32>
    %535 = tpu.matmul %532, %534, %cst_446 {dimension_numbers = #tpu.dot_dimension_numbers<[1], [0], [0], [1], [0, 0, 1, 1], [], []>} : vector<16x12xbf16>, vector<12x128xbf16>, vector<16x128xf32> -> vector<16x128xf32>
    %536 = arith.addf %531, %535 : vector<16x128xf32>
    %c0_447 = arith.constant 0 : index
    %c16 = arith.constant 16 : index
    %c0_448 = arith.constant 0 : index
    %c0_449 = arith.constant 0 : index
    %537 = vector.load %arg1[%c0_447, %c16, %c0_448, %c0_449] : memref<1x17x17x12xbf16, #tpu.memory_space<vmem>>, vector<1x1x17x12xbf16>
    %538 = vector.shape_cast %537 : vector<1x1x17x12xbf16> to vector<17x12xbf16>
    %539 = vector.extract_strided_slice %538 {offsets = [0, 0], sizes = [16, 12], strides = [1, 1]} : vector<17x12xbf16> to vector<16x12xbf16>
    %c2_450 = arith.constant 2 : index
    %c0_451 = arith.constant 0 : index
    %c0_452 = arith.constant 0 : index
    %540 = vector.load %arg2[%c2_450, %c0_451, %c0_452] : memref<4x12x128xbf16, #tpu.memory_space<vmem>>, vector<1x12x128xbf16>
    %541 = vector.shape_cast %540 : vector<1x12x128xbf16> to vector<12x128xbf16>
    %cst_453 = arith.constant dense<0.000000e+00> : vector<16x128xf32>
    %542 = tpu.matmul %539, %541, %cst_453 {dimension_numbers = #tpu.dot_dimension_numbers<[1], [0], [0], [1], [0, 0, 1, 1], [], []>} : vector<16x12xbf16>, vector<12x128xbf16>, vector<16x128xf32> -> vector<16x128xf32>
    %543 = arith.addf %536, %542 : vector<16x128xf32>
    %544 = vector.extract_strided_slice %538 {offsets = [1, 0], sizes = [16, 12], strides = [1, 1]} : vector<17x12xbf16> to vector<16x12xbf16>
    %c3_454 = arith.constant 3 : index
    %c0_455 = arith.constant 0 : index
    %c0_456 = arith.constant 0 : index
    %545 = vector.load %arg2[%c3_454, %c0_455, %c0_456] : memref<4x12x128xbf16, #tpu.memory_space<vmem>>, vector<1x12x128xbf16>
    %546 = vector.shape_cast %545 : vector<1x12x128xbf16> to vector<12x128xbf16>
    %cst_457 = arith.constant dense<0.000000e+00> : vector<16x128xf32>
    %547 = tpu.matmul %544, %546, %cst_457 {dimension_numbers = #tpu.dot_dimension_numbers<[1], [0], [0], [1], [0, 0, 1, 1], [], []>} : vector<16x12xbf16>, vector<12x128xbf16>, vector<16x128xf32> -> vector<16x128xf32>
    %548 = arith.addf %543, %547 : vector<16x128xf32>
    %549 = vector.broadcast %0 : vector<1x128xf32> to vector<16x128xf32>
    %550 = arith.addf %548, %549 : vector<16x128xf32>
    %cst_458 = arith.constant 0.000000e+00 : f32
    %551 = vector.broadcast %cst_458 : f32 to vector<16x128xf32>
    %552 = arith.subf %551, %550 : vector<16x128xf32>
    %553 = math.exp %552 : vector<16x128xf32>
    %cst_459 = arith.constant 1.000000e+00 : f32
    %554 = vector.broadcast %cst_459 : f32 to vector<16x128xf32>
    %555 = arith.addf %554, %553 : vector<16x128xf32>
    %556 = tpu.reciprocal %555 {approx = true} : vector<16x128xf32> -> vector<16x128xf32>
    %557 = arith.mulf %550, %556 : vector<16x128xf32>
    %c0_460 = arith.constant 0 : index
    %c15_461 = arith.constant 15 : index
    %c0_462 = arith.constant 0 : index
    %c0_463 = arith.constant 0 : index
    %558 = vector.load %arg4[%c0_460, %c15_461, %c0_462, %c0_463] : memref<1x16x16x128xf32, #tpu.memory_space<vmem>>, vector<1x1x16x128xf32>
    %559 = vector.shape_cast %558 : vector<1x1x16x128xf32> to vector<16x128xf32>
    %560 = vector.shape_cast %557 : vector<16x128xf32> to vector<1x1x16x128xf32>
    tpu.vector_store %arg4[%c0_460, %c15_461, %c0_462, %c0_463], %560 {strides = array<i32>} : memref<1x16x16x128xf32, #tpu.memory_space<vmem>>, vector<1x1x16x128xf32>,
    return
  }
  func.func @transform_0(%arg0: i32) -> (i32, i32, i32, i32) {
    %c0_i32 = arith.constant 0 : i32
    %c0_i32_0 = arith.constant 0 : i32
    %c0_i32_1 = arith.constant 0 : i32
    %c0_i32_2 = arith.constant 0 : i32
    return %arg0, %c0_i32, %c0_i32_0, %c0_i32_1 : i32, i32, i32, i32
  }
  func.func @transform_1(%arg0: i32) -> (i32, i32, i32) {
    %c0_i32 = arith.constant 0 : i32
    %c0_i32_0 = arith.constant 0 : i32
    %c0_i32_1 = arith.constant 0 : i32
    %c0_i32_2 = arith.constant 0 : i32
    return %c0_i32, %c0_i32_0, %c0_i32_1 : i32, i32, i32
  }
  func.func @transform_2(%arg0: i32) -> (i32, i32) {
    %c0_i32 = arith.constant 0 : i32
    %c0_i32_0 = arith.constant 0 : i32
    %c0_i32_1 = arith.constant 0 : i32
    return %c0_i32, %c0_i32_0 : i32, i32
  }
  func.func @transform_3(%arg0: i32) -> (i32, i32, i32, i32) {
    %c0_i32 = arith.constant 0 : i32
    %c0_i32_0 = arith.constant 0 : i32
    %c0_i32_1 = arith.constant 0 : i32
    %c0_i32_2 = arith.constant 0 : i32
    return %arg0, %c0_i32, %c0_i32_0, %c0_i32_1 : i32, i32, i32, i32
  }
}

module attributes {stable_mosaic.version = 11 : i64} {
  func.func @_s2d_conv_kernel(%arg0: i32, %arg1: memref<1x9x9x64xbf16, #tpu.memory_space<vmem>>, %arg2: memref<4x64x128xbf16, #tpu.memory_space<vmem>>, %arg3: memref<1x128xf32, #tpu.memory_space<vmem>>, %arg4: memref<1x8x8x128xf32, #tpu.memory_space<vmem>>) attributes {dimension_semantics = [#tpu.dimension_semantics<parallel>], iteration_bounds = array<i64: 2>, scalar_prefetch = 0 : i64, scratch_operands = 0 : i64, tpu.core_type = #tpu.core_type<tc>, window_params = [{transform_indices = @transform_0, window_bounds = array<i64: 1, 9, 9, 64>}, {pipeline_mode = #tpu.pipeline_mode<synchronous>, transform_indices = @transform_1, window_bounds = array<i64: 4, 64, 128>}, {pipeline_mode = #tpu.pipeline_mode<synchronous>, transform_indices = @transform_2, window_bounds = array<i64: 1, 128>}, {transform_indices = @transform_3, window_bounds = array<i64: 1, 8, 8, 128>}]} {
    %c0 = arith.constant 0 : index
    %c0_0 = arith.constant 0 : index
    %0 = vector.load %arg3[%c0, %c0_0] : memref<1x128xf32, #tpu.memory_space<vmem>>, vector<1x128xf32>
    %c0_1 = arith.constant 0 : index
    %c0_2 = arith.constant 0 : index
    %c0_3 = arith.constant 0 : index
    %c0_4 = arith.constant 0 : index
    %1 = vector.load %arg1[%c0_1, %c0_2, %c0_3, %c0_4] : memref<1x9x9x64xbf16, #tpu.memory_space<vmem>>, vector<1x1x9x64xbf16>
    %2 = vector.shape_cast %1 : vector<1x1x9x64xbf16> to vector<9x64xbf16>
    %3 = vector.extract_strided_slice %2 {offsets = [0, 0], sizes = [8, 64], strides = [1, 1]} : vector<9x64xbf16> to vector<8x64xbf16>
    %c0_5 = arith.constant 0 : index
    %c0_6 = arith.constant 0 : index
    %c0_7 = arith.constant 0 : index
    %4 = vector.load %arg2[%c0_5, %c0_6, %c0_7] : memref<4x64x128xbf16, #tpu.memory_space<vmem>>, vector<1x64x128xbf16>
    %5 = vector.shape_cast %4 : vector<1x64x128xbf16> to vector<64x128xbf16>
    %cst = arith.constant dense<0.000000e+00> : vector<8x128xf32>
    %6 = tpu.matmul %3, %5, %cst {dimension_numbers = #tpu.dot_dimension_numbers<[1], [0], [0], [1], [0, 0, 1, 1], [], []>} : vector<8x64xbf16>, vector<64x128xbf16>, vector<8x128xf32> -> vector<8x128xf32>
    %7 = vector.extract_strided_slice %2 {offsets = [1, 0], sizes = [8, 64], strides = [1, 1]} : vector<9x64xbf16> to vector<8x64xbf16>
    %c1 = arith.constant 1 : index
    %c0_8 = arith.constant 0 : index
    %c0_9 = arith.constant 0 : index
    %8 = vector.load %arg2[%c1, %c0_8, %c0_9] : memref<4x64x128xbf16, #tpu.memory_space<vmem>>, vector<1x64x128xbf16>
    %9 = vector.shape_cast %8 : vector<1x64x128xbf16> to vector<64x128xbf16>
    %cst_10 = arith.constant dense<0.000000e+00> : vector<8x128xf32>
    %10 = tpu.matmul %7, %9, %cst_10 {dimension_numbers = #tpu.dot_dimension_numbers<[1], [0], [0], [1], [0, 0, 1, 1], [], []>} : vector<8x64xbf16>, vector<64x128xbf16>, vector<8x128xf32> -> vector<8x128xf32>
    %11 = arith.addf %6, %10 : vector<8x128xf32>
    %c0_11 = arith.constant 0 : index
    %c1_12 = arith.constant 1 : index
    %c0_13 = arith.constant 0 : index
    %c0_14 = arith.constant 0 : index
    %12 = vector.load %arg1[%c0_11, %c1_12, %c0_13, %c0_14] : memref<1x9x9x64xbf16, #tpu.memory_space<vmem>>, vector<1x1x9x64xbf16>
    %13 = vector.shape_cast %12 : vector<1x1x9x64xbf16> to vector<9x64xbf16>
    %14 = vector.extract_strided_slice %13 {offsets = [0, 0], sizes = [8, 64], strides = [1, 1]} : vector<9x64xbf16> to vector<8x64xbf16>
    %c2 = arith.constant 2 : index
    %c0_15 = arith.constant 0 : index
    %c0_16 = arith.constant 0 : index
    %15 = vector.load %arg2[%c2, %c0_15, %c0_16] : memref<4x64x128xbf16, #tpu.memory_space<vmem>>, vector<1x64x128xbf16>
    %16 = vector.shape_cast %15 : vector<1x64x128xbf16> to vector<64x128xbf16>
    %cst_17 = arith.constant dense<0.000000e+00> : vector<8x128xf32>
    %17 = tpu.matmul %14, %16, %cst_17 {dimension_numbers = #tpu.dot_dimension_numbers<[1], [0], [0], [1], [0, 0, 1, 1], [], []>} : vector<8x64xbf16>, vector<64x128xbf16>, vector<8x128xf32> -> vector<8x128xf32>
    %18 = arith.addf %11, %17 : vector<8x128xf32>
    %19 = vector.extract_strided_slice %13 {offsets = [1, 0], sizes = [8, 64], strides = [1, 1]} : vector<9x64xbf16> to vector<8x64xbf16>
    %c3 = arith.constant 3 : index
    %c0_18 = arith.constant 0 : index
    %c0_19 = arith.constant 0 : index
    %20 = vector.load %arg2[%c3, %c0_18, %c0_19] : memref<4x64x128xbf16, #tpu.memory_space<vmem>>, vector<1x64x128xbf16>
    %21 = vector.shape_cast %20 : vector<1x64x128xbf16> to vector<64x128xbf16>
    %cst_20 = arith.constant dense<0.000000e+00> : vector<8x128xf32>
    %22 = tpu.matmul %19, %21, %cst_20 {dimension_numbers = #tpu.dot_dimension_numbers<[1], [0], [0], [1], [0, 0, 1, 1], [], []>} : vector<8x64xbf16>, vector<64x128xbf16>, vector<8x128xf32> -> vector<8x128xf32>
    %23 = arith.addf %18, %22 : vector<8x128xf32>
    %24 = vector.broadcast %0 : vector<1x128xf32> to vector<8x128xf32>
    %25 = arith.addf %23, %24 : vector<8x128xf32>
    %cst_21 = arith.constant 0.000000e+00 : f32
    %26 = vector.broadcast %cst_21 : f32 to vector<8x128xf32>
    %27 = arith.subf %26, %25 : vector<8x128xf32>
    %28 = math.exp %27 : vector<8x128xf32>
    %cst_22 = arith.constant 1.000000e+00 : f32
    %29 = vector.broadcast %cst_22 : f32 to vector<8x128xf32>
    %30 = arith.addf %29, %28 : vector<8x128xf32>
    %31 = tpu.reciprocal %30 {approx = true} : vector<8x128xf32> -> vector<8x128xf32>
    %32 = arith.mulf %25, %31 : vector<8x128xf32>
    %c0_23 = arith.constant 0 : index
    %c0_24 = arith.constant 0 : index
    %c0_25 = arith.constant 0 : index
    %c0_26 = arith.constant 0 : index
    %33 = vector.load %arg4[%c0_23, %c0_24, %c0_25, %c0_26] : memref<1x8x8x128xf32, #tpu.memory_space<vmem>>, vector<1x1x8x128xf32>
    %34 = vector.shape_cast %33 : vector<1x1x8x128xf32> to vector<8x128xf32>
    %35 = vector.shape_cast %32 : vector<8x128xf32> to vector<1x1x8x128xf32>
    tpu.vector_store %arg4[%c0_23, %c0_24, %c0_25, %c0_26], %35 {strides = array<i32>} : memref<1x8x8x128xf32, #tpu.memory_space<vmem>>, vector<1x1x8x128xf32>,
    %c0_27 = arith.constant 0 : index
    %c1_28 = arith.constant 1 : index
    %c0_29 = arith.constant 0 : index
    %c0_30 = arith.constant 0 : index
    %36 = vector.load %arg1[%c0_27, %c1_28, %c0_29, %c0_30] : memref<1x9x9x64xbf16, #tpu.memory_space<vmem>>, vector<1x1x9x64xbf16>
    %37 = vector.shape_cast %36 : vector<1x1x9x64xbf16> to vector<9x64xbf16>
    %38 = vector.extract_strided_slice %37 {offsets = [0, 0], sizes = [8, 64], strides = [1, 1]} : vector<9x64xbf16> to vector<8x64xbf16>
    %c0_31 = arith.constant 0 : index
    %c0_32 = arith.constant 0 : index
    %c0_33 = arith.constant 0 : index
    %39 = vector.load %arg2[%c0_31, %c0_32, %c0_33] : memref<4x64x128xbf16, #tpu.memory_space<vmem>>, vector<1x64x128xbf16>
    %40 = vector.shape_cast %39 : vector<1x64x128xbf16> to vector<64x128xbf16>
    %cst_34 = arith.constant dense<0.000000e+00> : vector<8x128xf32>
    %41 = tpu.matmul %38, %40, %cst_34 {dimension_numbers = #tpu.dot_dimension_numbers<[1], [0], [0], [1], [0, 0, 1, 1], [], []>} : vector<8x64xbf16>, vector<64x128xbf16>, vector<8x128xf32> -> vector<8x128xf32>
    %42 = vector.extract_strided_slice %37 {offsets = [1, 0], sizes = [8, 64], strides = [1, 1]} : vector<9x64xbf16> to vector<8x64xbf16>
    %c1_35 = arith.constant 1 : index
    %c0_36 = arith.constant 0 : index
    %c0_37 = arith.constant 0 : index
    %43 = vector.load %arg2[%c1_35, %c0_36, %c0_37] : memref<4x64x128xbf16, #tpu.memory_space<vmem>>, vector<1x64x128xbf16>
    %44 = vector.shape_cast %43 : vector<1x64x128xbf16> to vector<64x128xbf16>
    %cst_38 = arith.constant dense<0.000000e+00> : vector<8x128xf32>
    %45 = tpu.matmul %42, %44, %cst_38 {dimension_numbers = #tpu.dot_dimension_numbers<[1], [0], [0], [1], [0, 0, 1, 1], [], []>} : vector<8x64xbf16>, vector<64x128xbf16>, vector<8x128xf32> -> vector<8x128xf32>
    %46 = arith.addf %41, %45 : vector<8x128xf32>
    %c0_39 = arith.constant 0 : index
    %c2_40 = arith.constant 2 : index
    %c0_41 = arith.constant 0 : index
    %c0_42 = arith.constant 0 : index
    %47 = vector.load %arg1[%c0_39, %c2_40, %c0_41, %c0_42] : memref<1x9x9x64xbf16, #tpu.memory_space<vmem>>, vector<1x1x9x64xbf16>
    %48 = vector.shape_cast %47 : vector<1x1x9x64xbf16> to vector<9x64xbf16>
    %49 = vector.extract_strided_slice %48 {offsets = [0, 0], sizes = [8, 64], strides = [1, 1]} : vector<9x64xbf16> to vector<8x64xbf16>
    %c2_43 = arith.constant 2 : index
    %c0_44 = arith.constant 0 : index
    %c0_45 = arith.constant 0 : index
    %50 = vector.load %arg2[%c2_43, %c0_44, %c0_45] : memref<4x64x128xbf16, #tpu.memory_space<vmem>>, vector<1x64x128xbf16>
    %51 = vector.shape_cast %50 : vector<1x64x128xbf16> to vector<64x128xbf16>
    %cst_46 = arith.constant dense<0.000000e+00> : vector<8x128xf32>
    %52 = tpu.matmul %49, %51, %cst_46 {dimension_numbers = #tpu.dot_dimension_numbers<[1], [0], [0], [1], [0, 0, 1, 1], [], []>} : vector<8x64xbf16>, vector<64x128xbf16>, vector<8x128xf32> -> vector<8x128xf32>
    %53 = arith.addf %46, %52 : vector<8x128xf32>
    %54 = vector.extract_strided_slice %48 {offsets = [1, 0], sizes = [8, 64], strides = [1, 1]} : vector<9x64xbf16> to vector<8x64xbf16>
    %c3_47 = arith.constant 3 : index
    %c0_48 = arith.constant 0 : index
    %c0_49 = arith.constant 0 : index
    %55 = vector.load %arg2[%c3_47, %c0_48, %c0_49] : memref<4x64x128xbf16, #tpu.memory_space<vmem>>, vector<1x64x128xbf16>
    %56 = vector.shape_cast %55 : vector<1x64x128xbf16> to vector<64x128xbf16>
    %cst_50 = arith.constant dense<0.000000e+00> : vector<8x128xf32>
    %57 = tpu.matmul %54, %56, %cst_50 {dimension_numbers = #tpu.dot_dimension_numbers<[1], [0], [0], [1], [0, 0, 1, 1], [], []>} : vector<8x64xbf16>, vector<64x128xbf16>, vector<8x128xf32> -> vector<8x128xf32>
    %58 = arith.addf %53, %57 : vector<8x128xf32>
    %59 = vector.broadcast %0 : vector<1x128xf32> to vector<8x128xf32>
    %60 = arith.addf %58, %59 : vector<8x128xf32>
    %cst_51 = arith.constant 0.000000e+00 : f32
    %61 = vector.broadcast %cst_51 : f32 to vector<8x128xf32>
    %62 = arith.subf %61, %60 : vector<8x128xf32>
    %63 = math.exp %62 : vector<8x128xf32>
    %cst_52 = arith.constant 1.000000e+00 : f32
    %64 = vector.broadcast %cst_52 : f32 to vector<8x128xf32>
    %65 = arith.addf %64, %63 : vector<8x128xf32>
    %66 = tpu.reciprocal %65 {approx = true} : vector<8x128xf32> -> vector<8x128xf32>
    %67 = arith.mulf %60, %66 : vector<8x128xf32>
    %c0_53 = arith.constant 0 : index
    %c1_54 = arith.constant 1 : index
    %c0_55 = arith.constant 0 : index
    %c0_56 = arith.constant 0 : index
    %68 = vector.load %arg4[%c0_53, %c1_54, %c0_55, %c0_56] : memref<1x8x8x128xf32, #tpu.memory_space<vmem>>, vector<1x1x8x128xf32>
    %69 = vector.shape_cast %68 : vector<1x1x8x128xf32> to vector<8x128xf32>
    %70 = vector.shape_cast %67 : vector<8x128xf32> to vector<1x1x8x128xf32>
    tpu.vector_store %arg4[%c0_53, %c1_54, %c0_55, %c0_56], %70 {strides = array<i32>} : memref<1x8x8x128xf32, #tpu.memory_space<vmem>>, vector<1x1x8x128xf32>,
    %c0_57 = arith.constant 0 : index
    %c2_58 = arith.constant 2 : index
    %c0_59 = arith.constant 0 : index
    %c0_60 = arith.constant 0 : index
    %71 = vector.load %arg1[%c0_57, %c2_58, %c0_59, %c0_60] : memref<1x9x9x64xbf16, #tpu.memory_space<vmem>>, vector<1x1x9x64xbf16>
    %72 = vector.shape_cast %71 : vector<1x1x9x64xbf16> to vector<9x64xbf16>
    %73 = vector.extract_strided_slice %72 {offsets = [0, 0], sizes = [8, 64], strides = [1, 1]} : vector<9x64xbf16> to vector<8x64xbf16>
    %c0_61 = arith.constant 0 : index
    %c0_62 = arith.constant 0 : index
    %c0_63 = arith.constant 0 : index
    %74 = vector.load %arg2[%c0_61, %c0_62, %c0_63] : memref<4x64x128xbf16, #tpu.memory_space<vmem>>, vector<1x64x128xbf16>
    %75 = vector.shape_cast %74 : vector<1x64x128xbf16> to vector<64x128xbf16>
    %cst_64 = arith.constant dense<0.000000e+00> : vector<8x128xf32>
    %76 = tpu.matmul %73, %75, %cst_64 {dimension_numbers = #tpu.dot_dimension_numbers<[1], [0], [0], [1], [0, 0, 1, 1], [], []>} : vector<8x64xbf16>, vector<64x128xbf16>, vector<8x128xf32> -> vector<8x128xf32>
    %77 = vector.extract_strided_slice %72 {offsets = [1, 0], sizes = [8, 64], strides = [1, 1]} : vector<9x64xbf16> to vector<8x64xbf16>
    %c1_65 = arith.constant 1 : index
    %c0_66 = arith.constant 0 : index
    %c0_67 = arith.constant 0 : index
    %78 = vector.load %arg2[%c1_65, %c0_66, %c0_67] : memref<4x64x128xbf16, #tpu.memory_space<vmem>>, vector<1x64x128xbf16>
    %79 = vector.shape_cast %78 : vector<1x64x128xbf16> to vector<64x128xbf16>
    %cst_68 = arith.constant dense<0.000000e+00> : vector<8x128xf32>
    %80 = tpu.matmul %77, %79, %cst_68 {dimension_numbers = #tpu.dot_dimension_numbers<[1], [0], [0], [1], [0, 0, 1, 1], [], []>} : vector<8x64xbf16>, vector<64x128xbf16>, vector<8x128xf32> -> vector<8x128xf32>
    %81 = arith.addf %76, %80 : vector<8x128xf32>
    %c0_69 = arith.constant 0 : index
    %c3_70 = arith.constant 3 : index
    %c0_71 = arith.constant 0 : index
    %c0_72 = arith.constant 0 : index
    %82 = vector.load %arg1[%c0_69, %c3_70, %c0_71, %c0_72] : memref<1x9x9x64xbf16, #tpu.memory_space<vmem>>, vector<1x1x9x64xbf16>
    %83 = vector.shape_cast %82 : vector<1x1x9x64xbf16> to vector<9x64xbf16>
    %84 = vector.extract_strided_slice %83 {offsets = [0, 0], sizes = [8, 64], strides = [1, 1]} : vector<9x64xbf16> to vector<8x64xbf16>
    %c2_73 = arith.constant 2 : index
    %c0_74 = arith.constant 0 : index
    %c0_75 = arith.constant 0 : index
    %85 = vector.load %arg2[%c2_73, %c0_74, %c0_75] : memref<4x64x128xbf16, #tpu.memory_space<vmem>>, vector<1x64x128xbf16>
    %86 = vector.shape_cast %85 : vector<1x64x128xbf16> to vector<64x128xbf16>
    %cst_76 = arith.constant dense<0.000000e+00> : vector<8x128xf32>
    %87 = tpu.matmul %84, %86, %cst_76 {dimension_numbers = #tpu.dot_dimension_numbers<[1], [0], [0], [1], [0, 0, 1, 1], [], []>} : vector<8x64xbf16>, vector<64x128xbf16>, vector<8x128xf32> -> vector<8x128xf32>
    %88 = arith.addf %81, %87 : vector<8x128xf32>
    %89 = vector.extract_strided_slice %83 {offsets = [1, 0], sizes = [8, 64], strides = [1, 1]} : vector<9x64xbf16> to vector<8x64xbf16>
    %c3_77 = arith.constant 3 : index
    %c0_78 = arith.constant 0 : index
    %c0_79 = arith.constant 0 : index
    %90 = vector.load %arg2[%c3_77, %c0_78, %c0_79] : memref<4x64x128xbf16, #tpu.memory_space<vmem>>, vector<1x64x128xbf16>
    %91 = vector.shape_cast %90 : vector<1x64x128xbf16> to vector<64x128xbf16>
    %cst_80 = arith.constant dense<0.000000e+00> : vector<8x128xf32>
    %92 = tpu.matmul %89, %91, %cst_80 {dimension_numbers = #tpu.dot_dimension_numbers<[1], [0], [0], [1], [0, 0, 1, 1], [], []>} : vector<8x64xbf16>, vector<64x128xbf16>, vector<8x128xf32> -> vector<8x128xf32>
    %93 = arith.addf %88, %92 : vector<8x128xf32>
    %94 = vector.broadcast %0 : vector<1x128xf32> to vector<8x128xf32>
    %95 = arith.addf %93, %94 : vector<8x128xf32>
    %cst_81 = arith.constant 0.000000e+00 : f32
    %96 = vector.broadcast %cst_81 : f32 to vector<8x128xf32>
    %97 = arith.subf %96, %95 : vector<8x128xf32>
    %98 = math.exp %97 : vector<8x128xf32>
    %cst_82 = arith.constant 1.000000e+00 : f32
    %99 = vector.broadcast %cst_82 : f32 to vector<8x128xf32>
    %100 = arith.addf %99, %98 : vector<8x128xf32>
    %101 = tpu.reciprocal %100 {approx = true} : vector<8x128xf32> -> vector<8x128xf32>
    %102 = arith.mulf %95, %101 : vector<8x128xf32>
    %c0_83 = arith.constant 0 : index
    %c2_84 = arith.constant 2 : index
    %c0_85 = arith.constant 0 : index
    %c0_86 = arith.constant 0 : index
    %103 = vector.load %arg4[%c0_83, %c2_84, %c0_85, %c0_86] : memref<1x8x8x128xf32, #tpu.memory_space<vmem>>, vector<1x1x8x128xf32>
    %104 = vector.shape_cast %103 : vector<1x1x8x128xf32> to vector<8x128xf32>
    %105 = vector.shape_cast %102 : vector<8x128xf32> to vector<1x1x8x128xf32>
    tpu.vector_store %arg4[%c0_83, %c2_84, %c0_85, %c0_86], %105 {strides = array<i32>} : memref<1x8x8x128xf32, #tpu.memory_space<vmem>>, vector<1x1x8x128xf32>,
    %c0_87 = arith.constant 0 : index
    %c3_88 = arith.constant 3 : index
    %c0_89 = arith.constant 0 : index
    %c0_90 = arith.constant 0 : index
    %106 = vector.load %arg1[%c0_87, %c3_88, %c0_89, %c0_90] : memref<1x9x9x64xbf16, #tpu.memory_space<vmem>>, vector<1x1x9x64xbf16>
    %107 = vector.shape_cast %106 : vector<1x1x9x64xbf16> to vector<9x64xbf16>
    %108 = vector.extract_strided_slice %107 {offsets = [0, 0], sizes = [8, 64], strides = [1, 1]} : vector<9x64xbf16> to vector<8x64xbf16>
    %c0_91 = arith.constant 0 : index
    %c0_92 = arith.constant 0 : index
    %c0_93 = arith.constant 0 : index
    %109 = vector.load %arg2[%c0_91, %c0_92, %c0_93] : memref<4x64x128xbf16, #tpu.memory_space<vmem>>, vector<1x64x128xbf16>
    %110 = vector.shape_cast %109 : vector<1x64x128xbf16> to vector<64x128xbf16>
    %cst_94 = arith.constant dense<0.000000e+00> : vector<8x128xf32>
    %111 = tpu.matmul %108, %110, %cst_94 {dimension_numbers = #tpu.dot_dimension_numbers<[1], [0], [0], [1], [0, 0, 1, 1], [], []>} : vector<8x64xbf16>, vector<64x128xbf16>, vector<8x128xf32> -> vector<8x128xf32>
    %112 = vector.extract_strided_slice %107 {offsets = [1, 0], sizes = [8, 64], strides = [1, 1]} : vector<9x64xbf16> to vector<8x64xbf16>
    %c1_95 = arith.constant 1 : index
    %c0_96 = arith.constant 0 : index
    %c0_97 = arith.constant 0 : index
    %113 = vector.load %arg2[%c1_95, %c0_96, %c0_97] : memref<4x64x128xbf16, #tpu.memory_space<vmem>>, vector<1x64x128xbf16>
    %114 = vector.shape_cast %113 : vector<1x64x128xbf16> to vector<64x128xbf16>
    %cst_98 = arith.constant dense<0.000000e+00> : vector<8x128xf32>
    %115 = tpu.matmul %112, %114, %cst_98 {dimension_numbers = #tpu.dot_dimension_numbers<[1], [0], [0], [1], [0, 0, 1, 1], [], []>} : vector<8x64xbf16>, vector<64x128xbf16>, vector<8x128xf32> -> vector<8x128xf32>
    %116 = arith.addf %111, %115 : vector<8x128xf32>
    %c0_99 = arith.constant 0 : index
    %c4 = arith.constant 4 : index
    %c0_100 = arith.constant 0 : index
    %c0_101 = arith.constant 0 : index
    %117 = vector.load %arg1[%c0_99, %c4, %c0_100, %c0_101] : memref<1x9x9x64xbf16, #tpu.memory_space<vmem>>, vector<1x1x9x64xbf16>
    %118 = vector.shape_cast %117 : vector<1x1x9x64xbf16> to vector<9x64xbf16>
    %119 = vector.extract_strided_slice %118 {offsets = [0, 0], sizes = [8, 64], strides = [1, 1]} : vector<9x64xbf16> to vector<8x64xbf16>
    %c2_102 = arith.constant 2 : index
    %c0_103 = arith.constant 0 : index
    %c0_104 = arith.constant 0 : index
    %120 = vector.load %arg2[%c2_102, %c0_103, %c0_104] : memref<4x64x128xbf16, #tpu.memory_space<vmem>>, vector<1x64x128xbf16>
    %121 = vector.shape_cast %120 : vector<1x64x128xbf16> to vector<64x128xbf16>
    %cst_105 = arith.constant dense<0.000000e+00> : vector<8x128xf32>
    %122 = tpu.matmul %119, %121, %cst_105 {dimension_numbers = #tpu.dot_dimension_numbers<[1], [0], [0], [1], [0, 0, 1, 1], [], []>} : vector<8x64xbf16>, vector<64x128xbf16>, vector<8x128xf32> -> vector<8x128xf32>
    %123 = arith.addf %116, %122 : vector<8x128xf32>
    %124 = vector.extract_strided_slice %118 {offsets = [1, 0], sizes = [8, 64], strides = [1, 1]} : vector<9x64xbf16> to vector<8x64xbf16>
    %c3_106 = arith.constant 3 : index
    %c0_107 = arith.constant 0 : index
    %c0_108 = arith.constant 0 : index
    %125 = vector.load %arg2[%c3_106, %c0_107, %c0_108] : memref<4x64x128xbf16, #tpu.memory_space<vmem>>, vector<1x64x128xbf16>
    %126 = vector.shape_cast %125 : vector<1x64x128xbf16> to vector<64x128xbf16>
    %cst_109 = arith.constant dense<0.000000e+00> : vector<8x128xf32>
    %127 = tpu.matmul %124, %126, %cst_109 {dimension_numbers = #tpu.dot_dimension_numbers<[1], [0], [0], [1], [0, 0, 1, 1], [], []>} : vector<8x64xbf16>, vector<64x128xbf16>, vector<8x128xf32> -> vector<8x128xf32>
    %128 = arith.addf %123, %127 : vector<8x128xf32>
    %129 = vector.broadcast %0 : vector<1x128xf32> to vector<8x128xf32>
    %130 = arith.addf %128, %129 : vector<8x128xf32>
    %cst_110 = arith.constant 0.000000e+00 : f32
    %131 = vector.broadcast %cst_110 : f32 to vector<8x128xf32>
    %132 = arith.subf %131, %130 : vector<8x128xf32>
    %133 = math.exp %132 : vector<8x128xf32>
    %cst_111 = arith.constant 1.000000e+00 : f32
    %134 = vector.broadcast %cst_111 : f32 to vector<8x128xf32>
    %135 = arith.addf %134, %133 : vector<8x128xf32>
    %136 = tpu.reciprocal %135 {approx = true} : vector<8x128xf32> -> vector<8x128xf32>
    %137 = arith.mulf %130, %136 : vector<8x128xf32>
    %c0_112 = arith.constant 0 : index
    %c3_113 = arith.constant 3 : index
    %c0_114 = arith.constant 0 : index
    %c0_115 = arith.constant 0 : index
    %138 = vector.load %arg4[%c0_112, %c3_113, %c0_114, %c0_115] : memref<1x8x8x128xf32, #tpu.memory_space<vmem>>, vector<1x1x8x128xf32>
    %139 = vector.shape_cast %138 : vector<1x1x8x128xf32> to vector<8x128xf32>
    %140 = vector.shape_cast %137 : vector<8x128xf32> to vector<1x1x8x128xf32>
    tpu.vector_store %arg4[%c0_112, %c3_113, %c0_114, %c0_115], %140 {strides = array<i32>} : memref<1x8x8x128xf32, #tpu.memory_space<vmem>>, vector<1x1x8x128xf32>,
    %c0_116 = arith.constant 0 : index
    %c4_117 = arith.constant 4 : index
    %c0_118 = arith.constant 0 : index
    %c0_119 = arith.constant 0 : index
    %141 = vector.load %arg1[%c0_116, %c4_117, %c0_118, %c0_119] : memref<1x9x9x64xbf16, #tpu.memory_space<vmem>>, vector<1x1x9x64xbf16>
    %142 = vector.shape_cast %141 : vector<1x1x9x64xbf16> to vector<9x64xbf16>
    %143 = vector.extract_strided_slice %142 {offsets = [0, 0], sizes = [8, 64], strides = [1, 1]} : vector<9x64xbf16> to vector<8x64xbf16>
    %c0_120 = arith.constant 0 : index
    %c0_121 = arith.constant 0 : index
    %c0_122 = arith.constant 0 : index
    %144 = vector.load %arg2[%c0_120, %c0_121, %c0_122] : memref<4x64x128xbf16, #tpu.memory_space<vmem>>, vector<1x64x128xbf16>
    %145 = vector.shape_cast %144 : vector<1x64x128xbf16> to vector<64x128xbf16>
    %cst_123 = arith.constant dense<0.000000e+00> : vector<8x128xf32>
    %146 = tpu.matmul %143, %145, %cst_123 {dimension_numbers = #tpu.dot_dimension_numbers<[1], [0], [0], [1], [0, 0, 1, 1], [], []>} : vector<8x64xbf16>, vector<64x128xbf16>, vector<8x128xf32> -> vector<8x128xf32>
    %147 = vector.extract_strided_slice %142 {offsets = [1, 0], sizes = [8, 64], strides = [1, 1]} : vector<9x64xbf16> to vector<8x64xbf16>
    %c1_124 = arith.constant 1 : index
    %c0_125 = arith.constant 0 : index
    %c0_126 = arith.constant 0 : index
    %148 = vector.load %arg2[%c1_124, %c0_125, %c0_126] : memref<4x64x128xbf16, #tpu.memory_space<vmem>>, vector<1x64x128xbf16>
    %149 = vector.shape_cast %148 : vector<1x64x128xbf16> to vector<64x128xbf16>
    %cst_127 = arith.constant dense<0.000000e+00> : vector<8x128xf32>
    %150 = tpu.matmul %147, %149, %cst_127 {dimension_numbers = #tpu.dot_dimension_numbers<[1], [0], [0], [1], [0, 0, 1, 1], [], []>} : vector<8x64xbf16>, vector<64x128xbf16>, vector<8x128xf32> -> vector<8x128xf32>
    %151 = arith.addf %146, %150 : vector<8x128xf32>
    %c0_128 = arith.constant 0 : index
    %c5 = arith.constant 5 : index
    %c0_129 = arith.constant 0 : index
    %c0_130 = arith.constant 0 : index
    %152 = vector.load %arg1[%c0_128, %c5, %c0_129, %c0_130] : memref<1x9x9x64xbf16, #tpu.memory_space<vmem>>, vector<1x1x9x64xbf16>
    %153 = vector.shape_cast %152 : vector<1x1x9x64xbf16> to vector<9x64xbf16>
    %154 = vector.extract_strided_slice %153 {offsets = [0, 0], sizes = [8, 64], strides = [1, 1]} : vector<9x64xbf16> to vector<8x64xbf16>
    %c2_131 = arith.constant 2 : index
    %c0_132 = arith.constant 0 : index
    %c0_133 = arith.constant 0 : index
    %155 = vector.load %arg2[%c2_131, %c0_132, %c0_133] : memref<4x64x128xbf16, #tpu.memory_space<vmem>>, vector<1x64x128xbf16>
    %156 = vector.shape_cast %155 : vector<1x64x128xbf16> to vector<64x128xbf16>
    %cst_134 = arith.constant dense<0.000000e+00> : vector<8x128xf32>
    %157 = tpu.matmul %154, %156, %cst_134 {dimension_numbers = #tpu.dot_dimension_numbers<[1], [0], [0], [1], [0, 0, 1, 1], [], []>} : vector<8x64xbf16>, vector<64x128xbf16>, vector<8x128xf32> -> vector<8x128xf32>
    %158 = arith.addf %151, %157 : vector<8x128xf32>
    %159 = vector.extract_strided_slice %153 {offsets = [1, 0], sizes = [8, 64], strides = [1, 1]} : vector<9x64xbf16> to vector<8x64xbf16>
    %c3_135 = arith.constant 3 : index
    %c0_136 = arith.constant 0 : index
    %c0_137 = arith.constant 0 : index
    %160 = vector.load %arg2[%c3_135, %c0_136, %c0_137] : memref<4x64x128xbf16, #tpu.memory_space<vmem>>, vector<1x64x128xbf16>
    %161 = vector.shape_cast %160 : vector<1x64x128xbf16> to vector<64x128xbf16>
    %cst_138 = arith.constant dense<0.000000e+00> : vector<8x128xf32>
    %162 = tpu.matmul %159, %161, %cst_138 {dimension_numbers = #tpu.dot_dimension_numbers<[1], [0], [0], [1], [0, 0, 1, 1], [], []>} : vector<8x64xbf16>, vector<64x128xbf16>, vector<8x128xf32> -> vector<8x128xf32>
    %163 = arith.addf %158, %162 : vector<8x128xf32>
    %164 = vector.broadcast %0 : vector<1x128xf32> to vector<8x128xf32>
    %165 = arith.addf %163, %164 : vector<8x128xf32>
    %cst_139 = arith.constant 0.000000e+00 : f32
    %166 = vector.broadcast %cst_139 : f32 to vector<8x128xf32>
    %167 = arith.subf %166, %165 : vector<8x128xf32>
    %168 = math.exp %167 : vector<8x128xf32>
    %cst_140 = arith.constant 1.000000e+00 : f32
    %169 = vector.broadcast %cst_140 : f32 to vector<8x128xf32>
    %170 = arith.addf %169, %168 : vector<8x128xf32>
    %171 = tpu.reciprocal %170 {approx = true} : vector<8x128xf32> -> vector<8x128xf32>
    %172 = arith.mulf %165, %171 : vector<8x128xf32>
    %c0_141 = arith.constant 0 : index
    %c4_142 = arith.constant 4 : index
    %c0_143 = arith.constant 0 : index
    %c0_144 = arith.constant 0 : index
    %173 = vector.load %arg4[%c0_141, %c4_142, %c0_143, %c0_144] : memref<1x8x8x128xf32, #tpu.memory_space<vmem>>, vector<1x1x8x128xf32>
    %174 = vector.shape_cast %173 : vector<1x1x8x128xf32> to vector<8x128xf32>
    %175 = vector.shape_cast %172 : vector<8x128xf32> to vector<1x1x8x128xf32>
    tpu.vector_store %arg4[%c0_141, %c4_142, %c0_143, %c0_144], %175 {strides = array<i32>} : memref<1x8x8x128xf32, #tpu.memory_space<vmem>>, vector<1x1x8x128xf32>,
    %c0_145 = arith.constant 0 : index
    %c5_146 = arith.constant 5 : index
    %c0_147 = arith.constant 0 : index
    %c0_148 = arith.constant 0 : index
    %176 = vector.load %arg1[%c0_145, %c5_146, %c0_147, %c0_148] : memref<1x9x9x64xbf16, #tpu.memory_space<vmem>>, vector<1x1x9x64xbf16>
    %177 = vector.shape_cast %176 : vector<1x1x9x64xbf16> to vector<9x64xbf16>
    %178 = vector.extract_strided_slice %177 {offsets = [0, 0], sizes = [8, 64], strides = [1, 1]} : vector<9x64xbf16> to vector<8x64xbf16>
    %c0_149 = arith.constant 0 : index
    %c0_150 = arith.constant 0 : index
    %c0_151 = arith.constant 0 : index
    %179 = vector.load %arg2[%c0_149, %c0_150, %c0_151] : memref<4x64x128xbf16, #tpu.memory_space<vmem>>, vector<1x64x128xbf16>
    %180 = vector.shape_cast %179 : vector<1x64x128xbf16> to vector<64x128xbf16>
    %cst_152 = arith.constant dense<0.000000e+00> : vector<8x128xf32>
    %181 = tpu.matmul %178, %180, %cst_152 {dimension_numbers = #tpu.dot_dimension_numbers<[1], [0], [0], [1], [0, 0, 1, 1], [], []>} : vector<8x64xbf16>, vector<64x128xbf16>, vector<8x128xf32> -> vector<8x128xf32>
    %182 = vector.extract_strided_slice %177 {offsets = [1, 0], sizes = [8, 64], strides = [1, 1]} : vector<9x64xbf16> to vector<8x64xbf16>
    %c1_153 = arith.constant 1 : index
    %c0_154 = arith.constant 0 : index
    %c0_155 = arith.constant 0 : index
    %183 = vector.load %arg2[%c1_153, %c0_154, %c0_155] : memref<4x64x128xbf16, #tpu.memory_space<vmem>>, vector<1x64x128xbf16>
    %184 = vector.shape_cast %183 : vector<1x64x128xbf16> to vector<64x128xbf16>
    %cst_156 = arith.constant dense<0.000000e+00> : vector<8x128xf32>
    %185 = tpu.matmul %182, %184, %cst_156 {dimension_numbers = #tpu.dot_dimension_numbers<[1], [0], [0], [1], [0, 0, 1, 1], [], []>} : vector<8x64xbf16>, vector<64x128xbf16>, vector<8x128xf32> -> vector<8x128xf32>
    %186 = arith.addf %181, %185 : vector<8x128xf32>
    %c0_157 = arith.constant 0 : index
    %c6 = arith.constant 6 : index
    %c0_158 = arith.constant 0 : index
    %c0_159 = arith.constant 0 : index
    %187 = vector.load %arg1[%c0_157, %c6, %c0_158, %c0_159] : memref<1x9x9x64xbf16, #tpu.memory_space<vmem>>, vector<1x1x9x64xbf16>
    %188 = vector.shape_cast %187 : vector<1x1x9x64xbf16> to vector<9x64xbf16>
    %189 = vector.extract_strided_slice %188 {offsets = [0, 0], sizes = [8, 64], strides = [1, 1]} : vector<9x64xbf16> to vector<8x64xbf16>
    %c2_160 = arith.constant 2 : index
    %c0_161 = arith.constant 0 : index
    %c0_162 = arith.constant 0 : index
    %190 = vector.load %arg2[%c2_160, %c0_161, %c0_162] : memref<4x64x128xbf16, #tpu.memory_space<vmem>>, vector<1x64x128xbf16>
    %191 = vector.shape_cast %190 : vector<1x64x128xbf16> to vector<64x128xbf16>
    %cst_163 = arith.constant dense<0.000000e+00> : vector<8x128xf32>
    %192 = tpu.matmul %189, %191, %cst_163 {dimension_numbers = #tpu.dot_dimension_numbers<[1], [0], [0], [1], [0, 0, 1, 1], [], []>} : vector<8x64xbf16>, vector<64x128xbf16>, vector<8x128xf32> -> vector<8x128xf32>
    %193 = arith.addf %186, %192 : vector<8x128xf32>
    %194 = vector.extract_strided_slice %188 {offsets = [1, 0], sizes = [8, 64], strides = [1, 1]} : vector<9x64xbf16> to vector<8x64xbf16>
    %c3_164 = arith.constant 3 : index
    %c0_165 = arith.constant 0 : index
    %c0_166 = arith.constant 0 : index
    %195 = vector.load %arg2[%c3_164, %c0_165, %c0_166] : memref<4x64x128xbf16, #tpu.memory_space<vmem>>, vector<1x64x128xbf16>
    %196 = vector.shape_cast %195 : vector<1x64x128xbf16> to vector<64x128xbf16>
    %cst_167 = arith.constant dense<0.000000e+00> : vector<8x128xf32>
    %197 = tpu.matmul %194, %196, %cst_167 {dimension_numbers = #tpu.dot_dimension_numbers<[1], [0], [0], [1], [0, 0, 1, 1], [], []>} : vector<8x64xbf16>, vector<64x128xbf16>, vector<8x128xf32> -> vector<8x128xf32>
    %198 = arith.addf %193, %197 : vector<8x128xf32>
    %199 = vector.broadcast %0 : vector<1x128xf32> to vector<8x128xf32>
    %200 = arith.addf %198, %199 : vector<8x128xf32>
    %cst_168 = arith.constant 0.000000e+00 : f32
    %201 = vector.broadcast %cst_168 : f32 to vector<8x128xf32>
    %202 = arith.subf %201, %200 : vector<8x128xf32>
    %203 = math.exp %202 : vector<8x128xf32>
    %cst_169 = arith.constant 1.000000e+00 : f32
    %204 = vector.broadcast %cst_169 : f32 to vector<8x128xf32>
    %205 = arith.addf %204, %203 : vector<8x128xf32>
    %206 = tpu.reciprocal %205 {approx = true} : vector<8x128xf32> -> vector<8x128xf32>
    %207 = arith.mulf %200, %206 : vector<8x128xf32>
    %c0_170 = arith.constant 0 : index
    %c5_171 = arith.constant 5 : index
    %c0_172 = arith.constant 0 : index
    %c0_173 = arith.constant 0 : index
    %208 = vector.load %arg4[%c0_170, %c5_171, %c0_172, %c0_173] : memref<1x8x8x128xf32, #tpu.memory_space<vmem>>, vector<1x1x8x128xf32>
    %209 = vector.shape_cast %208 : vector<1x1x8x128xf32> to vector<8x128xf32>
    %210 = vector.shape_cast %207 : vector<8x128xf32> to vector<1x1x8x128xf32>
    tpu.vector_store %arg4[%c0_170, %c5_171, %c0_172, %c0_173], %210 {strides = array<i32>} : memref<1x8x8x128xf32, #tpu.memory_space<vmem>>, vector<1x1x8x128xf32>,
    %c0_174 = arith.constant 0 : index
    %c6_175 = arith.constant 6 : index
    %c0_176 = arith.constant 0 : index
    %c0_177 = arith.constant 0 : index
    %211 = vector.load %arg1[%c0_174, %c6_175, %c0_176, %c0_177] : memref<1x9x9x64xbf16, #tpu.memory_space<vmem>>, vector<1x1x9x64xbf16>
    %212 = vector.shape_cast %211 : vector<1x1x9x64xbf16> to vector<9x64xbf16>
    %213 = vector.extract_strided_slice %212 {offsets = [0, 0], sizes = [8, 64], strides = [1, 1]} : vector<9x64xbf16> to vector<8x64xbf16>
    %c0_178 = arith.constant 0 : index
    %c0_179 = arith.constant 0 : index
    %c0_180 = arith.constant 0 : index
    %214 = vector.load %arg2[%c0_178, %c0_179, %c0_180] : memref<4x64x128xbf16, #tpu.memory_space<vmem>>, vector<1x64x128xbf16>
    %215 = vector.shape_cast %214 : vector<1x64x128xbf16> to vector<64x128xbf16>
    %cst_181 = arith.constant dense<0.000000e+00> : vector<8x128xf32>
    %216 = tpu.matmul %213, %215, %cst_181 {dimension_numbers = #tpu.dot_dimension_numbers<[1], [0], [0], [1], [0, 0, 1, 1], [], []>} : vector<8x64xbf16>, vector<64x128xbf16>, vector<8x128xf32> -> vector<8x128xf32>
    %217 = vector.extract_strided_slice %212 {offsets = [1, 0], sizes = [8, 64], strides = [1, 1]} : vector<9x64xbf16> to vector<8x64xbf16>
    %c1_182 = arith.constant 1 : index
    %c0_183 = arith.constant 0 : index
    %c0_184 = arith.constant 0 : index
    %218 = vector.load %arg2[%c1_182, %c0_183, %c0_184] : memref<4x64x128xbf16, #tpu.memory_space<vmem>>, vector<1x64x128xbf16>
    %219 = vector.shape_cast %218 : vector<1x64x128xbf16> to vector<64x128xbf16>
    %cst_185 = arith.constant dense<0.000000e+00> : vector<8x128xf32>
    %220 = tpu.matmul %217, %219, %cst_185 {dimension_numbers = #tpu.dot_dimension_numbers<[1], [0], [0], [1], [0, 0, 1, 1], [], []>} : vector<8x64xbf16>, vector<64x128xbf16>, vector<8x128xf32> -> vector<8x128xf32>
    %221 = arith.addf %216, %220 : vector<8x128xf32>
    %c0_186 = arith.constant 0 : index
    %c7 = arith.constant 7 : index
    %c0_187 = arith.constant 0 : index
    %c0_188 = arith.constant 0 : index
    %222 = vector.load %arg1[%c0_186, %c7, %c0_187, %c0_188] : memref<1x9x9x64xbf16, #tpu.memory_space<vmem>>, vector<1x1x9x64xbf16>
    %223 = vector.shape_cast %222 : vector<1x1x9x64xbf16> to vector<9x64xbf16>
    %224 = vector.extract_strided_slice %223 {offsets = [0, 0], sizes = [8, 64], strides = [1, 1]} : vector<9x64xbf16> to vector<8x64xbf16>
    %c2_189 = arith.constant 2 : index
    %c0_190 = arith.constant 0 : index
    %c0_191 = arith.constant 0 : index
    %225 = vector.load %arg2[%c2_189, %c0_190, %c0_191] : memref<4x64x128xbf16, #tpu.memory_space<vmem>>, vector<1x64x128xbf16>
    %226 = vector.shape_cast %225 : vector<1x64x128xbf16> to vector<64x128xbf16>
    %cst_192 = arith.constant dense<0.000000e+00> : vector<8x128xf32>
    %227 = tpu.matmul %224, %226, %cst_192 {dimension_numbers = #tpu.dot_dimension_numbers<[1], [0], [0], [1], [0, 0, 1, 1], [], []>} : vector<8x64xbf16>, vector<64x128xbf16>, vector<8x128xf32> -> vector<8x128xf32>
    %228 = arith.addf %221, %227 : vector<8x128xf32>
    %229 = vector.extract_strided_slice %223 {offsets = [1, 0], sizes = [8, 64], strides = [1, 1]} : vector<9x64xbf16> to vector<8x64xbf16>
    %c3_193 = arith.constant 3 : index
    %c0_194 = arith.constant 0 : index
    %c0_195 = arith.constant 0 : index
    %230 = vector.load %arg2[%c3_193, %c0_194, %c0_195] : memref<4x64x128xbf16, #tpu.memory_space<vmem>>, vector<1x64x128xbf16>
    %231 = vector.shape_cast %230 : vector<1x64x128xbf16> to vector<64x128xbf16>
    %cst_196 = arith.constant dense<0.000000e+00> : vector<8x128xf32>
    %232 = tpu.matmul %229, %231, %cst_196 {dimension_numbers = #tpu.dot_dimension_numbers<[1], [0], [0], [1], [0, 0, 1, 1], [], []>} : vector<8x64xbf16>, vector<64x128xbf16>, vector<8x128xf32> -> vector<8x128xf32>
    %233 = arith.addf %228, %232 : vector<8x128xf32>
    %234 = vector.broadcast %0 : vector<1x128xf32> to vector<8x128xf32>
    %235 = arith.addf %233, %234 : vector<8x128xf32>
    %cst_197 = arith.constant 0.000000e+00 : f32
    %236 = vector.broadcast %cst_197 : f32 to vector<8x128xf32>
    %237 = arith.subf %236, %235 : vector<8x128xf32>
    %238 = math.exp %237 : vector<8x128xf32>
    %cst_198 = arith.constant 1.000000e+00 : f32
    %239 = vector.broadcast %cst_198 : f32 to vector<8x128xf32>
    %240 = arith.addf %239, %238 : vector<8x128xf32>
    %241 = tpu.reciprocal %240 {approx = true} : vector<8x128xf32> -> vector<8x128xf32>
    %242 = arith.mulf %235, %241 : vector<8x128xf32>
    %c0_199 = arith.constant 0 : index
    %c6_200 = arith.constant 6 : index
    %c0_201 = arith.constant 0 : index
    %c0_202 = arith.constant 0 : index
    %243 = vector.load %arg4[%c0_199, %c6_200, %c0_201, %c0_202] : memref<1x8x8x128xf32, #tpu.memory_space<vmem>>, vector<1x1x8x128xf32>
    %244 = vector.shape_cast %243 : vector<1x1x8x128xf32> to vector<8x128xf32>
    %245 = vector.shape_cast %242 : vector<8x128xf32> to vector<1x1x8x128xf32>
    tpu.vector_store %arg4[%c0_199, %c6_200, %c0_201, %c0_202], %245 {strides = array<i32>} : memref<1x8x8x128xf32, #tpu.memory_space<vmem>>, vector<1x1x8x128xf32>,
    %c0_203 = arith.constant 0 : index
    %c7_204 = arith.constant 7 : index
    %c0_205 = arith.constant 0 : index
    %c0_206 = arith.constant 0 : index
    %246 = vector.load %arg1[%c0_203, %c7_204, %c0_205, %c0_206] : memref<1x9x9x64xbf16, #tpu.memory_space<vmem>>, vector<1x1x9x64xbf16>
    %247 = vector.shape_cast %246 : vector<1x1x9x64xbf16> to vector<9x64xbf16>
    %248 = vector.extract_strided_slice %247 {offsets = [0, 0], sizes = [8, 64], strides = [1, 1]} : vector<9x64xbf16> to vector<8x64xbf16>
    %c0_207 = arith.constant 0 : index
    %c0_208 = arith.constant 0 : index
    %c0_209 = arith.constant 0 : index
    %249 = vector.load %arg2[%c0_207, %c0_208, %c0_209] : memref<4x64x128xbf16, #tpu.memory_space<vmem>>, vector<1x64x128xbf16>
    %250 = vector.shape_cast %249 : vector<1x64x128xbf16> to vector<64x128xbf16>
    %cst_210 = arith.constant dense<0.000000e+00> : vector<8x128xf32>
    %251 = tpu.matmul %248, %250, %cst_210 {dimension_numbers = #tpu.dot_dimension_numbers<[1], [0], [0], [1], [0, 0, 1, 1], [], []>} : vector<8x64xbf16>, vector<64x128xbf16>, vector<8x128xf32> -> vector<8x128xf32>
    %252 = vector.extract_strided_slice %247 {offsets = [1, 0], sizes = [8, 64], strides = [1, 1]} : vector<9x64xbf16> to vector<8x64xbf16>
    %c1_211 = arith.constant 1 : index
    %c0_212 = arith.constant 0 : index
    %c0_213 = arith.constant 0 : index
    %253 = vector.load %arg2[%c1_211, %c0_212, %c0_213] : memref<4x64x128xbf16, #tpu.memory_space<vmem>>, vector<1x64x128xbf16>
    %254 = vector.shape_cast %253 : vector<1x64x128xbf16> to vector<64x128xbf16>
    %cst_214 = arith.constant dense<0.000000e+00> : vector<8x128xf32>
    %255 = tpu.matmul %252, %254, %cst_214 {dimension_numbers = #tpu.dot_dimension_numbers<[1], [0], [0], [1], [0, 0, 1, 1], [], []>} : vector<8x64xbf16>, vector<64x128xbf16>, vector<8x128xf32> -> vector<8x128xf32>
    %256 = arith.addf %251, %255 : vector<8x128xf32>
    %c0_215 = arith.constant 0 : index
    %c8 = arith.constant 8 : index
    %c0_216 = arith.constant 0 : index
    %c0_217 = arith.constant 0 : index
    %257 = vector.load %arg1[%c0_215, %c8, %c0_216, %c0_217] : memref<1x9x9x64xbf16, #tpu.memory_space<vmem>>, vector<1x1x9x64xbf16>
    %258 = vector.shape_cast %257 : vector<1x1x9x64xbf16> to vector<9x64xbf16>
    %259 = vector.extract_strided_slice %258 {offsets = [0, 0], sizes = [8, 64], strides = [1, 1]} : vector<9x64xbf16> to vector<8x64xbf16>
    %c2_218 = arith.constant 2 : index
    %c0_219 = arith.constant 0 : index
    %c0_220 = arith.constant 0 : index
    %260 = vector.load %arg2[%c2_218, %c0_219, %c0_220] : memref<4x64x128xbf16, #tpu.memory_space<vmem>>, vector<1x64x128xbf16>
    %261 = vector.shape_cast %260 : vector<1x64x128xbf16> to vector<64x128xbf16>
    %cst_221 = arith.constant dense<0.000000e+00> : vector<8x128xf32>
    %262 = tpu.matmul %259, %261, %cst_221 {dimension_numbers = #tpu.dot_dimension_numbers<[1], [0], [0], [1], [0, 0, 1, 1], [], []>} : vector<8x64xbf16>, vector<64x128xbf16>, vector<8x128xf32> -> vector<8x128xf32>
    %263 = arith.addf %256, %262 : vector<8x128xf32>
    %264 = vector.extract_strided_slice %258 {offsets = [1, 0], sizes = [8, 64], strides = [1, 1]} : vector<9x64xbf16> to vector<8x64xbf16>
    %c3_222 = arith.constant 3 : index
    %c0_223 = arith.constant 0 : index
    %c0_224 = arith.constant 0 : index
    %265 = vector.load %arg2[%c3_222, %c0_223, %c0_224] : memref<4x64x128xbf16, #tpu.memory_space<vmem>>, vector<1x64x128xbf16>
    %266 = vector.shape_cast %265 : vector<1x64x128xbf16> to vector<64x128xbf16>
    %cst_225 = arith.constant dense<0.000000e+00> : vector<8x128xf32>
    %267 = tpu.matmul %264, %266, %cst_225 {dimension_numbers = #tpu.dot_dimension_numbers<[1], [0], [0], [1], [0, 0, 1, 1], [], []>} : vector<8x64xbf16>, vector<64x128xbf16>, vector<8x128xf32> -> vector<8x128xf32>
    %268 = arith.addf %263, %267 : vector<8x128xf32>
    %269 = vector.broadcast %0 : vector<1x128xf32> to vector<8x128xf32>
    %270 = arith.addf %268, %269 : vector<8x128xf32>
    %cst_226 = arith.constant 0.000000e+00 : f32
    %271 = vector.broadcast %cst_226 : f32 to vector<8x128xf32>
    %272 = arith.subf %271, %270 : vector<8x128xf32>
    %273 = math.exp %272 : vector<8x128xf32>
    %cst_227 = arith.constant 1.000000e+00 : f32
    %274 = vector.broadcast %cst_227 : f32 to vector<8x128xf32>
    %275 = arith.addf %274, %273 : vector<8x128xf32>
    %276 = tpu.reciprocal %275 {approx = true} : vector<8x128xf32> -> vector<8x128xf32>
    %277 = arith.mulf %270, %276 : vector<8x128xf32>
    %c0_228 = arith.constant 0 : index
    %c7_229 = arith.constant 7 : index
    %c0_230 = arith.constant 0 : index
    %c0_231 = arith.constant 0 : index
    %278 = vector.load %arg4[%c0_228, %c7_229, %c0_230, %c0_231] : memref<1x8x8x128xf32, #tpu.memory_space<vmem>>, vector<1x1x8x128xf32>
    %279 = vector.shape_cast %278 : vector<1x1x8x128xf32> to vector<8x128xf32>
    %280 = vector.shape_cast %277 : vector<8x128xf32> to vector<1x1x8x128xf32>
    tpu.vector_store %arg4[%c0_228, %c7_229, %c0_230, %c0_231], %280 {strides = array<i32>} : memref<1x8x8x128xf32, #tpu.memory_space<vmem>>, vector<1x1x8x128xf32>,
    return
  }
  func.func @transform_0(%arg0: i32) -> (i32, i32, i32, i32) {
    %c0_i32 = arith.constant 0 : i32
    %c0_i32_0 = arith.constant 0 : i32
    %c0_i32_1 = arith.constant 0 : i32
    %c0_i32_2 = arith.constant 0 : i32
    return %arg0, %c0_i32, %c0_i32_0, %c0_i32_1 : i32, i32, i32, i32
  }
  func.func @transform_1(%arg0: i32) -> (i32, i32, i32) {
    %c0_i32 = arith.constant 0 : i32
    %c0_i32_0 = arith.constant 0 : i32
    %c0_i32_1 = arith.constant 0 : i32
    %c0_i32_2 = arith.constant 0 : i32
    return %c0_i32, %c0_i32_0, %c0_i32_1 : i32, i32, i32
  }
  func.func @transform_2(%arg0: i32) -> (i32, i32) {
    %c0_i32 = arith.constant 0 : i32
    %c0_i32_0 = arith.constant 0 : i32
    %c0_i32_1 = arith.constant 0 : i32
    return %c0_i32, %c0_i32_0 : i32, i32
  }
  func.func @transform_3(%arg0: i32) -> (i32, i32, i32, i32) {
    %c0_i32 = arith.constant 0 : i32
    %c0_i32_0 = arith.constant 0 : i32
    %c0_i32_1 = arith.constant 0 : i32
    %c0_i32_2 = arith.constant 0 : i32
    return %arg0, %c0_i32, %c0_i32_0, %c0_i32_1 : i32, i32, i32, i32
  }
}

module attributes {stable_mosaic.version = 11 : i64} {
  func.func @_mm_bias_act_kernel(%arg0: i32, %arg1: memref<128x32xbf16, #tpu.memory_space<vmem>>, %arg2: memref<32x128xbf16, #tpu.memory_space<vmem>>, %arg3: memref<1x128xf32, #tpu.memory_space<vmem>>, %arg4: memref<128x128xf32, #tpu.memory_space<vmem>>) attributes {dimension_semantics = [#tpu.dimension_semantics<parallel>], iteration_bounds = array<i64: 1>, scalar_prefetch = 0 : i64, scratch_operands = 0 : i64, tpu.core_type = #tpu.core_type<tc>, window_params = [{transform_indices = @transform_0, window_bounds = array<i64: 128, 32>}, {pipeline_mode = #tpu.pipeline_mode<synchronous>, transform_indices = @transform_1, window_bounds = array<i64: 32, 128>}, {pipeline_mode = #tpu.pipeline_mode<synchronous>, transform_indices = @transform_2, window_bounds = array<i64: 1, 128>}, {transform_indices = @transform_3, window_bounds = array<i64: 128, 128>}]} {
    %c0 = arith.constant 0 : index
    %c0_0 = arith.constant 0 : index
    %0 = vector.load %arg1[%c0, %c0_0] : memref<128x32xbf16, #tpu.memory_space<vmem>>, vector<128x32xbf16>
    %c0_1 = arith.constant 0 : index
    %c0_2 = arith.constant 0 : index
    %1 = vector.load %arg2[%c0_1, %c0_2] : memref<32x128xbf16, #tpu.memory_space<vmem>>, vector<32x128xbf16>
    %cst = arith.constant dense<0.000000e+00> : vector<128x128xf32>
    %2 = tpu.matmul %0, %1, %cst {dimension_numbers = #tpu.dot_dimension_numbers<[1], [0], [0], [1], [0, 0, 1, 1], [], []>} : vector<128x32xbf16>, vector<32x128xbf16>, vector<128x128xf32> -> vector<128x128xf32>
    %c0_3 = arith.constant 0 : index
    %c0_4 = arith.constant 0 : index
    %3 = vector.load %arg3[%c0_3, %c0_4] : memref<1x128xf32, #tpu.memory_space<vmem>>, vector<1x128xf32>
    %4 = vector.broadcast %3 : vector<1x128xf32> to vector<128x128xf32>
    %5 = arith.addf %2, %4 : vector<128x128xf32>
    %c0_5 = arith.constant 0 : index
    %c0_6 = arith.constant 0 : index
    %6 = vector.load %arg4[%c0_5, %c0_6] : memref<128x128xf32, #tpu.memory_space<vmem>>, vector<128x128xf32>
    tpu.vector_store %arg4[%c0_5, %c0_6], %5 {strides = array<i32>} : memref<128x128xf32, #tpu.memory_space<vmem>>, vector<128x128xf32>,
    return
  }
  func.func @transform_0(%arg0: i32) -> (i32, i32) {
    %c0_i32 = arith.constant 0 : i32
    %c0_i32_0 = arith.constant 0 : i32
    return %arg0, %c0_i32 : i32, i32
  }
  func.func @transform_1(%arg0: i32) -> (i32, i32) {
    %c0_i32 = arith.constant 0 : i32
    %c0_i32_0 = arith.constant 0 : i32
    %c0_i32_1 = arith.constant 0 : i32
    return %c0_i32, %c0_i32_0 : i32, i32
  }
  func.func @transform_2(%arg0: i32) -> (i32, i32) {
    %c0_i32 = arith.constant 0 : i32
    %c0_i32_0 = arith.constant 0 : i32
    %c0_i32_1 = arith.constant 0 : i32
    return %c0_i32, %c0_i32_0 : i32, i32
  }
  func.func @transform_3(%arg0: i32) -> (i32, i32) {
    %c0_i32 = arith.constant 0 : i32
    %c0_i32_0 = arith.constant 0 : i32
    return %arg0, %c0_i32 : i32, i32
  }
}

module attributes {stable_mosaic.version = 11 : i64} {
  func.func @_s2d_conv_kernel(%arg0: i32, %arg1: memref<1x5x5x128xbf16, #tpu.memory_space<vmem>>, %arg2: memref<4x128x128xbf16, #tpu.memory_space<vmem>>, %arg3: memref<1x128xf32, #tpu.memory_space<vmem>>, %arg4: memref<1x4x4x128xf32, #tpu.memory_space<vmem>>) attributes {dimension_semantics = [#tpu.dimension_semantics<parallel>], iteration_bounds = array<i64: 2>, scalar_prefetch = 0 : i64, scratch_operands = 0 : i64, tpu.core_type = #tpu.core_type<tc>, window_params = [{transform_indices = @transform_0, window_bounds = array<i64: 1, 5, 5, 128>}, {pipeline_mode = #tpu.pipeline_mode<synchronous>, transform_indices = @transform_1, window_bounds = array<i64: 4, 128, 128>}, {pipeline_mode = #tpu.pipeline_mode<synchronous>, transform_indices = @transform_2, window_bounds = array<i64: 1, 128>}, {transform_indices = @transform_3, window_bounds = array<i64: 1, 4, 4, 128>}]} {
    %c0 = arith.constant 0 : index
    %c0_0 = arith.constant 0 : index
    %0 = vector.load %arg3[%c0, %c0_0] : memref<1x128xf32, #tpu.memory_space<vmem>>, vector<1x128xf32>
    %c0_1 = arith.constant 0 : index
    %c0_2 = arith.constant 0 : index
    %c0_3 = arith.constant 0 : index
    %c0_4 = arith.constant 0 : index
    %1 = vector.load %arg1[%c0_1, %c0_2, %c0_3, %c0_4] : memref<1x5x5x128xbf16, #tpu.memory_space<vmem>>, vector<1x1x5x128xbf16>
    %2 = vector.shape_cast %1 : vector<1x1x5x128xbf16> to vector<5x128xbf16>
    %3 = vector.extract_strided_slice %2 {offsets = [0, 0], sizes = [4, 128], strides = [1, 1]} : vector<5x128xbf16> to vector<4x128xbf16>
    %c0_5 = arith.constant 0 : index
    %c0_6 = arith.constant 0 : index
    %c0_7 = arith.constant 0 : index
    %4 = vector.load %arg2[%c0_5, %c0_6, %c0_7] : memref<4x128x128xbf16, #tpu.memory_space<vmem>>, vector<1x128x128xbf16>
    %5 = vector.shape_cast %4 : vector<1x128x128xbf16> to vector<128x128xbf16>
    %cst = arith.constant dense<0.000000e+00> : vector<4x128xf32>
    %6 = tpu.matmul %3, %5, %cst {dimension_numbers = #tpu.dot_dimension_numbers<[1], [0], [0], [1], [0, 0, 1, 1], [], []>} : vector<4x128xbf16>, vector<128x128xbf16>, vector<4x128xf32> -> vector<4x128xf32>
    %7 = vector.extract_strided_slice %2 {offsets = [1, 0], sizes = [4, 128], strides = [1, 1]} : vector<5x128xbf16> to vector<4x128xbf16>
    %c1 = arith.constant 1 : index
    %c0_8 = arith.constant 0 : index
    %c0_9 = arith.constant 0 : index
    %8 = vector.load %arg2[%c1, %c0_8, %c0_9] : memref<4x128x128xbf16, #tpu.memory_space<vmem>>, vector<1x128x128xbf16>
    %9 = vector.shape_cast %8 : vector<1x128x128xbf16> to vector<128x128xbf16>
    %cst_10 = arith.constant dense<0.000000e+00> : vector<4x128xf32>
    %10 = tpu.matmul %7, %9, %cst_10 {dimension_numbers = #tpu.dot_dimension_numbers<[1], [0], [0], [1], [0, 0, 1, 1], [], []>} : vector<4x128xbf16>, vector<128x128xbf16>, vector<4x128xf32> -> vector<4x128xf32>
    %11 = arith.addf %6, %10 : vector<4x128xf32>
    %c0_11 = arith.constant 0 : index
    %c1_12 = arith.constant 1 : index
    %c0_13 = arith.constant 0 : index
    %c0_14 = arith.constant 0 : index
    %12 = vector.load %arg1[%c0_11, %c1_12, %c0_13, %c0_14] : memref<1x5x5x128xbf16, #tpu.memory_space<vmem>>, vector<1x1x5x128xbf16>
    %13 = vector.shape_cast %12 : vector<1x1x5x128xbf16> to vector<5x128xbf16>
    %14 = vector.extract_strided_slice %13 {offsets = [0, 0], sizes = [4, 128], strides = [1, 1]} : vector<5x128xbf16> to vector<4x128xbf16>
    %c2 = arith.constant 2 : index
    %c0_15 = arith.constant 0 : index
    %c0_16 = arith.constant 0 : index
    %15 = vector.load %arg2[%c2, %c0_15, %c0_16] : memref<4x128x128xbf16, #tpu.memory_space<vmem>>, vector<1x128x128xbf16>
    %16 = vector.shape_cast %15 : vector<1x128x128xbf16> to vector<128x128xbf16>
    %cst_17 = arith.constant dense<0.000000e+00> : vector<4x128xf32>
    %17 = tpu.matmul %14, %16, %cst_17 {dimension_numbers = #tpu.dot_dimension_numbers<[1], [0], [0], [1], [0, 0, 1, 1], [], []>} : vector<4x128xbf16>, vector<128x128xbf16>, vector<4x128xf32> -> vector<4x128xf32>
    %18 = arith.addf %11, %17 : vector<4x128xf32>
    %19 = vector.extract_strided_slice %13 {offsets = [1, 0], sizes = [4, 128], strides = [1, 1]} : vector<5x128xbf16> to vector<4x128xbf16>
    %c3 = arith.constant 3 : index
    %c0_18 = arith.constant 0 : index
    %c0_19 = arith.constant 0 : index
    %20 = vector.load %arg2[%c3, %c0_18, %c0_19] : memref<4x128x128xbf16, #tpu.memory_space<vmem>>, vector<1x128x128xbf16>
    %21 = vector.shape_cast %20 : vector<1x128x128xbf16> to vector<128x128xbf16>
    %cst_20 = arith.constant dense<0.000000e+00> : vector<4x128xf32>
    %22 = tpu.matmul %19, %21, %cst_20 {dimension_numbers = #tpu.dot_dimension_numbers<[1], [0], [0], [1], [0, 0, 1, 1], [], []>} : vector<4x128xbf16>, vector<128x128xbf16>, vector<4x128xf32> -> vector<4x128xf32>
    %23 = arith.addf %18, %22 : vector<4x128xf32>
    %24 = vector.broadcast %0 : vector<1x128xf32> to vector<4x128xf32>
    %25 = arith.addf %23, %24 : vector<4x128xf32>
    %cst_21 = arith.constant 0.000000e+00 : f32
    %26 = vector.broadcast %cst_21 : f32 to vector<4x128xf32>
    %27 = arith.subf %26, %25 : vector<4x128xf32>
    %28 = math.exp %27 : vector<4x128xf32>
    %cst_22 = arith.constant 1.000000e+00 : f32
    %29 = vector.broadcast %cst_22 : f32 to vector<4x128xf32>
    %30 = arith.addf %29, %28 : vector<4x128xf32>
    %31 = tpu.reciprocal %30 {approx = true} : vector<4x128xf32> -> vector<4x128xf32>
    %32 = arith.mulf %25, %31 : vector<4x128xf32>
    %c0_23 = arith.constant 0 : index
    %c0_24 = arith.constant 0 : index
    %c0_25 = arith.constant 0 : index
    %c0_26 = arith.constant 0 : index
    %33 = vector.load %arg4[%c0_23, %c0_24, %c0_25, %c0_26] : memref<1x4x4x128xf32, #tpu.memory_space<vmem>>, vector<1x1x4x128xf32>
    %34 = vector.shape_cast %33 : vector<1x1x4x128xf32> to vector<4x128xf32>
    %35 = vector.shape_cast %32 : vector<4x128xf32> to vector<1x1x4x128xf32>
    tpu.vector_store %arg4[%c0_23, %c0_24, %c0_25, %c0_26], %35 {strides = array<i32>} : memref<1x4x4x128xf32, #tpu.memory_space<vmem>>, vector<1x1x4x128xf32>,
    %c0_27 = arith.constant 0 : index
    %c1_28 = arith.constant 1 : index
    %c0_29 = arith.constant 0 : index
    %c0_30 = arith.constant 0 : index
    %36 = vector.load %arg1[%c0_27, %c1_28, %c0_29, %c0_30] : memref<1x5x5x128xbf16, #tpu.memory_space<vmem>>, vector<1x1x5x128xbf16>
    %37 = vector.shape_cast %36 : vector<1x1x5x128xbf16> to vector<5x128xbf16>
    %38 = vector.extract_strided_slice %37 {offsets = [0, 0], sizes = [4, 128], strides = [1, 1]} : vector<5x128xbf16> to vector<4x128xbf16>
    %c0_31 = arith.constant 0 : index
    %c0_32 = arith.constant 0 : index
    %c0_33 = arith.constant 0 : index
    %39 = vector.load %arg2[%c0_31, %c0_32, %c0_33] : memref<4x128x128xbf16, #tpu.memory_space<vmem>>, vector<1x128x128xbf16>
    %40 = vector.shape_cast %39 : vector<1x128x128xbf16> to vector<128x128xbf16>
    %cst_34 = arith.constant dense<0.000000e+00> : vector<4x128xf32>
    %41 = tpu.matmul %38, %40, %cst_34 {dimension_numbers = #tpu.dot_dimension_numbers<[1], [0], [0], [1], [0, 0, 1, 1], [], []>} : vector<4x128xbf16>, vector<128x128xbf16>, vector<4x128xf32> -> vector<4x128xf32>
    %42 = vector.extract_strided_slice %37 {offsets = [1, 0], sizes = [4, 128], strides = [1, 1]} : vector<5x128xbf16> to vector<4x128xbf16>
    %c1_35 = arith.constant 1 : index
    %c0_36 = arith.constant 0 : index
    %c0_37 = arith.constant 0 : index
    %43 = vector.load %arg2[%c1_35, %c0_36, %c0_37] : memref<4x128x128xbf16, #tpu.memory_space<vmem>>, vector<1x128x128xbf16>
    %44 = vector.shape_cast %43 : vector<1x128x128xbf16> to vector<128x128xbf16>
    %cst_38 = arith.constant dense<0.000000e+00> : vector<4x128xf32>
    %45 = tpu.matmul %42, %44, %cst_38 {dimension_numbers = #tpu.dot_dimension_numbers<[1], [0], [0], [1], [0, 0, 1, 1], [], []>} : vector<4x128xbf16>, vector<128x128xbf16>, vector<4x128xf32> -> vector<4x128xf32>
    %46 = arith.addf %41, %45 : vector<4x128xf32>
    %c0_39 = arith.constant 0 : index
    %c2_40 = arith.constant 2 : index
    %c0_41 = arith.constant 0 : index
    %c0_42 = arith.constant 0 : index
    %47 = vector.load %arg1[%c0_39, %c2_40, %c0_41, %c0_42] : memref<1x5x5x128xbf16, #tpu.memory_space<vmem>>, vector<1x1x5x128xbf16>
    %48 = vector.shape_cast %47 : vector<1x1x5x128xbf16> to vector<5x128xbf16>
    %49 = vector.extract_strided_slice %48 {offsets = [0, 0], sizes = [4, 128], strides = [1, 1]} : vector<5x128xbf16> to vector<4x128xbf16>
    %c2_43 = arith.constant 2 : index
    %c0_44 = arith.constant 0 : index
    %c0_45 = arith.constant 0 : index
    %50 = vector.load %arg2[%c2_43, %c0_44, %c0_45] : memref<4x128x128xbf16, #tpu.memory_space<vmem>>, vector<1x128x128xbf16>
    %51 = vector.shape_cast %50 : vector<1x128x128xbf16> to vector<128x128xbf16>
    %cst_46 = arith.constant dense<0.000000e+00> : vector<4x128xf32>
    %52 = tpu.matmul %49, %51, %cst_46 {dimension_numbers = #tpu.dot_dimension_numbers<[1], [0], [0], [1], [0, 0, 1, 1], [], []>} : vector<4x128xbf16>, vector<128x128xbf16>, vector<4x128xf32> -> vector<4x128xf32>
    %53 = arith.addf %46, %52 : vector<4x128xf32>
    %54 = vector.extract_strided_slice %48 {offsets = [1, 0], sizes = [4, 128], strides = [1, 1]} : vector<5x128xbf16> to vector<4x128xbf16>
    %c3_47 = arith.constant 3 : index
    %c0_48 = arith.constant 0 : index
    %c0_49 = arith.constant 0 : index
    %55 = vector.load %arg2[%c3_47, %c0_48, %c0_49] : memref<4x128x128xbf16, #tpu.memory_space<vmem>>, vector<1x128x128xbf16>
    %56 = vector.shape_cast %55 : vector<1x128x128xbf16> to vector<128x128xbf16>
    %cst_50 = arith.constant dense<0.000000e+00> : vector<4x128xf32>
    %57 = tpu.matmul %54, %56, %cst_50 {dimension_numbers = #tpu.dot_dimension_numbers<[1], [0], [0], [1], [0, 0, 1, 1], [], []>} : vector<4x128xbf16>, vector<128x128xbf16>, vector<4x128xf32> -> vector<4x128xf32>
    %58 = arith.addf %53, %57 : vector<4x128xf32>
    %59 = vector.broadcast %0 : vector<1x128xf32> to vector<4x128xf32>
    %60 = arith.addf %58, %59 : vector<4x128xf32>
    %cst_51 = arith.constant 0.000000e+00 : f32
    %61 = vector.broadcast %cst_51 : f32 to vector<4x128xf32>
    %62 = arith.subf %61, %60 : vector<4x128xf32>
    %63 = math.exp %62 : vector<4x128xf32>
    %cst_52 = arith.constant 1.000000e+00 : f32
    %64 = vector.broadcast %cst_52 : f32 to vector<4x128xf32>
    %65 = arith.addf %64, %63 : vector<4x128xf32>
    %66 = tpu.reciprocal %65 {approx = true} : vector<4x128xf32> -> vector<4x128xf32>
    %67 = arith.mulf %60, %66 : vector<4x128xf32>
    %c0_53 = arith.constant 0 : index
    %c1_54 = arith.constant 1 : index
    %c0_55 = arith.constant 0 : index
    %c0_56 = arith.constant 0 : index
    %68 = vector.load %arg4[%c0_53, %c1_54, %c0_55, %c0_56] : memref<1x4x4x128xf32, #tpu.memory_space<vmem>>, vector<1x1x4x128xf32>
    %69 = vector.shape_cast %68 : vector<1x1x4x128xf32> to vector<4x128xf32>
    %70 = vector.shape_cast %67 : vector<4x128xf32> to vector<1x1x4x128xf32>
    tpu.vector_store %arg4[%c0_53, %c1_54, %c0_55, %c0_56], %70 {strides = array<i32>} : memref<1x4x4x128xf32, #tpu.memory_space<vmem>>, vector<1x1x4x128xf32>,
    %c0_57 = arith.constant 0 : index
    %c2_58 = arith.constant 2 : index
    %c0_59 = arith.constant 0 : index
    %c0_60 = arith.constant 0 : index
    %71 = vector.load %arg1[%c0_57, %c2_58, %c0_59, %c0_60] : memref<1x5x5x128xbf16, #tpu.memory_space<vmem>>, vector<1x1x5x128xbf16>
    %72 = vector.shape_cast %71 : vector<1x1x5x128xbf16> to vector<5x128xbf16>
    %73 = vector.extract_strided_slice %72 {offsets = [0, 0], sizes = [4, 128], strides = [1, 1]} : vector<5x128xbf16> to vector<4x128xbf16>
    %c0_61 = arith.constant 0 : index
    %c0_62 = arith.constant 0 : index
    %c0_63 = arith.constant 0 : index
    %74 = vector.load %arg2[%c0_61, %c0_62, %c0_63] : memref<4x128x128xbf16, #tpu.memory_space<vmem>>, vector<1x128x128xbf16>
    %75 = vector.shape_cast %74 : vector<1x128x128xbf16> to vector<128x128xbf16>
    %cst_64 = arith.constant dense<0.000000e+00> : vector<4x128xf32>
    %76 = tpu.matmul %73, %75, %cst_64 {dimension_numbers = #tpu.dot_dimension_numbers<[1], [0], [0], [1], [0, 0, 1, 1], [], []>} : vector<4x128xbf16>, vector<128x128xbf16>, vector<4x128xf32> -> vector<4x128xf32>
    %77 = vector.extract_strided_slice %72 {offsets = [1, 0], sizes = [4, 128], strides = [1, 1]} : vector<5x128xbf16> to vector<4x128xbf16>
    %c1_65 = arith.constant 1 : index
    %c0_66 = arith.constant 0 : index
    %c0_67 = arith.constant 0 : index
    %78 = vector.load %arg2[%c1_65, %c0_66, %c0_67] : memref<4x128x128xbf16, #tpu.memory_space<vmem>>, vector<1x128x128xbf16>
    %79 = vector.shape_cast %78 : vector<1x128x128xbf16> to vector<128x128xbf16>
    %cst_68 = arith.constant dense<0.000000e+00> : vector<4x128xf32>
    %80 = tpu.matmul %77, %79, %cst_68 {dimension_numbers = #tpu.dot_dimension_numbers<[1], [0], [0], [1], [0, 0, 1, 1], [], []>} : vector<4x128xbf16>, vector<128x128xbf16>, vector<4x128xf32> -> vector<4x128xf32>
    %81 = arith.addf %76, %80 : vector<4x128xf32>
    %c0_69 = arith.constant 0 : index
    %c3_70 = arith.constant 3 : index
    %c0_71 = arith.constant 0 : index
    %c0_72 = arith.constant 0 : index
    %82 = vector.load %arg1[%c0_69, %c3_70, %c0_71, %c0_72] : memref<1x5x5x128xbf16, #tpu.memory_space<vmem>>, vector<1x1x5x128xbf16>
    %83 = vector.shape_cast %82 : vector<1x1x5x128xbf16> to vector<5x128xbf16>
    %84 = vector.extract_strided_slice %83 {offsets = [0, 0], sizes = [4, 128], strides = [1, 1]} : vector<5x128xbf16> to vector<4x128xbf16>
    %c2_73 = arith.constant 2 : index
    %c0_74 = arith.constant 0 : index
    %c0_75 = arith.constant 0 : index
    %85 = vector.load %arg2[%c2_73, %c0_74, %c0_75] : memref<4x128x128xbf16, #tpu.memory_space<vmem>>, vector<1x128x128xbf16>
    %86 = vector.shape_cast %85 : vector<1x128x128xbf16> to vector<128x128xbf16>
    %cst_76 = arith.constant dense<0.000000e+00> : vector<4x128xf32>
    %87 = tpu.matmul %84, %86, %cst_76 {dimension_numbers = #tpu.dot_dimension_numbers<[1], [0], [0], [1], [0, 0, 1, 1], [], []>} : vector<4x128xbf16>, vector<128x128xbf16>, vector<4x128xf32> -> vector<4x128xf32>
    %88 = arith.addf %81, %87 : vector<4x128xf32>
    %89 = vector.extract_strided_slice %83 {offsets = [1, 0], sizes = [4, 128], strides = [1, 1]} : vector<5x128xbf16> to vector<4x128xbf16>
    %c3_77 = arith.constant 3 : index
    %c0_78 = arith.constant 0 : index
    %c0_79 = arith.constant 0 : index
    %90 = vector.load %arg2[%c3_77, %c0_78, %c0_79] : memref<4x128x128xbf16, #tpu.memory_space<vmem>>, vector<1x128x128xbf16>
    %91 = vector.shape_cast %90 : vector<1x128x128xbf16> to vector<128x128xbf16>
    %cst_80 = arith.constant dense<0.000000e+00> : vector<4x128xf32>
    %92 = tpu.matmul %89, %91, %cst_80 {dimension_numbers = #tpu.dot_dimension_numbers<[1], [0], [0], [1], [0, 0, 1, 1], [], []>} : vector<4x128xbf16>, vector<128x128xbf16>, vector<4x128xf32> -> vector<4x128xf32>
    %93 = arith.addf %88, %92 : vector<4x128xf32>
    %94 = vector.broadcast %0 : vector<1x128xf32> to vector<4x128xf32>
    %95 = arith.addf %93, %94 : vector<4x128xf32>
    %cst_81 = arith.constant 0.000000e+00 : f32
    %96 = vector.broadcast %cst_81 : f32 to vector<4x128xf32>
    %97 = arith.subf %96, %95 : vector<4x128xf32>
    %98 = math.exp %97 : vector<4x128xf32>
    %cst_82 = arith.constant 1.000000e+00 : f32
    %99 = vector.broadcast %cst_82 : f32 to vector<4x128xf32>
    %100 = arith.addf %99, %98 : vector<4x128xf32>
    %101 = tpu.reciprocal %100 {approx = true} : vector<4x128xf32> -> vector<4x128xf32>
    %102 = arith.mulf %95, %101 : vector<4x128xf32>
    %c0_83 = arith.constant 0 : index
    %c2_84 = arith.constant 2 : index
    %c0_85 = arith.constant 0 : index
    %c0_86 = arith.constant 0 : index
    %103 = vector.load %arg4[%c0_83, %c2_84, %c0_85, %c0_86] : memref<1x4x4x128xf32, #tpu.memory_space<vmem>>, vector<1x1x4x128xf32>
    %104 = vector.shape_cast %103 : vector<1x1x4x128xf32> to vector<4x128xf32>
    %105 = vector.shape_cast %102 : vector<4x128xf32> to vector<1x1x4x128xf32>
    tpu.vector_store %arg4[%c0_83, %c2_84, %c0_85, %c0_86], %105 {strides = array<i32>} : memref<1x4x4x128xf32, #tpu.memory_space<vmem>>, vector<1x1x4x128xf32>,
    %c0_87 = arith.constant 0 : index
    %c3_88 = arith.constant 3 : index
    %c0_89 = arith.constant 0 : index
    %c0_90 = arith.constant 0 : index
    %106 = vector.load %arg1[%c0_87, %c3_88, %c0_89, %c0_90] : memref<1x5x5x128xbf16, #tpu.memory_space<vmem>>, vector<1x1x5x128xbf16>
    %107 = vector.shape_cast %106 : vector<1x1x5x128xbf16> to vector<5x128xbf16>
    %108 = vector.extract_strided_slice %107 {offsets = [0, 0], sizes = [4, 128], strides = [1, 1]} : vector<5x128xbf16> to vector<4x128xbf16>
    %c0_91 = arith.constant 0 : index
    %c0_92 = arith.constant 0 : index
    %c0_93 = arith.constant 0 : index
    %109 = vector.load %arg2[%c0_91, %c0_92, %c0_93] : memref<4x128x128xbf16, #tpu.memory_space<vmem>>, vector<1x128x128xbf16>
    %110 = vector.shape_cast %109 : vector<1x128x128xbf16> to vector<128x128xbf16>
    %cst_94 = arith.constant dense<0.000000e+00> : vector<4x128xf32>
    %111 = tpu.matmul %108, %110, %cst_94 {dimension_numbers = #tpu.dot_dimension_numbers<[1], [0], [0], [1], [0, 0, 1, 1], [], []>} : vector<4x128xbf16>, vector<128x128xbf16>, vector<4x128xf32> -> vector<4x128xf32>
    %112 = vector.extract_strided_slice %107 {offsets = [1, 0], sizes = [4, 128], strides = [1, 1]} : vector<5x128xbf16> to vector<4x128xbf16>
    %c1_95 = arith.constant 1 : index
    %c0_96 = arith.constant 0 : index
    %c0_97 = arith.constant 0 : index
    %113 = vector.load %arg2[%c1_95, %c0_96, %c0_97] : memref<4x128x128xbf16, #tpu.memory_space<vmem>>, vector<1x128x128xbf16>
    %114 = vector.shape_cast %113 : vector<1x128x128xbf16> to vector<128x128xbf16>
    %cst_98 = arith.constant dense<0.000000e+00> : vector<4x128xf32>
    %115 = tpu.matmul %112, %114, %cst_98 {dimension_numbers = #tpu.dot_dimension_numbers<[1], [0], [0], [1], [0, 0, 1, 1], [], []>} : vector<4x128xbf16>, vector<128x128xbf16>, vector<4x128xf32> -> vector<4x128xf32>
    %116 = arith.addf %111, %115 : vector<4x128xf32>
    %c0_99 = arith.constant 0 : index
    %c4 = arith.constant 4 : index
    %c0_100 = arith.constant 0 : index
    %c0_101 = arith.constant 0 : index
    %117 = vector.load %arg1[%c0_99, %c4, %c0_100, %c0_101] : memref<1x5x5x128xbf16, #tpu.memory_space<vmem>>, vector<1x1x5x128xbf16>
    %118 = vector.shape_cast %117 : vector<1x1x5x128xbf16> to vector<5x128xbf16>
    %119 = vector.extract_strided_slice %118 {offsets = [0, 0], sizes = [4, 128], strides = [1, 1]} : vector<5x128xbf16> to vector<4x128xbf16>
    %c2_102 = arith.constant 2 : index
    %c0_103 = arith.constant 0 : index
    %c0_104 = arith.constant 0 : index
    %120 = vector.load %arg2[%c2_102, %c0_103, %c0_104] : memref<4x128x128xbf16, #tpu.memory_space<vmem>>, vector<1x128x128xbf16>
    %121 = vector.shape_cast %120 : vector<1x128x128xbf16> to vector<128x128xbf16>
    %cst_105 = arith.constant dense<0.000000e+00> : vector<4x128xf32>
    %122 = tpu.matmul %119, %121, %cst_105 {dimension_numbers = #tpu.dot_dimension_numbers<[1], [0], [0], [1], [0, 0, 1, 1], [], []>} : vector<4x128xbf16>, vector<128x128xbf16>, vector<4x128xf32> -> vector<4x128xf32>
    %123 = arith.addf %116, %122 : vector<4x128xf32>
    %124 = vector.extract_strided_slice %118 {offsets = [1, 0], sizes = [4, 128], strides = [1, 1]} : vector<5x128xbf16> to vector<4x128xbf16>
    %c3_106 = arith.constant 3 : index
    %c0_107 = arith.constant 0 : index
    %c0_108 = arith.constant 0 : index
    %125 = vector.load %arg2[%c3_106, %c0_107, %c0_108] : memref<4x128x128xbf16, #tpu.memory_space<vmem>>, vector<1x128x128xbf16>
    %126 = vector.shape_cast %125 : vector<1x128x128xbf16> to vector<128x128xbf16>
    %cst_109 = arith.constant dense<0.000000e+00> : vector<4x128xf32>
    %127 = tpu.matmul %124, %126, %cst_109 {dimension_numbers = #tpu.dot_dimension_numbers<[1], [0], [0], [1], [0, 0, 1, 1], [], []>} : vector<4x128xbf16>, vector<128x128xbf16>, vector<4x128xf32> -> vector<4x128xf32>
    %128 = arith.addf %123, %127 : vector<4x128xf32>
    %129 = vector.broadcast %0 : vector<1x128xf32> to vector<4x128xf32>
    %130 = arith.addf %128, %129 : vector<4x128xf32>
    %cst_110 = arith.constant 0.000000e+00 : f32
    %131 = vector.broadcast %cst_110 : f32 to vector<4x128xf32>
    %132 = arith.subf %131, %130 : vector<4x128xf32>
    %133 = math.exp %132 : vector<4x128xf32>
    %cst_111 = arith.constant 1.000000e+00 : f32
    %134 = vector.broadcast %cst_111 : f32 to vector<4x128xf32>
    %135 = arith.addf %134, %133 : vector<4x128xf32>
    %136 = tpu.reciprocal %135 {approx = true} : vector<4x128xf32> -> vector<4x128xf32>
    %137 = arith.mulf %130, %136 : vector<4x128xf32>
    %c0_112 = arith.constant 0 : index
    %c3_113 = arith.constant 3 : index
    %c0_114 = arith.constant 0 : index
    %c0_115 = arith.constant 0 : index
    %138 = vector.load %arg4[%c0_112, %c3_113, %c0_114, %c0_115] : memref<1x4x4x128xf32, #tpu.memory_space<vmem>>, vector<1x1x4x128xf32>
    %139 = vector.shape_cast %138 : vector<1x1x4x128xf32> to vector<4x128xf32>
    %140 = vector.shape_cast %137 : vector<4x128xf32> to vector<1x1x4x128xf32>
    tpu.vector_store %arg4[%c0_112, %c3_113, %c0_114, %c0_115], %140 {strides = array<i32>} : memref<1x4x4x128xf32, #tpu.memory_space<vmem>>, vector<1x1x4x128xf32>,
    return
  }
  func.func @transform_0(%arg0: i32) -> (i32, i32, i32, i32) {
    %c0_i32 = arith.constant 0 : i32
    %c0_i32_0 = arith.constant 0 : i32
    %c0_i32_1 = arith.constant 0 : i32
    %c0_i32_2 = arith.constant 0 : i32
    return %arg0, %c0_i32, %c0_i32_0, %c0_i32_1 : i32, i32, i32, i32
  }
  func.func @transform_1(%arg0: i32) -> (i32, i32, i32) {
    %c0_i32 = arith.constant 0 : i32
    %c0_i32_0 = arith.constant 0 : i32
    %c0_i32_1 = arith.constant 0 : i32
    %c0_i32_2 = arith.constant 0 : i32
    return %c0_i32, %c0_i32_0, %c0_i32_1 : i32, i32, i32
  }
  func.func @transform_2(%arg0: i32) -> (i32, i32) {
    %c0_i32 = arith.constant 0 : i32
    %c0_i32_0 = arith.constant 0 : i32
    %c0_i32_1 = arith.constant 0 : i32
    return %c0_i32, %c0_i32_0 : i32, i32
  }
  func.func @transform_3(%arg0: i32) -> (i32, i32, i32, i32) {
    %c0_i32 = arith.constant 0 : i32
    %c0_i32_0 = arith.constant 0 : i32
    %c0_i32_1 = arith.constant 0 : i32
    %c0_i32_2 = arith.constant 0 : i32
    return %arg0, %c0_i32, %c0_i32_0, %c0_i32_1 : i32, i32, i32, i32
  }
}

module attributes {stable_mosaic.version = 11 : i64} {
  func.func @_mm_bias_act_kernel(%arg0: i32, %arg1: memref<32x64xbf16, #tpu.memory_space<vmem>>, %arg2: memref<64x128xbf16, #tpu.memory_space<vmem>>, %arg3: memref<1x128xf32, #tpu.memory_space<vmem>>, %arg4: memref<32x128xf32, #tpu.memory_space<vmem>>) attributes {dimension_semantics = [#tpu.dimension_semantics<parallel>], iteration_bounds = array<i64: 1>, scalar_prefetch = 0 : i64, scratch_operands = 0 : i64, tpu.core_type = #tpu.core_type<tc>, window_params = [{transform_indices = @transform_0, window_bounds = array<i64: 32, 64>}, {pipeline_mode = #tpu.pipeline_mode<synchronous>, transform_indices = @transform_1, window_bounds = array<i64: 64, 128>}, {pipeline_mode = #tpu.pipeline_mode<synchronous>, transform_indices = @transform_2, window_bounds = array<i64: 1, 128>}, {transform_indices = @transform_3, window_bounds = array<i64: 32, 128>}]} {
    %c0 = arith.constant 0 : index
    %c0_0 = arith.constant 0 : index
    %0 = vector.load %arg1[%c0, %c0_0] : memref<32x64xbf16, #tpu.memory_space<vmem>>, vector<32x64xbf16>
    %c0_1 = arith.constant 0 : index
    %c0_2 = arith.constant 0 : index
    %1 = vector.load %arg2[%c0_1, %c0_2] : memref<64x128xbf16, #tpu.memory_space<vmem>>, vector<64x128xbf16>
    %cst = arith.constant dense<0.000000e+00> : vector<32x128xf32>
    %2 = tpu.matmul %0, %1, %cst {dimension_numbers = #tpu.dot_dimension_numbers<[1], [0], [0], [1], [0, 0, 1, 1], [], []>} : vector<32x64xbf16>, vector<64x128xbf16>, vector<32x128xf32> -> vector<32x128xf32>
    %c0_3 = arith.constant 0 : index
    %c0_4 = arith.constant 0 : index
    %3 = vector.load %arg3[%c0_3, %c0_4] : memref<1x128xf32, #tpu.memory_space<vmem>>, vector<1x128xf32>
    %4 = vector.broadcast %3 : vector<1x128xf32> to vector<32x128xf32>
    %5 = arith.addf %2, %4 : vector<32x128xf32>
    %c0_5 = arith.constant 0 : index
    %c0_6 = arith.constant 0 : index
    %6 = vector.load %arg4[%c0_5, %c0_6] : memref<32x128xf32, #tpu.memory_space<vmem>>, vector<32x128xf32>
    tpu.vector_store %arg4[%c0_5, %c0_6], %5 {strides = array<i32>} : memref<32x128xf32, #tpu.memory_space<vmem>>, vector<32x128xf32>,
    return
  }
  func.func @transform_0(%arg0: i32) -> (i32, i32) {
    %c0_i32 = arith.constant 0 : i32
    %c0_i32_0 = arith.constant 0 : i32
    return %arg0, %c0_i32 : i32, i32
  }
  func.func @transform_1(%arg0: i32) -> (i32, i32) {
    %c0_i32 = arith.constant 0 : i32
    %c0_i32_0 = arith.constant 0 : i32
    %c0_i32_1 = arith.constant 0 : i32
    return %c0_i32, %c0_i32_0 : i32, i32
  }
  func.func @transform_2(%arg0: i32) -> (i32, i32) {
    %c0_i32 = arith.constant 0 : i32
    %c0_i32_0 = arith.constant 0 : i32
    %c0_i32_1 = arith.constant 0 : i32
    return %c0_i32, %c0_i32_0 : i32, i32
  }
  func.func @transform_3(%arg0: i32) -> (i32, i32) {
    %c0_i32 = arith.constant 0 : i32
    %c0_i32_0 = arith.constant 0 : i32
    return %arg0, %c0_i32 : i32, i32
  }
}

module attributes {stable_mosaic.version = 11 : i64} {
  func.func @_decode_kernel(%arg0: i32, %arg1: i32, %arg2: memref<1x16x128xf32, #tpu.memory_space<vmem>>, %arg3: memref<1x4x128xf32, #tpu.memory_space<vmem>>, %arg4: memref<2x128xf32, #tpu.memory_space<vmem>>, %arg5: memref<1x128xf32, #tpu.memory_space<vmem>>, %arg6: memref<1x8x128xf32, #tpu.memory_space<vmem>>) attributes {dimension_semantics = [#tpu.dimension_semantics<parallel>, #tpu.dimension_semantics<parallel>], iteration_bounds = array<i64: 2, 1>, scalar_prefetch = 0 : i64, scratch_operands = 0 : i64, tpu.core_type = #tpu.core_type<tc>, window_params = [{transform_indices = @transform_0, window_bounds = array<i64: 1, 16, 128>}, {transform_indices = @transform_1, window_bounds = array<i64: 1, 4, 128>}, {transform_indices = @transform_2, window_bounds = array<i64: 2, 128>}, {transform_indices = @transform_3, window_bounds = array<i64: 1, 128>}, {transform_indices = @transform_4, window_bounds = array<i64: 1, 8, 128>}]} {
    %c0 = arith.constant 0 : index
    %c0_0 = arith.constant 0 : index
    %c0_1 = arith.constant 0 : index
    %0 = vector.load %arg2[%c0, %c0_0, %c0_1] : memref<1x16x128xf32, #tpu.memory_space<vmem>>, vector<1x16x128xf32>
    %1 = vector.shape_cast %0 : vector<1x16x128xf32> to vector<16x128xf32>
    %c0_2 = arith.constant 0 : index
    %c0_3 = arith.constant 0 : index
    %2 = vector.load %arg5[%c0_2, %c0_3] : memref<1x128xf32, #tpu.memory_space<vmem>>, vector<1x128xf32>
    %c0_4 = arith.constant 0 : index
    %c0_5 = arith.constant 0 : index
    %3 = vector.load %arg4[%c0_4, %c0_5] : memref<2x128xf32, #tpu.memory_space<vmem>>, vector<1x128xf32>
    %c1 = arith.constant 1 : index
    %c0_6 = arith.constant 0 : index
    %4 = vector.load %arg4[%c1, %c0_6] : memref<2x128xf32, #tpu.memory_space<vmem>>, vector<1x128xf32>
    %5 = vector.extract_strided_slice %1 {offsets = [0, 0], sizes = [4, 128], strides = [1, 1]} : vector<16x128xf32> to vector<4x128xf32>
    %6 = vector.extract_strided_slice %5 {offsets = [0, 0], sizes = [1, 128], strides = [1, 1]} : vector<4x128xf32> to vector<1x128xf32>
    %7 = vector.extract_strided_slice %5 {offsets = [1, 0], sizes = [1, 128], strides = [1, 1]} : vector<4x128xf32> to vector<1x128xf32>
    %8 = arith.maximumf %6, %7 : vector<1x128xf32>
    %9 = vector.extract_strided_slice %5 {offsets = [2, 0], sizes = [1, 128], strides = [1, 1]} : vector<4x128xf32> to vector<1x128xf32>
    %10 = arith.maximumf %8, %9 : vector<1x128xf32>
    %11 = vector.extract_strided_slice %5 {offsets = [3, 0], sizes = [1, 128], strides = [1, 1]} : vector<4x128xf32> to vector<1x128xf32>
    %12 = arith.maximumf %10, %11 : vector<1x128xf32>
    %13 = vector.extract_strided_slice %5 {offsets = [0, 0], sizes = [1, 128], strides = [1, 1]} : vector<4x128xf32> to vector<1x128xf32>
    %14 = arith.subf %13, %12 : vector<1x128xf32>
    %15 = math.exp %14 : vector<1x128xf32>
    %cst = arith.constant 0.000000e+00 : f32
    %16 = vector.broadcast %cst : f32 to vector<1x128xf32>
    %17 = arith.mulf %15, %16 : vector<1x128xf32>
    %18 = vector.extract_strided_slice %5 {offsets = [1, 0], sizes = [1, 128], strides = [1, 1]} : vector<4x128xf32> to vector<1x128xf32>
    %19 = arith.subf %18, %12 : vector<1x128xf32>
    %20 = math.exp %19 : vector<1x128xf32>
    %21 = arith.addf %15, %20 : vector<1x128xf32>
    %cst_7 = arith.constant 1.000000e+00 : f32
    %22 = vector.broadcast %cst_7 : f32 to vector<1x128xf32>
    %23 = arith.mulf %20, %22 : vector<1x128xf32>
    %24 = arith.addf %17, %23 : vector<1x128xf32>
    %25 = vector.extract_strided_slice %5 {offsets = [2, 0], sizes = [1, 128], strides = [1, 1]} : vector<4x128xf32> to vector<1x128xf32>
    %26 = arith.subf %25, %12 : vector<1x128xf32>
    %27 = math.exp %26 : vector<1x128xf32>
    %28 = arith.addf %21, %27 : vector<1x128xf32>
    %cst_8 = arith.constant 2.000000e+00 : f32
    %29 = vector.broadcast %cst_8 : f32 to vector<1x128xf32>
    %30 = arith.mulf %27, %29 : vector<1x128xf32>
    %31 = arith.addf %24, %30 : vector<1x128xf32>
    %32 = vector.extract_strided_slice %5 {offsets = [3, 0], sizes = [1, 128], strides = [1, 1]} : vector<4x128xf32> to vector<1x128xf32>
    %33 = arith.subf %32, %12 : vector<1x128xf32>
    %34 = math.exp %33 : vector<1x128xf32>
    %35 = arith.addf %28, %34 : vector<1x128xf32>
    %cst_9 = arith.constant 3.000000e+00 : f32
    %36 = vector.broadcast %cst_9 : f32 to vector<1x128xf32>
    %37 = arith.mulf %34, %36 : vector<1x128xf32>
    %38 = arith.addf %31, %37 : vector<1x128xf32>
    %39 = tpu.reciprocal %35 {approx = true} : vector<1x128xf32> -> vector<1x128xf32>
    %40 = arith.mulf %38, %39 : vector<1x128xf32>
    %41 = vector.extract_strided_slice %1 {offsets = [4, 0], sizes = [4, 128], strides = [1, 1]} : vector<16x128xf32> to vector<4x128xf32>
    %42 = vector.extract_strided_slice %41 {offsets = [0, 0], sizes = [1, 128], strides = [1, 1]} : vector<4x128xf32> to vector<1x128xf32>
    %43 = vector.extract_strided_slice %41 {offsets = [1, 0], sizes = [1, 128], strides = [1, 1]} : vector<4x128xf32> to vector<1x128xf32>
    %44 = arith.maximumf %42, %43 : vector<1x128xf32>
    %45 = vector.extract_strided_slice %41 {offsets = [2, 0], sizes = [1, 128], strides = [1, 1]} : vector<4x128xf32> to vector<1x128xf32>
    %46 = arith.maximumf %44, %45 : vector<1x128xf32>
    %47 = vector.extract_strided_slice %41 {offsets = [3, 0], sizes = [1, 128], strides = [1, 1]} : vector<4x128xf32> to vector<1x128xf32>
    %48 = arith.maximumf %46, %47 : vector<1x128xf32>
    %49 = vector.extract_strided_slice %41 {offsets = [0, 0], sizes = [1, 128], strides = [1, 1]} : vector<4x128xf32> to vector<1x128xf32>
    %50 = arith.subf %49, %48 : vector<1x128xf32>
    %51 = math.exp %50 : vector<1x128xf32>
    %cst_10 = arith.constant 0.000000e+00 : f32
    %52 = vector.broadcast %cst_10 : f32 to vector<1x128xf32>
    %53 = arith.mulf %51, %52 : vector<1x128xf32>
    %54 = vector.extract_strided_slice %41 {offsets = [1, 0], sizes = [1, 128], strides = [1, 1]} : vector<4x128xf32> to vector<1x128xf32>
    %55 = arith.subf %54, %48 : vector<1x128xf32>
    %56 = math.exp %55 : vector<1x128xf32>
    %57 = arith.addf %51, %56 : vector<1x128xf32>
    %cst_11 = arith.constant 1.000000e+00 : f32
    %58 = vector.broadcast %cst_11 : f32 to vector<1x128xf32>
    %59 = arith.mulf %56, %58 : vector<1x128xf32>
    %60 = arith.addf %53, %59 : vector<1x128xf32>
    %61 = vector.extract_strided_slice %41 {offsets = [2, 0], sizes = [1, 128], strides = [1, 1]} : vector<4x128xf32> to vector<1x128xf32>
    %62 = arith.subf %61, %48 : vector<1x128xf32>
    %63 = math.exp %62 : vector<1x128xf32>
    %64 = arith.addf %57, %63 : vector<1x128xf32>
    %cst_12 = arith.constant 2.000000e+00 : f32
    %65 = vector.broadcast %cst_12 : f32 to vector<1x128xf32>
    %66 = arith.mulf %63, %65 : vector<1x128xf32>
    %67 = arith.addf %60, %66 : vector<1x128xf32>
    %68 = vector.extract_strided_slice %41 {offsets = [3, 0], sizes = [1, 128], strides = [1, 1]} : vector<4x128xf32> to vector<1x128xf32>
    %69 = arith.subf %68, %48 : vector<1x128xf32>
    %70 = math.exp %69 : vector<1x128xf32>
    %71 = arith.addf %64, %70 : vector<1x128xf32>
    %cst_13 = arith.constant 3.000000e+00 : f32
    %72 = vector.broadcast %cst_13 : f32 to vector<1x128xf32>
    %73 = arith.mulf %70, %72 : vector<1x128xf32>
    %74 = arith.addf %67, %73 : vector<1x128xf32>
    %75 = tpu.reciprocal %71 {approx = true} : vector<1x128xf32> -> vector<1x128xf32>
    %76 = arith.mulf %74, %75 : vector<1x128xf32>
    %77 = vector.extract_strided_slice %1 {offsets = [8, 0], sizes = [4, 128], strides = [1, 1]} : vector<16x128xf32> to vector<4x128xf32>
    %78 = vector.extract_strided_slice %77 {offsets = [0, 0], sizes = [1, 128], strides = [1, 1]} : vector<4x128xf32> to vector<1x128xf32>
    %79 = vector.extract_strided_slice %77 {offsets = [1, 0], sizes = [1, 128], strides = [1, 1]} : vector<4x128xf32> to vector<1x128xf32>
    %80 = arith.maximumf %78, %79 : vector<1x128xf32>
    %81 = vector.extract_strided_slice %77 {offsets = [2, 0], sizes = [1, 128], strides = [1, 1]} : vector<4x128xf32> to vector<1x128xf32>
    %82 = arith.maximumf %80, %81 : vector<1x128xf32>
    %83 = vector.extract_strided_slice %77 {offsets = [3, 0], sizes = [1, 128], strides = [1, 1]} : vector<4x128xf32> to vector<1x128xf32>
    %84 = arith.maximumf %82, %83 : vector<1x128xf32>
    %85 = vector.extract_strided_slice %77 {offsets = [0, 0], sizes = [1, 128], strides = [1, 1]} : vector<4x128xf32> to vector<1x128xf32>
    %86 = arith.subf %85, %84 : vector<1x128xf32>
    %87 = math.exp %86 : vector<1x128xf32>
    %cst_14 = arith.constant 0.000000e+00 : f32
    %88 = vector.broadcast %cst_14 : f32 to vector<1x128xf32>
    %89 = arith.mulf %87, %88 : vector<1x128xf32>
    %90 = vector.extract_strided_slice %77 {offsets = [1, 0], sizes = [1, 128], strides = [1, 1]} : vector<4x128xf32> to vector<1x128xf32>
    %91 = arith.subf %90, %84 : vector<1x128xf32>
    %92 = math.exp %91 : vector<1x128xf32>
    %93 = arith.addf %87, %92 : vector<1x128xf32>
    %cst_15 = arith.constant 1.000000e+00 : f32
    %94 = vector.broadcast %cst_15 : f32 to vector<1x128xf32>
    %95 = arith.mulf %92, %94 : vector<1x128xf32>
    %96 = arith.addf %89, %95 : vector<1x128xf32>
    %97 = vector.extract_strided_slice %77 {offsets = [2, 0], sizes = [1, 128], strides = [1, 1]} : vector<4x128xf32> to vector<1x128xf32>
    %98 = arith.subf %97, %84 : vector<1x128xf32>
    %99 = math.exp %98 : vector<1x128xf32>
    %100 = arith.addf %93, %99 : vector<1x128xf32>
    %cst_16 = arith.constant 2.000000e+00 : f32
    %101 = vector.broadcast %cst_16 : f32 to vector<1x128xf32>
    %102 = arith.mulf %99, %101 : vector<1x128xf32>
    %103 = arith.addf %96, %102 : vector<1x128xf32>
    %104 = vector.extract_strided_slice %77 {offsets = [3, 0], sizes = [1, 128], strides = [1, 1]} : vector<4x128xf32> to vector<1x128xf32>
    %105 = arith.subf %104, %84 : vector<1x128xf32>
    %106 = math.exp %105 : vector<1x128xf32>
    %107 = arith.addf %100, %106 : vector<1x128xf32>
    %cst_17 = arith.constant 3.000000e+00 : f32
    %108 = vector.broadcast %cst_17 : f32 to vector<1x128xf32>
    %109 = arith.mulf %106, %108 : vector<1x128xf32>
    %110 = arith.addf %103, %109 : vector<1x128xf32>
    %111 = tpu.reciprocal %107 {approx = true} : vector<1x128xf32> -> vector<1x128xf32>
    %112 = arith.mulf %110, %111 : vector<1x128xf32>
    %113 = vector.extract_strided_slice %1 {offsets = [12, 0], sizes = [4, 128], strides = [1, 1]} : vector<16x128xf32> to vector<4x128xf32>
    %114 = vector.extract_strided_slice %113 {offsets = [0, 0], sizes = [1, 128], strides = [1, 1]} : vector<4x128xf32> to vector<1x128xf32>
    %115 = vector.extract_strided_slice %113 {offsets = [1, 0], sizes = [1, 128], strides = [1, 1]} : vector<4x128xf32> to vector<1x128xf32>
    %116 = arith.maximumf %114, %115 : vector<1x128xf32>
    %117 = vector.extract_strided_slice %113 {offsets = [2, 0], sizes = [1, 128], strides = [1, 1]} : vector<4x128xf32> to vector<1x128xf32>
    %118 = arith.maximumf %116, %117 : vector<1x128xf32>
    %119 = vector.extract_strided_slice %113 {offsets = [3, 0], sizes = [1, 128], strides = [1, 1]} : vector<4x128xf32> to vector<1x128xf32>
    %120 = arith.maximumf %118, %119 : vector<1x128xf32>
    %121 = vector.extract_strided_slice %113 {offsets = [0, 0], sizes = [1, 128], strides = [1, 1]} : vector<4x128xf32> to vector<1x128xf32>
    %122 = arith.subf %121, %120 : vector<1x128xf32>
    %123 = math.exp %122 : vector<1x128xf32>
    %cst_18 = arith.constant 0.000000e+00 : f32
    %124 = vector.broadcast %cst_18 : f32 to vector<1x128xf32>
    %125 = arith.mulf %123, %124 : vector<1x128xf32>
    %126 = vector.extract_strided_slice %113 {offsets = [1, 0], sizes = [1, 128], strides = [1, 1]} : vector<4x128xf32> to vector<1x128xf32>
    %127 = arith.subf %126, %120 : vector<1x128xf32>
    %128 = math.exp %127 : vector<1x128xf32>
    %129 = arith.addf %123, %128 : vector<1x128xf32>
    %cst_19 = arith.constant 1.000000e+00 : f32
    %130 = vector.broadcast %cst_19 : f32 to vector<1x128xf32>
    %131 = arith.mulf %128, %130 : vector<1x128xf32>
    %132 = arith.addf %125, %131 : vector<1x128xf32>
    %133 = vector.extract_strided_slice %113 {offsets = [2, 0], sizes = [1, 128], strides = [1, 1]} : vector<4x128xf32> to vector<1x128xf32>
    %134 = arith.subf %133, %120 : vector<1x128xf32>
    %135 = math.exp %134 : vector<1x128xf32>
    %136 = arith.addf %129, %135 : vector<1x128xf32>
    %cst_20 = arith.constant 2.000000e+00 : f32
    %137 = vector.broadcast %cst_20 : f32 to vector<1x128xf32>
    %138 = arith.mulf %135, %137 : vector<1x128xf32>
    %139 = arith.addf %132, %138 : vector<1x128xf32>
    %140 = vector.extract_strided_slice %113 {offsets = [3, 0], sizes = [1, 128], strides = [1, 1]} : vector<4x128xf32> to vector<1x128xf32>
    %141 = arith.subf %140, %120 : vector<1x128xf32>
    %142 = math.exp %141 : vector<1x128xf32>
    %143 = arith.addf %136, %142 : vector<1x128xf32>
    %cst_21 = arith.constant 3.000000e+00 : f32
    %144 = vector.broadcast %cst_21 : f32 to vector<1x128xf32>
    %145 = arith.mulf %142, %144 : vector<1x128xf32>
    %146 = arith.addf %139, %145 : vector<1x128xf32>
    %147 = tpu.reciprocal %143 {approx = true} : vector<1x128xf32> -> vector<1x128xf32>
    %148 = arith.mulf %146, %147 : vector<1x128xf32>
    %149 = arith.subf %3, %40 : vector<1x128xf32>
    %150 = arith.subf %4, %76 : vector<1x128xf32>
    %151 = arith.addf %3, %112 : vector<1x128xf32>
    %152 = arith.addf %4, %148 : vector<1x128xf32>
    %153 = arith.addf %149, %151 : vector<1x128xf32>
    %cst_22 = arith.constant 5.000000e-01 : f32
    %154 = vector.broadcast %cst_22 : f32 to vector<1x128xf32>
    %155 = arith.mulf %153, %154 : vector<1x128xf32>
    %156 = arith.mulf %155, %2 : vector<1x128xf32>
    %c0_23 = arith.constant 0 : index
    %c0_24 = arith.constant 0 : index
    %c0_25 = arith.constant 0 : index
    %157 = vector.load %arg6[%c0_23, %c0_24, %c0_25] : memref<1x8x128xf32, #tpu.memory_space<vmem>>, vector<1x1x128xf32>
    %158 = vector.shape_cast %157 : vector<1x1x128xf32> to vector<1x128xf32>
    %159 = vector.shape_cast %156 : vector<1x128xf32> to vector<1x1x128xf32>
    tpu.vector_store %arg6[%c0_23, %c0_24, %c0_25], %159 {strides = array<i32>} : memref<1x8x128xf32, #tpu.memory_space<vmem>>, vector<1x1x128xf32>,
    %160 = arith.addf %150, %152 : vector<1x128xf32>
    %cst_26 = arith.constant 5.000000e-01 : f32
    %161 = vector.broadcast %cst_26 : f32 to vector<1x128xf32>
    %162 = arith.mulf %160, %161 : vector<1x128xf32>
    %163 = arith.mulf %162, %2 : vector<1x128xf32>
    %c0_27 = arith.constant 0 : index
    %c1_28 = arith.constant 1 : index
    %c0_29 = arith.constant 0 : index
    %164 = vector.load %arg6[%c0_27, %c1_28, %c0_29] : memref<1x8x128xf32, #tpu.memory_space<vmem>>, vector<1x1x128xf32>
    %165 = vector.shape_cast %164 : vector<1x1x128xf32> to vector<1x128xf32>
    %166 = vector.shape_cast %163 : vector<1x128xf32> to vector<1x1x128xf32>
    tpu.vector_store %arg6[%c0_27, %c1_28, %c0_29], %166 {strides = array<i32>} : memref<1x8x128xf32, #tpu.memory_space<vmem>>, vector<1x1x128xf32>,
    %167 = arith.subf %151, %149 : vector<1x128xf32>
    %168 = arith.mulf %167, %2 : vector<1x128xf32>
    %c0_30 = arith.constant 0 : index
    %c2 = arith.constant 2 : index
    %c0_31 = arith.constant 0 : index
    %169 = vector.load %arg6[%c0_30, %c2, %c0_31] : memref<1x8x128xf32, #tpu.memory_space<vmem>>, vector<1x1x128xf32>
    %170 = vector.shape_cast %169 : vector<1x1x128xf32> to vector<1x128xf32>
    %171 = vector.shape_cast %168 : vector<1x128xf32> to vector<1x1x128xf32>
    tpu.vector_store %arg6[%c0_30, %c2, %c0_31], %171 {strides = array<i32>} : memref<1x8x128xf32, #tpu.memory_space<vmem>>, vector<1x1x128xf32>,
    %172 = arith.subf %152, %150 : vector<1x128xf32>
    %173 = arith.mulf %172, %2 : vector<1x128xf32>
    %c0_32 = arith.constant 0 : index
    %c3 = arith.constant 3 : index
    %c0_33 = arith.constant 0 : index
    %174 = vector.load %arg6[%c0_32, %c3, %c0_33] : memref<1x8x128xf32, #tpu.memory_space<vmem>>, vector<1x1x128xf32>
    %175 = vector.shape_cast %174 : vector<1x1x128xf32> to vector<1x128xf32>
    %176 = vector.shape_cast %173 : vector<1x128xf32> to vector<1x1x128xf32>
    tpu.vector_store %arg6[%c0_32, %c3, %c0_33], %176 {strides = array<i32>} : memref<1x8x128xf32, #tpu.memory_space<vmem>>, vector<1x1x128xf32>,
    %c0_34 = arith.constant 0 : index
    %c0_35 = arith.constant 0 : index
    %c0_36 = arith.constant 0 : index
    %177 = vector.load %arg3[%c0_34, %c0_35, %c0_36] : memref<1x4x128xf32, #tpu.memory_space<vmem>>, vector<1x4x128xf32>
    %178 = vector.shape_cast %177 : vector<1x4x128xf32> to vector<4x128xf32>
    %cst_37 = arith.constant 0.000000e+00 : f32
    %179 = vector.broadcast %cst_37 : f32 to vector<4x128xf32>
    %180 = arith.subf %179, %178 : vector<4x128xf32>
    %181 = math.exp %180 : vector<4x128xf32>
    %cst_38 = arith.constant 1.000000e+00 : f32
    %182 = vector.broadcast %cst_38 : f32 to vector<4x128xf32>
    %183 = arith.addf %182, %181 : vector<4x128xf32>
    %184 = tpu.reciprocal %183 {approx = true} : vector<4x128xf32> -> vector<4x128xf32>
    %c0_39 = arith.constant 0 : index
    %c4 = arith.constant 4 : index
    %c0_40 = arith.constant 0 : index
    %185 = vector.load %arg6[%c0_39, %c4, %c0_40] : memref<1x8x128xf32, #tpu.memory_space<vmem>>, vector<1x4x128xf32>
    %186 = vector.shape_cast %185 : vector<1x4x128xf32> to vector<4x128xf32>
    %187 = vector.shape_cast %184 : vector<4x128xf32> to vector<1x4x128xf32>
    tpu.vector_store %arg6[%c0_39, %c4, %c0_40], %187 {strides = array<i32>} : memref<1x8x128xf32, #tpu.memory_space<vmem>>, vector<1x4x128xf32>,
    return
  }
  func.func @transform_0(%arg0: i32, %arg1: i32) -> (i32, i32, i32) {
    %c0_i32 = arith.constant 0 : i32
    %c0_i32_0 = arith.constant 0 : i32
    return %arg0, %c0_i32, %arg1 : i32, i32, i32
  }
  func.func @transform_1(%arg0: i32, %arg1: i32) -> (i32, i32, i32) {
    %c0_i32 = arith.constant 0 : i32
    %c0_i32_0 = arith.constant 0 : i32
    return %arg0, %c0_i32, %arg1 : i32, i32, i32
  }
  func.func @transform_2(%arg0: i32, %arg1: i32) -> (i32, i32) {
    %c0_i32 = arith.constant 0 : i32
    %c0_i32_0 = arith.constant 0 : i32
    return %c0_i32, %arg1 : i32, i32
  }
  func.func @transform_3(%arg0: i32, %arg1: i32) -> (i32, i32) {
    %c0_i32 = arith.constant 0 : i32
    %c0_i32_0 = arith.constant 0 : i32
    return %c0_i32, %arg1 : i32, i32
  }
  func.func @transform_4(%arg0: i32, %arg1: i32) -> (i32, i32, i32) {
    %c0_i32 = arith.constant 0 : i32
    %c0_i32_0 = arith.constant 0 : i32
    return %arg0, %c0_i32, %arg1 : i32, i32, i32
  }
}

</mosaic_0001>

<llo_original>
// kernel: yolo_wrapper_forward.6
$region0: #{yolo_wrapper_forward.6}
  #allocation0 [shape = 'u32[]', space=smem, size = 0x4, offset = 0x4, fixed_abs, tag = 'smem constant byte address 0x4 - core index']
  #allocation1 [shape = 'u32[72,128]{1,0:T(1,128)}', space=vmem, size = 0x9000, scoped, tag = 'internal scratch']
  %s0 = inlined_call_operand.vmem [shape: bf16[2,17,17,12], index: 0, kind: input, shape index: {}]
  %s1 = inlined_call_operand.vmem [shape: bf16[4,12,128], index: 1, kind: input, shape index: {}]
  %s2 = inlined_call_operand.vmem [shape: f32[1,128], index: 2, kind: input, shape index: {}]
  %s3 = inlined_call_operand.vmem [shape: f32[2,16,16,128], index: 3, kind: output, shape index: {}]
  %s4 = sld [smem:[#allocation0]]
  $region45: #{yolo_wrapper_forward.6} parent=0
    _
  %s6 = ssub.s32 1, %s4
  %s7 = scalar_select 0, %s6, %s4
  loop: start=0, step=1, limit=4
  $region2: #{yolo_wrapper_forward.6} parent=0 // loop_pre_header
    _
  $region3: #{yolo_wrapper_forward.6} parent=0 // loop_header
    %s9 = sphi 0, %s13
    %p10 = scmp.ge.s32.totalorder %s9, 4
    %s19 = sphi 0, %s21
    %s22 = sphi 0, %s19
    %s23 = sphi 0, %s22
    %s39 = sphi 0, %s23
    %s43 = sphi 0, %s43
    %s45 = sphi 0, %s43
    %s46 = sphi 0, %s45
    %s60 = sphi 0, %s46
    %s64 = sphi 0, %s64
    %s66 = sphi 0, %s64
    %s67 = sphi 0, %s66
    %s81 = sphi 0, %s67
    %s87 = sphi 0, %s89
    %s90 = sphi 0, %s87
    %s91 = sphi 0, %s90
    %s107 = sphi 0, %s91
  $region4: #{yolo_wrapper_forward.6} parent=0 // loop_header_branch
    %12 = sbr.rel (%p10) target = $region8
  $region5: #{yolo_wrapper_forward.6} parent=0 // loop_body
    %s14 = ssub.s32 %s9, 1
    %s15 = ssub.s32 %s9, 2
    %s16 = sadd.s32 %s9, 1
    %s17 = ssub.s32 %s9, %s16
    %p18 = scmp.eq.s32.totalorder %s17, 0
    %s20 = sadd.s32 %s19, 1
    %s21 = scalar_select %p18, %s19, %s20
    %p24 = pneg %p18
    %p25 = scmp.eq.s32.totalorder %s9, 1
    %p26 = por %p24, %p25
    %p27 = scmp.ne.s32.totalorder %s19, %s22
    %p28 = scmp.eq.s32.totalorder %s9, 0
    %p29 = por %p27, %p28
    %p30 = scmp.ne.s32.totalorder %s19, %s22
    %p31 = scmp.eq.s32.totalorder %s14, 1
    %p32 = por %p30, %p31
    %p33 = scmp.ne.s32.totalorder %s22, %s23
    %p34 = scmp.eq.s32.totalorder %s14, 0
    %p35 = por %p33, %p34
    %p36 = scmp.ne.s32.totalorder %s22, %s23
    %p37 = scmp.eq.s32.totalorder %s15, 1
    %p38 = por %p36, %p37
    %p40 = scmp.ne.s32.totalorder %s23, %s39
    %p41 = scmp.eq.s32.totalorder %s15, 0
    %p42 = por %p40, %p41
    %s44 = sadd.s32 %s43, 1
    %p47 = scmp.eq.s32.totalorder %s9, 1
    %p48 = scmp.ne.s32.totalorder %s43, %s45
    %p49 = scmp.eq.s32.totalorder %s9, 0
    %p50 = por %p48, %p49
    %p51 = scmp.ne.s32.totalorder %s43, %s45
    %p52 = scmp.eq.s32.totalorder %s14, 1
    %p53 = por %p51, %p52
    %p54 = scmp.ne.s32.totalorder %s45, %s46
    %p55 = scmp.eq.s32.totalorder %s14, 0
    %p56 = por %p54, %p55
    %p57 = scmp.ne.s32.totalorder %s45, %s46
    %p58 = scmp.eq.s32.totalorder %s15, 1
    %p59 = por %p57, %p58
    %p61 = scmp.ne.s32.totalorder %s46, %s60
    %p62 = scmp.eq.s32.totalorder %s15, 0
    %p63 = por %p61, %p62
    %s65 = sadd.s32 %s64, 1
    %p68 = scmp.eq.s32.totalorder %s9, 1
    %p69 = scmp.ne.s32.totalorder %s64, %s66
    %p70 = scmp.eq.s32.totalorder %s9, 0
    %p71 = por %p69, %p70
    %p72 = scmp.ne.s32.totalorder %s64, %s66
    %p73 = scmp.eq.s32.totalorder %s14, 1
    %p74 = por %p72, %p73
    %p75 = scmp.ne.s32.totalorder %s66, %s67
    %p76 = scmp.eq.s32.totalorder %s14, 0
    %p77 = por %p75, %p76
    %p78 = scmp.ne.s32.totalorder %s66, %s67
    %p79 = scmp.eq.s32.totalorder %s15, 1
    %p80 = por %p78, %p79
    %p82 = scmp.ne.s32.totalorder %s67, %s81
    %p83 = scmp.eq.s32.totalorder %s15, 0
    %p84 = por %p82, %p83
    %s85 = ssub.s32 %s9, %s16
    %p86 = scmp.eq.s32.totalorder %s85, 0
    %s88 = sadd.s32 %s87, 1
    %s89 = scalar_select %p86, %s87, %s88
    %p92 = pneg %p86
    %p93 = scmp.eq.s32.totalorder %s9, 1
    %p94 = por %p92, %p93
    %p95 = scmp.ne.s32.totalorder %s87, %s90
    %p96 = scmp.eq.s32.totalorder %s9, 0
    %p97 = por %p95, %p96
    %p98 = scmp.ne.s32.totalorder %s87, %s90
    %p99 = scmp.eq.s32.totalorder %s14, 1
    %p100 = por %p98, %p99
    %p101 = scmp.ne.s32.totalorder %s90, %s91
    %p102 = scmp.eq.s32.totalorder %s14, 0
    %p103 = por %p101, %p102
    %p104 = scmp.ne.s32.totalorder %s90, %s91
    %p105 = scmp.eq.s32.totalorder %s15, 1
    %p106 = por %p104, %p105
    %p108 = scmp.ne.s32.totalorder %s91, %s107
    %p109 = scmp.eq.s32.totalorder %s15, 0
    %p110 = por %p108, %p109
    %p111 = scmp.le.s32.totalorder 1, %s9
    %p112 = scmp.lt.s32.totalorder %s9, 3
    %p113 = pnand %p111, %p112
    %p114 = pneg %p113
    // Predicated region
    $region9: #{yolo_wrapper_forward.6} parent=5 // pred_check
      _
    $region10: #{yolo_wrapper_forward.6} parent=5 // pred_check_branch
      %116 = sbr.rel (%p113) target = $region12
    $region11: #{yolo_wrapper_forward.6} parent=5 // pred_region
      %s117 = ssub.s32 %s9, 1
      // Predicated region
      $region13: #{yolo_wrapper_forward.6} parent=11 // pred_check
        %p118 = pneg %p56
      $region14: #{yolo_wrapper_forward.6} parent=11 // pred_check_branch
        %120 = sbr.rel (%p118) target = $region16
      $region15: #{yolo_wrapper_forward.6} parent=11 // pred_region
        _
      $region16: #{yolo_wrapper_forward.6} parent=11 // pred_fallthru
        _
      // Predicated region
      $region17: #{yolo_wrapper_forward.6} parent=11 // pred_check
        %p121 = pneg %p77
      $region18: #{yolo_wrapper_forward.6} parent=11 // pred_check_branch
        %123 = sbr.rel (%p121) target = $region20
      $region19: #{yolo_wrapper_forward.6} parent=11 // pred_region
        _
      $region20: #{yolo_wrapper_forward.6} parent=11 // pred_fallthru
        _
    $region12: #{yolo_wrapper_forward.6} parent=5 // pred_fallthru
      _
    %p124 = scmp.lt.s32.totalorder %s9, 2
    // Predicated region
    $region21: #{yolo_wrapper_forward.6} parent=5 // pred_check
      %p125 = pneg %p124
    $region22: #{yolo_wrapper_forward.6} parent=5 // pred_check_branch
      %127 = sbr.rel (%p125) target = $region24
    $region23: #{yolo_wrapper_forward.6} parent=5 // pred_region
      // Predicated region
      $region25: #{yolo_wrapper_forward.6} parent=23 // pred_check
        %p128 = pneg %p29
      $region26: #{yolo_wrapper_forward.6} parent=23 // pred_check_branch
        %130 = sbr.rel (%p128) target = $region28
      $region27: #{yolo_wrapper_forward.6} parent=23 // pred_region
        %p131 = scmp.lt.s32.totalorder %s9, 1
        %s132 = scalar_select %p131, %s9, 1
        %s133 = smul.addr %s132, 51
        %s134 = smul.addr %s133, 4
        %s135 = scalar_lea.vmem %s0, %s134
      $region28: #{yolo_wrapper_forward.6} parent=23 // pred_fallthru
        _
    $region24: #{yolo_wrapper_forward.6} parent=5 // pred_fallthru
      _
    %p136 = scmp.le.s32.totalorder 1, %s9
    %p137 = scmp.lt.s32.totalorder %s9, 3
    %p138 = pnand %p136, %p137
    %p139 = pneg %p138
    // Predicated region
    $region29: #{yolo_wrapper_forward.6} parent=5 // pred_check
      _
    $region30: #{yolo_wrapper_forward.6} parent=5 // pred_check_branch
      %141 = sbr.rel (%p138) target = $region32
    $region31: #{yolo_wrapper_forward.6} parent=5 // pred_region
      %s142 = ssub.s32 %s9, 1
      %p143 = scmp.lt.s32.totalorder %s14, 1
      %s144 = scalar_select %p143, %s14, 1
      %s145 = smul.addr %s144, 51
      %s146 = smul.addr %s145, 4
      %s147 = scalar_lea.vmem %s0, %s146
      %p148 = pneg %p35
      %p149 = pneg %p32
      %p150 = pneg %p56
      %p151 = pneg %p53
      %p152 = pneg %p77
      %p153 = pneg %p74
      %p154 = pneg %p103
      %p155 = pneg %p100
      %p156 = scmp.lt.s32.totalorder %s14, 1
      %s157 = scalar_select %p156, %s14, 1
      %s158 = smul.addr %s157, 32
      %s159 = smul.addr %s158, 8
      %s160 = scalar_lea.vmem %s3, %s159
      %p161 = scmp.lt.s32.totalorder %s14, 1
      %s162 = scalar_select %p161, %s14, 1
      %s163 = smul.addr %s162, 51
      %s164 = smul.addr %s163, 4
      %s165 = scalar_lea.vmem %s0, %s164
      %p166 = scmp.lt.s32.totalorder %s14, 1
      %s167 = scalar_select %p166, %s14, 1
      %s168 = smul.addr %s167, 32
      %s169 = smul.addr %s168, 8
      %s170 = scalar_lea.vmem %s3, %s169
      %v172 = vld [vmem:[%s2] sm:$0x1]
      %v173 = vld [vmem:[%s165] sm:$0xf]
      %v174 = vld [vmem:[%s165 + $0x4] sm:$0xf]
      %v175 = vld [vmem:[%s165 + $0x8] sm:$0x1]
      %v176 = vld [vmem:[%s1] sm:$0xf]
      %v177 = vld [vmem:[%s1 + $0x4] sm:$0x3]
      %s178 = scalar_lea.vmem %s1, 8
      %v179 = vld [vmem:[%s178] sm:$0xf]
      %v180 = vld [vmem:[%s178 + $0x4] sm:$0x3]
      %v184 = vunpack.c.l.b16 %v173
      %v185 = vunpack.c.l.b16 %v174
      %v186 = vunpack.c.l.b16 %v175
      %v187 = vpack.c.b16 %v185, %v184
      %v188 = vpack.c.b16 %v186, %v186
      %vm189 = vsmask.f32 7424
      %v191 = vshrl.u32 %v187, 16
      %v193 = vshll.u32 %v187, 16
      %v195 = vrot.slane %v193, 1
      %v196 = vor.u32 %v191, %v195
      %v198 = vshll.u32 %v188, 16
      %v200 = vrot.slane %v198, 1
      %v201 = vsel %vm189, %v196, %v200
      %v204 = vunpack.c.l.b16 %v179
      %v205 = vunpack.c.l.b16 %v180
      %v206 = vpack.c.b16 %v205, %v204
      %vm207 = vcmask 97280
      %v209 = vsel %vm207, %v201, 0
      %vm211 = vcmask 1045504
      %v213 = vsel %vm211, %v206, 0
      %215 = vmatpush.bf16.msra.mxu0 0
      %216 = vmatpush.bf16.msra.mxu0 0
      %217 = vmatpush.bf16.msra.mxu0 0
      %218 = vmatpush.bf16.msra.mxu0 0
      %219 = vmatpush.bf16.msra.mxu0 0
      %220 = vmatpush.bf16.msra.mxu0 0
      %221 = vmatpush.bf16.msra.mxu0 0
      %222 = vmatpush.bf16.msra.mxu0 %v213
      %223 = vmatmul.bf16.gmra.mxu0 %v209
      %v224 = vpop.f32.mrf.mxu0
      %v225 = vadd.f32 0.0, %v224
      %v226 = vpop.f32.mrf.mxu0
      %v227 = vadd.f32 0.0, %v226
      %228 = vdwg.mxu0
      %v231 = vunpack.c.l.b16 %v176
      %v232 = vunpack.c.l.b16 %v177
      %v233 = vpack.c.b16 %v232, %v231
      %v234 = vsel %vm207, %v187, 0
      %v237 = vsel %vm211, %v233, 0
      %239 = vmatpush.bf16.msra.mxu0 0
      %240 = vmatpush.bf16.msra.mxu0 0
      %241 = vmatpush.bf16.msra.mxu0 0
      %242 = vmatpush.bf16.msra.mxu0 0
      %243 = vmatpush.bf16.msra.mxu0 0
      %244 = vmatpush.bf16.msra.mxu0 0
      %245 = vmatpush.bf16.msra.mxu0 0
      %246 = vmatpush.bf16.msra.mxu0 %v237
      %247 = vmatmul.bf16.gmra.mxu0 %v234
      %v248 = vpop.f32.mrf.mxu0
      %v249 = vadd.f32 %v225, %v248
      %v250 = vpop.f32.mrf.mxu0
      %v251 = vadd.f32 %v227, %v250
      %252 = vdwg.mxu0
      %s253 = scalar_lea.vmem %s165, 12
      %v254 = vld [vmem:[%s253] sm:$0xf]
      %v255 = vld [vmem:[%s253 + $0x4] sm:$0xf]
      %v256 = vld [vmem:[%s253 + $0x8] sm:$0x1]
      %s257 = scalar_lea.vmem %s1, 16
      %v258 = vld [vmem:[%s257] sm:$0xf]
      %v259 = vld [vmem:[%s257 + $0x4] sm:$0x3]
      %v262 = vunpack.c.l.b16 %v254
      %v263 = vunpack.c.l.b16 %v255
      %v264 = vpack.c.b16 %v263, %v262
      %v267 = vunpack.c.l.b16 %v258
      %v268 = vunpack.c.l.b16 %v259
      %v269 = vpack.c.b16 %v268, %v267
      %v271 = vsel %vm207, %v264, 0
      %v274 = vsel %vm211, %v269, 0
      %276 = vmatpush.bf16.msra.mxu0 0
      %277 = vmatpush.bf16.msra.mxu0 0
      %278 = vmatpush.bf16.msra.mxu0 0
      %279 = vmatpush.bf16.msra.mxu0 0
      %280 = vmatpush.bf16.msra.mxu0 0
      %281 = vmatpush.bf16.msra.mxu0 0
      %282 = vmatpush.bf16.msra.mxu0 0
      %283 = vmatpush.bf16.msra.mxu0 %v274
      %284 = vmatmul.bf16.gmra.mxu0 %v271
      %v285 = vpop.f32.mrf.mxu0
      %v286 = vadd.f32 0.0, %v285
      %v287 = vpop.f32.mrf.mxu0
      %v288 = vadd.f32 0.0, %v287
      %289 = vdwg.mxu0
      %v290 = vadd.f32 %v249, %v286
      %v291 = vadd.f32 %v251, %v288
      %s292 = scalar_lea.vmem %s1, 24
      %v293 = vld [vmem:[%s292] sm:$0xf]
      %v294 = vld [vmem:[%s292 + $0x4] sm:$0x3]
      %v296 = vunpack.c.l.b16 %v256
      %v297 = vpack.c.b16 %v296, %v296
      %v298 = vshrl.u32 %v264, 16
      %v300 = vshll.u32 %v264, 16
      %v302 = vrot.slane %v300, 1
      %v303 = vor.u32 %v298, %v302
      %v305 = vshll.u32 %v297, 16
      %v307 = vrot.slane %v305, 1
      %v308 = vsel %vm189, %v303, %v307
      %v311 = vunpack.c.l.b16 %v293
      %v312 = vunpack.c.l.b16 %v294
      %v313 = vpack.c.b16 %v312, %v311
      %v315 = vsel %vm207, %v308, 0
      %v318 = vsel %vm211, %v313, 0
      %320 = vmatpush.bf16.msra.mxu0 0
      %321 = vmatpush.bf16.msra.mxu0 0
      %322 = vmatpush.bf16.msra.mxu0 0
      %323 = vmatpush.bf16.msra.mxu0 0
      %324 = vmatpush.bf16.msra.mxu0 0
      %325 = vmatpush.bf16.msra.mxu0 0
      %326 = vmatpush.bf16.msra.mxu0 0
      %327 = vmatpush.bf16.msra.mxu0 %v318
      %328 = vmatmul.bf16.gmra.mxu0 %v315
      %v329 = vpop.f32.mrf.mxu0
      %v330 = vadd.f32 0.0, %v329
      %v331 = vpop.f32.mrf.mxu0
      %v332 = vadd.f32 0.0, %v331
      %333 = vdwg.mxu0
      %v334 = vadd.f32 %v290, %v330
      %v335 = vadd.f32 %v291, %v332
      %v337 = vperm.slane %v172, 0
      %v339 = vadd.f32 %v334, %v337
      %v340 = vadd.f32 %v335, %v337
      %v341 = vsub.f32 0.0, %v339
      %v342 = vsub.f32 0.0, %v340
      %v343 = vmul.f32 %v341, 1.442695
      %v344 = vpow.pop %v343
      %v345 = vmul.f32 %v342, 1.442695
      %v346 = vpow.pop %v345
      %v347 = vadd.f32 %v344, 1.0
      %v348 = vadd.f32 %v346, 1.0
      %v349 = vrcp.pop %v347
      %v350 = vrcp.pop %v348
      %v351 = vmul.f32 %v339, %v349
      %v352 = vmul.f32 %v340, %v350
      %353 = vst [vmem:[%s170] sm:$0xff] %v351
      %354 = vst [vmem:[%s170 + $0x8] sm:$0xff] %v352
      %v355 = vld [vmem:[%s253] sm:$0xf]
      %v356 = vld [vmem:[%s253 + $0x4] sm:$0xf]
      %v357 = vld [vmem:[%s253 + $0x8] sm:$0x1]
      %v358 = vld [vmem:[%s1] sm:$0xf]
      %v359 = vld [vmem:[%s1 + $0x4] sm:$0x3]
      %v360 = vld [vmem:[%s178] sm:$0xf]
      %v361 = vld [vmem:[%s178 + $0x4] sm:$0x3]
      %v365 = vunpack.c.l.b16 %v355
      %v366 = vunpack.c.l.b16 %v356
      %v367 = vunpack.c.l.b16 %v357
      %v368 = vpack.c.b16 %v366, %v365
      %v369 = vpack.c.b16 %v367, %v367
      %v371 = vshrl.u32 %v368, 16
      %v373 = vshll.u32 %v368, 16
      %v375 = vrot.slane %v373, 1
      %v376 = vor.u32 %v371, %v375
      %v378 = vshll.u32 %v369, 16
      %v380 = vrot.slane %v378, 1
      %v381 = vsel %vm189, %v376, %v380
      %v384 = vunpack.c.l.b16 %v360
      %v385 = vunpack.c.l.b16 %v361
      %v386 = vpack.c.b16 %v385, %v384
      %v388 = vsel %vm207, %v381, 0
      %v391 = vsel %vm211, %v386, 0
      %393 = vmatpush.bf16.msra.mxu0 0
      %394 = vmatpush.bf16.msra.mxu0 0
      %395 = vmatpush.bf16.msra.mxu0 0
      %396 = vmatpush.bf16.msra.mxu0 0
      %397 = vmatpush.bf16.msra.mxu0 0
      %398 = vmatpush.bf16.msra.mxu0 0
      %399 = vmatpush.bf16.msra.mxu0 0
      %400 = vmatpush.bf16.msra.mxu0 %v391
      %401 = vmatmul.bf16.gmra.mxu0 %v388
      %v402 = vpop.f32.mrf.mxu0
      %v403 = vadd.f32 0.0, %v402
      %v404 = vpop.f32.mrf.mxu0
      %v405 = vadd.f32 0.0, %v404
      %406 = vdwg.mxu0
      %v409 = vunpack.c.l.b16 %v358
      %v410 = vunpack.c.l.b16 %v359
      %v411 = vpack.c.b16 %v410, %v409
      %v412 = vsel %vm207, %v368, 0
      %v415 = vsel %vm211, %v411, 0
      %417 = vmatpush.bf16.msra.mxu0 0
      %418 = vmatpush.bf16.msra.mxu0 0
      %419 = vmatpush.bf16.msra.mxu0 0
      %420 = vmatpush.bf16.msra.mxu0 0
      %421 = vmatpush.bf16.msra.mxu0 0
      %422 = vmatpush.bf16.msra.mxu0 0
      %423 = vmatpush.bf16.msra.mxu0 0
      %424 = vmatpush.bf16.msra.mxu0 %v415
      %425 = vmatmul.bf16.gmra.mxu0 %v412
      %v426 = vpop.f32.mrf.mxu0
      %v427 = vadd.f32 %v403, %v426
      %v428 = vpop.f32.mrf.mxu0
      %v429 = vadd.f32 %v405, %v428
      %430 = vdwg.mxu0
      %s431 = scalar_lea.vmem %s165, 24
      %v432 = vld [vmem:[%s431] sm:$0xf]
      %v433 = vld [vmem:[%s431 + $0x4] sm:$0xf]
      %v434 = vld [vmem:[%s431 + $0x8] sm:$0x1]
      %v435 = vld [vmem:[%s257] sm:$0xf]
      %v436 = vld [vmem:[%s257 + $0x4] sm:$0x3]
      %v439 = vunpack.c.l.b16 %v432
      %v440 = vunpack.c.l.b16 %v433
      %v441 = vpack.c.b16 %v440, %v439
      %v444 = vunpack.c.l.b16 %v435
      %v445 = vunpack.c.l.b16 %v436
      %v446 = vpack.c.b16 %v445, %v444
      %v448 = vsel %vm207, %v441, 0
      %v451 = vsel %vm211, %v446, 0
      %453 = vmatpush.bf16.msra.mxu0 0
      %454 = vmatpush.bf16.msra.mxu0 0
      %455 = vmatpush.bf16.msra.mxu0 0
      %456 = vmatpush.bf16.msra.mxu0 0
      %457 = vmatpush.bf16.msra.mxu0 0
      %458 = vmatpush.bf16.msra.mxu0 0
      %459 = vmatpush.bf16.msra.mxu0 0
      %460 = vmatpush.bf16.msra.mxu0 %v451
      %461 = vmatmul.bf16.gmra.mxu0 %v448
      %v462 = vpop.f32.mrf.mxu0
      %v463 = vadd.f32 0.0, %v462
      %v464 = vpop.f32.mrf.mxu0
      %v465 = vadd.f32 0.0, %v464
      %466 = vdwg.mxu0
      %v467 = vadd.f32 %v427, %v463
      %v468 = vadd.f32 %v429, %v465
      %v469 = vld [vmem:[%s292] sm:$0xf]
      %v470 = vld [vmem:[%s292 + $0x4] sm:$0x3]
      %v472 = vunpack.c.l.b16 %v434
      %v473 = vpack.c.b16 %v472, %v472
      %v474 = vshrl.u32 %v441, 16
      %v476 = vshll.u32 %v441, 16
      %v478 = vrot.slane %v476, 1
      %v479 = vor.u32 %v474, %v478
      %v481 = vshll.u32 %v473, 16
      %v483 = vrot.slane %v481, 1
      %v484 = vsel %vm189, %v479, %v483
      %v487 = vunpack.c.l.b16 %v469
      %v488 = vunpack.c.l.b16 %v470
      %v489 = vpack.c.b16 %v488, %v487
      %v491 = vsel %vm207, %v484, 0
      %v494 = vsel %vm211, %v489, 0
      %496 = vmatpush.bf16.msra.mxu0 0
      %497 = vmatpush.bf16.msra.mxu0 0
      %498 = vmatpush.bf16.msra.mxu0 0
      %499 = vmatpush.bf16.msra.mxu0 0
      %500 = vmatpush.bf16.msra.mxu0 0
      %501 = vmatpush.bf16.msra.mxu0 0
      %502 = vmatpush.bf16.msra.mxu0 0
      %503 = vmatpush.bf16.msra.mxu0 %v494
      %504 = vmatmul.bf16.gmra.mxu0 %v491
      %v505 = vpop.f32.mrf.mxu0
      %v506 = vadd.f32 0.0, %v505
      %v507 = vpop.f32.mrf.mxu0
      %v508 = vadd.f32 0.0, %v507
      %509 = vdwg.mxu0
      %v510 = vadd.f32 %v467, %v506
      %v511 = vadd.f32 %v468, %v508
      %v512 = vadd.f32 %v510, %v337
      %v513 = vadd.f32 %v511, %v337
      %v514 = vsub.f32 0.0, %v512
      %v515 = vsub.f32 0.0, %v513
      %v516 = vmul.f32 %v514, 1.442695
      %v517 = vpow.pop %v516
      %v518 = vmul.f32 %v515, 1.442695
      %v519 = vpow.pop %v518
      %v520 = vadd.f32 %v517, 1.0
      %v521 = vadd.f32 %v519, 1.0
      %v522 = vrcp.pop %v520
      %v523 = vrcp.pop %v521
      %v524 = vmul.f32 %v512, %v522
      %v525 = vmul.f32 %v513, %v523
      %s526 = scalar_lea.vmem %s170, 16
      %527 = vst [vmem:[%s526] sm:$0xff] %v524
      %528 = vst [vmem:[%s526 + $0x8] sm:$0xff] %v525
      %v529 = vld [vmem:[%s431] sm:$0xf]
      %v530 = vld [vmem:[%s431 + $0x4] sm:$0xf]
      %v531 = vld [vmem:[%s431 + $0x8] sm:$0x1]
      %v532 = vld [vmem:[%s1] sm:$0xf]
      %v533 = vld [vmem:[%s1 + $0x4] sm:$0x3]
      %v534 = vld [vmem:[%s178] sm:$0xf]
      %v535 = vld [vmem:[%s178 + $0x4] sm:$0x3]
      %v539 = vunpack.c.l.b16 %v529
      %v540 = vunpack.c.l.b16 %v530
      %v541 = vunpack.c.l.b16 %v531
      %v542 = vpack.c.b16 %v540, %v539
      %v543 = vpack.c.b16 %v541, %v541
      %v545 = vshrl.u32 %v542, 16
      %v547 = vshll.u32 %v542, 16
      %v549 = vrot.slane %v547, 1
      %v550 = vor.u32 %v545, %v549
      %v552 = vshll.u32 %v543, 16
      %v554 = vrot.slane %v552, 1
      %v555 = vsel %vm189, %v550, %v554
      %v558 = vunpack.c.l.b16 %v534
      %v559 = vunpack.c.l.b16 %v535
      %v560 = vpack.c.b16 %v559, %v558
      %v562 = vsel %vm207, %v555, 0
      %v565 = vsel %vm211, %v560, 0
      %567 = vmatpush.bf16.msra.mxu0 0
      %568 = vmatpush.bf16.msra.mxu0 0
      %569 = vmatpush.bf16.msra.mxu0 0
      %570 = vmatpush.bf16.msra.mxu0 0
      %571 = vmatpush.bf16.msra.mxu0 0
      %572 = vmatpush.bf16.msra.mxu0 0
      %573 = vmatpush.bf16.msra.mxu0 0
      %574 = vmatpush.bf16.msra.mxu0 %v565
      %575 = vmatmul.bf16.gmra.mxu0 %v562
      %v576 = vpop.f32.mrf.mxu0
      %v577 = vadd.f32 0.0, %v576
      %v578 = vpop.f32.mrf.mxu0
      %v579 = vadd.f32 0.0, %v578
      %580 = vdwg.mxu0
      %v583 = vunpack.c.l.b16 %v532
      %v584 = vunpack.c.l.b16 %v533
      %v585 = vpack.c.b16 %v584, %v583
      %v586 = vsel %vm207, %v542, 0
      %v589 = vsel %vm211, %v585, 0
      %591 = vmatpush.bf16.msra.mxu0 0
      %592 = vmatpush.bf16.msra.mxu0 0
      %593 = vmatpush.bf16.msra.mxu0 0
      %594 = vmatpush.bf16.msra.mxu0 0
      %595 = vmatpush.bf16.msra.mxu0 0
      %596 = vmatpush.bf16.msra.mxu0 0
      %597 = vmatpush.bf16.msra.mxu0 0
      %598 = vmatpush.bf16.msra.mxu0 %v589
      %599 = vmatmul.bf16.gmra.mxu0 %v586
      %v600 = vpop.f32.mrf.mxu0
      %v601 = vadd.f32 %v577, %v600
      %v602 = vpop.f32.mrf.mxu0
      %v603 = vadd.f32 %v579, %v602
      %604 = vdwg.mxu0
      %s605 = scalar_lea.vmem %s165, 36
      %v606 = vld [vmem:[%s605] sm:$0xf]
      %v607 = vld [vmem:[%s605 + $0x4] sm:$0xf]
      %v608 = vld [vmem:[%s605 + $0x8] sm:$0x1]
      %v609 = vld [vmem:[%s257] sm:$0xf]
      %v610 = vld [vmem:[%s257 + $0x4] sm:$0x3]
      %v613 = vunpack.c.l.b16 %v606
      %v614 = vunpack.c.l.b16 %v607
      %v615 = vpack.c.b16 %v614, %v613
      %v618 = vunpack.c.l.b16 %v609
      %v619 = vunpack.c.l.b16 %v610
      %v620 = vpack.c.b16 %v619, %v618
      %v622 = vsel %vm207, %v615, 0
      %v625 = vsel %vm211, %v620, 0
      %627 = vmatpush.bf16.msra.mxu0 0
      %628 = vmatpush.bf16.msra.mxu0 0
      %629 = vmatpush.bf16.msra.mxu0 0
      %630 = vmatpush.bf16.msra.mxu0 0
      %631 = vmatpush.bf16.msra.mxu0 0
      %632 = vmatpush.bf16.msra.mxu0 0
      %633 = vmatpush.bf16.msra.mxu0 0
      %634 = vmatpush.bf16.msra.mxu0 %v625
      %635 = vmatmul.bf16.gmra.mxu0 %v622
      %v636 = vpop.f32.mrf.mxu0
      %v637 = vadd.f32 0.0, %v636
      %v638 = vpop.f32.mrf.mxu0
      %v639 = vadd.f32 0.0, %v638
      %640 = vdwg.mxu0
      %v641 = vadd.f32 %v601, %v637
      %v642 = vadd.f32 %v603, %v639
      %v643 = vld [vmem:[%s292] sm:$0xf]
      %v644 = vld [vmem:[%s292 + $0x4] sm:$0x3]
      %v646 = vunpack.c.l.b16 %v608
      %v647 = vpack.c.b16 %v646, %v646
      %v648 = vshrl.u32 %v615, 16
      %v650 = vshll.u32 %v615, 16
      %v652 = vrot.slane %v650, 1
      %v653 = vor.u32 %v648, %v652
      %v655 = vshll.u32 %v647, 16
      %v657 = vrot.slane %v655, 1
      %v658 = vsel %vm189, %v653, %v657
      %v661 = vunpack.c.l.b16 %v643
      %v662 = vunpack.c.l.b16 %v644
      %v663 = vpack.c.b16 %v662, %v661
      %v665 = vsel %vm207, %v658, 0
      %v668 = vsel %vm211, %v663, 0
      %670 = vmatpush.bf16.msra.mxu0 0
      %671 = vmatpush.bf16.msra.mxu0 0
      %672 = vmatpush.bf16.msra.mxu0 0
      %673 = vmatpush.bf16.msra.mxu0 0
      %674 = vmatpush.bf16.msra.mxu0 0
      %675 = vmatpush.bf16.msra.mxu0 0
      %676 = vmatpush.bf16.msra.mxu0 0
      %677 = vmatpush.bf16.msra.mxu0 %v668
      %678 = vmatmul.bf16.gmra.mxu0 %v665
      %v679 = vpop.f32.mrf.mxu0
      %v680 = vadd.f32 0.0, %v679
      %v681 = vpop.f32.mrf.mxu0
      %v682 = vadd.f32 0.0, %v681
      %683 = vdwg.mxu0
      %v684 = vadd.f32 %v641, %v680
      %v685 = vadd.f32 %v642, %v682
      %v686 = vadd.f32 %v684, %v337
      %v687 = vadd.f32 %v685, %v337
      %v688 = vsub.f32 0.0, %v686
      %v689 = vsub.f32 0.0, %v687
      %v690 = vmul.f32 %v688, 1.442695
      %v691 = vpow.pop %v690
      %v692 = vmul.f32 %v689, 1.442695
      %v693 = vpow.pop %v692
      %v694 = vadd.f32 %v691, 1.0
      %v695 = vadd.f32 %v693, 1.0
      %v696 = vrcp.pop %v694
      %v697 = vrcp.pop %v695
      %v698 = vmul.f32 %v686, %v696
      %v699 = vmul.f32 %v687, %v697
      %s700 = scalar_lea.vmem %s170, 32
      %701 = vst [vmem:[%s700] sm:$0xff] %v698
      %702 = vst [vmem:[%s700 + $0x8] sm:$0xff] %v699
      %v703 = vld [vmem:[%s605] sm:$0xf]
      %v704 = vld [vmem:[%s605 + $0x4] sm:$0xf]
      %v705 = vld [vmem:[%s605 + $0x8] sm:$0x1]
      %v706 = vld [vmem:[%s1] sm:$0xf]
      %v707 = vld [vmem:[%s1 + $0x4] sm:$0x3]
      %v708 = vld [vmem:[%s178] sm:$0xf]
      %v709 = vld [vmem:[%s178 + $0x4] sm:$0x3]
      %v713 = vunpack.c.l.b16 %v703
      %v714 = vunpack.c.l.b16 %v704
      %v715 = vunpack.c.l.b16 %v705
      %v716 = vpack.c.b16 %v714, %v713
      %v717 = vpack.c.b16 %v715, %v715
      %v719 = vshrl.u32 %v716, 16
      %v721 = vshll.u32 %v716, 16
      %v723 = vrot.slane %v721, 1
      %v724 = vor.u32 %v719, %v723
      %v726 = vshll.u32 %v717, 16
      %v728 = vrot.slane %v726, 1
      %v729 = vsel %vm189, %v724, %v728
      %v732 = vunpack.c.l.b16 %v708
      %v733 = vunpack.c.l.b16 %v709
      %v734 = vpack.c.b16 %v733, %v732
      %v736 = vsel %vm207, %v729, 0
      %v739 = vsel %vm211, %v734, 0
      %741 = vmatpush.bf16.msra.mxu0 0
      %742 = vmatpush.bf16.msra.mxu0 0
      %743 = vmatpush.bf16.msra.mxu0 0
      %744 = vmatpush.bf16.msra.mxu0 0
      %745 = vmatpush.bf16.msra.mxu0 0
      %746 = vmatpush.bf16.msra.mxu0 0
      %747 = vmatpush.bf16.msra.mxu0 0
      %748 = vmatpush.bf16.msra.mxu0 %v739
      %749 = vmatmul.bf16.gmra.mxu0 %v736
      %v750 = vpop.f32.mrf.mxu0
      %v751 = vadd.f32 0.0, %v750
      %v752 = vpop.f32.mrf.mxu0
      %v753 = vadd.f32 0.0, %v752
      %754 = vdwg.mxu0
      %v757 = vunpack.c.l.b16 %v706
      %v758 = vunpack.c.l.b16 %v707
      %v759 = vpack.c.b16 %v758, %v757
      %v760 = vsel %vm207, %v716, 0
      %v763 = vsel %vm211, %v759, 0
      %765 = vmatpush.bf16.msra.mxu0 0
      %766 = vmatpush.bf16.msra.mxu0 0
      %767 = vmatpush.bf16.msra.mxu0 0
      %768 = vmatpush.bf16.msra.mxu0 0
      %769 = vmatpush.bf16.msra.mxu0 0
      %770 = vmatpush.bf16.msra.mxu0 0
      %771 = vmatpush.bf16.msra.mxu0 0
      %772 = vmatpush.bf16.msra.mxu0 %v763
      %773 = vmatmul.bf16.gmra.mxu0 %v760
      %v774 = vpop.f32.mrf.mxu0
      %v775 = vadd.f32 %v751, %v774
      %v776 = vpop.f32.mrf.mxu0
      %v777 = vadd.f32 %v753, %v776
      %778 = vdwg.mxu0
      %s779 = scalar_lea.vmem %s165, 48
      %v780 = vld [vmem:[%s779] sm:$0xf]
      %v781 = vld [vmem:[%s779 + $0x4] sm:$0xf]
      %v782 = vld [vmem:[%s779 + $0x8] sm:$0x1]
      %v783 = vld [vmem:[%s257] sm:$0xf]
      %v784 = vld [vmem:[%s257 + $0x4] sm:$0x3]
      %v787 = vunpack.c.l.b16 %v780
      %v788 = vunpack.c.l.b16 %v781
      %v789 = vpack.c.b16 %v788, %v787
      %v792 = vunpack.c.l.b16 %v783
      %v793 = vunpack.c.l.b16 %v784
      %v794 = vpack.c.b16 %v793, %v792
      %v796 = vsel %vm207, %v789, 0
      %v799 = vsel %vm211, %v794, 0
      %801 = vmatpush.bf16.msra.mxu0 0
      %802 = vmatpush.bf16.msra.mxu0 0
      %803 = vmatpush.bf16.msra.mxu0 0
      %804 = vmatpush.bf16.msra.mxu0 0
      %805 = vmatpush.bf16.msra.mxu0 0
      %806 = vmatpush.bf16.msra.mxu0 0
      %807 = vmatpush.bf16.msra.mxu0 0
      %808 = vmatpush.bf16.msra.mxu0 %v799
      %809 = vmatmul.bf16.gmra.mxu0 %v796
      %v810 = vpop.f32.mrf.mxu0
      %v811 = vadd.f32 0.0, %v810
      %v812 = vpop.f32.mrf.mxu0
      %v813 = vadd.f32 0.0, %v812
      %814 = vdwg.mxu0
      %v815 = vadd.f32 %v775, %v811
      %v816 = vadd.f32 %v777, %v813
      %v817 = vld [vmem:[%s292] sm:$0xf]
      %v818 = vld [vmem:[%s292 + $0x4] sm:$0x3]
      %v820 = vunpack.c.l.b16 %v782
      %v821 = vpack.c.b16 %v820, %v820
      %v822 = vshrl.u32 %v789, 16
      %v824 = vshll.u32 %v789, 16
      %v826 = vrot.slane %v824, 1
      %v827 = vor.u32 %v822, %v826
      %v829 = vshll.u32 %v821, 16
      %v831 = vrot.slane %v829, 1
      %v832 = vsel %vm189, %v827, %v831
      %v835 = vunpack.c.l.b16 %v817
      %v836 = vunpack.c.l.b16 %v818
      %v837 = vpack.c.b16 %v836, %v835
      %v839 = vsel %vm207, %v832, 0
      %v842 = vsel %vm211, %v837, 0
      %844 = vmatpush.bf16.msra.mxu0 0
      %845 = vmatpush.bf16.msra.mxu0 0
      %846 = vmatpush.bf16.msra.mxu0 0
      %847 = vmatpush.bf16.msra.mxu0 0
      %848 = vmatpush.bf16.msra.mxu0 0
      %849 = vmatpush.bf16.msra.mxu0 0
      %850 = vmatpush.bf16.msra.mxu0 0
      %851 = vmatpush.bf16.msra.mxu0 %v842
      %852 = vmatmul.bf16.gmra.mxu0 %v839
      %v853 = vpop.f32.mrf.mxu0
      %v854 = vadd.f32 0.0, %v853
      %v855 = vpop.f32.mrf.mxu0
      %v856 = vadd.f32 0.0, %v855
      %857 = vdwg.mxu0
      %v858 = vadd.f32 %v815, %v854
      %v859 = vadd.f32 %v816, %v856
      %v860 = vadd.f32 %v858, %v337
      %v861 = vadd.f32 %v859, %v337
      %v862 = vsub.f32 0.0, %v860
      %v863 = vsub.f32 0.0, %v861
      %v864 = vmul.f32 %v862, 1.442695
      %v865 = vpow.pop %v864
      %v866 = vmul.f32 %v863, 1.442695
      %v867 = vpow.pop %v866
      %v868 = vadd.f32 %v865, 1.0
      %v869 = vadd.f32 %v867, 1.0
      %v870 = vrcp.pop %v868
      %v871 = vrcp.pop %v869
      %v872 = vmul.f32 %v860, %v870
      %v873 = vmul.f32 %v861, %v871
      %s874 = scalar_lea.vmem %s170, 48
      %875 = vst [vmem:[%s874] sm:$0xff] %v872
      %876 = vst [vmem:[%s874 + $0x8] sm:$0xff] %v873
      %v877 = vld [vmem:[%s779] sm:$0xf]
      %v878 = vld [vmem:[%s779 + $0x4] sm:$0xf]
      %v879 = vld [vmem:[%s779 + $0x8] sm:$0x1]
      %v880 = vld [vmem:[%s1] sm:$0xf]
      %v881 = vld [vmem:[%s1 + $0x4] sm:$0x3]
      %v882 = vld [vmem:[%s178] sm:$0xf]
      %v883 = vld [vmem:[%s178 + $0x4] sm:$0x3]
      %v887 = vunpack.c.l.b16 %v877
      %v888 = vunpack.c.l.b16 %v878
      %v889 = vunpack.c.l.b16 %v879
      %v890 = vpack.c.b16 %v888, %v887
      %v891 = vpack.c.b16 %v889, %v889
      %v893 = vshrl.u32 %v890, 16
      %v895 = vshll.u32 %v890, 16
      %v897 = vrot.slane %v895, 1
      %v898 = vor.u32 %v893, %v897
      %v900 = vshll.u32 %v891, 16
      %v902 = vrot.slane %v900, 1
      %v903 = vsel %vm189, %v898, %v902
      %v906 = vunpack.c.l.b16 %v882
      %v907 = vunpack.c.l.b16 %v883
      %v908 = vpack.c.b16 %v907, %v906
      %v910 = vsel %vm207, %v903, 0
      %v913 = vsel %vm211, %v908, 0
      %915 = vmatpush.bf16.msra.mxu0 0
      %916 = vmatpush.bf16.msra.mxu0 0
      %917 = vmatpush.bf16.msra.mxu0 0
      %918 = vmatpush.bf16.msra.mxu0 0
      %919 = vmatpush.bf16.msra.mxu0 0
      %920 = vmatpush.bf16.msra.mxu0 0
      %921 = vmatpush.bf16.msra.mxu0 0
      %922 = vmatpush.bf16.msra.mxu0 %v913
      %923 = vmatmul.bf16.gmra.mxu0 %v910
      %v924 = vpop.f32.mrf.mxu0
      %v925 = vadd.f32 0.0, %v924
      %v926 = vpop.f32.mrf.mxu0
      %v927 = vadd.f32 0.0, %v926
      %928 = vdwg.mxu0
      %v931 = vunpack.c.l.b16 %v880
      %v932 = vunpack.c.l.b16 %v881
      %v933 = vpack.c.b16 %v932, %v931
      %v934 = vsel %vm207, %v890, 0
      %v937 = vsel %vm211, %v933, 0
      %939 = vmatpush.bf16.msra.mxu0 0
      %940 = vmatpush.bf16.msra.mxu0 0
      %941 = vmatpush.bf16.msra.mxu0 0
      %942 = vmatpush.bf16.msra.mxu0 0
      %943 = vmatpush.bf16.msra.mxu0 0
      %944 = vmatpush.bf16.msra.mxu0 0
      %945 = vmatpush.bf16.msra.mxu0 0
      %946 = vmatpush.bf16.msra.mxu0 %v937
      %947 = vmatmul.bf16.gmra.mxu0 %v934
      %v948 = vpop.f32.mrf.mxu0
      %v949 = vadd.f32 %v925, %v948
      %v950 = vpop.f32.mrf.mxu0
      %v951 = vadd.f32 %v927, %v950
      %952 = vdwg.mxu0
      %s953 = scalar_lea.vmem %s165, 60
      %v954 = vld [vmem:[%s953] sm:$0xf]
      %v955 = vld [vmem:[%s953 + $0x4] sm:$0xf]
      %v956 = vld [vmem:[%s953 + $0x8] sm:$0x1]
      %v957 = vld [vmem:[%s257] sm:$0xf]
      %v958 = vld [vmem:[%s257 + $0x4] sm:$0x3]
      %v961 = vunpack.c.l.b16 %v954
      %v962 = vunpack.c.l.b16 %v955
      %v963 = vpack.c.b16 %v962, %v961
      %v966 = vunpack.c.l.b16 %v957
      %v967 = vunpack.c.l.b16 %v958
      %v968 = vpack.c.b16 %v967, %v966
      %v970 = vsel %vm207, %v963, 0
      %v973 = vsel %vm211, %v968, 0
      %975 = vmatpush.bf16.msra.mxu0 0
      %976 = vmatpush.bf16.msra.mxu0 0
      %977 = vmatpush.bf16.msra.mxu0 0
      %978 = vmatpush.bf16.msra.mxu0 0
      %979 = vmatpush.bf16.msra.mxu0 0
      %980 = vmatpush.bf16.msra.mxu0 0
      %981 = vmatpush.bf16.msra.mxu0 0
      %982 = vmatpush.bf16.msra.mxu0 %v973
      %983 = vmatmul.bf16.gmra.mxu0 %v970
      %v984 = vpop.f32.mrf.mxu0
      %v985 = vadd.f32 0.0, %v984
      %v986 = vpop.f32.mrf.mxu0
      %v987 = vadd.f32 0.0, %v986
      %988 = vdwg.mxu0
      %v989 = vadd.f32 %v949, %v985
      %v990 = vadd.f32 %v951, %v987
      %v991 = vld [vmem:[%s292] sm:$0xf]
      %v992 = vld [vmem:[%s292 + $0x4] sm:$0x3]
      %v994 = vunpack.c.l.b16 %v956
      %v995 = vpack.c.b16 %v994, %v994
      %v996 = vshrl.u32 %v963, 16
      %v998 = vshll.u32 %v963, 16
      %v1000 = vrot.slane %v998, 1
      %v1001 = vor.u32 %v996, %v1000
      %v1003 = vshll.u32 %v995, 16
      %v1005 = vrot.slane %v1003, 1
      %v1006 = vsel %vm189, %v1001, %v1005
      %v1009 = vunpack.c.l.b16 %v991
      %v1010 = vunpack.c.l.b16 %v992
      %v1011 = vpack.c.b16 %v1010, %v1009
      %v1013 = vsel %vm207, %v1006, 0
      %v1016 = vsel %vm211, %v1011, 0
      %1018 = vmatpush.bf16.msra.mxu0 0
      %1019 = vmatpush.bf16.msra.mxu0 0
      %1020 = vmatpush.bf16.msra.mxu0 0
      %1021 = vmatpush.bf16.msra.mxu0 0
      %1022 = vmatpush.bf16.msra.mxu0 0
      %1023 = vmatpush.bf16.msra.mxu0 0
      %1024 = vmatpush.bf16.msra.mxu0 0
      %1025 = vmatpush.bf16.msra.mxu0 %v1016
      %1026 = vmatmul.bf16.gmra.mxu0 %v1013
      %v1027 = vpop.f32.mrf.mxu0
      %v1028 = vadd.f32 0.0, %v1027
      %v1029 = vpop.f32.mrf.mxu0
      %v1030 = vadd.f32 0.0, %v1029
      %1031 = vdwg.mxu0
      %v1032 = vadd.f32 %v989, %v1028
      %v1033 = vadd.f32 %v990, %v1030
      %v1034 = vadd.f32 %v1032, %v337
      %v1035 = vadd.f32 %v1033, %v337
      %v1036 = vsub.f32 0.0, %v1034
      %v1037 = vsub.f32 0.0, %v1035
      %v1038 = vmul.f32 %v1036, 1.442695
      %v1039 = vpow.pop %v1038
      %v1040 = vmul.f32 %v1037, 1.442695
      %v1041 = vpow.pop %v1040
      %v1042 = vadd.f32 %v1039, 1.0
      %v1043 = vadd.f32 %v1041, 1.0
      %v1044 = vrcp.pop %v1042
      %v1045 = vrcp.pop %v1043
      %v1046 = vmul.f32 %v1034, %v1044
      %v1047 = vmul.f32 %v1035, %v1045
      %s1048 = scalar_lea.vmem %s170, 64
      %1049 = vst [vmem:[%s1048] sm:$0xff] %v1046
      %1050 = vst [vmem:[%s1048 + $0x8] sm:$0xff] %v1047
      %v1051 = vld [vmem:[%s953] sm:$0xf]
      %v1052 = vld [vmem:[%s953 + $0x4] sm:$0xf]
      %v1053 = vld [vmem:[%s953 + $0x8] sm:$0x1]
      %v1054 = vld [vmem:[%s1] sm:$0xf]
      %v1055 = vld [vmem:[%s1 + $0x4] sm:$0x3]
      %v1056 = vld [vmem:[%s178] sm:$0xf]
      %v1057 = vld [vmem:[%s178 + $0x4] sm:$0x3]
      %v1061 = vunpack.c.l.b16 %v1051
      %v1062 = vunpack.c.l.b16 %v1052
      %v1063 = vunpack.c.l.b16 %v1053
      %v1064 = vpack.c.b16 %v1062, %v1061
      %v1065 = vpack.c.b16 %v1063, %v1063
      %v1067 = vshrl.u32 %v1064, 16
      %v1069 = vshll.u32 %v1064, 16
      %v1071 = vrot.slane %v1069, 1
      %v1072 = vor.u32 %v1067, %v1071
      %v1074 = vshll.u32 %v1065, 16
      %v1076 = vrot.slane %v1074, 1
      %v1077 = vsel %vm189, %v1072, %v1076
      %v1080 = vunpack.c.l.b16 %v1056
      %v1081 = vunpack.c.l.b16 %v1057
      %v1082 = vpack.c.b16 %v1081, %v1080
      %v1084 = vsel %vm207, %v1077, 0
      %v1087 = vsel %vm211, %v1082, 0
      %1089 = vmatpush.bf16.msra.mxu0 0
      %1090 = vmatpush.bf16.msra.mxu0 0
      %1091 = vmatpush.bf16.msra.mxu0 0
      %1092 = vmatpush.bf16.msra.mxu0 0
      %1093 = vmatpush.bf16.msra.mxu0 0
      %1094 = vmatpush.bf16.msra.mxu0 0
      %1095 = vmatpush.bf16.msra.mxu0 0
      %1096 = vmatpush.bf16.msra.mxu0 %v1087
      %1097 = vmatmul.bf16.gmra.mxu0 %v1084
      %v1098 = vpop.f32.mrf.mxu0
      %v1099 = vadd.f32 0.0, %v1098
      %v1100 = vpop.f32.mrf.mxu0
      %v1101 = vadd.f32 0.0, %v1100
      %1102 = vdwg.mxu0
      %v1105 = vunpack.c.l.b16 %v1054
      %v1106 = vunpack.c.l.b16 %v1055
      %v1107 = vpack.c.b16 %v1106, %v1105
      %v1108 = vsel %vm207, %v1064, 0
      %v1111 = vsel %vm211, %v1107, 0
      %1113 = vmatpush.bf16.msra.mxu0 0
      %1114 = vmatpush.bf16.msra.mxu0 0
      %1115 = vmatpush.bf16.msra.mxu0 0
      %1116 = vmatpush.bf16.msra.mxu0 0
      %1117 = vmatpush.bf16.msra.mxu0 0
      %1118 = vmatpush.bf16.msra.mxu0 0
      %1119 = vmatpush.bf16.msra.mxu0 0
      %1120 = vmatpush.bf16.msra.mxu0 %v1111
      %1121 = vmatmul.bf16.gmra.mxu0 %v1108
      %v1122 = vpop.f32.mrf.mxu0
      %v1123 = vadd.f32 %v1099, %v1122
      %v1124 = vpop.f32.mrf.mxu0
      %v1125 = vadd.f32 %v1101, %v1124
      %1126 = vdwg.mxu0
      %s1127 = scalar_lea.vmem %s165, 72
      %v1128 = vld [vmem:[%s1127] sm:$0xf]
      %v1129 = vld [vmem:[%s1127 + $0x4] sm:$0xf]
      %v1130 = vld [vmem:[%s1127 + $0x8] sm:$0x1]
      %v1131 = vld [vmem:[%s257] sm:$0xf]
      %v1132 = vld [vmem:[%s257 + $0x4] sm:$0x3]
      %v1135 = vunpack.c.l.b16 %v1128
      %v1136 = vunpack.c.l.b16 %v1129
      %v1137 = vpack.c.b16 %v1136, %v1135
      %v1140 = vunpack.c.l.b16 %v1131
      %v1141 = vunpack.c.l.b16 %v1132
      %v1142 = vpack.c.b16 %v1141, %v1140
      %v1144 = vsel %vm207, %v1137, 0
      %v1147 = vsel %vm211, %v1142, 0
      %1149 = vmatpush.bf16.msra.mxu0 0
      %1150 = vmatpush.bf16.msra.mxu0 0
      %1151 = vmatpush.bf16.msra.mxu0 0
      %1152 = vmatpush.bf16.msra.mxu0 0
      %1153 = vmatpush.bf16.msra.mxu0 0
      %1154 = vmatpush.bf16.msra.mxu0 0
      %1155 = vmatpush.bf16.msra.mxu0 0
      %1156 = vmatpush.bf16.msra.mxu0 %v1147
      %1157 = vmatmul.bf16.gmra.mxu0 %v1144
      %v1158 = vpop.f32.mrf.mxu0
      %v1159 = vadd.f32 0.0, %v1158
      %v1160 = vpop.f32.mrf.mxu0
      %v1161 = vadd.f32 0.0, %v1160
      %1162 = vdwg.mxu0
      %v1163 = vadd.f32 %v1123, %v1159
      %v1164 = vadd.f32 %v1125, %v1161
      %v1165 = vld [vmem:[%s292] sm:$0xf]
      %v1166 = vld [vmem:[%s292 + $0x4] sm:$0x3]
      %v1168 = vunpack.c.l.b16 %v1130
      %v1169 = vpack.c.b16 %v1168, %v1168
      %v1170 = vshrl.u32 %v1137, 16
      %v1172 = vshll.u32 %v1137, 16
      %v1174 = vrot.slane %v1172, 1
      %v1175 = vor.u32 %v1170, %v1174
      %v1177 = vshll.u32 %v1169, 16
      %v1179 = vrot.slane %v1177, 1
      %v1180 = vsel %vm189, %v1175, %v1179
      %v1183 = vunpack.c.l.b16 %v1165
      %v1184 = vunpack.c.l.b16 %v1166
      %v1185 = vpack.c.b16 %v1184, %v1183
      %v1187 = vsel %vm207, %v1180, 0
      %v1190 = vsel %vm211, %v1185, 0
      %1192 = vmatpush.bf16.msra.mxu0 0
      %1193 = vmatpush.bf16.msra.mxu0 0
      %1194 = vmatpush.bf16.msra.mxu0 0
      %1195 = vmatpush.bf16.msra.mxu0 0
      %1196 = vmatpush.bf16.msra.mxu0 0
      %1197 = vmatpush.bf16.msra.mxu0 0
      %1198 = vmatpush.bf16.msra.mxu0 0
      %1199 = vmatpush.bf16.msra.mxu0 %v1190
      %1200 = vmatmul.bf16.gmra.mxu0 %v1187
      %v1201 = vpop.f32.mrf.mxu0
      %v1202 = vadd.f32 0.0, %v1201
      %v1203 = vpop.f32.mrf.mxu0
      %v1204 = vadd.f32 0.0, %v1203
      %1205 = vdwg.mxu0
      %v1206 = vadd.f32 %v1163, %v1202
      %v1207 = vadd.f32 %v1164, %v1204
      %v1208 = vadd.f32 %v1206, %v337
      %v1209 = vadd.f32 %v1207, %v337
      %v1210 = vsub.f32 0.0, %v1208
      %v1211 = vsub.f32 0.0, %v1209
      %v1212 = vmul.f32 %v1210, 1.442695
      %v1213 = vpow.pop %v1212
      %v1214 = vmul.f32 %v1211, 1.442695
      %v1215 = vpow.pop %v1214
      %v1216 = vadd.f32 %v1213, 1.0
      %v1217 = vadd.f32 %v1215, 1.0
      %v1218 = vrcp.pop %v1216
      %v1219 = vrcp.pop %v1217
      %v1220 = vmul.f32 %v1208, %v1218
      %v1221 = vmul.f32 %v1209, %v1219
      %s1222 = scalar_lea.vmem %s170, 80
      %1223 = vst [vmem:[%s1222] sm:$0xff] %v1220
      %1224 = vst [vmem:[%s1222 + $0x8] sm:$0xff] %v1221
      %v1225 = vld [vmem:[%s1127] sm:$0xf]
      %v1226 = vld [vmem:[%s1127 + $0x4] sm:$0xf]
      %v1227 = vld [vmem:[%s1127 + $0x8] sm:$0x1]
      %v1228 = vld [vmem:[%s1] sm:$0xf]
      %v1229 = vld [vmem:[%s1 + $0x4] sm:$0x3]
      %v1230 = vld [vmem:[%s178] sm:$0xf]
      %v1231 = vld [vmem:[%s178 + $0x4] sm:$0x3]
      %v1235 = vunpack.c.l.b16 %v1225
      %v1236 = vunpack.c.l.b16 %v1226
      %v1237 = vunpack.c.l.b16 %v1227
      %v1238 = vpack.c.b16 %v1236, %v1235
      %v1239 = vpack.c.b16 %v1237, %v1237
      %v1241 = vshrl.u32 %v1238, 16
      %v1243 = vshll.u32 %v1238, 16
      %v1245 = vrot.slane %v1243, 1
      %v1246 = vor.u32 %v1241, %v1245
      %v1248 = vshll.u32 %v1239, 16
      %v1250 = vrot.slane %v1248, 1
      %v1251 = vsel %vm189, %v1246, %v1250
      %v1254 = vunpack.c.l.b16 %v1230
      %v1255 = vunpack.c.l.b16 %v1231
      %v1256 = vpack.c.b16 %v1255, %v1254
      %v1258 = vsel %vm207, %v1251, 0
      %v1261 = vsel %vm211, %v1256, 0
      %1263 = vmatpush.bf16.msra.mxu0 0
      %1264 = vmatpush.bf16.msra.mxu0 0
      %1265 = vmatpush.bf16.msra.mxu0 0
      %1266 = vmatpush.bf16.msra.mxu0 0
      %1267 = vmatpush.bf16.msra.mxu0 0
      %1268 = vmatpush.bf16.msra.mxu0 0
      %1269 = vmatpush.bf16.msra.mxu0 0
      %1270 = vmatpush.bf16.msra.mxu0 %v1261
      %1271 = vmatmul.bf16.gmra.mxu0 %v1258
      %v1272 = vpop.f32.mrf.mxu0
      %v1273 = vadd.f32 0.0, %v1272
      %v1274 = vpop.f32.mrf.mxu0
      %v1275 = vadd.f32 0.0, %v1274
      %1276 = vdwg.mxu0
      %v1279 = vunpack.c.l.b16 %v1228
      %v1280 = vunpack.c.l.b16 %v1229
      %v1281 = vpack.c.b16 %v1280, %v1279
      %v1282 = vsel %vm207, %v1238, 0
      %v1285 = vsel %vm211, %v1281, 0
      %1287 = vmatpush.bf16.msra.mxu0 0
      %1288 = vmatpush.bf16.msra.mxu0 0
      %1289 = vmatpush.bf16.msra.mxu0 0
      %1290 = vmatpush.bf16.msra.mxu0 0
      %1291 = vmatpush.bf16.msra.mxu0 0
      %1292 = vmatpush.bf16.msra.mxu0 0
      %1293 = vmatpush.bf16.msra.mxu0 0
      %1294 = vmatpush.bf16.msra.mxu0 %v1285
      %1295 = vmatmul.bf16.gmra.mxu0 %v1282
      %v1296 = vpop.f32.mrf.mxu0
      %v1297 = vadd.f32 %v1273, %v1296
      %v1298 = vpop.f32.mrf.mxu0
      %v1299 = vadd.f32 %v1275, %v1298
      %1300 = vdwg.mxu0
      %s1301 = scalar_lea.vmem %s165, 84
      %v1302 = vld [vmem:[%s1301] sm:$0xf]
      %v1303 = vld [vmem:[%s1301 + $0x4] sm:$0xf]
      %v1304 = vld [vmem:[%s1301 + $0x8] sm:$0x1]
      %v1305 = vld [vmem:[%s257] sm:$0xf]
      %v1306 = vld [vmem:[%s257 + $0x4] sm:$0x3]
      %v1309 = vunpack.c.l.b16 %v1302
      %v1310 = vunpack.c.l.b16 %v1303
      %v1311 = vpack.c.b16 %v1310, %v1309
      %v1314 = vunpack.c.l.b16 %v1305
      %v1315 = vunpack.c.l.b16 %v1306
      %v1316 = vpack.c.b16 %v1315, %v1314
      %v1318 = vsel %vm207, %v1311, 0
      %v1321 = vsel %vm211, %v1316, 0
      %1323 = vmatpush.bf16.msra.mxu0 0
      %1324 = vmatpush.bf16.msra.mxu0 0
      %1325 = vmatpush.bf16.msra.mxu0 0
      %1326 = vmatpush.bf16.msra.mxu0 0
      %1327 = vmatpush.bf16.msra.mxu0 0
      %1328 = vmatpush.bf16.msra.mxu0 0
      %1329 = vmatpush.bf16.msra.mxu0 0
      %1330 = vmatpush.bf16.msra.mxu0 %v1321
      %1331 = vmatmul.bf16.gmra.mxu0 %v1318
      %v1332 = vpop.f32.mrf.mxu0
      %v1333 = vadd.f32 0.0, %v1332
      %v1334 = vpop.f32.mrf.mxu0
      %v1335 = vadd.f32 0.0, %v1334
      %1336 = vdwg.mxu0
      %v1337 = vadd.f32 %v1297, %v1333
      %v1338 = vadd.f32 %v1299, %v1335
      %v1339 = vld [vmem:[%s292] sm:$0xf]
      %v1340 = vld [vmem:[%s292 + $0x4] sm:$0x3]
      %v1342 = vunpack.c.l.b16 %v1304
      %v1343 = vpack.c.b16 %v1342, %v1342
      %v1344 = vshrl.u32 %v1311, 16
      %v1346 = vshll.u32 %v1311, 16
      %v1348 = vrot.slane %v1346, 1
      %v1349 = vor.u32 %v1344, %v1348
      %v1351 = vshll.u32 %v1343, 16
      %v1353 = vrot.slane %v1351, 1
      %v1354 = vsel %vm189, %v1349, %v1353
      %v1357 = vunpack.c.l.b16 %v1339
      %v1358 = vunpack.c.l.b16 %v1340
      %v1359 = vpack.c.b16 %v1358, %v1357
      %v1361 = vsel %vm207, %v1354, 0
      %v1364 = vsel %vm211, %v1359, 0
      %1366 = vmatpush.bf16.msra.mxu0 0
      %1367 = vmatpush.bf16.msra.mxu0 0
      %1368 = vmatpush.bf16.msra.mxu0 0
      %1369 = vmatpush.bf16.msra.mxu0 0
      %1370 = vmatpush.bf16.msra.mxu0 0
      %1371 = vmatpush.bf16.msra.mxu0 0
      %1372 = vmatpush.bf16.msra.mxu0 0
      %1373 = vmatpush.bf16.msra.mxu0 %v1364
      %1374 = vmatmul.bf16.gmra.mxu0 %v1361
      %v1375 = vpop.f32.mrf.mxu0
      %v1376 = vadd.f32 0.0, %v1375
      %v1377 = vpop.f32.mrf.mxu0
      %v1378 = vadd.f32 0.0, %v1377
      %1379 = vdwg.mxu0
      %v1380 = vadd.f32 %v1337, %v1376
      %v1381 = vadd.f32 %v1338, %v1378
      %v1382 = vadd.f32 %v1380, %v337
      %v1383 = vadd.f32 %v1381, %v337
      %v1384 = vsub.f32 0.0, %v1382
      %v1385 = vsub.f32 0.0, %v1383
      %v1386 = vmul.f32 %v1384, 1.442695
      %v1387 = vpow.pop %v1386
      %v1388 = vmul.f32 %v1385, 1.442695
      %v1389 = vpow.pop %v1388
      %v1390 = vadd.f32 %v1387, 1.0
      %v1391 = vadd.f32 %v1389, 1.0
      %v1392 = vrcp.pop %v1390
      %v1393 = vrcp.pop %v1391
      %v1394 = vmul.f32 %v1382, %v1392
      %v1395 = vmul.f32 %v1383, %v1393
      %s1396 = scalar_lea.vmem %s170, 96
      %1397 = vst [vmem:[%s1396] sm:$0xff] %v1394
      %1398 = vst [vmem:[%s1396 + $0x8] sm:$0xff] %v1395
      %v1399 = vld [vmem:[%s1301] sm:$0xf]
      %v1400 = vld [vmem:[%s1301 + $0x4] sm:$0xf]
      %v1401 = vld [vmem:[%s1301 + $0x8] sm:$0x1]
      %v1402 = vld [vmem:[%s1] sm:$0xf]
      %v1403 = vld [vmem:[%s1 + $0x4] sm:$0x3]
      %v1404 = vld [vmem:[%s178] sm:$0xf]
      %v1405 = vld [vmem:[%s178 + $0x4] sm:$0x3]
      %v1409 = vunpack.c.l.b16 %v1399
      %v1410 = vunpack.c.l.b16 %v1400
      %v1411 = vunpack.c.l.b16 %v1401
      %v1412 = vpack.c.b16 %v1410, %v1409
      %v1413 = vpack.c.b16 %v1411, %v1411
      %v1415 = vshrl.u32 %v1412, 16
      %v1417 = vshll.u32 %v1412, 16
      %v1419 = vrot.slane %v1417, 1
      %v1420 = vor.u32 %v1415, %v1419
      %v1422 = vshll.u32 %v1413, 16
      %v1424 = vrot.slane %v1422, 1
      %v1425 = vsel %vm189, %v1420, %v1424
      %v1428 = vunpack.c.l.b16 %v1404
      %v1429 = vunpack.c.l.b16 %v1405
      %v1430 = vpack.c.b16 %v1429, %v1428
      %v1432 = vsel %vm207, %v1425, 0
      %v1435 = vsel %vm211, %v1430, 0
      %1437 = vmatpush.bf16.msra.mxu0 0
      %1438 = vmatpush.bf16.msra.mxu0 0
      %1439 = vmatpush.bf16.msra.mxu0 0
      %1440 = vmatpush.bf16.msra.mxu0 0
      %1441 = vmatpush.bf16.msra.mxu0 0
      %1442 = vmatpush.bf16.msra.mxu0 0
      %1443 = vmatpush.bf16.msra.mxu0 0
      %1444 = vmatpush.bf16.msra.mxu0 %v1435
      %1445 = vmatmul.bf16.gmra.mxu0 %v1432
      %v1446 = vpop.f32.mrf.mxu0
      %v1447 = vadd.f32 0.0, %v1446
      %v1448 = vpop.f32.mrf.mxu0
      %v1449 = vadd.f32 0.0, %v1448
      %1450 = vdwg.mxu0
      %v1453 = vunpack.c.l.b16 %v1402
      %v1454 = vunpack.c.l.b16 %v1403
      %v1455 = vpack.c.b16 %v1454, %v1453
      %v1456 = vsel %vm207, %v1412, 0
      %v1459 = vsel %vm211, %v1455, 0
      %1461 = vmatpush.bf16.msra.mxu0 0
      %1462 = vmatpush.bf16.msra.mxu0 0
      %1463 = vmatpush.bf16.msra.mxu0 0
      %1464 = vmatpush.bf16.msra.mxu0 0
      %1465 = vmatpush.bf16.msra.mxu0 0
      %1466 = vmatpush.bf16.msra.mxu0 0
      %1467 = vmatpush.bf16.msra.mxu0 0
      %1468 = vmatpush.bf16.msra.mxu0 %v1459
      %1469 = vmatmul.bf16.gmra.mxu0 %v1456
      %v1470 = vpop.f32.mrf.mxu0
      %v1471 = vadd.f32 %v1447, %v1470
      %v1472 = vpop.f32.mrf.mxu0
      %v1473 = vadd.f32 %v1449, %v1472
      %1474 = vdwg.mxu0
      %s1475 = scalar_lea.vmem %s165, 96
      %v1476 = vld [vmem:[%s1475] sm:$0xf]
      %v1477 = vld [vmem:[%s1475 + $0x4] sm:$0xf]
      %v1478 = vld [vmem:[%s1475 + $0x8] sm:$0x1]
      %v1479 = vld [vmem:[%s257] sm:$0xf]
      %v1480 = vld [vmem:[%s257 + $0x4] sm:$0x3]
      %v1483 = vunpack.c.l.b16 %v1476
      %v1484 = vunpack.c.l.b16 %v1477
      %v1485 = vpack.c.b16 %v1484, %v1483
      %v1488 = vunpack.c.l.b16 %v1479
      %v1489 = vunpack.c.l.b16 %v1480
      %v1490 = vpack.c.b16 %v1489, %v1488
      %v1492 = vsel %vm207, %v1485, 0
      %v1495 = vsel %vm211, %v1490, 0
      %1497 = vmatpush.bf16.msra.mxu0 0
      %1498 = vmatpush.bf16.msra.mxu0 0
      %1499 = vmatpush.bf16.msra.mxu0 0
      %1500 = vmatpush.bf16.msra.mxu0 0
      %1501 = vmatpush.bf16.msra.mxu0 0
      %1502 = vmatpush.bf16.msra.mxu0 0
      %1503 = vmatpush.bf16.msra.mxu0 0
      %1504 = vmatpush.bf16.msra.mxu0 %v1495
      %1505 = vmatmul.bf16.gmra.mxu0 %v1492
      %v1506 = vpop.f32.mrf.mxu0
      %v1507 = vadd.f32 0.0, %v1506
      %v1508 = vpop.f32.mrf.mxu0
      %v1509 = vadd.f32 0.0, %v1508
      %1510 = vdwg.mxu0
      %v1511 = vadd.f32 %v1471, %v1507
      %v1512 = vadd.f32 %v1473, %v1509
      %v1513 = vld [vmem:[%s292] sm:$0xf]
      %v1514 = vld [vmem:[%s292 + $0x4] sm:$0x3]
      %v1516 = vunpack.c.l.b16 %v1478
      %v1517 = vpack.c.b16 %v1516, %v1516
      %v1518 = vshrl.u32 %v1485, 16
      %v1520 = vshll.u32 %v1485, 16
      %v1522 = vrot.slane %v1520, 1
      %v1523 = vor.u32 %v1518, %v1522
      %v1525 = vshll.u32 %v1517, 16
      %v1527 = vrot.slane %v1525, 1
      %v1528 = vsel %vm189, %v1523, %v1527
      %v1531 = vunpack.c.l.b16 %v1513
      %v1532 = vunpack.c.l.b16 %v1514
      %v1533 = vpack.c.b16 %v1532, %v1531
      %v1535 = vsel %vm207, %v1528, 0
      %v1538 = vsel %vm211, %v1533, 0
      %1540 = vmatpush.bf16.msra.mxu0 0
      %1541 = vmatpush.bf16.msra.mxu0 0
      %1542 = vmatpush.bf16.msra.mxu0 0
      %1543 = vmatpush.bf16.msra.mxu0 0
      %1544 = vmatpush.bf16.msra.mxu0 0
      %1545 = vmatpush.bf16.msra.mxu0 0
      %1546 = vmatpush.bf16.msra.mxu0 0
      %1547 = vmatpush.bf16.msra.mxu0 %v1538
      %1548 = vmatmul.bf16.gmra.mxu0 %v1535
      %v1549 = vpop.f32.mrf.mxu0
      %v1550 = vadd.f32 0.0, %v1549
      %v1551 = vpop.f32.mrf.mxu0
      %v1552 = vadd.f32 0.0, %v1551
      %1553 = vdwg.mxu0
      %v1554 = vadd.f32 %v1511, %v1550
      %v1555 = vadd.f32 %v1512, %v1552
      %v1556 = vadd.f32 %v1554, %v337
      %v1557 = vadd.f32 %v1555, %v337
      %v1558 = vsub.f32 0.0, %v1556
      %v1559 = vsub.f32 0.0, %v1557
      %v1560 = vmul.f32 %v1558, 1.442695
      %v1561 = vpow.pop %v1560
      %v1562 = vmul.f32 %v1559, 1.442695
      %v1563 = vpow.pop %v1562
      %v1564 = vadd.f32 %v1561, 1.0
      %v1565 = vadd.f32 %v1563, 1.0
      %v1566 = vrcp.pop %v1564
      %v1567 = vrcp.pop %v1565
      %v1568 = vmul.f32 %v1556, %v1566
      %v1569 = vmul.f32 %v1557, %v1567
      %s1570 = scalar_lea.vmem %s170, 112
      %1571 = vst [vmem:[%s1570] sm:$0xff] %v1568
      %1572 = vst [vmem:[%s1570 + $0x8] sm:$0xff] %v1569
      %v1573 = vld [vmem:[%s1475] sm:$0xf]
      %v1574 = vld [vmem:[%s1475 + $0x4] sm:$0xf]
      %v1575 = vld [vmem:[%s1475 + $0x8] sm:$0x1]
      %v1576 = vld [vmem:[%s1] sm:$0xf]
      %v1577 = vld [vmem:[%s1 + $0x4] sm:$0x3]
      %v1578 = vld [vmem:[%s178] sm:$0xf]
      %v1579 = vld [vmem:[%s178 + $0x4] sm:$0x3]
      %v1583 = vunpack.c.l.b16 %v1573
      %v1584 = vunpack.c.l.b16 %v1574
      %v1585 = vunpack.c.l.b16 %v1575
      %v1586 = vpack.c.b16 %v1584, %v1583
      %v1587 = vpack.c.b16 %v1585, %v1585
      %v1589 = vshrl.u32 %v1586, 16
      %v1591 = vshll.u32 %v1586, 16
      %v1593 = vrot.slane %v1591, 1
      %v1594 = vor.u32 %v1589, %v1593
      %v1596 = vshll.u32 %v1587, 16
      %v1598 = vrot.slane %v1596, 1
      %v1599 = vsel %vm189, %v1594, %v1598
      %v1602 = vunpack.c.l.b16 %v1578
      %v1603 = vunpack.c.l.b16 %v1579
      %v1604 = vpack.c.b16 %v1603, %v1602
      %v1606 = vsel %vm207, %v1599, 0
      %v1609 = vsel %vm211, %v1604, 0
      %1611 = vmatpush.bf16.msra.mxu0 0
      %1612 = vmatpush.bf16.msra.mxu0 0
      %1613 = vmatpush.bf16.msra.mxu0 0
      %1614 = vmatpush.bf16.msra.mxu0 0
      %1615 = vmatpush.bf16.msra.mxu0 0
      %1616 = vmatpush.bf16.msra.mxu0 0
      %1617 = vmatpush.bf16.msra.mxu0 0
      %1618 = vmatpush.bf16.msra.mxu0 %v1609
      %1619 = vmatmul.bf16.gmra.mxu0 %v1606
      %v1620 = vpop.f32.mrf.mxu0
      %v1621 = vadd.f32 0.0, %v1620
      %v1622 = vpop.f32.mrf.mxu0
      %v1623 = vadd.f32 0.0, %v1622
      %1624 = vdwg.mxu0
      %v1627 = vunpack.c.l.b16 %v1576
      %v1628 = vunpack.c.l.b16 %v1577
      %v1629 = vpack.c.b16 %v1628, %v1627
      %v1630 = vsel %vm207, %v1586, 0
      %v1633 = vsel %vm211, %v1629, 0
      %1635 = vmatpush.bf16.msra.mxu0 0
      %1636 = vmatpush.bf16.msra.mxu0 0
      %1637 = vmatpush.bf16.msra.mxu0 0
      %1638 = vmatpush.bf16.msra.mxu0 0
      %1639 = vmatpush.bf16.msra.mxu0 0
      %1640 = vmatpush.bf16.msra.mxu0 0
      %1641 = vmatpush.bf16.msra.mxu0 0
      %1642 = vmatpush.bf16.msra.mxu0 %v1633
      %1643 = vmatmul.bf16.gmra.mxu0 %v1630
      %v1644 = vpop.f32.mrf.mxu0
      %v1645 = vadd.f32 %v1621, %v1644
      %v1646 = vpop.f32.mrf.mxu0
      %v1647 = vadd.f32 %v1623, %v1646
      %1648 = vdwg.mxu0
      %s1649 = scalar_lea.vmem %s165, 108
      %v1650 = vld [vmem:[%s1649] sm:$0xf]
      %v1651 = vld [vmem:[%s1649 + $0x4] sm:$0xf]
      %v1652 = vld [vmem:[%s1649 + $0x8] sm:$0x1]
      %v1653 = vld [vmem:[%s257] sm:$0xf]
      %v1654 = vld [vmem:[%s257 + $0x4] sm:$0x3]
      %v1657 = vunpack.c.l.b16 %v1650
      %v1658 = vunpack.c.l.b16 %v1651
      %v1659 = vpack.c.b16 %v1658, %v1657
      %v1662 = vunpack.c.l.b16 %v1653
      %v1663 = vunpack.c.l.b16 %v1654
      %v1664 = vpack.c.b16 %v1663, %v1662
      %v1666 = vsel %vm207, %v1659, 0
      %v1669 = vsel %vm211, %v1664, 0
      %1671 = vmatpush.bf16.msra.mxu0 0
      %1672 = vmatpush.bf16.msra.mxu0 0
      %1673 = vmatpush.bf16.msra.mxu0 0
      %1674 = vmatpush.bf16.msra.mxu0 0
      %1675 = vmatpush.bf16.msra.mxu0 0
      %1676 = vmatpush.bf16.msra.mxu0 0
      %1677 = vmatpush.bf16.msra.mxu0 0
      %1678 = vmatpush.bf16.msra.mxu0 %v1669
      %1679 = vmatmul.bf16.gmra.mxu0 %v1666
      %v1680 = vpop.f32.mrf.mxu0
      %v1681 = vadd.f32 0.0, %v1680
      %v1682 = vpop.f32.mrf.mxu0
      %v1683 = vadd.f32 0.0, %v1682
      %1684 = vdwg.mxu0
      %v1685 = vadd.f32 %v1645, %v1681
      %v1686 = vadd.f32 %v1647, %v1683
      %v1687 = vld [vmem:[%s292] sm:$0xf]
      %v1688 = vld [vmem:[%s292 + $0x4] sm:$0x3]
      %v1690 = vunpack.c.l.b16 %v1652
      %v1691 = vpack.c.b16 %v1690, %v1690
      %v1692 = vshrl.u32 %v1659, 16
      %v1694 = vshll.u32 %v1659, 16
      %v1696 = vrot.slane %v1694, 1
      %v1697 = vor.u32 %v1692, %v1696
      %v1699 = vshll.u32 %v1691, 16
      %v1701 = vrot.slane %v1699, 1
      %v1702 = vsel %vm189, %v1697, %v1701
      %v1705 = vunpack.c.l.b16 %v1687
      %v1706 = vunpack.c.l.b16 %v1688
      %v1707 = vpack.c.b16 %v1706, %v1705
      %v1709 = vsel %vm207, %v1702, 0
      %v1712 = vsel %vm211, %v1707, 0
      %1714 = vmatpush.bf16.msra.mxu0 0
      %1715 = vmatpush.bf16.msra.mxu0 0
      %1716 = vmatpush.bf16.msra.mxu0 0
      %1717 = vmatpush.bf16.msra.mxu0 0
      %1718 = vmatpush.bf16.msra.mxu0 0
      %1719 = vmatpush.bf16.msra.mxu0 0
      %1720 = vmatpush.bf16.msra.mxu0 0
      %1721 = vmatpush.bf16.msra.mxu0 %v1712
      %1722 = vmatmul.bf16.gmra.mxu0 %v1709
      %v1723 = vpop.f32.mrf.mxu0
      %v1724 = vadd.f32 0.0, %v1723
      %v1725 = vpop.f32.mrf.mxu0
      %v1726 = vadd.f32 0.0, %v1725
      %1727 = vdwg.mxu0
      %v1728 = vadd.f32 %v1685, %v1724
      %v1729 = vadd.f32 %v1686, %v1726
      %v1730 = vadd.f32 %v1728, %v337
      %v1731 = vadd.f32 %v1729, %v337
      %v1732 = vsub.f32 0.0, %v1730
      %v1733 = vsub.f32 0.0, %v1731
      %v1734 = vmul.f32 %v1732, 1.442695
      %v1735 = vpow.pop %v1734
      %v1736 = vmul.f32 %v1733, 1.442695
      %v1737 = vpow.pop %v1736
      %v1738 = vadd.f32 %v1735, 1.0
      %v1739 = vadd.f32 %v1737, 1.0
      %v1740 = vrcp.pop %v1738
      %v1741 = vrcp.pop %v1739
      %v1742 = vmul.f32 %v1730, %v1740
      %v1743 = vmul.f32 %v1731, %v1741
      %s1744 = scalar_lea.vmem %s170, 128
      %1745 = vst [vmem:[%s1744] sm:$0xff] %v1742
      %1746 = vst [vmem:[%s1744 + $0x8] sm:$0xff] %v1743
      %v1747 = vld [vmem:[%s1649] sm:$0xf]
      %v1748 = vld [vmem:[%s1649 + $0x4] sm:$0xf]
      %v1749 = vld [vmem:[%s1649 + $0x8] sm:$0x1]
      %v1750 = vld [vmem:[%s1] sm:$0xf]
      %v1751 = vld [vmem:[%s1 + $0x4] sm:$0x3]
      %v1752 = vld [vmem:[%s178] sm:$0xf]
      %v1753 = vld [vmem:[%s178 + $0x4] sm:$0x3]
      %v1757 = vunpack.c.l.b16 %v1747
      %v1758 = vunpack.c.l.b16 %v1748
      %v1759 = vunpack.c.l.b16 %v1749
      %v1760 = vpack.c.b16 %v1758, %v1757
      %v1761 = vpack.c.b16 %v1759, %v1759
      %v1763 = vshrl.u32 %v1760, 16
      %v1765 = vshll.u32 %v1760, 16
      %v1767 = vrot.slane %v1765, 1
      %v1768 = vor.u32 %v1763, %v1767
      %v1770 = vshll.u32 %v1761, 16
      %v1772 = vrot.slane %v1770, 1
      %v1773 = vsel %vm189, %v1768, %v1772
      %v1776 = vunpack.c.l.b16 %v1752
      %v1777 = vunpack.c.l.b16 %v1753
      %v1778 = vpack.c.b16 %v1777, %v1776
      %v1780 = vsel %vm207, %v1773, 0
      %v1783 = vsel %vm211, %v1778, 0
      %1785 = vmatpush.bf16.msra.mxu0 0
      %1786 = vmatpush.bf16.msra.mxu0 0
      %1787 = vmatpush.bf16.msra.mxu0 0
      %1788 = vmatpush.bf16.msra.mxu0 0
      %1789 = vmatpush.bf16.msra.mxu0 0
      %1790 = vmatpush.bf16.msra.mxu0 0
      %1791 = vmatpush.bf16.msra.mxu0 0
      %1792 = vmatpush.bf16.msra.mxu0 %v1783
      %1793 = vmatmul.bf16.gmra.mxu0 %v1780
      %v1794 = vpop.f32.mrf.mxu0
      %v1795 = vadd.f32 0.0, %v1794
      %v1796 = vpop.f32.mrf.mxu0
      %v1797 = vadd.f32 0.0, %v1796
      %1798 = vdwg.mxu0
      %v1801 = vunpack.c.l.b16 %v1750
      %v1802 = vunpack.c.l.b16 %v1751
      %v1803 = vpack.c.b16 %v1802, %v1801
      %v1804 = vsel %vm207, %v1760, 0
      %v1807 = vsel %vm211, %v1803, 0
      %1809 = vmatpush.bf16.msra.mxu0 0
      %1810 = vmatpush.bf16.msra.mxu0 0
      %1811 = vmatpush.bf16.msra.mxu0 0
      %1812 = vmatpush.bf16.msra.mxu0 0
      %1813 = vmatpush.bf16.msra.mxu0 0
      %1814 = vmatpush.bf16.msra.mxu0 0
      %1815 = vmatpush.bf16.msra.mxu0 0
      %1816 = vmatpush.bf16.msra.mxu0 %v1807
      %1817 = vmatmul.bf16.gmra.mxu0 %v1804
      %v1818 = vpop.f32.mrf.mxu0
      %v1819 = vadd.f32 %v1795, %v1818
      %v1820 = vpop.f32.mrf.mxu0
      %v1821 = vadd.f32 %v1797, %v1820
      %1822 = vdwg.mxu0
      %s1823 = scalar_lea.vmem %s165, 120
      %v1824 = vld [vmem:[%s1823] sm:$0xf]
      %v1825 = vld [vmem:[%s1823 + $0x4] sm:$0xf]
      %v1826 = vld [vmem:[%s1823 + $0x8] sm:$0x1]
      %v1827 = vld [vmem:[%s257] sm:$0xf]
      %v1828 = vld [vmem:[%s257 + $0x4] sm:$0x3]
      %v1831 = vunpack.c.l.b16 %v1824
      %v1832 = vunpack.c.l.b16 %v1825
      %v1833 = vpack.c.b16 %v1832, %v1831
      %v1836 = vunpack.c.l.b16 %v1827
      %v1837 = vunpack.c.l.b16 %v1828
      %v1838 = vpack.c.b16 %v1837, %v1836
      %v1840 = vsel %vm207, %v1833, 0
      %v1843 = vsel %vm211, %v1838, 0
      %1845 = vmatpush.bf16.msra.mxu0 0
      %1846 = vmatpush.bf16.msra.mxu0 0
      %1847 = vmatpush.bf16.msra.mxu0 0
      %1848 = vmatpush.bf16.msra.mxu0 0
      %1849 = vmatpush.bf16.msra.mxu0 0
      %1850 = vmatpush.bf16.msra.mxu0 0
      %1851 = vmatpush.bf16.msra.mxu0 0
      %1852 = vmatpush.bf16.msra.mxu0 %v1843
      %1853 = vmatmul.bf16.gmra.mxu0 %v1840
      %v1854 = vpop.f32.mrf.mxu0
      %v1855 = vadd.f32 0.0, %v1854
      %v1856 = vpop.f32.mrf.mxu0
      %v1857 = vadd.f32 0.0, %v1856
      %1858 = vdwg.mxu0
      %v1859 = vadd.f32 %v1819, %v1855
      %v1860 = vadd.f32 %v1821, %v1857
      %v1861 = vld [vmem:[%s292] sm:$0xf]
      %v1862 = vld [vmem:[%s292 + $0x4] sm:$0x3]
      %v1864 = vunpack.c.l.b16 %v1826
      %v1865 = vpack.c.b16 %v1864, %v1864
      %v1866 = vshrl.u32 %v1833, 16
      %v1868 = vshll.u32 %v1833, 16
      %v1870 = vrot.slane %v1868, 1
      %v1871 = vor.u32 %v1866, %v1870
      %v1873 = vshll.u32 %v1865, 16
      %v1875 = vrot.slane %v1873, 1
      %v1876 = vsel %vm189, %v1871, %v1875
      %v1879 = vunpack.c.l.b16 %v1861
      %v1880 = vunpack.c.l.b16 %v1862
      %v1881 = vpack.c.b16 %v1880, %v1879
      %v1883 = vsel %vm207, %v1876, 0
      %v1886 = vsel %vm211, %v1881, 0
      %1888 = vmatpush.bf16.msra.mxu0 0
      %1889 = vmatpush.bf16.msra.mxu0 0
      %1890 = vmatpush.bf16.msra.mxu0 0
      %1891 = vmatpush.bf16.msra.mxu0 0
      %1892 = vmatpush.bf16.msra.mxu0 0
      %1893 = vmatpush.bf16.msra.mxu0 0
      %1894 = vmatpush.bf16.msra.mxu0 0
      %1895 = vmatpush.bf16.msra.mxu0 %v1886
      %1896 = vmatmul.bf16.gmra.mxu0 %v1883
      %v1897 = vpop.f32.mrf.mxu0
      %v1898 = vadd.f32 0.0, %v1897
      %v1899 = vpop.f32.mrf.mxu0
      %v1900 = vadd.f32 0.0, %v1899
      %1901 = vdwg.mxu0
      %v1902 = vadd.f32 %v1859, %v1898
      %v1903 = vadd.f32 %v1860, %v1900
      %v1904 = vadd.f32 %v1902, %v337
      %v1905 = vadd.f32 %v1903, %v337
      %v1906 = vsub.f32 0.0, %v1904
      %v1907 = vsub.f32 0.0, %v1905
      %v1908 = vmul.f32 %v1906, 1.442695
      %v1909 = vpow.pop %v1908
      %v1910 = vmul.f32 %v1907, 1.442695
      %v1911 = vpow.pop %v1910
      %v1912 = vadd.f32 %v1909, 1.0
      %v1913 = vadd.f32 %v1911, 1.0
      %v1914 = vrcp.pop %v1912
      %v1915 = vrcp.pop %v1913
      %v1916 = vmul.f32 %v1904, %v1914
      %v1917 = vmul.f32 %v1905, %v1915
      %s1918 = scalar_lea.vmem %s170, 144
      %1919 = vst [vmem:[%s1918] sm:$0xff] %v1916
      %1920 = vst [vmem:[%s1918 + $0x8] sm:$0xff] %v1917
      %v1921 = vld [vmem:[%s1823] sm:$0xf]
      %v1922 = vld [vmem:[%s1823 + $0x4] sm:$0xf]
      %v1923 = vld [vmem:[%s1823 + $0x8] sm:$0x1]
      %v1924 = vld [vmem:[%s1] sm:$0xf]
      %v1925 = vld [vmem:[%s1 + $0x4] sm:$0x3]
      %v1926 = vld [vmem:[%s178] sm:$0xf]
      %v1927 = vld [vmem:[%s178 + $0x4] sm:$0x3]
      %v1931 = vunpack.c.l.b16 %v1921
      %v1932 = vunpack.c.l.b16 %v1922
      %v1933 = vunpack.c.l.b16 %v1923
      %v1934 = vpack.c.b16 %v1932, %v1931
      %v1935 = vpack.c.b16 %v1933, %v1933
      %v1937 = vshrl.u32 %v1934, 16
      %v1939 = vshll.u32 %v1934, 16
      %v1941 = vrot.slane %v1939, 1
      %v1942 = vor.u32 %v1937, %v1941
      %v1944 = vshll.u32 %v1935, 16
      %v1946 = vrot.slane %v1944, 1
      %v1947 = vsel %vm189, %v1942, %v1946
      %v1950 = vunpack.c.l.b16 %v1926
      %v1951 = vunpack.c.l.b16 %v1927
      %v1952 = vpack.c.b16 %v1951, %v1950
      %v1954 = vsel %vm207, %v1947, 0
      %v1957 = vsel %vm211, %v1952, 0
      %1959 = vmatpush.bf16.msra.mxu0 0
      %1960 = vmatpush.bf16.msra.mxu0 0
      %1961 = vmatpush.bf16.msra.mxu0 0
      %1962 = vmatpush.bf16.msra.mxu0 0
      %1963 = vmatpush.bf16.msra.mxu0 0
      %1964 = vmatpush.bf16.msra.mxu0 0
      %1965 = vmatpush.bf16.msra.mxu0 0
      %1966 = vmatpush.bf16.msra.mxu0 %v1957
      %1967 = vmatmul.bf16.gmra.mxu0 %v1954
      %v1968 = vpop.f32.mrf.mxu0
      %v1969 = vadd.f32 0.0, %v1968
      %v1970 = vpop.f32.mrf.mxu0
      %v1971 = vadd.f32 0.0, %v1970
      %1972 = vdwg.mxu0
      %v1975 = vunpack.c.l.b16 %v1924
      %v1976 = vunpack.c.l.b16 %v1925
      %v1977 = vpack.c.b16 %v1976, %v1975
      %v1978 = vsel %vm207, %v1934, 0
      %v1981 = vsel %vm211, %v1977, 0
      %1983 = vmatpush.bf16.msra.mxu0 0
      %1984 = vmatpush.bf16.msra.mxu0 0
      %1985 = vmatpush.bf16.msra.mxu0 0
      %1986 = vmatpush.bf16.msra.mxu0 0
      %1987 = vmatpush.bf16.msra.mxu0 0
      %1988 = vmatpush.bf16.msra.mxu0 0
      %1989 = vmatpush.bf16.msra.mxu0 0
      %1990 = vmatpush.bf16.msra.mxu0 %v1981
      %1991 = vmatmul.bf16.gmra.mxu0 %v1978
      %v1992 = vpop.f32.mrf.mxu0
      %v1993 = vadd.f32 %v1969, %v1992
      %v1994 = vpop.f32.mrf.mxu0
      %v1995 = vadd.f32 %v1971, %v1994
      %1996 = vdwg.mxu0
      %s1997 = scalar_lea.vmem %s165, 132
      %v1998 = vld [vmem:[%s1997] sm:$0xf]
      %v1999 = vld [vmem:[%s1997 + $0x4] sm:$0xf]
      %v2000 = vld [vmem:[%s1997 + $0x8] sm:$0x1]
      %v2001 = vld [vmem:[%s257] sm:$0xf]
      %v2002 = vld [vmem:[%s257 + $0x4] sm:$0x3]
      %v2005 = vunpack.c.l.b16 %v1998
      %v2006 = vunpack.c.l.b16 %v1999
      %v2007 = vpack.c.b16 %v2006, %v2005
      %v2010 = vunpack.c.l.b16 %v2001
      %v2011 = vunpack.c.l.b16 %v2002
      %v2012 = vpack.c.b16 %v2011, %v2010
      %v2014 = vsel %vm207, %v2007, 0
      %v2017 = vsel %vm211, %v2012, 0
      %2019 = vmatpush.bf16.msra.mxu0 0
      %2020 = vmatpush.bf16.msra.mxu0 0
      %2021 = vmatpush.bf16.msra.mxu0 0
      %2022 = vmatpush.bf16.msra.mxu0 0
      %2023 = vmatpush.bf16.msra.mxu0 0
      %2024 = vmatpush.bf16.msra.mxu0 0
      %2025 = vmatpush.bf16.msra.mxu0 0
      %2026 = vmatpush.bf16.msra.mxu0 %v2017
      %2027 = vmatmul.bf16.gmra.mxu0 %v2014
      %v2028 = vpop.f32.mrf.mxu0
      %v2029 = vadd.f32 0.0, %v2028
      %v2030 = vpop.f32.mrf.mxu0
      %v2031 = vadd.f32 0.0, %v2030
      %2032 = vdwg.mxu0
      %v2033 = vadd.f32 %v1993, %v2029
      %v2034 = vadd.f32 %v1995, %v2031
      %v2035 = vld [vmem:[%s292] sm:$0xf]
      %v2036 = vld [vmem:[%s292 + $0x4] sm:$0x3]
      %v2038 = vunpack.c.l.b16 %v2000
      %v2039 = vpack.c.b16 %v2038, %v2038
      %v2040 = vshrl.u32 %v2007, 16
      %v2042 = vshll.u32 %v2007, 16
      %v2044 = vrot.slane %v2042, 1
      %v2045 = vor.u32 %v2040, %v2044
      %v2047 = vshll.u32 %v2039, 16
      %v2049 = vrot.slane %v2047, 1
      %v2050 = vsel %vm189, %v2045, %v2049
      %v2053 = vunpack.c.l.b16 %v2035
      %v2054 = vunpack.c.l.b16 %v2036
      %v2055 = vpack.c.b16 %v2054, %v2053
      %v2057 = vsel %vm207, %v2050, 0
      %v2060 = vsel %vm211, %v2055, 0
      %2062 = vmatpush.bf16.msra.mxu0 0
      %2063 = vmatpush.bf16.msra.mxu0 0
      %2064 = vmatpush.bf16.msra.mxu0 0
      %2065 = vmatpush.bf16.msra.mxu0 0
      %2066 = vmatpush.bf16.msra.mxu0 0
      %2067 = vmatpush.bf16.msra.mxu0 0
      %2068 = vmatpush.bf16.msra.mxu0 0
      %2069 = vmatpush.bf16.msra.mxu0 %v2060
      %2070 = vmatmul.bf16.gmra.mxu0 %v2057
      %v2071 = vpop.f32.mrf.mxu0
      %v2072 = vadd.f32 0.0, %v2071
      %v2073 = vpop.f32.mrf.mxu0
      %v2074 = vadd.f32 0.0, %v2073
      %2075 = vdwg.mxu0
      %v2076 = vadd.f32 %v2033, %v2072
      %v2077 = vadd.f32 %v2034, %v2074
      %v2078 = vadd.f32 %v2076, %v337
      %v2079 = vadd.f32 %v2077, %v337
      %v2080 = vsub.f32 0.0, %v2078
      %v2081 = vsub.f32 0.0, %v2079
      %v2082 = vmul.f32 %v2080, 1.442695
      %v2083 = vpow.pop %v2082
      %v2084 = vmul.f32 %v2081, 1.442695
      %v2085 = vpow.pop %v2084
      %v2086 = vadd.f32 %v2083, 1.0
      %v2087 = vadd.f32 %v2085, 1.0
      %v2088 = vrcp.pop %v2086
      %v2089 = vrcp.pop %v2087
      %v2090 = vmul.f32 %v2078, %v2088
      %v2091 = vmul.f32 %v2079, %v2089
      %s2092 = scalar_lea.vmem %s170, 160
      %2093 = vst [vmem:[%s2092] sm:$0xff] %v2090
      %2094 = vst [vmem:[%s2092 + $0x8] sm:$0xff] %v2091
      %v2095 = vld [vmem:[%s1997] sm:$0xf]
      %v2096 = vld [vmem:[%s1997 + $0x4] sm:$0xf]
      %v2097 = vld [vmem:[%s1997 + $0x8] sm:$0x1]
      %v2098 = vld [vmem:[%s1] sm:$0xf]
      %v2099 = vld [vmem:[%s1 + $0x4] sm:$0x3]
      %v2100 = vld [vmem:[%s178] sm:$0xf]
      %v2101 = vld [vmem:[%s178 + $0x4] sm:$0x3]
      %v2105 = vunpack.c.l.b16 %v2095
      %v2106 = vunpack.c.l.b16 %v2096
      %v2107 = vunpack.c.l.b16 %v2097
      %v2108 = vpack.c.b16 %v2106, %v2105
      %v2109 = vpack.c.b16 %v2107, %v2107
      %v2111 = vshrl.u32 %v2108, 16
      %v2113 = vshll.u32 %v2108, 16
      %v2115 = vrot.slane %v2113, 1
      %v2116 = vor.u32 %v2111, %v2115
      %v2118 = vshll.u32 %v2109, 16
      %v2120 = vrot.slane %v2118, 1
      %v2121 = vsel %vm189, %v2116, %v2120
      %v2124 = vunpack.c.l.b16 %v2100
      %v2125 = vunpack.c.l.b16 %v2101
      %v2126 = vpack.c.b16 %v2125, %v2124
      %v2128 = vsel %vm207, %v2121, 0
      %v2131 = vsel %vm211, %v2126, 0
      %2133 = vmatpush.bf16.msra.mxu0 0
      %2134 = vmatpush.bf16.msra.mxu0 0
      %2135 = vmatpush.bf16.msra.mxu0 0
      %2136 = vmatpush.bf16.msra.mxu0 0
      %2137 = vmatpush.bf16.msra.mxu0 0
      %2138 = vmatpush.bf16.msra.mxu0 0
      %2139 = vmatpush.bf16.msra.mxu0 0
      %2140 = vmatpush.bf16.msra.mxu0 %v2131
      %2141 = vmatmul.bf16.gmra.mxu0 %v2128
      %v2142 = vpop.f32.mrf.mxu0
      %v2143 = vadd.f32 0.0, %v2142
      %v2144 = vpop.f32.mrf.mxu0
      %v2145 = vadd.f32 0.0, %v2144
      %2146 = vdwg.mxu0
      %v2149 = vunpack.c.l.b16 %v2098
      %v2150 = vunpack.c.l.b16 %v2099
      %v2151 = vpack.c.b16 %v2150, %v2149
      %v2152 = vsel %vm207, %v2108, 0
      %v2155 = vsel %vm211, %v2151, 0
      %2157 = vmatpush.bf16.msra.mxu0 0
      %2158 = vmatpush.bf16.msra.mxu0 0
      %2159 = vmatpush.bf16.msra.mxu0 0
      %2160 = vmatpush.bf16.msra.mxu0 0
      %2161 = vmatpush.bf16.msra.mxu0 0
      %2162 = vmatpush.bf16.msra.mxu0 0
      %2163 = vmatpush.bf16.msra.mxu0 0
      %2164 = vmatpush.bf16.msra.mxu0 %v2155
      %2165 = vmatmul.bf16.gmra.mxu0 %v2152
      %v2166 = vpop.f32.mrf.mxu0
      %v2167 = vadd.f32 %v2143, %v2166
      %v2168 = vpop.f32.mrf.mxu0
      %v2169 = vadd.f32 %v2145, %v2168
      %2170 = vdwg.mxu0
      %s2171 = scalar_lea.vmem %s165, 144
      %v2172 = vld [vmem:[%s2171] sm:$0xf]
      %v2173 = vld [vmem:[%s2171 + $0x4] sm:$0xf]
      %v2174 = vld [vmem:[%s2171 + $0x8] sm:$0x1]
      %v2175 = vld [vmem:[%s257] sm:$0xf]
      %v2176 = vld [vmem:[%s257 + $0x4] sm:$0x3]
      %v2179 = vunpack.c.l.b16 %v2172
      %v2180 = vunpack.c.l.b16 %v2173
      %v2181 = vpack.c.b16 %v2180, %v2179
      %v2184 = vunpack.c.l.b16 %v2175
      %v2185 = vunpack.c.l.b16 %v2176
      %v2186 = vpack.c.b16 %v2185, %v2184
      %v2188 = vsel %vm207, %v2181, 0
      %v2191 = vsel %vm211, %v2186, 0
      %2193 = vmatpush.bf16.msra.mxu0 0
      %2194 = vmatpush.bf16.msra.mxu0 0
      %2195 = vmatpush.bf16.msra.mxu0 0
      %2196 = vmatpush.bf16.msra.mxu0 0
      %2197 = vmatpush.bf16.msra.mxu0 0
      %2198 = vmatpush.bf16.msra.mxu0 0
      %2199 = vmatpush.bf16.msra.mxu0 0
      %2200 = vmatpush.bf16.msra.mxu0 %v2191
      %2201 = vmatmul.bf16.gmra.mxu0 %v2188
      %v2202 = vpop.f32.mrf.mxu0
      %v2203 = vadd.f32 0.0, %v2202
      %v2204 = vpop.f32.mrf.mxu0
      %v2205 = vadd.f32 0.0, %v2204
      %2206 = vdwg.mxu0
      %v2207 = vadd.f32 %v2167, %v2203
      %v2208 = vadd.f32 %v2169, %v2205
      %v2209 = vld [vmem:[%s292] sm:$0xf]
      %v2210 = vld [vmem:[%s292 + $0x4] sm:$0x3]
      %v2212 = vunpack.c.l.b16 %v2174
      %v2213 = vpack.c.b16 %v2212, %v2212
      %v2214 = vshrl.u32 %v2181, 16
      %v2216 = vshll.u32 %v2181, 16
      %v2218 = vrot.slane %v2216, 1
      %v2219 = vor.u32 %v2214, %v2218
      %v2221 = vshll.u32 %v2213, 16
      %v2223 = vrot.slane %v2221, 1
      %v2224 = vsel %vm189, %v2219, %v2223
      %v2227 = vunpack.c.l.b16 %v2209
      %v2228 = vunpack.c.l.b16 %v2210
      %v2229 = vpack.c.b16 %v2228, %v2227
      %v2231 = vsel %vm207, %v2224, 0
      %v2234 = vsel %vm211, %v2229, 0
      %2236 = vmatpush.bf16.msra.mxu0 0
      %2237 = vmatpush.bf16.msra.mxu0 0
      %2238 = vmatpush.bf16.msra.mxu0 0
      %2239 = vmatpush.bf16.msra.mxu0 0
      %2240 = vmatpush.bf16.msra.mxu0 0
      %2241 = vmatpush.bf16.msra.mxu0 0
      %2242 = vmatpush.bf16.msra.mxu0 0
      %2243 = vmatpush.bf16.msra.mxu0 %v2234
      %2244 = vmatmul.bf16.gmra.mxu0 %v2231
      %v2245 = vpop.f32.mrf.mxu0
      %v2246 = vadd.f32 0.0, %v2245
      %v2247 = vpop.f32.mrf.mxu0
      %v2248 = vadd.f32 0.0, %v2247
      %2249 = vdwg.mxu0
      %v2250 = vadd.f32 %v2207, %v2246
      %v2251 = vadd.f32 %v2208, %v2248
      %v2252 = vadd.f32 %v2250, %v337
      %v2253 = vadd.f32 %v2251, %v337
      %v2254 = vsub.f32 0.0, %v2252
      %v2255 = vsub.f32 0.0, %v2253
      %v2256 = vmul.f32 %v2254, 1.442695
      %v2257 = vpow.pop %v2256
      %v2258 = vmul.f32 %v2255, 1.442695
      %v2259 = vpow.pop %v2258
      %v2260 = vadd.f32 %v2257, 1.0
      %v2261 = vadd.f32 %v2259, 1.0
      %v2262 = vrcp.pop %v2260
      %v2263 = vrcp.pop %v2261
      %v2264 = vmul.f32 %v2252, %v2262
      %v2265 = vmul.f32 %v2253, %v2263
      %s2266 = scalar_lea.vmem %s170, 176
      %2267 = vst [vmem:[%s2266] sm:$0xff] %v2264
      %2268 = vst [vmem:[%s2266 + $0x8] sm:$0xff] %v2265
      %v2269 = vld [vmem:[%s2171] sm:$0xf]
      %v2270 = vld [vmem:[%s2171 + $0x4] sm:$0xf]
      %v2271 = vld [vmem:[%s2171 + $0x8] sm:$0x1]
      %v2272 = vld [vmem:[%s1] sm:$0xf]
      %v2273 = vld [vmem:[%s1 + $0x4] sm:$0x3]
      %v2274 = vld [vmem:[%s178] sm:$0xf]
      %v2275 = vld [vmem:[%s178 + $0x4] sm:$0x3]
      %v2279 = vunpack.c.l.b16 %v2269
      %v2280 = vunpack.c.l.b16 %v2270
      %v2281 = vunpack.c.l.b16 %v2271
      %v2282 = vpack.c.b16 %v2280, %v2279
      %v2283 = vpack.c.b16 %v2281, %v2281
      %v2285 = vshrl.u32 %v2282, 16
      %v2287 = vshll.u32 %v2282, 16
      %v2289 = vrot.slane %v2287, 1
      %v2290 = vor.u32 %v2285, %v2289
      %v2292 = vshll.u32 %v2283, 16
      %v2294 = vrot.slane %v2292, 1
      %v2295 = vsel %vm189, %v2290, %v2294
      %v2298 = vunpack.c.l.b16 %v2274
      %v2299 = vunpack.c.l.b16 %v2275
      %v2300 = vpack.c.b16 %v2299, %v2298
      %v2302 = vsel %vm207, %v2295, 0
      %v2305 = vsel %vm211, %v2300, 0
      %2307 = vmatpush.bf16.msra.mxu0 0
      %2308 = vmatpush.bf16.msra.mxu0 0
      %2309 = vmatpush.bf16.msra.mxu0 0
      %2310 = vmatpush.bf16.msra.mxu0 0
      %2311 = vmatpush.bf16.msra.mxu0 0
      %2312 = vmatpush.bf16.msra.mxu0 0
      %2313 = vmatpush.bf16.msra.mxu0 0
      %2314 = vmatpush.bf16.msra.mxu0 %v2305
      %2315 = vmatmul.bf16.gmra.mxu0 %v2302
      %v2316 = vpop.f32.mrf.mxu0
      %v2317 = vadd.f32 0.0, %v2316
      %v2318 = vpop.f32.mrf.mxu0
      %v2319 = vadd.f32 0.0, %v2318
      %2320 = vdwg.mxu0
      %v2323 = vunpack.c.l.b16 %v2272
      %v2324 = vunpack.c.l.b16 %v2273
      %v2325 = vpack.c.b16 %v2324, %v2323
      %v2326 = vsel %vm207, %v2282, 0
      %v2329 = vsel %vm211, %v2325, 0
      %2331 = vmatpush.bf16.msra.mxu0 0
      %2332 = vmatpush.bf16.msra.mxu0 0
      %2333 = vmatpush.bf16.msra.mxu0 0
      %2334 = vmatpush.bf16.msra.mxu0 0
      %2335 = vmatpush.bf16.msra.mxu0 0
      %2336 = vmatpush.bf16.msra.mxu0 0
      %2337 = vmatpush.bf16.msra.mxu0 0
      %2338 = vmatpush.bf16.msra.mxu0 %v2329
      %2339 = vmatmul.bf16.gmra.mxu0 %v2326
      %v2340 = vpop.f32.mrf.mxu0
      %v2341 = vadd.f32 %v2317, %v2340
      %v2342 = vpop.f32.mrf.mxu0
      %v2343 = vadd.f32 %v2319, %v2342
      %2344 = vdwg.mxu0
      %s2345 = scalar_lea.vmem %s165, 156
      %v2346 = vld [vmem:[%s2345] sm:$0xf]
      %v2347 = vld [vmem:[%s2345 + $0x4] sm:$0xf]
      %v2348 = vld [vmem:[%s2345 + $0x8] sm:$0x1]
      %v2349 = vld [vmem:[%s257] sm:$0xf]
      %v2350 = vld [vmem:[%s257 + $0x4] sm:$0x3]
      %v2353 = vunpack.c.l.b16 %v2346
      %v2354 = vunpack.c.l.b16 %v2347
      %v2355 = vpack.c.b16 %v2354, %v2353
      %v2358 = vunpack.c.l.b16 %v2349
      %v2359 = vunpack.c.l.b16 %v2350
      %v2360 = vpack.c.b16 %v2359, %v2358
      %v2362 = vsel %vm207, %v2355, 0
      %v2365 = vsel %vm211, %v2360, 0
      %2367 = vmatpush.bf16.msra.mxu0 0
      %2368 = vmatpush.bf16.msra.mxu0 0
      %2369 = vmatpush.bf16.msra.mxu0 0
      %2370 = vmatpush.bf16.msra.mxu0 0
      %2371 = vmatpush.bf16.msra.mxu0 0
      %2372 = vmatpush.bf16.msra.mxu0 0
      %2373 = vmatpush.bf16.msra.mxu0 0
      %2374 = vmatpush.bf16.msra.mxu0 %v2365
      %2375 = vmatmul.bf16.gmra.mxu0 %v2362
      %v2376 = vpop.f32.mrf.mxu0
      %v2377 = vadd.f32 0.0, %v2376
      %v2378 = vpop.f32.mrf.mxu0
      %v2379 = vadd.f32 0.0, %v2378
      %2380 = vdwg.mxu0
      %v2381 = vadd.f32 %v2341, %v2377
      %v2382 = vadd.f32 %v2343, %v2379
      %v2383 = vld [vmem:[%s292] sm:$0xf]
      %v2384 = vld [vmem:[%s292 + $0x4] sm:$0x3]
      %v2386 = vunpack.c.l.b16 %v2348
      %v2387 = vpack.c.b16 %v2386, %v2386
      %v2388 = vshrl.u32 %v2355, 16
      %v2390 = vshll.u32 %v2355, 16
      %v2392 = vrot.slane %v2390, 1
      %v2393 = vor.u32 %v2388, %v2392
      %v2395 = vshll.u32 %v2387, 16
      %v2397 = vrot.slane %v2395, 1
      %v2398 = vsel %vm189, %v2393, %v2397
      %v2401 = vunpack.c.l.b16 %v2383
      %v2402 = vunpack.c.l.b16 %v2384
      %v2403 = vpack.c.b16 %v2402, %v2401
      %v2405 = vsel %vm207, %v2398, 0
      %v2408 = vsel %vm211, %v2403, 0
      %2410 = vmatpush.bf16.msra.mxu0 0
      %2411 = vmatpush.bf16.msra.mxu0 0
      %2412 = vmatpush.bf16.msra.mxu0 0
      %2413 = vmatpush.bf16.msra.mxu0 0
      %2414 = vmatpush.bf16.msra.mxu0 0
      %2415 = vmatpush.bf16.msra.mxu0 0
      %2416 = vmatpush.bf16.msra.mxu0 0
      %2417 = vmatpush.bf16.msra.mxu0 %v2408
      %2418 = vmatmul.bf16.gmra.mxu0 %v2405
      %v2419 = vpop.f32.mrf.mxu0
      %v2420 = vadd.f32 0.0, %v2419
      %v2421 = vpop.f32.mrf.mxu0
      %v2422 = vadd.f32 0.0, %v2421
      %2423 = vdwg.mxu0
      %v2424 = vadd.f32 %v2381, %v2420
      %v2425 = vadd.f32 %v2382, %v2422
      %v2426 = vadd.f32 %v2424, %v337
      %v2427 = vadd.f32 %v2425, %v337
      %v2428 = vsub.f32 0.0, %v2426
      %v2429 = vsub.f32 0.0, %v2427
      %v2430 = vmul.f32 %v2428, 1.442695
      %v2431 = vpow.pop %v2430
      %v2432 = vmul.f32 %v2429, 1.442695
      %v2433 = vpow.pop %v2432
      %v2434 = vadd.f32 %v2431, 1.0
      %v2435 = vadd.f32 %v2433, 1.0
      %v2436 = vrcp.pop %v2434
      %v2437 = vrcp.pop %v2435
      %v2438 = vmul.f32 %v2426, %v2436
      %v2439 = vmul.f32 %v2427, %v2437
      %s2440 = scalar_lea.vmem %s170, 192
      %2441 = vst [vmem:[%s2440] sm:$0xff] %v2438
      %2442 = vst [vmem:[%s2440 + $0x8] sm:$0xff] %v2439
      %v2443 = vld [vmem:[%s2345] sm:$0xf]
      %v2444 = vld [vmem:[%s2345 + $0x4] sm:$0xf]
      %v2445 = vld [vmem:[%s2345 + $0x8] sm:$0x1]
      %v2446 = vld [vmem:[%s1] sm:$0xf]
      %v2447 = vld [vmem:[%s1 + $0x4] sm:$0x3]
      %v2448 = vld [vmem:[%s178] sm:$0xf]
      %v2449 = vld [vmem:[%s178 + $0x4] sm:$0x3]
      %v2453 = vunpack.c.l.b16 %v2443
      %v2454 = vunpack.c.l.b16 %v2444
      %v2455 = vunpack.c.l.b16 %v2445
      %v2456 = vpack.c.b16 %v2454, %v2453
      %v2457 = vpack.c.b16 %v2455, %v2455
      %v2459 = vshrl.u32 %v2456, 16
      %v2461 = vshll.u32 %v2456, 16
      %v2463 = vrot.slane %v2461, 1
      %v2464 = vor.u32 %v2459, %v2463
      %v2466 = vshll.u32 %v2457, 16
      %v2468 = vrot.slane %v2466, 1
      %v2469 = vsel %vm189, %v2464, %v2468
      %v2472 = vunpack.c.l.b16 %v2448
      %v2473 = vunpack.c.l.b16 %v2449
      %v2474 = vpack.c.b16 %v2473, %v2472
      %v2476 = vsel %vm207, %v2469, 0
      %v2479 = vsel %vm211, %v2474, 0
      %2481 = vmatpush.bf16.msra.mxu0 0
      %2482 = vmatpush.bf16.msra.mxu0 0
      %2483 = vmatpush.bf16.msra.mxu0 0
      %2484 = vmatpush.bf16.msra.mxu0 0
      %2485 = vmatpush.bf16.msra.mxu0 0
      %2486 = vmatpush.bf16.msra.mxu0 0
      %2487 = vmatpush.bf16.msra.mxu0 0
      %2488 = vmatpush.bf16.msra.mxu0 %v2479
      %2489 = vmatmul.bf16.gmra.mxu0 %v2476
      %v2490 = vpop.f32.mrf.mxu0
      %v2491 = vadd.f32 0.0, %v2490
      %v2492 = vpop.f32.mrf.mxu0
      %v2493 = vadd.f32 0.0, %v2492
      %2494 = vdwg.mxu0
      %v2497 = vunpack.c.l.b16 %v2446
      %v2498 = vunpack.c.l.b16 %v2447
      %v2499 = vpack.c.b16 %v2498, %v2497
      %v2500 = vsel %vm207, %v2456, 0
      %v2503 = vsel %vm211, %v2499, 0
      %2505 = vmatpush.bf16.msra.mxu0 0
      %2506 = vmatpush.bf16.msra.mxu0 0
      %2507 = vmatpush.bf16.msra.mxu0 0
      %2508 = vmatpush.bf16.msra.mxu0 0
      %2509 = vmatpush.bf16.msra.mxu0 0
      %2510 = vmatpush.bf16.msra.mxu0 0
      %2511 = vmatpush.bf16.msra.mxu0 0
      %2512 = vmatpush.bf16.msra.mxu0 %v2503
      %2513 = vmatmul.bf16.gmra.mxu0 %v2500
      %v2514 = vpop.f32.mrf.mxu0
      %v2515 = vadd.f32 %v2491, %v2514
      %v2516 = vpop.f32.mrf.mxu0
      %v2517 = vadd.f32 %v2493, %v2516
      %2518 = vdwg.mxu0
      %s2519 = scalar_lea.vmem %s165, 168
      %v2520 = vld [vmem:[%s2519] sm:$0xf]
      %v2521 = vld [vmem:[%s2519 + $0x4] sm:$0xf]
      %v2522 = vld [vmem:[%s2519 + $0x8] sm:$0x1]
      %v2523 = vld [vmem:[%s257] sm:$0xf]
      %v2524 = vld [vmem:[%s257 + $0x4] sm:$0x3]
      %v2527 = vunpack.c.l.b16 %v2520
      %v2528 = vunpack.c.l.b16 %v2521
      %v2529 = vpack.c.b16 %v2528, %v2527
      %v2532 = vunpack.c.l.b16 %v2523
      %v2533 = vunpack.c.l.b16 %v2524
      %v2534 = vpack.c.b16 %v2533, %v2532
      %v2536 = vsel %vm207, %v2529, 0
      %v2539 = vsel %vm211, %v2534, 0
      %2541 = vmatpush.bf16.msra.mxu0 0
      %2542 = vmatpush.bf16.msra.mxu0 0
      %2543 = vmatpush.bf16.msra.mxu0 0
      %2544 = vmatpush.bf16.msra.mxu0 0
      %2545 = vmatpush.bf16.msra.mxu0 0
      %2546 = vmatpush.bf16.msra.mxu0 0
      %2547 = vmatpush.bf16.msra.mxu0 0
      %2548 = vmatpush.bf16.msra.mxu0 %v2539
      %2549 = vmatmul.bf16.gmra.mxu0 %v2536
      %v2550 = vpop.f32.mrf.mxu0
      %v2551 = vadd.f32 0.0, %v2550
      %v2552 = vpop.f32.mrf.mxu0
      %v2553 = vadd.f32 0.0, %v2552
      %2554 = vdwg.mxu0
      %v2555 = vadd.f32 %v2515, %v2551
      %v2556 = vadd.f32 %v2517, %v2553
      %v2557 = vld [vmem:[%s292] sm:$0xf]
      %v2558 = vld [vmem:[%s292 + $0x4] sm:$0x3]
      %v2560 = vunpack.c.l.b16 %v2522
      %v2561 = vpack.c.b16 %v2560, %v2560
      %v2562 = vshrl.u32 %v2529, 16
      %v2564 = vshll.u32 %v2529, 16
      %v2566 = vrot.slane %v2564, 1
      %v2567 = vor.u32 %v2562, %v2566
      %v2569 = vshll.u32 %v2561, 16
      %v2571 = vrot.slane %v2569, 1
      %v2572 = vsel %vm189, %v2567, %v2571
      %v2575 = vunpack.c.l.b16 %v2557
      %v2576 = vunpack.c.l.b16 %v2558
      %v2577 = vpack.c.b16 %v2576, %v2575
      %v2579 = vsel %vm207, %v2572, 0
      %v2582 = vsel %vm211, %v2577, 0
      %2584 = vmatpush.bf16.msra.mxu0 0
      %2585 = vmatpush.bf16.msra.mxu0 0
      %2586 = vmatpush.bf16.msra.mxu0 0
      %2587 = vmatpush.bf16.msra.mxu0 0
      %2588 = vmatpush.bf16.msra.mxu0 0
      %2589 = vmatpush.bf16.msra.mxu0 0
      %2590 = vmatpush.bf16.msra.mxu0 0
      %2591 = vmatpush.bf16.msra.mxu0 %v2582
      %2592 = vmatmul.bf16.gmra.mxu0 %v2579
      %v2593 = vpop.f32.mrf.mxu0
      %v2594 = vadd.f32 0.0, %v2593
      %v2595 = vpop.f32.mrf.mxu0
      %v2596 = vadd.f32 0.0, %v2595
      %2597 = vdwg.mxu0
      %v2598 = vadd.f32 %v2555, %v2594
      %v2599 = vadd.f32 %v2556, %v2596
      %v2600 = vadd.f32 %v2598, %v337
      %v2601 = vadd.f32 %v2599, %v337
      %v2602 = vsub.f32 0.0, %v2600
      %v2603 = vsub.f32 0.0, %v2601
      %v2604 = vmul.f32 %v2602, 1.442695
      %v2605 = vpow.pop %v2604
      %v2606 = vmul.f32 %v2603, 1.442695
      %v2607 = vpow.pop %v2606
      %v2608 = vadd.f32 %v2605, 1.0
      %v2609 = vadd.f32 %v2607, 1.0
      %v2610 = vrcp.pop %v2608
      %v2611 = vrcp.pop %v2609
      %v2612 = vmul.f32 %v2600, %v2610
      %v2613 = vmul.f32 %v2601, %v2611
      %s2614 = scalar_lea.vmem %s170, 208
      %2615 = vst [vmem:[%s2614] sm:$0xff] %v2612
      %2616 = vst [vmem:[%s2614 + $0x8] sm:$0xff] %v2613
      %v2617 = vld [vmem:[%s2519] sm:$0xf]
      %v2618 = vld [vmem:[%s2519 + $0x4] sm:$0xf]
      %v2619 = vld [vmem:[%s2519 + $0x8] sm:$0x1]
      %v2620 = vld [vmem:[%s1] sm:$0xf]
      %v2621 = vld [vmem:[%s1 + $0x4] sm:$0x3]
      %v2622 = vld [vmem:[%s178] sm:$0xf]
      %v2623 = vld [vmem:[%s178 + $0x4] sm:$0x3]
      %v2627 = vunpack.c.l.b16 %v2617
      %v2628 = vunpack.c.l.b16 %v2618
      %v2629 = vunpack.c.l.b16 %v2619
      %v2630 = vpack.c.b16 %v2628, %v2627
      %v2631 = vpack.c.b16 %v2629, %v2629
      %v2633 = vshrl.u32 %v2630, 16
      %v2635 = vshll.u32 %v2630, 16
      %v2637 = vrot.slane %v2635, 1
      %v2638 = vor.u32 %v2633, %v2637
      %v2640 = vshll.u32 %v2631, 16
      %v2642 = vrot.slane %v2640, 1
      %v2643 = vsel %vm189, %v2638, %v2642
      %v2646 = vunpack.c.l.b16 %v2622
      %v2647 = vunpack.c.l.b16 %v2623
      %v2648 = vpack.c.b16 %v2647, %v2646
      %v2650 = vsel %vm207, %v2643, 0
      %v2653 = vsel %vm211, %v2648, 0
      %2655 = vmatpush.bf16.msra.mxu0 0
      %2656 = vmatpush.bf16.msra.mxu0 0
      %2657 = vmatpush.bf16.msra.mxu0 0
      %2658 = vmatpush.bf16.msra.mxu0 0
      %2659 = vmatpush.bf16.msra.mxu0 0
      %2660 = vmatpush.bf16.msra.mxu0 0
      %2661 = vmatpush.bf16.msra.mxu0 0
      %2662 = vmatpush.bf16.msra.mxu0 %v2653
      %2663 = vmatmul.bf16.gmra.mxu0 %v2650
      %v2664 = vpop.f32.mrf.mxu0
      %v2665 = vadd.f32 0.0, %v2664
      %v2666 = vpop.f32.mrf.mxu0
      %v2667 = vadd.f32 0.0, %v2666
      %2668 = vdwg.mxu0
      %v2671 = vunpack.c.l.b16 %v2620
      %v2672 = vunpack.c.l.b16 %v2621
      %v2673 = vpack.c.b16 %v2672, %v2671
      %v2674 = vsel %vm207, %v2630, 0
      %v2677 = vsel %vm211, %v2673, 0
      %2679 = vmatpush.bf16.msra.mxu0 0
      %2680 = vmatpush.bf16.msra.mxu0 0
      %2681 = vmatpush.bf16.msra.mxu0 0
      %2682 = vmatpush.bf16.msra.mxu0 0
      %2683 = vmatpush.bf16.msra.mxu0 0
      %2684 = vmatpush.bf16.msra.mxu0 0
      %2685 = vmatpush.bf16.msra.mxu0 0
      %2686 = vmatpush.bf16.msra.mxu0 %v2677
      %2687 = vmatmul.bf16.gmra.mxu0 %v2674
      %v2688 = vpop.f32.mrf.mxu0
      %v2689 = vadd.f32 %v2665, %v2688
      %v2690 = vpop.f32.mrf.mxu0
      %v2691 = vadd.f32 %v2667, %v2690
      %2692 = vdwg.mxu0
      %s2693 = scalar_lea.vmem %s165, 180
      %v2694 = vld [vmem:[%s2693] sm:$0xf]
      %v2695 = vld [vmem:[%s2693 + $0x4] sm:$0xf]
      %v2696 = vld [vmem:[%s2693 + $0x8] sm:$0x1]
      %v2697 = vld [vmem:[%s257] sm:$0xf]
      %v2698 = vld [vmem:[%s257 + $0x4] sm:$0x3]
      %v2701 = vunpack.c.l.b16 %v2694
      %v2702 = vunpack.c.l.b16 %v2695
      %v2703 = vpack.c.b16 %v2702, %v2701
      %v2706 = vunpack.c.l.b16 %v2697
      %v2707 = vunpack.c.l.b16 %v2698
      %v2708 = vpack.c.b16 %v2707, %v2706
      %v2710 = vsel %vm207, %v2703, 0
      %v2713 = vsel %vm211, %v2708, 0
      %2715 = vmatpush.bf16.msra.mxu0 0
      %2716 = vmatpush.bf16.msra.mxu0 0
      %2717 = vmatpush.bf16.msra.mxu0 0
      %2718 = vmatpush.bf16.msra.mxu0 0
      %2719 = vmatpush.bf16.msra.mxu0 0
      %2720 = vmatpush.bf16.msra.mxu0 0
      %2721 = vmatpush.bf16.msra.mxu0 0
      %2722 = vmatpush.bf16.msra.mxu0 %v2713
      %2723 = vmatmul.bf16.gmra.mxu0 %v2710
      %v2724 = vpop.f32.mrf.mxu0
      %v2725 = vadd.f32 0.0, %v2724
      %v2726 = vpop.f32.mrf.mxu0
      %v2727 = vadd.f32 0.0, %v2726
      %2728 = vdwg.mxu0
      %v2729 = vadd.f32 %v2689, %v2725
      %v2730 = vadd.f32 %v2691, %v2727
      %v2731 = vld [vmem:[%s292] sm:$0xf]
      %v2732 = vld [vmem:[%s292 + $0x4] sm:$0x3]
      %v2734 = vunpack.c.l.b16 %v2696
      %v2735 = vpack.c.b16 %v2734, %v2734
      %v2736 = vshrl.u32 %v2703, 16
      %v2738 = vshll.u32 %v2703, 16
      %v2740 = vrot.slane %v2738, 1
      %v2741 = vor.u32 %v2736, %v2740
      %v2743 = vshll.u32 %v2735, 16
      %v2745 = vrot.slane %v2743, 1
      %v2746 = vsel %vm189, %v2741, %v2745
      %v2749 = vunpack.c.l.b16 %v2731
      %v2750 = vunpack.c.l.b16 %v2732
      %v2751 = vpack.c.b16 %v2750, %v2749
      %v2753 = vsel %vm207, %v2746, 0
      %v2756 = vsel %vm211, %v2751, 0
      %2758 = vmatpush.bf16.msra.mxu0 0
      %2759 = vmatpush.bf16.msra.mxu0 0
      %2760 = vmatpush.bf16.msra.mxu0 0
      %2761 = vmatpush.bf16.msra.mxu0 0
      %2762 = vmatpush.bf16.msra.mxu0 0
      %2763 = vmatpush.bf16.msra.mxu0 0
      %2764 = vmatpush.bf16.msra.mxu0 0
      %2765 = vmatpush.bf16.msra.mxu0 %v2756
      %2766 = vmatmul.bf16.gmra.mxu0 %v2753
      %v2767 = vpop.f32.mrf.mxu0
      %v2768 = vadd.f32 0.0, %v2767
      %v2769 = vpop.f32.mrf.mxu0
      %v2770 = vadd.f32 0.0, %v2769
      %2771 = vdwg.mxu0
      %v2772 = vadd.f32 %v2729, %v2768
      %v2773 = vadd.f32 %v2730, %v2770
      %v2774 = vadd.f32 %v2772, %v337
      %v2775 = vadd.f32 %v2773, %v337
      %v2776 = vsub.f32 0.0, %v2774
      %v2777 = vsub.f32 0.0, %v2775
      %v2778 = vmul.f32 %v2776, 1.442695
      %v2779 = vpow.pop %v2778
      %v2780 = vmul.f32 %v2777, 1.442695
      %v2781 = vpow.pop %v2780
      %v2782 = vadd.f32 %v2779, 1.0
      %v2783 = vadd.f32 %v2781, 1.0
      %v2784 = vrcp.pop %v2782
      %v2785 = vrcp.pop %v2783
      %v2786 = vmul.f32 %v2774, %v2784
      %v2787 = vmul.f32 %v2775, %v2785
      %s2788 = scalar_lea.vmem %s170, 224
      %2789 = vst [vmem:[%s2788] sm:$0xff] %v2786
      %2790 = vst [vmem:[%s2788 + $0x8] sm:$0xff] %v2787
      %v2791 = vld [vmem:[%s2693] sm:$0xf]
      %v2792 = vld [vmem:[%s2693 + $0x4] sm:$0xf]
      %v2793 = vld [vmem:[%s2693 + $0x8] sm:$0x1]
      %v2794 = vld [vmem:[%s1] sm:$0xf]
      %v2795 = vld [vmem:[%s1 + $0x4] sm:$0x3]
      %v2796 = vld [vmem:[%s178] sm:$0xf]
      %v2797 = vld [vmem:[%s178 + $0x4] sm:$0x3]
      %v2801 = vunpack.c.l.b16 %v2791
      %v2802 = vunpack.c.l.b16 %v2792
      %v2803 = vunpack.c.l.b16 %v2793
      %v2804 = vpack.c.b16 %v2802, %v2801
      %v2805 = vpack.c.b16 %v2803, %v2803
      %v2807 = vshrl.u32 %v2804, 16
      %v2809 = vshll.u32 %v2804, 16
      %v2811 = vrot.slane %v2809, 1
      %v2812 = vor.u32 %v2807, %v2811
      %v2814 = vshll.u32 %v2805, 16
      %v2816 = vrot.slane %v2814, 1
      %v2817 = vsel %vm189, %v2812, %v2816
      %v2820 = vunpack.c.l.b16 %v2796
      %v2821 = vunpack.c.l.b16 %v2797
      %v2822 = vpack.c.b16 %v2821, %v2820
      %v2824 = vsel %vm207, %v2817, 0
      %v2827 = vsel %vm211, %v2822, 0
      %2829 = vmatpush.bf16.msra.mxu0 0
      %2830 = vmatpush.bf16.msra.mxu0 0
      %2831 = vmatpush.bf16.msra.mxu0 0
      %2832 = vmatpush.bf16.msra.mxu0 0
      %2833 = vmatpush.bf16.msra.mxu0 0
      %2834 = vmatpush.bf16.msra.mxu0 0
      %2835 = vmatpush.bf16.msra.mxu0 0
      %2836 = vmatpush.bf16.msra.mxu0 %v2827
      %2837 = vmatmul.bf16.gmra.mxu0 %v2824
      %v2838 = vpop.f32.mrf.mxu0
      %v2839 = vadd.f32 0.0, %v2838
      %v2840 = vpop.f32.mrf.mxu0
      %v2841 = vadd.f32 0.0, %v2840
      %2842 = vdwg.mxu0
      %v2845 = vunpack.c.l.b16 %v2794
      %v2846 = vunpack.c.l.b16 %v2795
      %v2847 = vpack.c.b16 %v2846, %v2845
      %v2848 = vsel %vm207, %v2804, 0
      %v2851 = vsel %vm211, %v2847, 0
      %2853 = vmatpush.bf16.msra.mxu0 0
      %2854 = vmatpush.bf16.msra.mxu0 0
      %2855 = vmatpush.bf16.msra.mxu0 0
      %2856 = vmatpush.bf16.msra.mxu0 0
      %2857 = vmatpush.bf16.msra.mxu0 0
      %2858 = vmatpush.bf16.msra.mxu0 0
      %2859 = vmatpush.bf16.msra.mxu0 0
      %2860 = vmatpush.bf16.msra.mxu0 %v2851
      %2861 = vmatmul.bf16.gmra.mxu0 %v2848
      %v2862 = vpop.f32.mrf.mxu0
      %v2863 = vadd.f32 %v2839, %v2862
      %v2864 = vpop.f32.mrf.mxu0
      %v2865 = vadd.f32 %v2841, %v2864
      %2866 = vdwg.mxu0
      %s2867 = scalar_lea.vmem %s165, 192
      %v2868 = vld [vmem:[%s2867] sm:$0xf]
      %v2869 = vld [vmem:[%s2867 + $0x4] sm:$0xf]
      %v2870 = vld [vmem:[%s2867 + $0x8] sm:$0x1]
      %v2871 = vld [vmem:[%s257] sm:$0xf]
      %v2872 = vld [vmem:[%s257 + $0x4] sm:$0x3]
      %v2875 = vunpack.c.l.b16 %v2868
      %v2876 = vunpack.c.l.b16 %v2869
      %v2877 = vpack.c.b16 %v2876, %v2875
      %v2880 = vunpack.c.l.b16 %v2871
      %v2881 = vunpack.c.l.b16 %v2872
      %v2882 = vpack.c.b16 %v2881, %v2880
      %v2884 = vsel %vm207, %v2877, 0
      %v2887 = vsel %vm211, %v2882, 0
      %2889 = vmatpush.bf16.msra.mxu0 0
      %2890 = vmatpush.bf16.msra.mxu0 0
      %2891 = vmatpush.bf16.msra.mxu0 0
      %2892 = vmatpush.bf16.msra.mxu0 0
      %2893 = vmatpush.bf16.msra.mxu0 0
      %2894 = vmatpush.bf16.msra.mxu0 0
      %2895 = vmatpush.bf16.msra.mxu0 0
      %2896 = vmatpush.bf16.msra.mxu0 %v2887
      %2897 = vmatmul.bf16.gmra.mxu0 %v2884
      %v2898 = vpop.f32.mrf.mxu0
      %v2899 = vadd.f32 0.0, %v2898
      %v2900 = vpop.f32.mrf.mxu0
      %v2901 = vadd.f32 0.0, %v2900
      %2902 = vdwg.mxu0
      %v2903 = vadd.f32 %v2863, %v2899
      %v2904 = vadd.f32 %v2865, %v2901
      %v2905 = vld [vmem:[%s292] sm:$0xf]
      %v2906 = vld [vmem:[%s292 + $0x4] sm:$0x3]
      %v2908 = vunpack.c.l.b16 %v2870
      %v2909 = vpack.c.b16 %v2908, %v2908
      %v2910 = vshrl.u32 %v2877, 16
      %v2912 = vshll.u32 %v2877, 16
      %v2914 = vrot.slane %v2912, 1
      %v2915 = vor.u32 %v2910, %v2914
      %v2917 = vshll.u32 %v2909, 16
      %v2919 = vrot.slane %v2917, 1
      %v2920 = vsel %vm189, %v2915, %v2919
      %v2923 = vunpack.c.l.b16 %v2905
      %v2924 = vunpack.c.l.b16 %v2906
      %v2925 = vpack.c.b16 %v2924, %v2923
      %v2927 = vsel %vm207, %v2920, 0
      %v2930 = vsel %vm211, %v2925, 0
      %2932 = vmatpush.bf16.msra.mxu0 0
      %2933 = vmatpush.bf16.msra.mxu0 0
      %2934 = vmatpush.bf16.msra.mxu0 0
      %2935 = vmatpush.bf16.msra.mxu0 0
      %2936 = vmatpush.bf16.msra.mxu0 0
      %2937 = vmatpush.bf16.msra.mxu0 0
      %2938 = vmatpush.bf16.msra.mxu0 0
      %2939 = vmatpush.bf16.msra.mxu0 %v2930
      %2940 = vmatmul.bf16.gmra.mxu0 %v2927
      %v2941 = vpop.f32.mrf.mxu0
      %v2942 = vadd.f32 0.0, %v2941
      %v2943 = vpop.f32.mrf.mxu0
      %v2944 = vadd.f32 0.0, %v2943
      %2945 = vdwg.mxu0
      %v2946 = vadd.f32 %v2903, %v2942
      %v2947 = vadd.f32 %v2904, %v2944
      %v2948 = vadd.f32 %v2946, %v337
      %v2949 = vadd.f32 %v2947, %v337
      %v2950 = vsub.f32 0.0, %v2948
      %v2951 = vsub.f32 0.0, %v2949
      %v2952 = vmul.f32 %v2950, 1.442695
      %v2953 = vpow.pop %v2952
      %v2954 = vmul.f32 %v2951, 1.442695
      %v2955 = vpow.pop %v2954
      %v2956 = vadd.f32 %v2953, 1.0
      %v2957 = vadd.f32 %v2955, 1.0
      %v2958 = vrcp.pop %v2956
      %v2959 = vrcp.pop %v2957
      %v2960 = vmul.f32 %v2948, %v2958
      %v2961 = vmul.f32 %v2949, %v2959
      %s2962 = scalar_lea.vmem %s170, 240
      %2963 = vst [vmem:[%s2962] sm:$0xff] %v2960
      %2964 = vst [vmem:[%s2962 + $0x8] sm:$0xff] %v2961
      %p2965 = scmp.lt.s32.totalorder %s14, 1
      %s2966 = scalar_select %p2965, %s14, 1
      %s2967 = smul.addr %s2966, 32
      %s2968 = smul.addr %s2967, 8
      %s2969 = scalar_lea.vmem %s3, %s2968
      // Predicated region
      $region33: #{yolo_wrapper_forward.6} parent=31 // pred_check
        %p2970 = pneg %p100
      $region34: #{yolo_wrapper_forward.6} parent=31 // pred_check_branch
        %2972 = sbr.rel (%p2970) target = $region36
      $region35: #{yolo_wrapper_forward.6} parent=31 // pred_region
        _
      $region36: #{yolo_wrapper_forward.6} parent=31 // pred_fallthru
        _
    $region32: #{yolo_wrapper_forward.6} parent=5 // pred_fallthru
      _
    %p2973 = scmp.le.s32.totalorder 2, %s9
    // Predicated region
    $region37: #{yolo_wrapper_forward.6} parent=5 // pred_check
      %p2974 = pneg %p2973
    $region38: #{yolo_wrapper_forward.6} parent=5 // pred_check_branch
      %2976 = sbr.rel (%p2974) target = $region40
    $region39: #{yolo_wrapper_forward.6} parent=5 // pred_region
      %s2977 = ssub.s32 %s9, 2
      // Predicated region
      $region41: #{yolo_wrapper_forward.6} parent=39 // pred_check
        %p2978 = pneg %p106
      $region42: #{yolo_wrapper_forward.6} parent=39 // pred_check_branch
        %2980 = sbr.rel (%p2978) target = $region44
      $region43: #{yolo_wrapper_forward.6} parent=39 // pred_region
        %p2981 = scmp.lt.s32.totalorder %s15, 1
        %s2982 = scalar_select %p2981, %s15, 1
        %s2983 = smul.addr %s2982, 32
        %s2984 = smul.addr %s2983, 8
        %s2985 = scalar_lea.vmem %s3, %s2984
      $region44: #{yolo_wrapper_forward.6} parent=39 // pred_fallthru
        _
    $region40: #{yolo_wrapper_forward.6} parent=5 // pred_fallthru
      _
  $region6: #{yolo_wrapper_forward.6} parent=0 // loop_footer
    %s13 = sadd.s32 1, %s9
  $region7: #{yolo_wrapper_forward.6} parent=0 // loop_footer_branch
    %8 = sbr.rel target = $region3
  $region8: #{yolo_wrapper_forward.6} parent=0 // loop_exit
    _

// kernel: yolo_wrapper_forward.9
$region0: #{yolo_wrapper_forward.9}
  #allocation0 [shape = 'u32[]', space=smem, size = 0x4, offset = 0x4, fixed_abs, tag = 'smem constant byte address 0x4 - core index']
  #allocation1 [shape = 'u32[72,128]{1,0:T(1,128)}', space=vmem, size = 0x9000, scoped, tag = 'internal scratch']
  %s0 = inlined_call_operand.vmem [shape: bf16[128,32], index: 0, kind: input, shape index: {}]
  %s1 = inlined_call_operand.vmem [shape: bf16[32,128], index: 1, kind: input, shape index: {}]
  %s2 = inlined_call_operand.vmem [shape: f32[1,128], index: 2, kind: input, shape index: {}]
  %s3 = inlined_call_operand.vmem [shape: f32[128,128], index: 3, kind: output, shape index: {}]
  %s4 = sld [smem:[#allocation0]]
  $region22: #{yolo_wrapper_forward.9} parent=0
    _
  %s6 = ssub.s32 1, %s4
  %s7 = scalar_select 0, %s6, %s4
  // Predicated region
  $region2: #{yolo_wrapper_forward.9} parent=0 // pred_check
    _
  $region3: #{yolo_wrapper_forward.9} parent=0 // pred_check_branch
    %9 = sbr.rel (0) target = $region5
  $region4: #{yolo_wrapper_forward.9} parent=0 // pred_region
    _
  $region5: #{yolo_wrapper_forward.9} parent=0 // pred_fallthru
    _
  // Predicated region
  $region6: #{yolo_wrapper_forward.9} parent=0 // pred_check
    _
  $region7: #{yolo_wrapper_forward.9} parent=0 // pred_check_branch
    %11 = sbr.rel (0) target = $region9
  $region8: #{yolo_wrapper_forward.9} parent=0 // pred_region
    _
  $region9: #{yolo_wrapper_forward.9} parent=0 // pred_fallthru
    _
  // Predicated region
  $region10: #{yolo_wrapper_forward.9} parent=0 // pred_check
    _
  $region11: #{yolo_wrapper_forward.9} parent=0 // pred_check_branch
    %13 = sbr.rel (0) target = $region13
  $region12: #{yolo_wrapper_forward.9} parent=0 // pred_region
    _
  $region13: #{yolo_wrapper_forward.9} parent=0 // pred_fallthru
    _
  %v15 = vld [vmem:[%s0] sm:$0xf]
  %v16 = vld [vmem:[%s0 + $0x4] sm:$0xf]
  %v17 = vld [vmem:[%s0 + $0x8] sm:$0xf]
  %v18 = vld [vmem:[%s0 + $0xc] sm:$0xf]
  %v19 = vld [vmem:[%s0 + $0x10] sm:$0xf]
  %v20 = vld [vmem:[%s0 + $0x14] sm:$0xf]
  %v21 = vld [vmem:[%s0 + $0x18] sm:$0xf]
  %v22 = vld [vmem:[%s0 + $0x1c] sm:$0xf]
  %v23 = vld [vmem:[%s0 + $0x20] sm:$0xf]
  %v24 = vld [vmem:[%s0 + $0x24] sm:$0xf]
  %v25 = vld [vmem:[%s0 + $0x28] sm:$0xf]
  %v26 = vld [vmem:[%s0 + $0x2c] sm:$0xf]
  %v27 = vld [vmem:[%s0 + $0x30] sm:$0xf]
  %v28 = vld [vmem:[%s0 + $0x34] sm:$0xf]
  %v29 = vld [vmem:[%s0 + $0x38] sm:$0xf]
  %v30 = vld [vmem:[%s0 + $0x3c] sm:$0xf]
  %v31 = vld [vmem:[%s1] sm:$0xf]
  %v32 = vld [vmem:[%s1 + $0x4] sm:$0xf]
  %v33 = vld [vmem:[%s1 + $0x8] sm:$0xf]
  %v34 = vld [vmem:[%s1 + $0xc] sm:$0xf]
  %v35 = vld [vmem:[%s2] sm:$0x1]
  %v37 = vperm.slane %v35, 0
  %v55 = vunpack.c.l.b16 %v15
  %v56 = vunpack.c.l.b16 %v16
  %v57 = vunpack.c.l.b16 %v17
  %v58 = vunpack.c.l.b16 %v18
  %v59 = vunpack.c.l.b16 %v19
  %v60 = vunpack.c.l.b16 %v20
  %v61 = vunpack.c.l.b16 %v21
  %v62 = vunpack.c.l.b16 %v22
  %v63 = vunpack.c.l.b16 %v23
  %v64 = vunpack.c.l.b16 %v24
  %v65 = vunpack.c.l.b16 %v25
  %v66 = vunpack.c.l.b16 %v26
  %v67 = vunpack.c.l.b16 %v27
  %v68 = vunpack.c.l.b16 %v28
  %v69 = vunpack.c.l.b16 %v29
  %v70 = vunpack.c.l.b16 %v30
  %v71 = vpack.c.b16 %v56, %v55
  %v72 = vpack.c.b16 %v58, %v57
  %v73 = vpack.c.b16 %v60, %v59
  %v74 = vpack.c.b16 %v62, %v61
  %v75 = vpack.c.b16 %v64, %v63
  %v76 = vpack.c.b16 %v66, %v65
  %v77 = vpack.c.b16 %v68, %v67
  %v78 = vpack.c.b16 %v70, %v69
  %v83 = vunpack.c.l.b16 %v31
  %v84 = vunpack.c.l.b16 %v32
  %v85 = vunpack.c.l.b16 %v33
  %v86 = vunpack.c.l.b16 %v34
  %v87 = vpack.c.b16 %v84, %v83
  %v88 = vpack.c.b16 %v86, %v85
  %vm91 = vcmask 261120
  %v93 = vsel %vm91, %v71, 0
  %v96 = vsel %vm91, %v72, 0
  %v99 = vsel %vm91, %v73, 0
  %v102 = vsel %vm91, %v74, 0
  %v105 = vsel %vm91, %v75, 0
  %v108 = vsel %vm91, %v76, 0
  %v111 = vsel %vm91, %v77, 0
  %v114 = vsel %vm91, %v78, 0
  %116 = vmatpush.bf16.msra.mxu0 0
  %117 = vmatpush.bf16.msra.mxu0 0
  %118 = vmatpush.bf16.msra.mxu0 0
  %119 = vmatpush.bf16.msra.mxu0 0
  %120 = vmatpush.bf16.msra.mxu0 0
  %121 = vmatpush.bf16.msra.mxu0 0
  %122 = vmatpush.bf16.msra.mxu0 %v88
  %123 = vmatpush.bf16.msra.mxu0 %v87
  %124 = vmatmul.bf16.gmra.mxu0 %v93
  %v125 = vpop.f32.mrf.mxu0
  %v126 = vadd.f32 %v37, %v125
  %v127 = vpop.f32.mrf.mxu0
  %v128 = vadd.f32 %v37, %v127
  %129 = vmatmul.bf16.gmra.mxu0 %v96
  %v130 = vpop.f32.mrf.mxu0
  %v131 = vadd.f32 %v37, %v130
  %v132 = vpop.f32.mrf.mxu0
  %v133 = vadd.f32 %v37, %v132
  %134 = vmatmul.bf16.gmra.mxu0 %v99
  %v135 = vpop.f32.mrf.mxu0
  %v136 = vadd.f32 %v37, %v135
  %v137 = vpop.f32.mrf.mxu0
  %v138 = vadd.f32 %v37, %v137
  %139 = vmatmul.bf16.gmra.mxu0 %v102
  %v140 = vpop.f32.mrf.mxu0
  %v141 = vadd.f32 %v37, %v140
  %v142 = vpop.f32.mrf.mxu0
  %v143 = vadd.f32 %v37, %v142
  %144 = vmatmul.bf16.gmra.mxu0 %v105
  %v145 = vpop.f32.mrf.mxu0
  %v146 = vadd.f32 %v37, %v145
  %v147 = vpop.f32.mrf.mxu0
  %v148 = vadd.f32 %v37, %v147
  %149 = vmatmul.bf16.gmra.mxu0 %v108
  %v150 = vpop.f32.mrf.mxu0
  %v151 = vadd.f32 %v37, %v150
  %v152 = vpop.f32.mrf.mxu0
  %v153 = vadd.f32 %v37, %v152
  %154 = vmatmul.bf16.gmra.mxu0 %v111
  %v155 = vpop.f32.mrf.mxu0
  %v156 = vadd.f32 %v37, %v155
  %v157 = vpop.f32.mrf.mxu0
  %v158 = vadd.f32 %v37, %v157
  %159 = vmatmul.bf16.gmra.mxu0 %v114
  %v160 = vpop.f32.mrf.mxu0
  %v161 = vadd.f32 %v37, %v160
  %v162 = vpop.f32.mrf.mxu0
  %v163 = vadd.f32 %v37, %v162
  %164 = vdwg.mxu0
  %165 = vst [vmem:[%s3] sm:$0xff] %v126
  %166 = vst [vmem:[%s3 + $0x8] sm:$0xff] %v128
  %167 = vst [vmem:[%s3 + $0x10] sm:$0xff] %v131
  %168 = vst [vmem:[%s3 + $0x18] sm:$0xff] %v133
  %169 = vst [vmem:[%s3 + $0x20] sm:$0xff] %v136
  %170 = vst [vmem:[%s3 + $0x28] sm:$0xff] %v138
  %171 = vst [vmem:[%s3 + $0x30] sm:$0xff] %v141
  %172 = vst [vmem:[%s3 + $0x38] sm:$0xff] %v143
  %173 = vst [vmem:[%s3 + $0x40] sm:$0xff] %v146
  %174 = vst [vmem:[%s3 + $0x48] sm:$0xff] %v148
  %175 = vst [vmem:[%s3 + $0x50] sm:$0xff] %v151
  %176 = vst [vmem:[%s3 + $0x58] sm:$0xff] %v153
  %177 = vst [vmem:[%s3 + $0x60] sm:$0xff] %v156
  %178 = vst [vmem:[%s3 + $0x68] sm:$0xff] %v158
  %179 = vst [vmem:[%s3 + $0x70] sm:$0xff] %v161
  %180 = vst [vmem:[%s3 + $0x78] sm:$0xff] %v163
  // Predicated region
  $region14: #{yolo_wrapper_forward.9} parent=0 // pred_check
    _
  $region15: #{yolo_wrapper_forward.9} parent=0 // pred_check_branch
    %182 = sbr.rel (0) target = $region17
  $region16: #{yolo_wrapper_forward.9} parent=0 // pred_region
    _
  $region17: #{yolo_wrapper_forward.9} parent=0 // pred_fallthru
    _
  // Predicated region
  $region18: #{yolo_wrapper_forward.9} parent=0 // pred_check
    _
  $region19: #{yolo_wrapper_forward.9} parent=0 // pred_check_branch
    %184 = sbr.rel (0) target = $region21
  $region20: #{yolo_wrapper_forward.9} parent=0 // pred_region
    _
  $region21: #{yolo_wrapper_forward.9} parent=0 // pred_fallthru
    _

// kernel: yolo_wrapper_forward.7
$region0: #{yolo_wrapper_forward.7}
  #allocation0 [shape = 'u32[]', space=smem, size = 0x4, offset = 0x4, fixed_abs, tag = 'smem constant byte address 0x4 - core index']
  #allocation1 [shape = 'u32[72,128]{1,0:T(1,128)}', space=vmem, size = 0x9000, scoped, tag = 'internal scratch']
  %s0 = inlined_call_operand.vmem [shape: bf16[2,9,9,64], index: 0, kind: input, shape index: {}]
  %s1 = inlined_call_operand.vmem [shape: bf16[4,64,128], index: 1, kind: input, shape index: {}]
  %s2 = inlined_call_operand.vmem [shape: f32[1,128], index: 2, kind: input, shape index: {}]
  %s3 = inlined_call_operand.vmem [shape: f32[2,8,8,128], index: 3, kind: output, shape index: {}]
  %s4 = sld [smem:[#allocation0]]
  $region45: #{yolo_wrapper_forward.7} parent=0
    _
  %s6 = ssub.s32 1, %s4
  %s7 = scalar_select 0, %s6, %s4
  loop: start=0, step=1, limit=4
  $region2: #{yolo_wrapper_forward.7} parent=0 // loop_pre_header
    _
  $region3: #{yolo_wrapper_forward.7} parent=0 // loop_header
    %s9 = sphi 0, %s13
    %p10 = scmp.ge.s32.totalorder %s9, 4
    %s19 = sphi 0, %s21
    %s22 = sphi 0, %s19
    %s23 = sphi 0, %s22
    %s39 = sphi 0, %s23
    %s43 = sphi 0, %s43
    %s45 = sphi 0, %s43
    %s46 = sphi 0, %s45
    %s60 = sphi 0, %s46
    %s64 = sphi 0, %s64
    %s66 = sphi 0, %s64
    %s67 = sphi 0, %s66
    %s81 = sphi 0, %s67
    %s87 = sphi 0, %s89
    %s90 = sphi 0, %s87
    %s91 = sphi 0, %s90
    %s107 = sphi 0, %s91
  $region4: #{yolo_wrapper_forward.7} parent=0 // loop_header_branch
    %12 = sbr.rel (%p10) target = $region8
  $region5: #{yolo_wrapper_forward.7} parent=0 // loop_body
    %s14 = ssub.s32 %s9, 1
    %s15 = ssub.s32 %s9, 2
    %s16 = sadd.s32 %s9, 1
    %s17 = ssub.s32 %s9, %s16
    %p18 = scmp.eq.s32.totalorder %s17, 0
    %s20 = sadd.s32 %s19, 1
    %s21 = scalar_select %p18, %s19, %s20
    %p24 = pneg %p18
    %p25 = scmp.eq.s32.totalorder %s9, 1
    %p26 = por %p24, %p25
    %p27 = scmp.ne.s32.totalorder %s19, %s22
    %p28 = scmp.eq.s32.totalorder %s9, 0
    %p29 = por %p27, %p28
    %p30 = scmp.ne.s32.totalorder %s19, %s22
    %p31 = scmp.eq.s32.totalorder %s14, 1
    %p32 = por %p30, %p31
    %p33 = scmp.ne.s32.totalorder %s22, %s23
    %p34 = scmp.eq.s32.totalorder %s14, 0
    %p35 = por %p33, %p34
    %p36 = scmp.ne.s32.totalorder %s22, %s23
    %p37 = scmp.eq.s32.totalorder %s15, 1
    %p38 = por %p36, %p37
    %p40 = scmp.ne.s32.totalorder %s23, %s39
    %p41 = scmp.eq.s32.totalorder %s15, 0
    %p42 = por %p40, %p41
    %s44 = sadd.s32 %s43, 1
    %p47 = scmp.eq.s32.totalorder %s9, 1
    %p48 = scmp.ne.s32.totalorder %s43, %s45
    %p49 = scmp.eq.s32.totalorder %s9, 0
    %p50 = por %p48, %p49
    %p51 = scmp.ne.s32.totalorder %s43, %s45
    %p52 = scmp.eq.s32.totalorder %s14, 1
    %p53 = por %p51, %p52
    %p54 = scmp.ne.s32.totalorder %s45, %s46
    %p55 = scmp.eq.s32.totalorder %s14, 0
    %p56 = por %p54, %p55
    %p57 = scmp.ne.s32.totalorder %s45, %s46
    %p58 = scmp.eq.s32.totalorder %s15, 1
    %p59 = por %p57, %p58
    %p61 = scmp.ne.s32.totalorder %s46, %s60
    %p62 = scmp.eq.s32.totalorder %s15, 0
    %p63 = por %p61, %p62
    %s65 = sadd.s32 %s64, 1
    %p68 = scmp.eq.s32.totalorder %s9, 1
    %p69 = scmp.ne.s32.totalorder %s64, %s66
    %p70 = scmp.eq.s32.totalorder %s9, 0
    %p71 = por %p69, %p70
    %p72 = scmp.ne.s32.totalorder %s64, %s66
    %p73 = scmp.eq.s32.totalorder %s14, 1
    %p74 = por %p72, %p73
    %p75 = scmp.ne.s32.totalorder %s66, %s67
    %p76 = scmp.eq.s32.totalorder %s14, 0
    %p77 = por %p75, %p76
    %p78 = scmp.ne.s32.totalorder %s66, %s67
    %p79 = scmp.eq.s32.totalorder %s15, 1
    %p80 = por %p78, %p79
    %p82 = scmp.ne.s32.totalorder %s67, %s81
    %p83 = scmp.eq.s32.totalorder %s15, 0
    %p84 = por %p82, %p83
    %s85 = ssub.s32 %s9, %s16
    %p86 = scmp.eq.s32.totalorder %s85, 0
    %s88 = sadd.s32 %s87, 1
    %s89 = scalar_select %p86, %s87, %s88
    %p92 = pneg %p86
    %p93 = scmp.eq.s32.totalorder %s9, 1
    %p94 = por %p92, %p93
    %p95 = scmp.ne.s32.totalorder %s87, %s90
    %p96 = scmp.eq.s32.totalorder %s9, 0
    %p97 = por %p95, %p96
    %p98 = scmp.ne.s32.totalorder %s87, %s90
    %p99 = scmp.eq.s32.totalorder %s14, 1
    %p100 = por %p98, %p99
    %p101 = scmp.ne.s32.totalorder %s90, %s91
    %p102 = scmp.eq.s32.totalorder %s14, 0
    %p103 = por %p101, %p102
    %p104 = scmp.ne.s32.totalorder %s90, %s91
    %p105 = scmp.eq.s32.totalorder %s15, 1
    %p106 = por %p104, %p105
    %p108 = scmp.ne.s32.totalorder %s91, %s107
    %p109 = scmp.eq.s32.totalorder %s15, 0
    %p110 = por %p108, %p109
    %p111 = scmp.le.s32.totalorder 1, %s9
    %p112 = scmp.lt.s32.totalorder %s9, 3
    %p113 = pnand %p111, %p112
    %p114 = pneg %p113
    // Predicated region
    $region9: #{yolo_wrapper_forward.7} parent=5 // pred_check
      _
    $region10: #{yolo_wrapper_forward.7} parent=5 // pred_check_branch
      %116 = sbr.rel (%p113) target = $region12
    $region11: #{yolo_wrapper_forward.7} parent=5 // pred_region
      %s117 = ssub.s32 %s9, 1
      // Predicated region
      $region13: #{yolo_wrapper_forward.7} parent=11 // pred_check
        %p118 = pneg %p56
      $region14: #{yolo_wrapper_forward.7} parent=11 // pred_check_branch
        %120 = sbr.rel (%p118) target = $region16
      $region15: #{yolo_wrapper_forward.7} parent=11 // pred_region
        _
      $region16: #{yolo_wrapper_forward.7} parent=11 // pred_fallthru
        _
      // Predicated region
      $region17: #{yolo_wrapper_forward.7} parent=11 // pred_check
        %p121 = pneg %p77
      $region18: #{yolo_wrapper_forward.7} parent=11 // pred_check_branch
        %123 = sbr.rel (%p121) target = $region20
      $region19: #{yolo_wrapper_forward.7} parent=11 // pred_region
        _
      $region20: #{yolo_wrapper_forward.7} parent=11 // pred_fallthru
        _
    $region12: #{yolo_wrapper_forward.7} parent=5 // pred_fallthru
      _
    %p124 = scmp.lt.s32.totalorder %s9, 2
    // Predicated region
    $region21: #{yolo_wrapper_forward.7} parent=5 // pred_check
      %p125 = pneg %p124
    $region22: #{yolo_wrapper_forward.7} parent=5 // pred_check_branch
      %127 = sbr.rel (%p125) target = $region24
    $region23: #{yolo_wrapper_forward.7} parent=5 // pred_region
      // Predicated region
      $region25: #{yolo_wrapper_forward.7} parent=23 // pred_check
        %p128 = pneg %p29
      $region26: #{yolo_wrapper_forward.7} parent=23 // pred_check_branch
        %130 = sbr.rel (%p128) target = $region28
      $region27: #{yolo_wrapper_forward.7} parent=23 // pred_region
        %p131 = scmp.lt.s32.totalorder %s9, 1
        %s132 = scalar_select %p131, %s9, 1
        %s133 = smul.addr %s132, 18
        %s134 = smul.addr %s133, 4
        %s135 = scalar_lea.vmem %s0, %s134
      $region28: #{yolo_wrapper_forward.7} parent=23 // pred_fallthru
        _
    $region24: #{yolo_wrapper_forward.7} parent=5 // pred_fallthru
      _
    %p136 = scmp.le.s32.totalorder 1, %s9
    %p137 = scmp.lt.s32.totalorder %s9, 3
    %p138 = pnand %p136, %p137
    %p139 = pneg %p138
    // Predicated region
    $region29: #{yolo_wrapper_forward.7} parent=5 // pred_check
      _
    $region30: #{yolo_wrapper_forward.7} parent=5 // pred_check_branch
      %141 = sbr.rel (%p138) target = $region32
    $region31: #{yolo_wrapper_forward.7} parent=5 // pred_region
      %s142 = ssub.s32 %s9, 1
      %p143 = scmp.lt.s32.totalorder %s14, 1
      %s144 = scalar_select %p143, %s14, 1
      %s145 = smul.addr %s144, 18
      %s146 = smul.addr %s145, 4
      %s147 = scalar_lea.vmem %s0, %s146
      %p148 = pneg %p35
      %p149 = pneg %p32
      %p150 = pneg %p56
      %p151 = pneg %p53
      %p152 = pneg %p77
      %p153 = pneg %p74
      %p154 = pneg %p103
      %p155 = pneg %p100
      %p156 = scmp.lt.s32.totalorder %s14, 1
      %s157 = scalar_select %p156, %s14, 1
      %s158 = smul.addr %s157, 8
      %s159 = smul.addr %s158, 8
      %s160 = scalar_lea.vmem %s3, %s159
      %p161 = scmp.lt.s32.totalorder %s14, 1
      %s162 = scalar_select %p161, %s14, 1
      %s163 = smul.addr %s162, 18
      %s164 = smul.addr %s163, 4
      %s165 = scalar_lea.vmem %s0, %s164
      %p166 = scmp.lt.s32.totalorder %s14, 1
      %s167 = scalar_select %p166, %s14, 1
      %s168 = smul.addr %s167, 8
      %s169 = smul.addr %s168, 8
      %s170 = scalar_lea.vmem %s3, %s169
      %v172 = vld [vmem:[%s2] sm:$0x1]
      %v173 = vld [vmem:[%s165] sm:$0xf]
      %v174 = vld [vmem:[%s165 + $0x4] sm:$0x1]
      %v175 = vld [vmem:[%s1] sm:$0xf]
      %v176 = vld [vmem:[%s1 + $0x4] sm:$0xf]
      %v177 = vld [vmem:[%s1 + $0x8] sm:$0xf]
      %v178 = vld [vmem:[%s1 + $0xc] sm:$0xf]
      %v179 = vld [vmem:[%s1 + $0x10] sm:$0xf]
      %v180 = vld [vmem:[%s1 + $0x14] sm:$0xf]
      %v181 = vld [vmem:[%s1 + $0x18] sm:$0xf]
      %v182 = vld [vmem:[%s1 + $0x1c] sm:$0xf]
      %s183 = scalar_lea.vmem %s1, 32
      %v184 = vld [vmem:[%s183] sm:$0xf]
      %v185 = vld [vmem:[%s183 + $0x4] sm:$0xf]
      %v186 = vld [vmem:[%s183 + $0x8] sm:$0xf]
      %v187 = vld [vmem:[%s183 + $0xc] sm:$0xf]
      %v188 = vld [vmem:[%s183 + $0x10] sm:$0xf]
      %v189 = vld [vmem:[%s183 + $0x14] sm:$0xf]
      %v190 = vld [vmem:[%s183 + $0x18] sm:$0xf]
      %v191 = vld [vmem:[%s183 + $0x1c] sm:$0xf]
      %v194 = vunpack.c.l.b16 %v173
      %v195 = vunpack.c.l.b16 %v174
      %v196 = vpack.c.b16 %v195, %v194
      %v198 = vshrl.u32 %v196, 16
      %v200 = vshll.u32 %v196, 16
      %v202 = vrot.slane %v200, 1
      %v203 = vor.u32 %v198, %v202
      %v212 = vunpack.c.l.b16 %v184
      %v213 = vunpack.c.l.b16 %v185
      %v214 = vunpack.c.l.b16 %v186
      %v215 = vunpack.c.l.b16 %v187
      %v216 = vunpack.c.l.b16 %v188
      %v217 = vunpack.c.l.b16 %v189
      %v218 = vunpack.c.l.b16 %v190
      %v219 = vunpack.c.l.b16 %v191
      %v220 = vpack.c.b16 %v213, %v212
      %v221 = vpack.c.b16 %v215, %v214
      %v222 = vpack.c.b16 %v217, %v216
      %v223 = vpack.c.b16 %v219, %v218
      %vm228 = vcmask 523264
      %v230 = vsel %vm228, %v203, 0
      %232 = vmatpush.bf16.msra.mxu0 0
      %233 = vmatpush.bf16.msra.mxu0 0
      %234 = vmatpush.bf16.msra.mxu0 0
      %235 = vmatpush.bf16.msra.mxu0 0
      %236 = vmatpush.bf16.msra.mxu0 %v223
      %237 = vmatpush.bf16.msra.mxu0 %v222
      %238 = vmatpush.bf16.msra.mxu0 %v221
      %239 = vmatpush.bf16.msra.mxu0 %v220
      %240 = vmatmul.bf16.gmra.mxu0 %v230
      %v241 = vpop.f32.mrf.mxu0
      %v242 = vadd.f32 0.0, %v241
      %v243 = vpop.f32.mrf.mxu0
      %244 = vdwg.mxu0
      %v253 = vunpack.c.l.b16 %v175
      %v254 = vunpack.c.l.b16 %v176
      %v255 = vunpack.c.l.b16 %v177
      %v256 = vunpack.c.l.b16 %v178
      %v257 = vunpack.c.l.b16 %v179
      %v258 = vunpack.c.l.b16 %v180
      %v259 = vunpack.c.l.b16 %v181
      %v260 = vunpack.c.l.b16 %v182
      %v261 = vpack.c.b16 %v254, %v253
      %v262 = vpack.c.b16 %v256, %v255
      %v263 = vpack.c.b16 %v258, %v257
      %v264 = vpack.c.b16 %v260, %v259
      %v270 = vsel %vm228, %v173, 0
      %272 = vmatpush.bf16.msra.mxu0 0
      %273 = vmatpush.bf16.msra.mxu0 0
      %274 = vmatpush.bf16.msra.mxu0 0
      %275 = vmatpush.bf16.msra.mxu0 0
      %276 = vmatpush.bf16.msra.mxu0 %v264
      %277 = vmatpush.bf16.msra.mxu0 %v263
      %278 = vmatpush.bf16.msra.mxu0 %v262
      %279 = vmatpush.bf16.msra.mxu0 %v261
      %280 = vmatmul.bf16.gmra.mxu0 %v270
      %v281 = vpop.f32.mrf.mxu0
      %v282 = vadd.f32 %v242, %v281
      %v283 = vpop.f32.mrf.mxu0
      %284 = vdwg.mxu0
      %s285 = scalar_lea.vmem %s165, 8
      %v286 = vld [vmem:[%s285] sm:$0xf]
      %v287 = vld [vmem:[%s285 + $0x4] sm:$0x1]
      %s288 = scalar_lea.vmem %s1, 64
      %v289 = vld [vmem:[%s288] sm:$0xf]
      %v290 = vld [vmem:[%s288 + $0x4] sm:$0xf]
      %v291 = vld [vmem:[%s288 + $0x8] sm:$0xf]
      %v292 = vld [vmem:[%s288 + $0xc] sm:$0xf]
      %v293 = vld [vmem:[%s288 + $0x10] sm:$0xf]
      %v294 = vld [vmem:[%s288 + $0x14] sm:$0xf]
      %v295 = vld [vmem:[%s288 + $0x18] sm:$0xf]
      %v296 = vld [vmem:[%s288 + $0x1c] sm:$0xf]
      %v305 = vunpack.c.l.b16 %v289
      %v306 = vunpack.c.l.b16 %v290
      %v307 = vunpack.c.l.b16 %v291
      %v308 = vunpack.c.l.b16 %v292
      %v309 = vunpack.c.l.b16 %v293
      %v310 = vunpack.c.l.b16 %v294
      %v311 = vunpack.c.l.b16 %v295
      %v312 = vunpack.c.l.b16 %v296
      %v313 = vpack.c.b16 %v306, %v305
      %v314 = vpack.c.b16 %v308, %v307
      %v315 = vpack.c.b16 %v310, %v309
      %v316 = vpack.c.b16 %v312, %v311
      %v322 = vsel %vm228, %v286, 0
      %324 = vmatpush.bf16.msra.mxu0 0
      %325 = vmatpush.bf16.msra.mxu0 0
      %326 = vmatpush.bf16.msra.mxu0 0
      %327 = vmatpush.bf16.msra.mxu0 0
      %328 = vmatpush.bf16.msra.mxu0 %v316
      %329 = vmatpush.bf16.msra.mxu0 %v315
      %330 = vmatpush.bf16.msra.mxu0 %v314
      %331 = vmatpush.bf16.msra.mxu0 %v313
      %332 = vmatmul.bf16.gmra.mxu0 %v322
      %v333 = vpop.f32.mrf.mxu0
      %v334 = vadd.f32 0.0, %v333
      %v335 = vpop.f32.mrf.mxu0
      %336 = vdwg.mxu0
      %v337 = vadd.f32 %v282, %v334
      %s338 = scalar_lea.vmem %s1, 96
      %v339 = vld [vmem:[%s338] sm:$0xf]
      %v340 = vld [vmem:[%s338 + $0x4] sm:$0xf]
      %v341 = vld [vmem:[%s338 + $0x8] sm:$0xf]
      %v342 = vld [vmem:[%s338 + $0xc] sm:$0xf]
      %v343 = vld [vmem:[%s338 + $0x10] sm:$0xf]
      %v344 = vld [vmem:[%s338 + $0x14] sm:$0xf]
      %v345 = vld [vmem:[%s338 + $0x18] sm:$0xf]
      %v346 = vld [vmem:[%s338 + $0x1c] sm:$0xf]
      %v349 = vunpack.c.l.b16 %v286
      %v350 = vunpack.c.l.b16 %v287
      %v351 = vpack.c.b16 %v350, %v349
      %v353 = vshrl.u32 %v351, 16
      %v355 = vshll.u32 %v351, 16
      %v357 = vrot.slane %v355, 1
      %v358 = vor.u32 %v353, %v357
      %v367 = vunpack.c.l.b16 %v339
      %v368 = vunpack.c.l.b16 %v340
      %v369 = vunpack.c.l.b16 %v341
      %v370 = vunpack.c.l.b16 %v342
      %v371 = vunpack.c.l.b16 %v343
      %v372 = vunpack.c.l.b16 %v344
      %v373 = vunpack.c.l.b16 %v345
      %v374 = vunpack.c.l.b16 %v346
      %v375 = vpack.c.b16 %v368, %v367
      %v376 = vpack.c.b16 %v370, %v369
      %v377 = vpack.c.b16 %v372, %v371
      %v378 = vpack.c.b16 %v374, %v373
      %v384 = vsel %vm228, %v358, 0
      %386 = vmatpush.bf16.msra.mxu0 0
      %387 = vmatpush.bf16.msra.mxu0 0
      %388 = vmatpush.bf16.msra.mxu0 0
      %389 = vmatpush.bf16.msra.mxu0 0
      %390 = vmatpush.bf16.msra.mxu0 %v378
      %391 = vmatpush.bf16.msra.mxu0 %v377
      %392 = vmatpush.bf16.msra.mxu0 %v376
      %393 = vmatpush.bf16.msra.mxu0 %v375
      %394 = vmatmul.bf16.gmra.mxu0 %v384
      %v395 = vpop.f32.mrf.mxu0
      %v396 = vadd.f32 0.0, %v395
      %v397 = vpop.f32.mrf.mxu0
      %398 = vdwg.mxu0
      %v399 = vadd.f32 %v337, %v396
      %v401 = vperm.slane %v172, 0
      %v403 = vadd.f32 %v399, %v401
      %v404 = vsub.f32 0.0, %v403
      %v405 = vmul.f32 %v404, 1.442695
      %v406 = vpow.pop %v405
      %v407 = vadd.f32 %v406, 1.0
      %v408 = vrcp.pop %v407
      %v409 = vmul.f32 %v403, %v408
      %410 = vst [vmem:[%s170] sm:$0xff] %v409
      %v411 = vld [vmem:[%s285] sm:$0xf]
      %v412 = vld [vmem:[%s285 + $0x4] sm:$0x1]
      %v413 = vld [vmem:[%s1] sm:$0xf]
      %v414 = vld [vmem:[%s1 + $0x4] sm:$0xf]
      %v415 = vld [vmem:[%s1 + $0x8] sm:$0xf]
      %v416 = vld [vmem:[%s1 + $0xc] sm:$0xf]
      %v417 = vld [vmem:[%s1 + $0x10] sm:$0xf]
      %v418 = vld [vmem:[%s1 + $0x14] sm:$0xf]
      %v419 = vld [vmem:[%s1 + $0x18] sm:$0xf]
      %v420 = vld [vmem:[%s1 + $0x1c] sm:$0xf]
      %v421 = vld [vmem:[%s183] sm:$0xf]
      %v422 = vld [vmem:[%s183 + $0x4] sm:$0xf]
      %v423 = vld [vmem:[%s183 + $0x8] sm:$0xf]
      %v424 = vld [vmem:[%s183 + $0xc] sm:$0xf]
      %v425 = vld [vmem:[%s183 + $0x10] sm:$0xf]
      %v426 = vld [vmem:[%s183 + $0x14] sm:$0xf]
      %v427 = vld [vmem:[%s183 + $0x18] sm:$0xf]
      %v428 = vld [vmem:[%s183 + $0x1c] sm:$0xf]
      %v431 = vunpack.c.l.b16 %v411
      %v432 = vunpack.c.l.b16 %v412
      %v433 = vpack.c.b16 %v432, %v431
      %v435 = vshrl.u32 %v433, 16
      %v437 = vshll.u32 %v433, 16
      %v439 = vrot.slane %v437, 1
      %v440 = vor.u32 %v435, %v439
      %v449 = vunpack.c.l.b16 %v421
      %v450 = vunpack.c.l.b16 %v422
      %v451 = vunpack.c.l.b16 %v423
      %v452 = vunpack.c.l.b16 %v424
      %v453 = vunpack.c.l.b16 %v425
      %v454 = vunpack.c.l.b16 %v426
      %v455 = vunpack.c.l.b16 %v427
      %v456 = vunpack.c.l.b16 %v428
      %v457 = vpack.c.b16 %v450, %v449
      %v458 = vpack.c.b16 %v452, %v451
      %v459 = vpack.c.b16 %v454, %v453
      %v460 = vpack.c.b16 %v456, %v455
      %v466 = vsel %vm228, %v440, 0
      %468 = vmatpush.bf16.msra.mxu0 0
      %469 = vmatpush.bf16.msra.mxu0 0
      %470 = vmatpush.bf16.msra.mxu0 0
      %471 = vmatpush.bf16.msra.mxu0 0
      %472 = vmatpush.bf16.msra.mxu0 %v460
      %473 = vmatpush.bf16.msra.mxu0 %v459
      %474 = vmatpush.bf16.msra.mxu0 %v458
      %475 = vmatpush.bf16.msra.mxu0 %v457
      %476 = vmatmul.bf16.gmra.mxu0 %v466
      %v477 = vpop.f32.mrf.mxu0
      %v478 = vadd.f32 0.0, %v477
      %v479 = vpop.f32.mrf.mxu0
      %480 = vdwg.mxu0
      %v489 = vunpack.c.l.b16 %v413
      %v490 = vunpack.c.l.b16 %v414
      %v491 = vunpack.c.l.b16 %v415
      %v492 = vunpack.c.l.b16 %v416
      %v493 = vunpack.c.l.b16 %v417
      %v494 = vunpack.c.l.b16 %v418
      %v495 = vunpack.c.l.b16 %v419
      %v496 = vunpack.c.l.b16 %v420
      %v497 = vpack.c.b16 %v490, %v489
      %v498 = vpack.c.b16 %v492, %v491
      %v499 = vpack.c.b16 %v494, %v493
      %v500 = vpack.c.b16 %v496, %v495
      %v506 = vsel %vm228, %v411, 0
      %508 = vmatpush.bf16.msra.mxu0 0
      %509 = vmatpush.bf16.msra.mxu0 0
      %510 = vmatpush.bf16.msra.mxu0 0
      %511 = vmatpush.bf16.msra.mxu0 0
      %512 = vmatpush.bf16.msra.mxu0 %v500
      %513 = vmatpush.bf16.msra.mxu0 %v499
      %514 = vmatpush.bf16.msra.mxu0 %v498
      %515 = vmatpush.bf16.msra.mxu0 %v497
      %516 = vmatmul.bf16.gmra.mxu0 %v506
      %v517 = vpop.f32.mrf.mxu0
      %v518 = vadd.f32 %v478, %v517
      %v519 = vpop.f32.mrf.mxu0
      %520 = vdwg.mxu0
      %s521 = scalar_lea.vmem %s165, 16
      %v522 = vld [vmem:[%s521] sm:$0xf]
      %v523 = vld [vmem:[%s521 + $0x4] sm:$0x1]
      %v524 = vld [vmem:[%s288] sm:$0xf]
      %v525 = vld [vmem:[%s288 + $0x4] sm:$0xf]
      %v526 = vld [vmem:[%s288 + $0x8] sm:$0xf]
      %v527 = vld [vmem:[%s288 + $0xc] sm:$0xf]
      %v528 = vld [vmem:[%s288 + $0x10] sm:$0xf]
      %v529 = vld [vmem:[%s288 + $0x14] sm:$0xf]
      %v530 = vld [vmem:[%s288 + $0x18] sm:$0xf]
      %v531 = vld [vmem:[%s288 + $0x1c] sm:$0xf]
      %v540 = vunpack.c.l.b16 %v524
      %v541 = vunpack.c.l.b16 %v525
      %v542 = vunpack.c.l.b16 %v526
      %v543 = vunpack.c.l.b16 %v527
      %v544 = vunpack.c.l.b16 %v528
      %v545 = vunpack.c.l.b16 %v529
      %v546 = vunpack.c.l.b16 %v530
      %v547 = vunpack.c.l.b16 %v531
      %v548 = vpack.c.b16 %v541, %v540
      %v549 = vpack.c.b16 %v543, %v542
      %v550 = vpack.c.b16 %v545, %v544
      %v551 = vpack.c.b16 %v547, %v546
      %v557 = vsel %vm228, %v522, 0
      %559 = vmatpush.bf16.msra.mxu0 0
      %560 = vmatpush.bf16.msra.mxu0 0
      %561 = vmatpush.bf16.msra.mxu0 0
      %562 = vmatpush.bf16.msra.mxu0 0
      %563 = vmatpush.bf16.msra.mxu0 %v551
      %564 = vmatpush.bf16.msra.mxu0 %v550
      %565 = vmatpush.bf16.msra.mxu0 %v549
      %566 = vmatpush.bf16.msra.mxu0 %v548
      %567 = vmatmul.bf16.gmra.mxu0 %v557
      %v568 = vpop.f32.mrf.mxu0
      %v569 = vadd.f32 0.0, %v568
      %v570 = vpop.f32.mrf.mxu0
      %571 = vdwg.mxu0
      %v572 = vadd.f32 %v518, %v569
      %v573 = vld [vmem:[%s338] sm:$0xf]
      %v574 = vld [vmem:[%s338 + $0x4] sm:$0xf]
      %v575 = vld [vmem:[%s338 + $0x8] sm:$0xf]
      %v576 = vld [vmem:[%s338 + $0xc] sm:$0xf]
      %v577 = vld [vmem:[%s338 + $0x10] sm:$0xf]
      %v578 = vld [vmem:[%s338 + $0x14] sm:$0xf]
      %v579 = vld [vmem:[%s338 + $0x18] sm:$0xf]
      %v580 = vld [vmem:[%s338 + $0x1c] sm:$0xf]
      %v583 = vunpack.c.l.b16 %v522
      %v584 = vunpack.c.l.b16 %v523
      %v585 = vpack.c.b16 %v584, %v583
      %v587 = vshrl.u32 %v585, 16
      %v589 = vshll.u32 %v585, 16
      %v591 = vrot.slane %v589, 1
      %v592 = vor.u32 %v587, %v591
      %v601 = vunpack.c.l.b16 %v573
      %v602 = vunpack.c.l.b16 %v574
      %v603 = vunpack.c.l.b16 %v575
      %v604 = vunpack.c.l.b16 %v576
      %v605 = vunpack.c.l.b16 %v577
      %v606 = vunpack.c.l.b16 %v578
      %v607 = vunpack.c.l.b16 %v579
      %v608 = vunpack.c.l.b16 %v580
      %v609 = vpack.c.b16 %v602, %v601
      %v610 = vpack.c.b16 %v604, %v603
      %v611 = vpack.c.b16 %v606, %v605
      %v612 = vpack.c.b16 %v608, %v607
      %v618 = vsel %vm228, %v592, 0
      %620 = vmatpush.bf16.msra.mxu0 0
      %621 = vmatpush.bf16.msra.mxu0 0
      %622 = vmatpush.bf16.msra.mxu0 0
      %623 = vmatpush.bf16.msra.mxu0 0
      %624 = vmatpush.bf16.msra.mxu0 %v612
      %625 = vmatpush.bf16.msra.mxu0 %v611
      %626 = vmatpush.bf16.msra.mxu0 %v610
      %627 = vmatpush.bf16.msra.mxu0 %v609
      %628 = vmatmul.bf16.gmra.mxu0 %v618
      %v629 = vpop.f32.mrf.mxu0
      %v630 = vadd.f32 0.0, %v629
      %v631 = vpop.f32.mrf.mxu0
      %632 = vdwg.mxu0
      %v633 = vadd.f32 %v572, %v630
      %v634 = vadd.f32 %v633, %v401
      %v635 = vsub.f32 0.0, %v634
      %v636 = vmul.f32 %v635, 1.442695
      %v637 = vpow.pop %v636
      %v638 = vadd.f32 %v637, 1.0
      %v639 = vrcp.pop %v638
      %v640 = vmul.f32 %v634, %v639
      %s641 = scalar_lea.vmem %s170, 8
      %642 = vst [vmem:[%s641] sm:$0xff] %v640
      %v643 = vld [vmem:[%s521] sm:$0xf]
      %v644 = vld [vmem:[%s521 + $0x4] sm:$0x1]
      %v645 = vld [vmem:[%s1] sm:$0xf]
      %v646 = vld [vmem:[%s1 + $0x4] sm:$0xf]
      %v647 = vld [vmem:[%s1 + $0x8] sm:$0xf]
      %v648 = vld [vmem:[%s1 + $0xc] sm:$0xf]
      %v649 = vld [vmem:[%s1 + $0x10] sm:$0xf]
      %v650 = vld [vmem:[%s1 + $0x14] sm:$0xf]
      %v651 = vld [vmem:[%s1 + $0x18] sm:$0xf]
      %v652 = vld [vmem:[%s1 + $0x1c] sm:$0xf]
      %v653 = vld [vmem:[%s183] sm:$0xf]
      %v654 = vld [vmem:[%s183 + $0x4] sm:$0xf]
      %v655 = vld [vmem:[%s183 + $0x8] sm:$0xf]
      %v656 = vld [vmem:[%s183 + $0xc] sm:$0xf]
      %v657 = vld [vmem:[%s183 + $0x10] sm:$0xf]
      %v658 = vld [vmem:[%s183 + $0x14] sm:$0xf]
      %v659 = vld [vmem:[%s183 + $0x18] sm:$0xf]
      %v660 = vld [vmem:[%s183 + $0x1c] sm:$0xf]
      %v663 = vunpack.c.l.b16 %v643
      %v664 = vunpack.c.l.b16 %v644
      %v665 = vpack.c.b16 %v664, %v663
      %v667 = vshrl.u32 %v665, 16
      %v669 = vshll.u32 %v665, 16
      %v671 = vrot.slane %v669, 1
      %v672 = vor.u32 %v667, %v671
      %v681 = vunpack.c.l.b16 %v653
      %v682 = vunpack.c.l.b16 %v654
      %v683 = vunpack.c.l.b16 %v655
      %v684 = vunpack.c.l.b16 %v656
      %v685 = vunpack.c.l.b16 %v657
      %v686 = vunpack.c.l.b16 %v658
      %v687 = vunpack.c.l.b16 %v659
      %v688 = vunpack.c.l.b16 %v660
      %v689 = vpack.c.b16 %v682, %v681
      %v690 = vpack.c.b16 %v684, %v683
      %v691 = vpack.c.b16 %v686, %v685
      %v692 = vpack.c.b16 %v688, %v687
      %v698 = vsel %vm228, %v672, 0
      %700 = vmatpush.bf16.msra.mxu0 0
      %701 = vmatpush.bf16.msra.mxu0 0
      %702 = vmatpush.bf16.msra.mxu0 0
      %703 = vmatpush.bf16.msra.mxu0 0
      %704 = vmatpush.bf16.msra.mxu0 %v692
      %705 = vmatpush.bf16.msra.mxu0 %v691
      %706 = vmatpush.bf16.msra.mxu0 %v690
      %707 = vmatpush.bf16.msra.mxu0 %v689
      %708 = vmatmul.bf16.gmra.mxu0 %v698
      %v709 = vpop.f32.mrf.mxu0
      %v710 = vadd.f32 0.0, %v709
      %v711 = vpop.f32.mrf.mxu0
      %712 = vdwg.mxu0
      %v721 = vunpack.c.l.b16 %v645
      %v722 = vunpack.c.l.b16 %v646
      %v723 = vunpack.c.l.b16 %v647
      %v724 = vunpack.c.l.b16 %v648
      %v725 = vunpack.c.l.b16 %v649
      %v726 = vunpack.c.l.b16 %v650
      %v727 = vunpack.c.l.b16 %v651
      %v728 = vunpack.c.l.b16 %v652
      %v729 = vpack.c.b16 %v722, %v721
      %v730 = vpack.c.b16 %v724, %v723
      %v731 = vpack.c.b16 %v726, %v725
      %v732 = vpack.c.b16 %v728, %v727
      %v738 = vsel %vm228, %v643, 0
      %740 = vmatpush.bf16.msra.mxu0 0
      %741 = vmatpush.bf16.msra.mxu0 0
      %742 = vmatpush.bf16.msra.mxu0 0
      %743 = vmatpush.bf16.msra.mxu0 0
      %744 = vmatpush.bf16.msra.mxu0 %v732
      %745 = vmatpush.bf16.msra.mxu0 %v731
      %746 = vmatpush.bf16.msra.mxu0 %v730
      %747 = vmatpush.bf16.msra.mxu0 %v729
      %748 = vmatmul.bf16.gmra.mxu0 %v738
      %v749 = vpop.f32.mrf.mxu0
      %v750 = vadd.f32 %v710, %v749
      %v751 = vpop.f32.mrf.mxu0
      %752 = vdwg.mxu0
      %s753 = scalar_lea.vmem %s165, 24
      %v754 = vld [vmem:[%s753] sm:$0xf]
      %v755 = vld [vmem:[%s753 + $0x4] sm:$0x1]
      %v756 = vld [vmem:[%s288] sm:$0xf]
      %v757 = vld [vmem:[%s288 + $0x4] sm:$0xf]
      %v758 = vld [vmem:[%s288 + $0x8] sm:$0xf]
      %v759 = vld [vmem:[%s288 + $0xc] sm:$0xf]
      %v760 = vld [vmem:[%s288 + $0x10] sm:$0xf]
      %v761 = vld [vmem:[%s288 + $0x14] sm:$0xf]
      %v762 = vld [vmem:[%s288 + $0x18] sm:$0xf]
      %v763 = vld [vmem:[%s288 + $0x1c] sm:$0xf]
      %v772 = vunpack.c.l.b16 %v756
      %v773 = vunpack.c.l.b16 %v757
      %v774 = vunpack.c.l.b16 %v758
      %v775 = vunpack.c.l.b16 %v759
      %v776 = vunpack.c.l.b16 %v760
      %v777 = vunpack.c.l.b16 %v761
      %v778 = vunpack.c.l.b16 %v762
      %v779 = vunpack.c.l.b16 %v763
      %v780 = vpack.c.b16 %v773, %v772
      %v781 = vpack.c.b16 %v775, %v774
      %v782 = vpack.c.b16 %v777, %v776
      %v783 = vpack.c.b16 %v779, %v778
      %v789 = vsel %vm228, %v754, 0
      %791 = vmatpush.bf16.msra.mxu0 0
      %792 = vmatpush.bf16.msra.mxu0 0
      %793 = vmatpush.bf16.msra.mxu0 0
      %794 = vmatpush.bf16.msra.mxu0 0
      %795 = vmatpush.bf16.msra.mxu0 %v783
      %796 = vmatpush.bf16.msra.mxu0 %v782
      %797 = vmatpush.bf16.msra.mxu0 %v781
      %798 = vmatpush.bf16.msra.mxu0 %v780
      %799 = vmatmul.bf16.gmra.mxu0 %v789
      %v800 = vpop.f32.mrf.mxu0
      %v801 = vadd.f32 0.0, %v800
      %v802 = vpop.f32.mrf.mxu0
      %803 = vdwg.mxu0
      %v804 = vadd.f32 %v750, %v801
      %v805 = vld [vmem:[%s338] sm:$0xf]
      %v806 = vld [vmem:[%s338 + $0x4] sm:$0xf]
      %v807 = vld [vmem:[%s338 + $0x8] sm:$0xf]
      %v808 = vld [vmem:[%s338 + $0xc] sm:$0xf]
      %v809 = vld [vmem:[%s338 + $0x10] sm:$0xf]
      %v810 = vld [vmem:[%s338 + $0x14] sm:$0xf]
      %v811 = vld [vmem:[%s338 + $0x18] sm:$0xf]
      %v812 = vld [vmem:[%s338 + $0x1c] sm:$0xf]
      %v815 = vunpack.c.l.b16 %v754
      %v816 = vunpack.c.l.b16 %v755
      %v817 = vpack.c.b16 %v816, %v815
      %v819 = vshrl.u32 %v817, 16
      %v821 = vshll.u32 %v817, 16
      %v823 = vrot.slane %v821, 1
      %v824 = vor.u32 %v819, %v823
      %v833 = vunpack.c.l.b16 %v805
      %v834 = vunpack.c.l.b16 %v806
      %v835 = vunpack.c.l.b16 %v807
      %v836 = vunpack.c.l.b16 %v808
      %v837 = vunpack.c.l.b16 %v809
      %v838 = vunpack.c.l.b16 %v810
      %v839 = vunpack.c.l.b16 %v811
      %v840 = vunpack.c.l.b16 %v812
      %v841 = vpack.c.b16 %v834, %v833
      %v842 = vpack.c.b16 %v836, %v835
      %v843 = vpack.c.b16 %v838, %v837
      %v844 = vpack.c.b16 %v840, %v839
      %v850 = vsel %vm228, %v824, 0
      %852 = vmatpush.bf16.msra.mxu0 0
      %853 = vmatpush.bf16.msra.mxu0 0
      %854 = vmatpush.bf16.msra.mxu0 0
      %855 = vmatpush.bf16.msra.mxu0 0
      %856 = vmatpush.bf16.msra.mxu0 %v844
      %857 = vmatpush.bf16.msra.mxu0 %v843
      %858 = vmatpush.bf16.msra.mxu0 %v842
      %859 = vmatpush.bf16.msra.mxu0 %v841
      %860 = vmatmul.bf16.gmra.mxu0 %v850
      %v861 = vpop.f32.mrf.mxu0
      %v862 = vadd.f32 0.0, %v861
      %v863 = vpop.f32.mrf.mxu0
      %864 = vdwg.mxu0
      %v865 = vadd.f32 %v804, %v862
      %v866 = vadd.f32 %v865, %v401
      %v867 = vsub.f32 0.0, %v866
      %v868 = vmul.f32 %v867, 1.442695
      %v869 = vpow.pop %v868
      %v870 = vadd.f32 %v869, 1.0
      %v871 = vrcp.pop %v870
      %v872 = vmul.f32 %v866, %v871
      %s873 = scalar_lea.vmem %s170, 16
      %874 = vst [vmem:[%s873] sm:$0xff] %v872
      %v875 = vld [vmem:[%s753] sm:$0xf]
      %v876 = vld [vmem:[%s753 + $0x4] sm:$0x1]
      %v877 = vld [vmem:[%s1] sm:$0xf]
      %v878 = vld [vmem:[%s1 + $0x4] sm:$0xf]
      %v879 = vld [vmem:[%s1 + $0x8] sm:$0xf]
      %v880 = vld [vmem:[%s1 + $0xc] sm:$0xf]
      %v881 = vld [vmem:[%s1 + $0x10] sm:$0xf]
      %v882 = vld [vmem:[%s1 + $0x14] sm:$0xf]
      %v883 = vld [vmem:[%s1 + $0x18] sm:$0xf]
      %v884 = vld [vmem:[%s1 + $0x1c] sm:$0xf]
      %v885 = vld [vmem:[%s183] sm:$0xf]
      %v886 = vld [vmem:[%s183 + $0x4] sm:$0xf]
      %v887 = vld [vmem:[%s183 + $0x8] sm:$0xf]
      %v888 = vld [vmem:[%s183 + $0xc] sm:$0xf]
      %v889 = vld [vmem:[%s183 + $0x10] sm:$0xf]
      %v890 = vld [vmem:[%s183 + $0x14] sm:$0xf]
      %v891 = vld [vmem:[%s183 + $0x18] sm:$0xf]
      %v892 = vld [vmem:[%s183 + $0x1c] sm:$0xf]
      %v895 = vunpack.c.l.b16 %v875
      %v896 = vunpack.c.l.b16 %v876
      %v897 = vpack.c.b16 %v896, %v895
      %v899 = vshrl.u32 %v897, 16
      %v901 = vshll.u32 %v897, 16
      %v903 = vrot.slane %v901, 1
      %v904 = vor.u32 %v899, %v903
      %v913 = vunpack.c.l.b16 %v885
      %v914 = vunpack.c.l.b16 %v886
      %v915 = vunpack.c.l.b16 %v887
      %v916 = vunpack.c.l.b16 %v888
      %v917 = vunpack.c.l.b16 %v889
      %v918 = vunpack.c.l.b16 %v890
      %v919 = vunpack.c.l.b16 %v891
      %v920 = vunpack.c.l.b16 %v892
      %v921 = vpack.c.b16 %v914, %v913
      %v922 = vpack.c.b16 %v916, %v915
      %v923 = vpack.c.b16 %v918, %v917
      %v924 = vpack.c.b16 %v920, %v919
      %v930 = vsel %vm228, %v904, 0
      %932 = vmatpush.bf16.msra.mxu0 0
      %933 = vmatpush.bf16.msra.mxu0 0
      %934 = vmatpush.bf16.msra.mxu0 0
      %935 = vmatpush.bf16.msra.mxu0 0
      %936 = vmatpush.bf16.msra.mxu0 %v924
      %937 = vmatpush.bf16.msra.mxu0 %v923
      %938 = vmatpush.bf16.msra.mxu0 %v922
      %939 = vmatpush.bf16.msra.mxu0 %v921
      %940 = vmatmul.bf16.gmra.mxu0 %v930
      %v941 = vpop.f32.mrf.mxu0
      %v942 = vadd.f32 0.0, %v941
      %v943 = vpop.f32.mrf.mxu0
      %944 = vdwg.mxu0
      %v953 = vunpack.c.l.b16 %v877
      %v954 = vunpack.c.l.b16 %v878
      %v955 = vunpack.c.l.b16 %v879
      %v956 = vunpack.c.l.b16 %v880
      %v957 = vunpack.c.l.b16 %v881
      %v958 = vunpack.c.l.b16 %v882
      %v959 = vunpack.c.l.b16 %v883
      %v960 = vunpack.c.l.b16 %v884
      %v961 = vpack.c.b16 %v954, %v953
      %v962 = vpack.c.b16 %v956, %v955
      %v963 = vpack.c.b16 %v958, %v957
      %v964 = vpack.c.b16 %v960, %v959
      %v970 = vsel %vm228, %v875, 0
      %972 = vmatpush.bf16.msra.mxu0 0
      %973 = vmatpush.bf16.msra.mxu0 0
      %974 = vmatpush.bf16.msra.mxu0 0
      %975 = vmatpush.bf16.msra.mxu0 0
      %976 = vmatpush.bf16.msra.mxu0 %v964
      %977 = vmatpush.bf16.msra.mxu0 %v963
      %978 = vmatpush.bf16.msra.mxu0 %v962
      %979 = vmatpush.bf16.msra.mxu0 %v961
      %980 = vmatmul.bf16.gmra.mxu0 %v970
      %v981 = vpop.f32.mrf.mxu0
      %v982 = vadd.f32 %v942, %v981
      %v983 = vpop.f32.mrf.mxu0
      %984 = vdwg.mxu0
      %s985 = scalar_lea.vmem %s165, 32
      %v986 = vld [vmem:[%s985] sm:$0xf]
      %v987 = vld [vmem:[%s985 + $0x4] sm:$0x1]
      %v988 = vld [vmem:[%s288] sm:$0xf]
      %v989 = vld [vmem:[%s288 + $0x4] sm:$0xf]
      %v990 = vld [vmem:[%s288 + $0x8] sm:$0xf]
      %v991 = vld [vmem:[%s288 + $0xc] sm:$0xf]
      %v992 = vld [vmem:[%s288 + $0x10] sm:$0xf]
      %v993 = vld [vmem:[%s288 + $0x14] sm:$0xf]
      %v994 = vld [vmem:[%s288 + $0x18] sm:$0xf]
      %v995 = vld [vmem:[%s288 + $0x1c] sm:$0xf]
      %v1004 = vunpack.c.l.b16 %v988
      %v1005 = vunpack.c.l.b16 %v989
      %v1006 = vunpack.c.l.b16 %v990
      %v1007 = vunpack.c.l.b16 %v991
      %v1008 = vunpack.c.l.b16 %v992
      %v1009 = vunpack.c.l.b16 %v993
      %v1010 = vunpack.c.l.b16 %v994
      %v1011 = vunpack.c.l.b16 %v995
      %v1012 = vpack.c.b16 %v1005, %v1004
      %v1013 = vpack.c.b16 %v1007, %v1006
      %v1014 = vpack.c.b16 %v1009, %v1008
      %v1015 = vpack.c.b16 %v1011, %v1010
      %v1021 = vsel %vm228, %v986, 0
      %1023 = vmatpush.bf16.msra.mxu0 0
      %1024 = vmatpush.bf16.msra.mxu0 0
      %1025 = vmatpush.bf16.msra.mxu0 0
      %1026 = vmatpush.bf16.msra.mxu0 0
      %1027 = vmatpush.bf16.msra.mxu0 %v1015
      %1028 = vmatpush.bf16.msra.mxu0 %v1014
      %1029 = vmatpush.bf16.msra.mxu0 %v1013
      %1030 = vmatpush.bf16.msra.mxu0 %v1012
      %1031 = vmatmul.bf16.gmra.mxu0 %v1021
      %v1032 = vpop.f32.mrf.mxu0
      %v1033 = vadd.f32 0.0, %v1032
      %v1034 = vpop.f32.mrf.mxu0
      %1035 = vdwg.mxu0
      %v1036 = vadd.f32 %v982, %v1033
      %v1037 = vld [vmem:[%s338] sm:$0xf]
      %v1038 = vld [vmem:[%s338 + $0x4] sm:$0xf]
      %v1039 = vld [vmem:[%s338 + $0x8] sm:$0xf]
      %v1040 = vld [vmem:[%s338 + $0xc] sm:$0xf]
      %v1041 = vld [vmem:[%s338 + $0x10] sm:$0xf]
      %v1042 = vld [vmem:[%s338 + $0x14] sm:$0xf]
      %v1043 = vld [vmem:[%s338 + $0x18] sm:$0xf]
      %v1044 = vld [vmem:[%s338 + $0x1c] sm:$0xf]
      %v1047 = vunpack.c.l.b16 %v986
      %v1048 = vunpack.c.l.b16 %v987
      %v1049 = vpack.c.b16 %v1048, %v1047
      %v1051 = vshrl.u32 %v1049, 16
      %v1053 = vshll.u32 %v1049, 16
      %v1055 = vrot.slane %v1053, 1
      %v1056 = vor.u32 %v1051, %v1055
      %v1065 = vunpack.c.l.b16 %v1037
      %v1066 = vunpack.c.l.b16 %v1038
      %v1067 = vunpack.c.l.b16 %v1039
      %v1068 = vunpack.c.l.b16 %v1040
      %v1069 = vunpack.c.l.b16 %v1041
      %v1070 = vunpack.c.l.b16 %v1042
      %v1071 = vunpack.c.l.b16 %v1043
      %v1072 = vunpack.c.l.b16 %v1044
      %v1073 = vpack.c.b16 %v1066, %v1065
      %v1074 = vpack.c.b16 %v1068, %v1067
      %v1075 = vpack.c.b16 %v1070, %v1069
      %v1076 = vpack.c.b16 %v1072, %v1071
      %v1082 = vsel %vm228, %v1056, 0
      %1084 = vmatpush.bf16.msra.mxu0 0
      %1085 = vmatpush.bf16.msra.mxu0 0
      %1086 = vmatpush.bf16.msra.mxu0 0
      %1087 = vmatpush.bf16.msra.mxu0 0
      %1088 = vmatpush.bf16.msra.mxu0 %v1076
      %1089 = vmatpush.bf16.msra.mxu0 %v1075
      %1090 = vmatpush.bf16.msra.mxu0 %v1074
      %1091 = vmatpush.bf16.msra.mxu0 %v1073
      %1092 = vmatmul.bf16.gmra.mxu0 %v1082
      %v1093 = vpop.f32.mrf.mxu0
      %v1094 = vadd.f32 0.0, %v1093
      %v1095 = vpop.f32.mrf.mxu0
      %1096 = vdwg.mxu0
      %v1097 = vadd.f32 %v1036, %v1094
      %v1098 = vadd.f32 %v1097, %v401
      %v1099 = vsub.f32 0.0, %v1098
      %v1100 = vmul.f32 %v1099, 1.442695
      %v1101 = vpow.pop %v1100
      %v1102 = vadd.f32 %v1101, 1.0
      %v1103 = vrcp.pop %v1102
      %v1104 = vmul.f32 %v1098, %v1103
      %s1105 = scalar_lea.vmem %s170, 24
      %1106 = vst [vmem:[%s1105] sm:$0xff] %v1104
      %v1107 = vld [vmem:[%s985] sm:$0xf]
      %v1108 = vld [vmem:[%s985 + $0x4] sm:$0x1]
      %v1109 = vld [vmem:[%s1] sm:$0xf]
      %v1110 = vld [vmem:[%s1 + $0x4] sm:$0xf]
      %v1111 = vld [vmem:[%s1 + $0x8] sm:$0xf]
      %v1112 = vld [vmem:[%s1 + $0xc] sm:$0xf]
      %v1113 = vld [vmem:[%s1 + $0x10] sm:$0xf]
      %v1114 = vld [vmem:[%s1 + $0x14] sm:$0xf]
      %v1115 = vld [vmem:[%s1 + $0x18] sm:$0xf]
      %v1116 = vld [vmem:[%s1 + $0x1c] sm:$0xf]
      %v1117 = vld [vmem:[%s183] sm:$0xf]
      %v1118 = vld [vmem:[%s183 + $0x4] sm:$0xf]
      %v1119 = vld [vmem:[%s183 + $0x8] sm:$0xf]
      %v1120 = vld [vmem:[%s183 + $0xc] sm:$0xf]
      %v1121 = vld [vmem:[%s183 + $0x10] sm:$0xf]
      %v1122 = vld [vmem:[%s183 + $0x14] sm:$0xf]
      %v1123 = vld [vmem:[%s183 + $0x18] sm:$0xf]
      %v1124 = vld [vmem:[%s183 + $0x1c] sm:$0xf]
      %v1127 = vunpack.c.l.b16 %v1107
      %v1128 = vunpack.c.l.b16 %v1108
      %v1129 = vpack.c.b16 %v1128, %v1127
      %v1131 = vshrl.u32 %v1129, 16
      %v1133 = vshll.u32 %v1129, 16
      %v1135 = vrot.slane %v1133, 1
      %v1136 = vor.u32 %v1131, %v1135
      %v1145 = vunpack.c.l.b16 %v1117
      %v1146 = vunpack.c.l.b16 %v1118
      %v1147 = vunpack.c.l.b16 %v1119
      %v1148 = vunpack.c.l.b16 %v1120
      %v1149 = vunpack.c.l.b16 %v1121
      %v1150 = vunpack.c.l.b16 %v1122
      %v1151 = vunpack.c.l.b16 %v1123
      %v1152 = vunpack.c.l.b16 %v1124
      %v1153 = vpack.c.b16 %v1146, %v1145
      %v1154 = vpack.c.b16 %v1148, %v1147
      %v1155 = vpack.c.b16 %v1150, %v1149
      %v1156 = vpack.c.b16 %v1152, %v1151
      %v1162 = vsel %vm228, %v1136, 0
      %1164 = vmatpush.bf16.msra.mxu0 0
      %1165 = vmatpush.bf16.msra.mxu0 0
      %1166 = vmatpush.bf16.msra.mxu0 0
      %1167 = vmatpush.bf16.msra.mxu0 0
      %1168 = vmatpush.bf16.msra.mxu0 %v1156
      %1169 = vmatpush.bf16.msra.mxu0 %v1155
      %1170 = vmatpush.bf16.msra.mxu0 %v1154
      %1171 = vmatpush.bf16.msra.mxu0 %v1153
      %1172 = vmatmul.bf16.gmra.mxu0 %v1162
      %v1173 = vpop.f32.mrf.mxu0
      %v1174 = vadd.f32 0.0, %v1173
      %v1175 = vpop.f32.mrf.mxu0
      %1176 = vdwg.mxu0
      %v1185 = vunpack.c.l.b16 %v1109
      %v1186 = vunpack.c.l.b16 %v1110
      %v1187 = vunpack.c.l.b16 %v1111
      %v1188 = vunpack.c.l.b16 %v1112
      %v1189 = vunpack.c.l.b16 %v1113
      %v1190 = vunpack.c.l.b16 %v1114
      %v1191 = vunpack.c.l.b16 %v1115
      %v1192 = vunpack.c.l.b16 %v1116
      %v1193 = vpack.c.b16 %v1186, %v1185
      %v1194 = vpack.c.b16 %v1188, %v1187
      %v1195 = vpack.c.b16 %v1190, %v1189
      %v1196 = vpack.c.b16 %v1192, %v1191
      %v1202 = vsel %vm228, %v1107, 0
      %1204 = vmatpush.bf16.msra.mxu0 0
      %1205 = vmatpush.bf16.msra.mxu0 0
      %1206 = vmatpush.bf16.msra.mxu0 0
      %1207 = vmatpush.bf16.msra.mxu0 0
      %1208 = vmatpush.bf16.msra.mxu0 %v1196
      %1209 = vmatpush.bf16.msra.mxu0 %v1195
      %1210 = vmatpush.bf16.msra.mxu0 %v1194
      %1211 = vmatpush.bf16.msra.mxu0 %v1193
      %1212 = vmatmul.bf16.gmra.mxu0 %v1202
      %v1213 = vpop.f32.mrf.mxu0
      %v1214 = vadd.f32 %v1174, %v1213
      %v1215 = vpop.f32.mrf.mxu0
      %1216 = vdwg.mxu0
      %s1217 = scalar_lea.vmem %s165, 40
      %v1218 = vld [vmem:[%s1217] sm:$0xf]
      %v1219 = vld [vmem:[%s1217 + $0x4] sm:$0x1]
      %v1220 = vld [vmem:[%s288] sm:$0xf]
      %v1221 = vld [vmem:[%s288 + $0x4] sm:$0xf]
      %v1222 = vld [vmem:[%s288 + $0x8] sm:$0xf]
      %v1223 = vld [vmem:[%s288 + $0xc] sm:$0xf]
      %v1224 = vld [vmem:[%s288 + $0x10] sm:$0xf]
      %v1225 = vld [vmem:[%s288 + $0x14] sm:$0xf]
      %v1226 = vld [vmem:[%s288 + $0x18] sm:$0xf]
      %v1227 = vld [vmem:[%s288 + $0x1c] sm:$0xf]
      %v1236 = vunpack.c.l.b16 %v1220
      %v1237 = vunpack.c.l.b16 %v1221
      %v1238 = vunpack.c.l.b16 %v1222
      %v1239 = vunpack.c.l.b16 %v1223
      %v1240 = vunpack.c.l.b16 %v1224
      %v1241 = vunpack.c.l.b16 %v1225
      %v1242 = vunpack.c.l.b16 %v1226
      %v1243 = vunpack.c.l.b16 %v1227
      %v1244 = vpack.c.b16 %v1237, %v1236
      %v1245 = vpack.c.b16 %v1239, %v1238
      %v1246 = vpack.c.b16 %v1241, %v1240
      %v1247 = vpack.c.b16 %v1243, %v1242
      %v1253 = vsel %vm228, %v1218, 0
      %1255 = vmatpush.bf16.msra.mxu0 0
      %1256 = vmatpush.bf16.msra.mxu0 0
      %1257 = vmatpush.bf16.msra.mxu0 0
      %1258 = vmatpush.bf16.msra.mxu0 0
      %1259 = vmatpush.bf16.msra.mxu0 %v1247
      %1260 = vmatpush.bf16.msra.mxu0 %v1246
      %1261 = vmatpush.bf16.msra.mxu0 %v1245
      %1262 = vmatpush.bf16.msra.mxu0 %v1244
      %1263 = vmatmul.bf16.gmra.mxu0 %v1253
      %v1264 = vpop.f32.mrf.mxu0
      %v1265 = vadd.f32 0.0, %v1264
      %v1266 = vpop.f32.mrf.mxu0
      %1267 = vdwg.mxu0
      %v1268 = vadd.f32 %v1214, %v1265
      %v1269 = vld [vmem:[%s338] sm:$0xf]
      %v1270 = vld [vmem:[%s338 + $0x4] sm:$0xf]
      %v1271 = vld [vmem:[%s338 + $0x8] sm:$0xf]
      %v1272 = vld [vmem:[%s338 + $0xc] sm:$0xf]
      %v1273 = vld [vmem:[%s338 + $0x10] sm:$0xf]
      %v1274 = vld [vmem:[%s338 + $0x14] sm:$0xf]
      %v1275 = vld [vmem:[%s338 + $0x18] sm:$0xf]
      %v1276 = vld [vmem:[%s338 + $0x1c] sm:$0xf]
      %v1279 = vunpack.c.l.b16 %v1218
      %v1280 = vunpack.c.l.b16 %v1219
      %v1281 = vpack.c.b16 %v1280, %v1279
      %v1283 = vshrl.u32 %v1281, 16
      %v1285 = vshll.u32 %v1281, 16
      %v1287 = vrot.slane %v1285, 1
      %v1288 = vor.u32 %v1283, %v1287
      %v1297 = vunpack.c.l.b16 %v1269
      %v1298 = vunpack.c.l.b16 %v1270
      %v1299 = vunpack.c.l.b16 %v1271
      %v1300 = vunpack.c.l.b16 %v1272
      %v1301 = vunpack.c.l.b16 %v1273
      %v1302 = vunpack.c.l.b16 %v1274
      %v1303 = vunpack.c.l.b16 %v1275
      %v1304 = vunpack.c.l.b16 %v1276
      %v1305 = vpack.c.b16 %v1298, %v1297
      %v1306 = vpack.c.b16 %v1300, %v1299
      %v1307 = vpack.c.b16 %v1302, %v1301
      %v1308 = vpack.c.b16 %v1304, %v1303
      %v1314 = vsel %vm228, %v1288, 0
      %1316 = vmatpush.bf16.msra.mxu0 0
      %1317 = vmatpush.bf16.msra.mxu0 0
      %1318 = vmatpush.bf16.msra.mxu0 0
      %1319 = vmatpush.bf16.msra.mxu0 0
      %1320 = vmatpush.bf16.msra.mxu0 %v1308
      %1321 = vmatpush.bf16.msra.mxu0 %v1307
      %1322 = vmatpush.bf16.msra.mxu0 %v1306
      %1323 = vmatpush.bf16.msra.mxu0 %v1305
      %1324 = vmatmul.bf16.gmra.mxu0 %v1314
      %v1325 = vpop.f32.mrf.mxu0
      %v1326 = vadd.f32 0.0, %v1325
      %v1327 = vpop.f32.mrf.mxu0
      %1328 = vdwg.mxu0
      %v1329 = vadd.f32 %v1268, %v1326
      %v1330 = vadd.f32 %v1329, %v401
      %v1331 = vsub.f32 0.0, %v1330
      %v1332 = vmul.f32 %v1331, 1.442695
      %v1333 = vpow.pop %v1332
      %v1334 = vadd.f32 %v1333, 1.0
      %v1335 = vrcp.pop %v1334
      %v1336 = vmul.f32 %v1330, %v1335
      %s1337 = scalar_lea.vmem %s170, 32
      %1338 = vst [vmem:[%s1337] sm:$0xff] %v1336
      %v1339 = vld [vmem:[%s1217] sm:$0xf]
      %v1340 = vld [vmem:[%s1217 + $0x4] sm:$0x1]
      %v1341 = vld [vmem:[%s1] sm:$0xf]
      %v1342 = vld [vmem:[%s1 + $0x4] sm:$0xf]
      %v1343 = vld [vmem:[%s1 + $0x8] sm:$0xf]
      %v1344 = vld [vmem:[%s1 + $0xc] sm:$0xf]
      %v1345 = vld [vmem:[%s1 + $0x10] sm:$0xf]
      %v1346 = vld [vmem:[%s1 + $0x14] sm:$0xf]
      %v1347 = vld [vmem:[%s1 + $0x18] sm:$0xf]
      %v1348 = vld [vmem:[%s1 + $0x1c] sm:$0xf]
      %v1349 = vld [vmem:[%s183] sm:$0xf]
      %v1350 = vld [vmem:[%s183 + $0x4] sm:$0xf]
      %v1351 = vld [vmem:[%s183 + $0x8] sm:$0xf]
      %v1352 = vld [vmem:[%s183 + $0xc] sm:$0xf]
      %v1353 = vld [vmem:[%s183 + $0x10] sm:$0xf]
      %v1354 = vld [vmem:[%s183 + $0x14] sm:$0xf]
      %v1355 = vld [vmem:[%s183 + $0x18] sm:$0xf]
      %v1356 = vld [vmem:[%s183 + $0x1c] sm:$0xf]
      %v1359 = vunpack.c.l.b16 %v1339
      %v1360 = vunpack.c.l.b16 %v1340
      %v1361 = vpack.c.b16 %v1360, %v1359
      %v1363 = vshrl.u32 %v1361, 16
      %v1365 = vshll.u32 %v1361, 16
      %v1367 = vrot.slane %v1365, 1
      %v1368 = vor.u32 %v1363, %v1367
      %v1377 = vunpack.c.l.b16 %v1349
      %v1378 = vunpack.c.l.b16 %v1350
      %v1379 = vunpack.c.l.b16 %v1351
      %v1380 = vunpack.c.l.b16 %v1352
      %v1381 = vunpack.c.l.b16 %v1353
      %v1382 = vunpack.c.l.b16 %v1354
      %v1383 = vunpack.c.l.b16 %v1355
      %v1384 = vunpack.c.l.b16 %v1356
      %v1385 = vpack.c.b16 %v1378, %v1377
      %v1386 = vpack.c.b16 %v1380, %v1379
      %v1387 = vpack.c.b16 %v1382, %v1381
      %v1388 = vpack.c.b16 %v1384, %v1383
      %v1394 = vsel %vm228, %v1368, 0
      %1396 = vmatpush.bf16.msra.mxu0 0
      %1397 = vmatpush.bf16.msra.mxu0 0
      %1398 = vmatpush.bf16.msra.mxu0 0
      %1399 = vmatpush.bf16.msra.mxu0 0
      %1400 = vmatpush.bf16.msra.mxu0 %v1388
      %1401 = vmatpush.bf16.msra.mxu0 %v1387
      %1402 = vmatpush.bf16.msra.mxu0 %v1386
      %1403 = vmatpush.bf16.msra.mxu0 %v1385
      %1404 = vmatmul.bf16.gmra.mxu0 %v1394
      %v1405 = vpop.f32.mrf.mxu0
      %v1406 = vadd.f32 0.0, %v1405
      %v1407 = vpop.f32.mrf.mxu0
      %1408 = vdwg.mxu0
      %v1417 = vunpack.c.l.b16 %v1341
      %v1418 = vunpack.c.l.b16 %v1342
      %v1419 = vunpack.c.l.b16 %v1343
      %v1420 = vunpack.c.l.b16 %v1344
      %v1421 = vunpack.c.l.b16 %v1345
      %v1422 = vunpack.c.l.b16 %v1346
      %v1423 = vunpack.c.l.b16 %v1347
      %v1424 = vunpack.c.l.b16 %v1348
      %v1425 = vpack.c.b16 %v1418, %v1417
      %v1426 = vpack.c.b16 %v1420, %v1419
      %v1427 = vpack.c.b16 %v1422, %v1421
      %v1428 = vpack.c.b16 %v1424, %v1423
      %v1434 = vsel %vm228, %v1339, 0
      %1436 = vmatpush.bf16.msra.mxu0 0
      %1437 = vmatpush.bf16.msra.mxu0 0
      %1438 = vmatpush.bf16.msra.mxu0 0
      %1439 = vmatpush.bf16.msra.mxu0 0
      %1440 = vmatpush.bf16.msra.mxu0 %v1428
      %1441 = vmatpush.bf16.msra.mxu0 %v1427
      %1442 = vmatpush.bf16.msra.mxu0 %v1426
      %1443 = vmatpush.bf16.msra.mxu0 %v1425
      %1444 = vmatmul.bf16.gmra.mxu0 %v1434
      %v1445 = vpop.f32.mrf.mxu0
      %v1446 = vadd.f32 %v1406, %v1445
      %v1447 = vpop.f32.mrf.mxu0
      %1448 = vdwg.mxu0
      %s1449 = scalar_lea.vmem %s165, 48
      %v1450 = vld [vmem:[%s1449] sm:$0xf]
      %v1451 = vld [vmem:[%s1449 + $0x4] sm:$0x1]
      %v1452 = vld [vmem:[%s288] sm:$0xf]
      %v1453 = vld [vmem:[%s288 + $0x4] sm:$0xf]
      %v1454 = vld [vmem:[%s288 + $0x8] sm:$0xf]
      %v1455 = vld [vmem:[%s288 + $0xc] sm:$0xf]
      %v1456 = vld [vmem:[%s288 + $0x10] sm:$0xf]
      %v1457 = vld [vmem:[%s288 + $0x14] sm:$0xf]
      %v1458 = vld [vmem:[%s288 + $0x18] sm:$0xf]
      %v1459 = vld [vmem:[%s288 + $0x1c] sm:$0xf]
      %v1468 = vunpack.c.l.b16 %v1452
      %v1469 = vunpack.c.l.b16 %v1453
      %v1470 = vunpack.c.l.b16 %v1454
      %v1471 = vunpack.c.l.b16 %v1455
      %v1472 = vunpack.c.l.b16 %v1456
      %v1473 = vunpack.c.l.b16 %v1457
      %v1474 = vunpack.c.l.b16 %v1458
      %v1475 = vunpack.c.l.b16 %v1459
      %v1476 = vpack.c.b16 %v1469, %v1468
      %v1477 = vpack.c.b16 %v1471, %v1470
      %v1478 = vpack.c.b16 %v1473, %v1472
      %v1479 = vpack.c.b16 %v1475, %v1474
      %v1485 = vsel %vm228, %v1450, 0
      %1487 = vmatpush.bf16.msra.mxu0 0
      %1488 = vmatpush.bf16.msra.mxu0 0
      %1489 = vmatpush.bf16.msra.mxu0 0
      %1490 = vmatpush.bf16.msra.mxu0 0
      %1491 = vmatpush.bf16.msra.mxu0 %v1479
      %1492 = vmatpush.bf16.msra.mxu0 %v1478
      %1493 = vmatpush.bf16.msra.mxu0 %v1477
      %1494 = vmatpush.bf16.msra.mxu0 %v1476
      %1495 = vmatmul.bf16.gmra.mxu0 %v1485
      %v1496 = vpop.f32.mrf.mxu0
      %v1497 = vadd.f32 0.0, %v1496
      %v1498 = vpop.f32.mrf.mxu0
      %1499 = vdwg.mxu0
      %v1500 = vadd.f32 %v1446, %v1497
      %v1501 = vld [vmem:[%s338] sm:$0xf]
      %v1502 = vld [vmem:[%s338 + $0x4] sm:$0xf]
      %v1503 = vld [vmem:[%s338 + $0x8] sm:$0xf]
      %v1504 = vld [vmem:[%s338 + $0xc] sm:$0xf]
      %v1505 = vld [vmem:[%s338 + $0x10] sm:$0xf]
      %v1506 = vld [vmem:[%s338 + $0x14] sm:$0xf]
      %v1507 = vld [vmem:[%s338 + $0x18] sm:$0xf]
      %v1508 = vld [vmem:[%s338 + $0x1c] sm:$0xf]
      %v1511 = vunpack.c.l.b16 %v1450
      %v1512 = vunpack.c.l.b16 %v1451
      %v1513 = vpack.c.b16 %v1512, %v1511
      %v1515 = vshrl.u32 %v1513, 16
      %v1517 = vshll.u32 %v1513, 16
      %v1519 = vrot.slane %v1517, 1
      %v1520 = vor.u32 %v1515, %v1519
      %v1529 = vunpack.c.l.b16 %v1501
      %v1530 = vunpack.c.l.b16 %v1502
      %v1531 = vunpack.c.l.b16 %v1503
      %v1532 = vunpack.c.l.b16 %v1504
      %v1533 = vunpack.c.l.b16 %v1505
      %v1534 = vunpack.c.l.b16 %v1506
      %v1535 = vunpack.c.l.b16 %v1507
      %v1536 = vunpack.c.l.b16 %v1508
      %v1537 = vpack.c.b16 %v1530, %v1529
      %v1538 = vpack.c.b16 %v1532, %v1531
      %v1539 = vpack.c.b16 %v1534, %v1533
      %v1540 = vpack.c.b16 %v1536, %v1535
      %v1546 = vsel %vm228, %v1520, 0
      %1548 = vmatpush.bf16.msra.mxu0 0
      %1549 = vmatpush.bf16.msra.mxu0 0
      %1550 = vmatpush.bf16.msra.mxu0 0
      %1551 = vmatpush.bf16.msra.mxu0 0
      %1552 = vmatpush.bf16.msra.mxu0 %v1540
      %1553 = vmatpush.bf16.msra.mxu0 %v1539
      %1554 = vmatpush.bf16.msra.mxu0 %v1538
      %1555 = vmatpush.bf16.msra.mxu0 %v1537
      %1556 = vmatmul.bf16.gmra.mxu0 %v1546
      %v1557 = vpop.f32.mrf.mxu0
      %v1558 = vadd.f32 0.0, %v1557
      %v1559 = vpop.f32.mrf.mxu0
      %1560 = vdwg.mxu0
      %v1561 = vadd.f32 %v1500, %v1558
      %v1562 = vadd.f32 %v1561, %v401
      %v1563 = vsub.f32 0.0, %v1562
      %v1564 = vmul.f32 %v1563, 1.442695
      %v1565 = vpow.pop %v1564
      %v1566 = vadd.f32 %v1565, 1.0
      %v1567 = vrcp.pop %v1566
      %v1568 = vmul.f32 %v1562, %v1567
      %s1569 = scalar_lea.vmem %s170, 40
      %1570 = vst [vmem:[%s1569] sm:$0xff] %v1568
      %v1571 = vld [vmem:[%s1449] sm:$0xf]
      %v1572 = vld [vmem:[%s1449 + $0x4] sm:$0x1]
      %v1573 = vld [vmem:[%s1] sm:$0xf]
      %v1574 = vld [vmem:[%s1 + $0x4] sm:$0xf]
      %v1575 = vld [vmem:[%s1 + $0x8] sm:$0xf]
      %v1576 = vld [vmem:[%s1 + $0xc] sm:$0xf]
      %v1577 = vld [vmem:[%s1 + $0x10] sm:$0xf]
      %v1578 = vld [vmem:[%s1 + $0x14] sm:$0xf]
      %v1579 = vld [vmem:[%s1 + $0x18] sm:$0xf]
      %v1580 = vld [vmem:[%s1 + $0x1c] sm:$0xf]
      %v1581 = vld [vmem:[%s183] sm:$0xf]
      %v1582 = vld [vmem:[%s183 + $0x4] sm:$0xf]
      %v1583 = vld [vmem:[%s183 + $0x8] sm:$0xf]
      %v1584 = vld [vmem:[%s183 + $0xc] sm:$0xf]
      %v1585 = vld [vmem:[%s183 + $0x10] sm:$0xf]
      %v1586 = vld [vmem:[%s183 + $0x14] sm:$0xf]
      %v1587 = vld [vmem:[%s183 + $0x18] sm:$0xf]
      %v1588 = vld [vmem:[%s183 + $0x1c] sm:$0xf]
      %v1591 = vunpack.c.l.b16 %v1571
      %v1592 = vunpack.c.l.b16 %v1572
      %v1593 = vpack.c.b16 %v1592, %v1591
      %v1595 = vshrl.u32 %v1593, 16
      %v1597 = vshll.u32 %v1593, 16
      %v1599 = vrot.slane %v1597, 1
      %v1600 = vor.u32 %v1595, %v1599
      %v1609 = vunpack.c.l.b16 %v1581
      %v1610 = vunpack.c.l.b16 %v1582
      %v1611 = vunpack.c.l.b16 %v1583
      %v1612 = vunpack.c.l.b16 %v1584
      %v1613 = vunpack.c.l.b16 %v1585
      %v1614 = vunpack.c.l.b16 %v1586
      %v1615 = vunpack.c.l.b16 %v1587
      %v1616 = vunpack.c.l.b16 %v1588
      %v1617 = vpack.c.b16 %v1610, %v1609
      %v1618 = vpack.c.b16 %v1612, %v1611
      %v1619 = vpack.c.b16 %v1614, %v1613
      %v1620 = vpack.c.b16 %v1616, %v1615
      %v1626 = vsel %vm228, %v1600, 0
      %1628 = vmatpush.bf16.msra.mxu0 0
      %1629 = vmatpush.bf16.msra.mxu0 0
      %1630 = vmatpush.bf16.msra.mxu0 0
      %1631 = vmatpush.bf16.msra.mxu0 0
      %1632 = vmatpush.bf16.msra.mxu0 %v1620
      %1633 = vmatpush.bf16.msra.mxu0 %v1619
      %1634 = vmatpush.bf16.msra.mxu0 %v1618
      %1635 = vmatpush.bf16.msra.mxu0 %v1617
      %1636 = vmatmul.bf16.gmra.mxu0 %v1626
      %v1637 = vpop.f32.mrf.mxu0
      %v1638 = vadd.f32 0.0, %v1637
      %v1639 = vpop.f32.mrf.mxu0
      %1640 = vdwg.mxu0
      %v1649 = vunpack.c.l.b16 %v1573
      %v1650 = vunpack.c.l.b16 %v1574
      %v1651 = vunpack.c.l.b16 %v1575
      %v1652 = vunpack.c.l.b16 %v1576
      %v1653 = vunpack.c.l.b16 %v1577
      %v1654 = vunpack.c.l.b16 %v1578
      %v1655 = vunpack.c.l.b16 %v1579
      %v1656 = vunpack.c.l.b16 %v1580
      %v1657 = vpack.c.b16 %v1650, %v1649
      %v1658 = vpack.c.b16 %v1652, %v1651
      %v1659 = vpack.c.b16 %v1654, %v1653
      %v1660 = vpack.c.b16 %v1656, %v1655
      %v1666 = vsel %vm228, %v1571, 0
      %1668 = vmatpush.bf16.msra.mxu0 0
      %1669 = vmatpush.bf16.msra.mxu0 0
      %1670 = vmatpush.bf16.msra.mxu0 0
      %1671 = vmatpush.bf16.msra.mxu0 0
      %1672 = vmatpush.bf16.msra.mxu0 %v1660
      %1673 = vmatpush.bf16.msra.mxu0 %v1659
      %1674 = vmatpush.bf16.msra.mxu0 %v1658
      %1675 = vmatpush.bf16.msra.mxu0 %v1657
      %1676 = vmatmul.bf16.gmra.mxu0 %v1666
      %v1677 = vpop.f32.mrf.mxu0
      %v1678 = vadd.f32 %v1638, %v1677
      %v1679 = vpop.f32.mrf.mxu0
      %1680 = vdwg.mxu0
      %s1681 = scalar_lea.vmem %s165, 56
      %v1682 = vld [vmem:[%s1681] sm:$0xf]
      %v1683 = vld [vmem:[%s1681 + $0x4] sm:$0x1]
      %v1684 = vld [vmem:[%s288] sm:$0xf]
      %v1685 = vld [vmem:[%s288 + $0x4] sm:$0xf]
      %v1686 = vld [vmem:[%s288 + $0x8] sm:$0xf]
      %v1687 = vld [vmem:[%s288 + $0xc] sm:$0xf]
      %v1688 = vld [vmem:[%s288 + $0x10] sm:$0xf]
      %v1689 = vld [vmem:[%s288 + $0x14] sm:$0xf]
      %v1690 = vld [vmem:[%s288 + $0x18] sm:$0xf]
      %v1691 = vld [vmem:[%s288 + $0x1c] sm:$0xf]
      %v1700 = vunpack.c.l.b16 %v1684
      %v1701 = vunpack.c.l.b16 %v1685
      %v1702 = vunpack.c.l.b16 %v1686
      %v1703 = vunpack.c.l.b16 %v1687
      %v1704 = vunpack.c.l.b16 %v1688
      %v1705 = vunpack.c.l.b16 %v1689
      %v1706 = vunpack.c.l.b16 %v1690
      %v1707 = vunpack.c.l.b16 %v1691
      %v1708 = vpack.c.b16 %v1701, %v1700
      %v1709 = vpack.c.b16 %v1703, %v1702
      %v1710 = vpack.c.b16 %v1705, %v1704
      %v1711 = vpack.c.b16 %v1707, %v1706
      %v1717 = vsel %vm228, %v1682, 0
      %1719 = vmatpush.bf16.msra.mxu0 0
      %1720 = vmatpush.bf16.msra.mxu0 0
      %1721 = vmatpush.bf16.msra.mxu0 0
      %1722 = vmatpush.bf16.msra.mxu0 0
      %1723 = vmatpush.bf16.msra.mxu0 %v1711
      %1724 = vmatpush.bf16.msra.mxu0 %v1710
      %1725 = vmatpush.bf16.msra.mxu0 %v1709
      %1726 = vmatpush.bf16.msra.mxu0 %v1708
      %1727 = vmatmul.bf16.gmra.mxu0 %v1717
      %v1728 = vpop.f32.mrf.mxu0
      %v1729 = vadd.f32 0.0, %v1728
      %v1730 = vpop.f32.mrf.mxu0
      %1731 = vdwg.mxu0
      %v1732 = vadd.f32 %v1678, %v1729
      %v1733 = vld [vmem:[%s338] sm:$0xf]
      %v1734 = vld [vmem:[%s338 + $0x4] sm:$0xf]
      %v1735 = vld [vmem:[%s338 + $0x8] sm:$0xf]
      %v1736 = vld [vmem:[%s338 + $0xc] sm:$0xf]
      %v1737 = vld [vmem:[%s338 + $0x10] sm:$0xf]
      %v1738 = vld [vmem:[%s338 + $0x14] sm:$0xf]
      %v1739 = vld [vmem:[%s338 + $0x18] sm:$0xf]
      %v1740 = vld [vmem:[%s338 + $0x1c] sm:$0xf]
      %v1743 = vunpack.c.l.b16 %v1682
      %v1744 = vunpack.c.l.b16 %v1683
      %v1745 = vpack.c.b16 %v1744, %v1743
      %v1747 = vshrl.u32 %v1745, 16
      %v1749 = vshll.u32 %v1745, 16
      %v1751 = vrot.slane %v1749, 1
      %v1752 = vor.u32 %v1747, %v1751
      %v1761 = vunpack.c.l.b16 %v1733
      %v1762 = vunpack.c.l.b16 %v1734
      %v1763 = vunpack.c.l.b16 %v1735
      %v1764 = vunpack.c.l.b16 %v1736
      %v1765 = vunpack.c.l.b16 %v1737
      %v1766 = vunpack.c.l.b16 %v1738
      %v1767 = vunpack.c.l.b16 %v1739
      %v1768 = vunpack.c.l.b16 %v1740
      %v1769 = vpack.c.b16 %v1762, %v1761
      %v1770 = vpack.c.b16 %v1764, %v1763
      %v1771 = vpack.c.b16 %v1766, %v1765
      %v1772 = vpack.c.b16 %v1768, %v1767
      %v1778 = vsel %vm228, %v1752, 0
      %1780 = vmatpush.bf16.msra.mxu0 0
      %1781 = vmatpush.bf16.msra.mxu0 0
      %1782 = vmatpush.bf16.msra.mxu0 0
      %1783 = vmatpush.bf16.msra.mxu0 0
      %1784 = vmatpush.bf16.msra.mxu0 %v1772
      %1785 = vmatpush.bf16.msra.mxu0 %v1771
      %1786 = vmatpush.bf16.msra.mxu0 %v1770
      %1787 = vmatpush.bf16.msra.mxu0 %v1769
      %1788 = vmatmul.bf16.gmra.mxu0 %v1778
      %v1789 = vpop.f32.mrf.mxu0
      %v1790 = vadd.f32 0.0, %v1789
      %v1791 = vpop.f32.mrf.mxu0
      %1792 = vdwg.mxu0
      %v1793 = vadd.f32 %v1732, %v1790
      %v1794 = vadd.f32 %v1793, %v401
      %v1795 = vsub.f32 0.0, %v1794
      %v1796 = vmul.f32 %v1795, 1.442695
      %v1797 = vpow.pop %v1796
      %v1798 = vadd.f32 %v1797, 1.0
      %v1799 = vrcp.pop %v1798
      %v1800 = vmul.f32 %v1794, %v1799
      %s1801 = scalar_lea.vmem %s170, 48
      %1802 = vst [vmem:[%s1801] sm:$0xff] %v1800
      %v1803 = vld [vmem:[%s1681] sm:$0xf]
      %v1804 = vld [vmem:[%s1681 + $0x4] sm:$0x1]
      %v1805 = vld [vmem:[%s1] sm:$0xf]
      %v1806 = vld [vmem:[%s1 + $0x4] sm:$0xf]
      %v1807 = vld [vmem:[%s1 + $0x8] sm:$0xf]
      %v1808 = vld [vmem:[%s1 + $0xc] sm:$0xf]
      %v1809 = vld [vmem:[%s1 + $0x10] sm:$0xf]
      %v1810 = vld [vmem:[%s1 + $0x14] sm:$0xf]
      %v1811 = vld [vmem:[%s1 + $0x18] sm:$0xf]
      %v1812 = vld [vmem:[%s1 + $0x1c] sm:$0xf]
      %v1813 = vld [vmem:[%s183] sm:$0xf]
      %v1814 = vld [vmem:[%s183 + $0x4] sm:$0xf]
      %v1815 = vld [vmem:[%s183 + $0x8] sm:$0xf]
      %v1816 = vld [vmem:[%s183 + $0xc] sm:$0xf]
      %v1817 = vld [vmem:[%s183 + $0x10] sm:$0xf]
      %v1818 = vld [vmem:[%s183 + $0x14] sm:$0xf]
      %v1819 = vld [vmem:[%s183 + $0x18] sm:$0xf]
      %v1820 = vld [vmem:[%s183 + $0x1c] sm:$0xf]
      %v1823 = vunpack.c.l.b16 %v1803
      %v1824 = vunpack.c.l.b16 %v1804
      %v1825 = vpack.c.b16 %v1824, %v1823
      %v1827 = vshrl.u32 %v1825, 16
      %v1829 = vshll.u32 %v1825, 16
      %v1831 = vrot.slane %v1829, 1
      %v1832 = vor.u32 %v1827, %v1831
      %v1841 = vunpack.c.l.b16 %v1813
      %v1842 = vunpack.c.l.b16 %v1814
      %v1843 = vunpack.c.l.b16 %v1815
      %v1844 = vunpack.c.l.b16 %v1816
      %v1845 = vunpack.c.l.b16 %v1817
      %v1846 = vunpack.c.l.b16 %v1818
      %v1847 = vunpack.c.l.b16 %v1819
      %v1848 = vunpack.c.l.b16 %v1820
      %v1849 = vpack.c.b16 %v1842, %v1841
      %v1850 = vpack.c.b16 %v1844, %v1843
      %v1851 = vpack.c.b16 %v1846, %v1845
      %v1852 = vpack.c.b16 %v1848, %v1847
      %v1858 = vsel %vm228, %v1832, 0
      %1860 = vmatpush.bf16.msra.mxu0 0
      %1861 = vmatpush.bf16.msra.mxu0 0
      %1862 = vmatpush.bf16.msra.mxu0 0
      %1863 = vmatpush.bf16.msra.mxu0 0
      %1864 = vmatpush.bf16.msra.mxu0 %v1852
      %1865 = vmatpush.bf16.msra.mxu0 %v1851
      %1866 = vmatpush.bf16.msra.mxu0 %v1850
      %1867 = vmatpush.bf16.msra.mxu0 %v1849
      %1868 = vmatmul.bf16.gmra.mxu0 %v1858
      %v1869 = vpop.f32.mrf.mxu0
      %v1870 = vadd.f32 0.0, %v1869
      %v1871 = vpop.f32.mrf.mxu0
      %1872 = vdwg.mxu0
      %v1881 = vunpack.c.l.b16 %v1805
      %v1882 = vunpack.c.l.b16 %v1806
      %v1883 = vunpack.c.l.b16 %v1807
      %v1884 = vunpack.c.l.b16 %v1808
      %v1885 = vunpack.c.l.b16 %v1809
      %v1886 = vunpack.c.l.b16 %v1810
      %v1887 = vunpack.c.l.b16 %v1811
      %v1888 = vunpack.c.l.b16 %v1812
      %v1889 = vpack.c.b16 %v1882, %v1881
      %v1890 = vpack.c.b16 %v1884, %v1883
      %v1891 = vpack.c.b16 %v1886, %v1885
      %v1892 = vpack.c.b16 %v1888, %v1887
      %v1898 = vsel %vm228, %v1803, 0
      %1900 = vmatpush.bf16.msra.mxu0 0
      %1901 = vmatpush.bf16.msra.mxu0 0
      %1902 = vmatpush.bf16.msra.mxu0 0
      %1903 = vmatpush.bf16.msra.mxu0 0
      %1904 = vmatpush.bf16.msra.mxu0 %v1892
      %1905 = vmatpush.bf16.msra.mxu0 %v1891
      %1906 = vmatpush.bf16.msra.mxu0 %v1890
      %1907 = vmatpush.bf16.msra.mxu0 %v1889
      %1908 = vmatmul.bf16.gmra.mxu0 %v1898
      %v1909 = vpop.f32.mrf.mxu0
      %v1910 = vadd.f32 %v1870, %v1909
      %v1911 = vpop.f32.mrf.mxu0
      %1912 = vdwg.mxu0
      %s1913 = scalar_lea.vmem %s165, 64
      %v1914 = vld [vmem:[%s1913] sm:$0xf]
      %v1915 = vld [vmem:[%s1913 + $0x4] sm:$0x1]
      %v1916 = vld [vmem:[%s288] sm:$0xf]
      %v1917 = vld [vmem:[%s288 + $0x4] sm:$0xf]
      %v1918 = vld [vmem:[%s288 + $0x8] sm:$0xf]
      %v1919 = vld [vmem:[%s288 + $0xc] sm:$0xf]
      %v1920 = vld [vmem:[%s288 + $0x10] sm:$0xf]
      %v1921 = vld [vmem:[%s288 + $0x14] sm:$0xf]
      %v1922 = vld [vmem:[%s288 + $0x18] sm:$0xf]
      %v1923 = vld [vmem:[%s288 + $0x1c] sm:$0xf]
      %v1932 = vunpack.c.l.b16 %v1916
      %v1933 = vunpack.c.l.b16 %v1917
      %v1934 = vunpack.c.l.b16 %v1918
      %v1935 = vunpack.c.l.b16 %v1919
      %v1936 = vunpack.c.l.b16 %v1920
      %v1937 = vunpack.c.l.b16 %v1921
      %v1938 = vunpack.c.l.b16 %v1922
      %v1939 = vunpack.c.l.b16 %v1923
      %v1940 = vpack.c.b16 %v1933, %v1932
      %v1941 = vpack.c.b16 %v1935, %v1934
      %v1942 = vpack.c.b16 %v1937, %v1936
      %v1943 = vpack.c.b16 %v1939, %v1938
      %v1949 = vsel %vm228, %v1914, 0
      %1951 = vmatpush.bf16.msra.mxu0 0
      %1952 = vmatpush.bf16.msra.mxu0 0
      %1953 = vmatpush.bf16.msra.mxu0 0
      %1954 = vmatpush.bf16.msra.mxu0 0
      %1955 = vmatpush.bf16.msra.mxu0 %v1943
      %1956 = vmatpush.bf16.msra.mxu0 %v1942
      %1957 = vmatpush.bf16.msra.mxu0 %v1941
      %1958 = vmatpush.bf16.msra.mxu0 %v1940
      %1959 = vmatmul.bf16.gmra.mxu0 %v1949
      %v1960 = vpop.f32.mrf.mxu0
      %v1961 = vadd.f32 0.0, %v1960
      %v1962 = vpop.f32.mrf.mxu0
      %1963 = vdwg.mxu0
      %v1964 = vadd.f32 %v1910, %v1961
      %v1965 = vld [vmem:[%s338] sm:$0xf]
      %v1966 = vld [vmem:[%s338 + $0x4] sm:$0xf]
      %v1967 = vld [vmem:[%s338 + $0x8] sm:$0xf]
      %v1968 = vld [vmem:[%s338 + $0xc] sm:$0xf]
      %v1969 = vld [vmem:[%s338 + $0x10] sm:$0xf]
      %v1970 = vld [vmem:[%s338 + $0x14] sm:$0xf]
      %v1971 = vld [vmem:[%s338 + $0x18] sm:$0xf]
      %v1972 = vld [vmem:[%s338 + $0x1c] sm:$0xf]
      %v1975 = vunpack.c.l.b16 %v1914
      %v1976 = vunpack.c.l.b16 %v1915
      %v1977 = vpack.c.b16 %v1976, %v1975
      %v1979 = vshrl.u32 %v1977, 16
      %v1981 = vshll.u32 %v1977, 16
      %v1983 = vrot.slane %v1981, 1
      %v1984 = vor.u32 %v1979, %v1983
      %v1993 = vunpack.c.l.b16 %v1965
      %v1994 = vunpack.c.l.b16 %v1966
      %v1995 = vunpack.c.l.b16 %v1967
      %v1996 = vunpack.c.l.b16 %v1968
      %v1997 = vunpack.c.l.b16 %v1969
      %v1998 = vunpack.c.l.b16 %v1970
      %v1999 = vunpack.c.l.b16 %v1971
      %v2000 = vunpack.c.l.b16 %v1972
      %v2001 = vpack.c.b16 %v1994, %v1993
      %v2002 = vpack.c.b16 %v1996, %v1995
      %v2003 = vpack.c.b16 %v1998, %v1997
      %v2004 = vpack.c.b16 %v2000, %v1999
      %v2010 = vsel %vm228, %v1984, 0
      %2012 = vmatpush.bf16.msra.mxu0 0
      %2013 = vmatpush.bf16.msra.mxu0 0
      %2014 = vmatpush.bf16.msra.mxu0 0
      %2015 = vmatpush.bf16.msra.mxu0 0
      %2016 = vmatpush.bf16.msra.mxu0 %v2004
      %2017 = vmatpush.bf16.msra.mxu0 %v2003
      %2018 = vmatpush.bf16.msra.mxu0 %v2002
      %2019 = vmatpush.bf16.msra.mxu0 %v2001
      %2020 = vmatmul.bf16.gmra.mxu0 %v2010
      %v2021 = vpop.f32.mrf.mxu0
      %v2022 = vadd.f32 0.0, %v2021
      %v2023 = vpop.f32.mrf.mxu0
      %2024 = vdwg.mxu0
      %v2025 = vadd.f32 %v1964, %v2022
      %v2026 = vadd.f32 %v2025, %v401
      %v2027 = vsub.f32 0.0, %v2026
      %v2028 = vmul.f32 %v2027, 1.442695
      %v2029 = vpow.pop %v2028
      %v2030 = vadd.f32 %v2029, 1.0
      %v2031 = vrcp.pop %v2030
      %v2032 = vmul.f32 %v2026, %v2031
      %s2033 = scalar_lea.vmem %s170, 56
      %2034 = vst [vmem:[%s2033] sm:$0xff] %v2032
      %p2035 = scmp.lt.s32.totalorder %s14, 1
      %s2036 = scalar_select %p2035, %s14, 1
      %s2037 = smul.addr %s2036, 8
      %s2038 = smul.addr %s2037, 8
      %s2039 = scalar_lea.vmem %s3, %s2038
      // Predicated region
      $region33: #{yolo_wrapper_forward.7} parent=31 // pred_check
        %p2040 = pneg %p100
      $region34: #{yolo_wrapper_forward.7} parent=31 // pred_check_branch
        %2042 = sbr.rel (%p2040) target = $region36
      $region35: #{yolo_wrapper_forward.7} parent=31 // pred_region
        _
      $region36: #{yolo_wrapper_forward.7} parent=31 // pred_fallthru
        _
    $region32: #{yolo_wrapper_forward.7} parent=5 // pred_fallthru
      _
    %p2043 = scmp.le.s32.totalorder 2, %s9
    // Predicated region
    $region37: #{yolo_wrapper_forward.7} parent=5 // pred_check
      %p2044 = pneg %p2043
    $region38: #{yolo_wrapper_forward.7} parent=5 // pred_check_branch
      %2046 = sbr.rel (%p2044) target = $region40
    $region39: #{yolo_wrapper_forward.7} parent=5 // pred_region
      %s2047 = ssub.s32 %s9, 2
      // Predicated region
      $region41: #{yolo_wrapper_forward.7} parent=39 // pred_check
        %p2048 = pneg %p106
      $region42: #{yolo_wrapper_forward.7} parent=39 // pred_check_branch
        %2050 = sbr.rel (%p2048) target = $region44
      $region43: #{yolo_wrapper_forward.7} parent=39 // pred_region
        %p2051 = scmp.lt.s32.totalorder %s15, 1
        %s2052 = scalar_select %p2051, %s15, 1
        %s2053 = smul.addr %s2052, 8
        %s2054 = smul.addr %s2053, 8
        %s2055 = scalar_lea.vmem %s3, %s2054
      $region44: #{yolo_wrapper_forward.7} parent=39 // pred_fallthru
        _
    $region40: #{yolo_wrapper_forward.7} parent=5 // pred_fallthru
      _
  $region6: #{yolo_wrapper_forward.7} parent=0 // loop_footer
    %s13 = sadd.s32 1, %s9
  $region7: #{yolo_wrapper_forward.7} parent=0 // loop_footer_branch
    %8 = sbr.rel target = $region3
  $region8: #{yolo_wrapper_forward.7} parent=0 // loop_exit
    _

// kernel: yolo_wrapper_forward.10
$region0: #{yolo_wrapper_forward.10}
  #allocation0 [shape = 'u32[]', space=smem, size = 0x4, offset = 0x4, fixed_abs, tag = 'smem constant byte address 0x4 - core index']
  #allocation1 [shape = 'u32[72,128]{1,0:T(1,128)}', space=vmem, size = 0x9000, scoped, tag = 'internal scratch']
  %s0 = inlined_call_operand.vmem [shape: bf16[32,64], index: 0, kind: input, shape index: {}]
  %s1 = inlined_call_operand.vmem [shape: bf16[64,128], index: 1, kind: input, shape index: {}]
  %s2 = inlined_call_operand.vmem [shape: f32[1,128], index: 2, kind: input, shape index: {}]
  %s3 = inlined_call_operand.vmem [shape: f32[32,128], index: 3, kind: output, shape index: {}]
  %s4 = sld [smem:[#allocation0]]
  $region22: #{yolo_wrapper_forward.10} parent=0
    _
  %s6 = ssub.s32 1, %s4
  %s7 = scalar_select 0, %s6, %s4
  // Predicated region
  $region2: #{yolo_wrapper_forward.10} parent=0 // pred_check
    _
  $region3: #{yolo_wrapper_forward.10} parent=0 // pred_check_branch
    %9 = sbr.rel (0) target = $region5
  $region4: #{yolo_wrapper_forward.10} parent=0 // pred_region
    _
  $region5: #{yolo_wrapper_forward.10} parent=0 // pred_fallthru
    _
  // Predicated region
  $region6: #{yolo_wrapper_forward.10} parent=0 // pred_check
    _
  $region7: #{yolo_wrapper_forward.10} parent=0 // pred_check_branch
    %11 = sbr.rel (0) target = $region9
  $region8: #{yolo_wrapper_forward.10} parent=0 // pred_region
    _
  $region9: #{yolo_wrapper_forward.10} parent=0 // pred_fallthru
    _
  // Predicated region
  $region10: #{yolo_wrapper_forward.10} parent=0 // pred_check
    _
  $region11: #{yolo_wrapper_forward.10} parent=0 // pred_check_branch
    %13 = sbr.rel (0) target = $region13
  $region12: #{yolo_wrapper_forward.10} parent=0 // pred_region
    _
  $region13: #{yolo_wrapper_forward.10} parent=0 // pred_fallthru
    _
  %v15 = vld [vmem:[%s0] sm:$0xf]
  %v16 = vld [vmem:[%s0 + $0x4] sm:$0xf]
  %v17 = vld [vmem:[%s0 + $0x8] sm:$0xf]
  %v18 = vld [vmem:[%s0 + $0xc] sm:$0xf]
  %v19 = vld [vmem:[%s1] sm:$0xf]
  %v20 = vld [vmem:[%s1 + $0x4] sm:$0xf]
  %v21 = vld [vmem:[%s1 + $0x8] sm:$0xf]
  %v22 = vld [vmem:[%s1 + $0xc] sm:$0xf]
  %v23 = vld [vmem:[%s1 + $0x10] sm:$0xf]
  %v24 = vld [vmem:[%s1 + $0x14] sm:$0xf]
  %v25 = vld [vmem:[%s1 + $0x18] sm:$0xf]
  %v26 = vld [vmem:[%s1 + $0x1c] sm:$0xf]
  %v27 = vld [vmem:[%s2] sm:$0x1]
  %v29 = vperm.slane %v27, 0
  %v35 = vunpack.c.l.b16 %v15
  %v36 = vunpack.c.l.b16 %v16
  %v37 = vunpack.c.l.b16 %v17
  %v38 = vunpack.c.l.b16 %v18
  %v39 = vpack.c.b16 %v36, %v35
  %v40 = vpack.c.b16 %v38, %v37
  %v49 = vunpack.c.l.b16 %v19
  %v50 = vunpack.c.l.b16 %v20
  %v51 = vunpack.c.l.b16 %v21
  %v52 = vunpack.c.l.b16 %v22
  %v53 = vunpack.c.l.b16 %v23
  %v54 = vunpack.c.l.b16 %v24
  %v55 = vunpack.c.l.b16 %v25
  %v56 = vunpack.c.l.b16 %v26
  %v57 = vpack.c.b16 %v50, %v49
  %v58 = vpack.c.b16 %v52, %v51
  %v59 = vpack.c.b16 %v54, %v53
  %v60 = vpack.c.b16 %v56, %v55
  %vm65 = vcmask 523264
  %v67 = vsel %vm65, %v39, 0
  %v70 = vsel %vm65, %v40, 0
  %72 = vmatpush.bf16.msra.mxu0 0
  %73 = vmatpush.bf16.msra.mxu0 0
  %74 = vmatpush.bf16.msra.mxu0 0
  %75 = vmatpush.bf16.msra.mxu0 0
  %76 = vmatpush.bf16.msra.mxu0 %v60
  %77 = vmatpush.bf16.msra.mxu0 %v59
  %78 = vmatpush.bf16.msra.mxu0 %v58
  %79 = vmatpush.bf16.msra.mxu0 %v57
  %80 = vmatmul.bf16.gmra.mxu0 %v67
  %v81 = vpop.f32.mrf.mxu0
  %v82 = vadd.f32 %v29, %v81
  %v83 = vpop.f32.mrf.mxu0
  %v84 = vadd.f32 %v29, %v83
  %85 = vmatmul.bf16.gmra.mxu0 %v70
  %v86 = vpop.f32.mrf.mxu0
  %v87 = vadd.f32 %v29, %v86
  %v88 = vpop.f32.mrf.mxu0
  %v89 = vadd.f32 %v29, %v88
  %90 = vdwg.mxu0
  %91 = vst [vmem:[%s3] sm:$0xff] %v82
  %92 = vst [vmem:[%s3 + $0x8] sm:$0xff] %v84
  %93 = vst [vmem:[%s3 + $0x10] sm:$0xff] %v87
  %94 = vst [vmem:[%s3 + $0x18] sm:$0xff] %v89
  // Predicated region
  $region14: #{yolo_wrapper_forward.10} parent=0 // pred_check
    _
  $region15: #{yolo_wrapper_forward.10} parent=0 // pred_check_branch
    %96 = sbr.rel (0) target = $region17
  $region16: #{yolo_wrapper_forward.10} parent=0 // pred_region
    _
  $region17: #{yolo_wrapper_forward.10} parent=0 // pred_fallthru
    _
  // Predicated region
  $region18: #{yolo_wrapper_forward.10} parent=0 // pred_check
    _
  $region19: #{yolo_wrapper_forward.10} parent=0 // pred_check_branch
    %98 = sbr.rel (0) target = $region21
  $region20: #{yolo_wrapper_forward.10} parent=0 // pred_region
    _
  $region21: #{yolo_wrapper_forward.10} parent=0 // pred_fallthru
    _

// kernel: yolo_wrapper_forward.8
$region0: #{yolo_wrapper_forward.8}
  #allocation0 [shape = 'u32[]', space=smem, size = 0x4, offset = 0x4, fixed_abs, tag = 'smem constant byte address 0x4 - core index']
  #allocation1 [shape = 'u32[72,128]{1,0:T(1,128)}', space=vmem, size = 0x9000, scoped, tag = 'internal scratch']
  %s0 = inlined_call_operand.vmem [shape: bf16[2,5,5,128], index: 0, kind: input, shape index: {}]
  %s1 = inlined_call_operand.vmem [shape: bf16[4,128,128], index: 1, kind: input, shape index: {}]
  %s2 = inlined_call_operand.vmem [shape: f32[1,128], index: 2, kind: input, shape index: {}]
  %s3 = inlined_call_operand.vmem [shape: f32[2,4,4,128], index: 3, kind: output, shape index: {}]
  %s4 = sld [smem:[#allocation0]]
  $region45: #{yolo_wrapper_forward.8} parent=0
    _
  %s6 = ssub.s32 1, %s4
  %s7 = scalar_select 0, %s6, %s4
  loop: start=0, step=1, limit=4
  $region2: #{yolo_wrapper_forward.8} parent=0 // loop_pre_header
    _
  $region3: #{yolo_wrapper_forward.8} parent=0 // loop_header
    %s9 = sphi 0, %s13
    %p10 = scmp.ge.s32.totalorder %s9, 4
    %s19 = sphi 0, %s21
    %s22 = sphi 0, %s19
    %s23 = sphi 0, %s22
    %s39 = sphi 0, %s23
    %s43 = sphi 0, %s43
    %s45 = sphi 0, %s43
    %s46 = sphi 0, %s45
    %s60 = sphi 0, %s46
    %s64 = sphi 0, %s64
    %s66 = sphi 0, %s64
    %s67 = sphi 0, %s66
    %s81 = sphi 0, %s67
    %s87 = sphi 0, %s89
    %s90 = sphi 0, %s87
    %s91 = sphi 0, %s90
    %s107 = sphi 0, %s91
  $region4: #{yolo_wrapper_forward.8} parent=0 // loop_header_branch
    %12 = sbr.rel (%p10) target = $region8
  $region5: #{yolo_wrapper_forward.8} parent=0 // loop_body
    %s14 = ssub.s32 %s9, 1
    %s15 = ssub.s32 %s9, 2
    %s16 = sadd.s32 %s9, 1
    %s17 = ssub.s32 %s9, %s16
    %p18 = scmp.eq.s32.totalorder %s17, 0
    %s20 = sadd.s32 %s19, 1
    %s21 = scalar_select %p18, %s19, %s20
    %p24 = pneg %p18
    %p25 = scmp.eq.s32.totalorder %s9, 1
    %p26 = por %p24, %p25
    %p27 = scmp.ne.s32.totalorder %s19, %s22
    %p28 = scmp.eq.s32.totalorder %s9, 0
    %p29 = por %p27, %p28
    %p30 = scmp.ne.s32.totalorder %s19, %s22
    %p31 = scmp.eq.s32.totalorder %s14, 1
    %p32 = por %p30, %p31
    %p33 = scmp.ne.s32.totalorder %s22, %s23
    %p34 = scmp.eq.s32.totalorder %s14, 0
    %p35 = por %p33, %p34
    %p36 = scmp.ne.s32.totalorder %s22, %s23
    %p37 = scmp.eq.s32.totalorder %s15, 1
    %p38 = por %p36, %p37
    %p40 = scmp.ne.s32.totalorder %s23, %s39
    %p41 = scmp.eq.s32.totalorder %s15, 0
    %p42 = por %p40, %p41
    %s44 = sadd.s32 %s43, 1
    %p47 = scmp.eq.s32.totalorder %s9, 1
    %p48 = scmp.ne.s32.totalorder %s43, %s45
    %p49 = scmp.eq.s32.totalorder %s9, 0
    %p50 = por %p48, %p49
    %p51 = scmp.ne.s32.totalorder %s43, %s45
    %p52 = scmp.eq.s32.totalorder %s14, 1
    %p53 = por %p51, %p52
    %p54 = scmp.ne.s32.totalorder %s45, %s46
    %p55 = scmp.eq.s32.totalorder %s14, 0
    %p56 = por %p54, %p55
    %p57 = scmp.ne.s32.totalorder %s45, %s46
    %p58 = scmp.eq.s32.totalorder %s15, 1
    %p59 = por %p57, %p58
    %p61 = scmp.ne.s32.totalorder %s46, %s60
    %p62 = scmp.eq.s32.totalorder %s15, 0
    %p63 = por %p61, %p62
    %s65 = sadd.s32 %s64, 1
    %p68 = scmp.eq.s32.totalorder %s9, 1
    %p69 = scmp.ne.s32.totalorder %s64, %s66
    %p70 = scmp.eq.s32.totalorder %s9, 0
    %p71 = por %p69, %p70
    %p72 = scmp.ne.s32.totalorder %s64, %s66
    %p73 = scmp.eq.s32.totalorder %s14, 1
    %p74 = por %p72, %p73
    %p75 = scmp.ne.s32.totalorder %s66, %s67
    %p76 = scmp.eq.s32.totalorder %s14, 0
    %p77 = por %p75, %p76
    %p78 = scmp.ne.s32.totalorder %s66, %s67
    %p79 = scmp.eq.s32.totalorder %s15, 1
    %p80 = por %p78, %p79
    %p82 = scmp.ne.s32.totalorder %s67, %s81
    %p83 = scmp.eq.s32.totalorder %s15, 0
    %p84 = por %p82, %p83
    %s85 = ssub.s32 %s9, %s16
    %p86 = scmp.eq.s32.totalorder %s85, 0
    %s88 = sadd.s32 %s87, 1
    %s89 = scalar_select %p86, %s87, %s88
    %p92 = pneg %p86
    %p93 = scmp.eq.s32.totalorder %s9, 1
    %p94 = por %p92, %p93
    %p95 = scmp.ne.s32.totalorder %s87, %s90
    %p96 = scmp.eq.s32.totalorder %s9, 0
    %p97 = por %p95, %p96
    %p98 = scmp.ne.s32.totalorder %s87, %s90
    %p99 = scmp.eq.s32.totalorder %s14, 1
    %p100 = por %p98, %p99
    %p101 = scmp.ne.s32.totalorder %s90, %s91
    %p102 = scmp.eq.s32.totalorder %s14, 0
    %p103 = por %p101, %p102
    %p104 = scmp.ne.s32.totalorder %s90, %s91
    %p105 = scmp.eq.s32.totalorder %s15, 1
    %p106 = por %p104, %p105
    %p108 = scmp.ne.s32.totalorder %s91, %s107
    %p109 = scmp.eq.s32.totalorder %s15, 0
    %p110 = por %p108, %p109
    %p111 = scmp.le.s32.totalorder 1, %s9
    %p112 = scmp.lt.s32.totalorder %s9, 3
    %p113 = pnand %p111, %p112
    %p114 = pneg %p113
    // Predicated region
    $region9: #{yolo_wrapper_forward.8} parent=5 // pred_check
      _
    $region10: #{yolo_wrapper_forward.8} parent=5 // pred_check_branch
      %116 = sbr.rel (%p113) target = $region12
    $region11: #{yolo_wrapper_forward.8} parent=5 // pred_region
      %s117 = ssub.s32 %s9, 1
      // Predicated region
      $region13: #{yolo_wrapper_forward.8} parent=11 // pred_check
        %p118 = pneg %p56
      $region14: #{yolo_wrapper_forward.8} parent=11 // pred_check_branch
        %120 = sbr.rel (%p118) target = $region16
      $region15: #{yolo_wrapper_forward.8} parent=11 // pred_region
        _
      $region16: #{yolo_wrapper_forward.8} parent=11 // pred_fallthru
        _
      // Predicated region
      $region17: #{yolo_wrapper_forward.8} parent=11 // pred_check
        %p121 = pneg %p77
      $region18: #{yolo_wrapper_forward.8} parent=11 // pred_check_branch
        %123 = sbr.rel (%p121) target = $region20
      $region19: #{yolo_wrapper_forward.8} parent=11 // pred_region
        _
      $region20: #{yolo_wrapper_forward.8} parent=11 // pred_fallthru
        _
    $region12: #{yolo_wrapper_forward.8} parent=5 // pred_fallthru
      _
    %p124 = scmp.lt.s32.totalorder %s9, 2
    // Predicated region
    $region21: #{yolo_wrapper_forward.8} parent=5 // pred_check
      %p125 = pneg %p124
    $region22: #{yolo_wrapper_forward.8} parent=5 // pred_check_branch
      %127 = sbr.rel (%p125) target = $region24
    $region23: #{yolo_wrapper_forward.8} parent=5 // pred_region
      // Predicated region
      $region25: #{yolo_wrapper_forward.8} parent=23 // pred_check
        %p128 = pneg %p29
      $region26: #{yolo_wrapper_forward.8} parent=23 // pred_check_branch
        %130 = sbr.rel (%p128) target = $region28
      $region27: #{yolo_wrapper_forward.8} parent=23 // pred_region
        %p131 = scmp.lt.s32.totalorder %s9, 1
        %s132 = scalar_select %p131, %s9, 1
        %s133 = smul.addr %s132, 5
        %s134 = smul.addr %s133, 4
        %s135 = scalar_lea.vmem %s0, %s134
      $region28: #{yolo_wrapper_forward.8} parent=23 // pred_fallthru
        _
    $region24: #{yolo_wrapper_forward.8} parent=5 // pred_fallthru
      _
    %p136 = scmp.le.s32.totalorder 1, %s9
    %p137 = scmp.lt.s32.totalorder %s9, 3
    %p138 = pnand %p136, %p137
    %p139 = pneg %p138
    // Predicated region
    $region29: #{yolo_wrapper_forward.8} parent=5 // pred_check
      _
    $region30: #{yolo_wrapper_forward.8} parent=5 // pred_check_branch
      %141 = sbr.rel (%p138) target = $region32
    $region31: #{yolo_wrapper_forward.8} parent=5 // pred_region
      %s142 = ssub.s32 %s9, 1
      %p143 = scmp.lt.s32.totalorder %s14, 1
      %s144 = scalar_select %p143, %s14, 1
      %s145 = smul.addr %s144, 5
      %s146 = smul.addr %s145, 4
      %s147 = scalar_lea.vmem %s0, %s146
      %p148 = pneg %p35
      %p149 = pneg %p32
      %p150 = pneg %p56
      %p151 = pneg %p53
      %p152 = pneg %p77
      %p153 = pneg %p74
      %p154 = pneg %p103
      %p155 = pneg %p100
      %p156 = scmp.lt.s32.totalorder %s14, 1
      %s157 = scalar_select %p156, %s14, 1
      %s158 = smul.addr %s157, 4
      %s159 = smul.addr %s158, 4
      %s160 = scalar_lea.vmem %s3, %s159
      %p161 = scmp.lt.s32.totalorder %s14, 1
      %s162 = scalar_select %p161, %s14, 1
      %s163 = smul.addr %s162, 5
      %s164 = smul.addr %s163, 4
      %s165 = scalar_lea.vmem %s0, %s164
      %p166 = scmp.lt.s32.totalorder %s14, 1
      %s167 = scalar_select %p166, %s14, 1
      %s168 = smul.addr %s167, 4
      %s169 = smul.addr %s168, 4
      %s170 = scalar_lea.vmem %s3, %s169
      %v171 = vld [vmem:[%s2] sm:$0x1]
      %v172 = vld [vmem:[%s165] sm:$0x7]
      %v173 = vld [vmem:[%s1] sm:$0xf]
      %v174 = vld [vmem:[%s1 + $0x4] sm:$0xf]
      %v175 = vld [vmem:[%s1 + $0x8] sm:$0xf]
      %v176 = vld [vmem:[%s1 + $0xc] sm:$0xf]
      %v177 = vld [vmem:[%s1 + $0x10] sm:$0xf]
      %v178 = vld [vmem:[%s1 + $0x14] sm:$0xf]
      %v179 = vld [vmem:[%s1 + $0x18] sm:$0xf]
      %v180 = vld [vmem:[%s1 + $0x1c] sm:$0xf]
      %v181 = vld [vmem:[%s1 + $0x20] sm:$0xf]
      %v182 = vld [vmem:[%s1 + $0x24] sm:$0xf]
      %v183 = vld [vmem:[%s1 + $0x28] sm:$0xf]
      %v184 = vld [vmem:[%s1 + $0x2c] sm:$0xf]
      %v185 = vld [vmem:[%s1 + $0x30] sm:$0xf]
      %v186 = vld [vmem:[%s1 + $0x34] sm:$0xf]
      %v187 = vld [vmem:[%s1 + $0x38] sm:$0xf]
      %v188 = vld [vmem:[%s1 + $0x3c] sm:$0xf]
      %s189 = scalar_lea.vmem %s1, 64
      %v190 = vld [vmem:[%s189] sm:$0xf]
      %v191 = vld [vmem:[%s189 + $0x4] sm:$0xf]
      %v192 = vld [vmem:[%s189 + $0x8] sm:$0xf]
      %v193 = vld [vmem:[%s189 + $0xc] sm:$0xf]
      %v194 = vld [vmem:[%s189 + $0x10] sm:$0xf]
      %v195 = vld [vmem:[%s189 + $0x14] sm:$0xf]
      %v196 = vld [vmem:[%s189 + $0x18] sm:$0xf]
      %v197 = vld [vmem:[%s189 + $0x1c] sm:$0xf]
      %v198 = vld [vmem:[%s189 + $0x20] sm:$0xf]
      %v199 = vld [vmem:[%s189 + $0x24] sm:$0xf]
      %v200 = vld [vmem:[%s189 + $0x28] sm:$0xf]
      %v201 = vld [vmem:[%s189 + $0x2c] sm:$0xf]
      %v202 = vld [vmem:[%s189 + $0x30] sm:$0xf]
      %v203 = vld [vmem:[%s189 + $0x34] sm:$0xf]
      %v204 = vld [vmem:[%s189 + $0x38] sm:$0xf]
      %v205 = vld [vmem:[%s189 + $0x3c] sm:$0xf]
      %v207 = vunpack.c.l.b16 %v172
      %v208 = vpack.c.b16 %v207, %v207
      %v210 = vshrl.u32 %v208, 16
      %v212 = vshll.u32 %v208, 16
      %v214 = vrot.slane %v212, 1
      %v215 = vor.u32 %v210, %v214
      %v233 = vunpack.c.l.b16 %v190
      %v234 = vunpack.c.l.b16 %v191
      %v235 = vunpack.c.l.b16 %v192
      %v236 = vunpack.c.l.b16 %v193
      %v237 = vunpack.c.l.b16 %v194
      %v238 = vunpack.c.l.b16 %v195
      %v239 = vunpack.c.l.b16 %v196
      %v240 = vunpack.c.l.b16 %v197
      %v241 = vunpack.c.l.b16 %v198
      %v242 = vunpack.c.l.b16 %v199
      %v243 = vunpack.c.l.b16 %v200
      %v244 = vunpack.c.l.b16 %v201
      %v245 = vunpack.c.l.b16 %v202
      %v246 = vunpack.c.l.b16 %v203
      %v247 = vunpack.c.l.b16 %v204
      %v248 = vunpack.c.l.b16 %v205
      %v249 = vpack.c.b16 %v234, %v233
      %v250 = vpack.c.b16 %v236, %v235
      %v251 = vpack.c.b16 %v238, %v237
      %v252 = vpack.c.b16 %v240, %v239
      %v253 = vpack.c.b16 %v242, %v241
      %v254 = vpack.c.b16 %v244, %v243
      %v255 = vpack.c.b16 %v246, %v245
      %v256 = vpack.c.b16 %v248, %v247
      %265 = vmatpush.bf16.msra.mxu0 %v256
      %266 = vmatpush.bf16.msra.mxu0 %v255
      %267 = vmatpush.bf16.msra.mxu0 %v254
      %268 = vmatpush.bf16.msra.mxu0 %v253
      %269 = vmatpush.bf16.msra.mxu0 %v252
      %270 = vmatpush.bf16.msra.mxu0 %v251
      %271 = vmatpush.bf16.msra.mxu0 %v250
      %272 = vmatpush.bf16.msra.mxu0 %v249
      %273 = vmatmul.bf16.gmra.mxu0 %v215
      %v274 = vpop.f32.mrf.mxu0
      %v275 = vadd.f32 0.0, %v274
      %v276 = vpop.f32.mrf.mxu0
      %277 = vdwg.mxu0
      %v294 = vunpack.c.l.b16 %v173
      %v295 = vunpack.c.l.b16 %v174
      %v296 = vunpack.c.l.b16 %v175
      %v297 = vunpack.c.l.b16 %v176
      %v298 = vunpack.c.l.b16 %v177
      %v299 = vunpack.c.l.b16 %v178
      %v300 = vunpack.c.l.b16 %v179
      %v301 = vunpack.c.l.b16 %v180
      %v302 = vunpack.c.l.b16 %v181
      %v303 = vunpack.c.l.b16 %v182
      %v304 = vunpack.c.l.b16 %v183
      %v305 = vunpack.c.l.b16 %v184
      %v306 = vunpack.c.l.b16 %v185
      %v307 = vunpack.c.l.b16 %v186
      %v308 = vunpack.c.l.b16 %v187
      %v309 = vunpack.c.l.b16 %v188
      %v310 = vpack.c.b16 %v295, %v294
      %v311 = vpack.c.b16 %v297, %v296
      %v312 = vpack.c.b16 %v299, %v298
      %v313 = vpack.c.b16 %v301, %v300
      %v314 = vpack.c.b16 %v303, %v302
      %v315 = vpack.c.b16 %v305, %v304
      %v316 = vpack.c.b16 %v307, %v306
      %v317 = vpack.c.b16 %v309, %v308
      %326 = vmatpush.bf16.msra.mxu0 %v317
      %327 = vmatpush.bf16.msra.mxu0 %v316
      %328 = vmatpush.bf16.msra.mxu0 %v315
      %329 = vmatpush.bf16.msra.mxu0 %v314
      %330 = vmatpush.bf16.msra.mxu0 %v313
      %331 = vmatpush.bf16.msra.mxu0 %v312
      %332 = vmatpush.bf16.msra.mxu0 %v311
      %333 = vmatpush.bf16.msra.mxu0 %v310
      %334 = vmatmul.bf16.gmra.mxu0 %v172
      %v335 = vpop.f32.mrf.mxu0
      %v336 = vadd.f32 %v275, %v335
      %v337 = vpop.f32.mrf.mxu0
      %338 = vdwg.mxu0
      %s339 = scalar_lea.vmem %s165, 4
      %v340 = vld [vmem:[%s339] sm:$0x7]
      %s341 = scalar_lea.vmem %s1, 128
      %v342 = vld [vmem:[%s341] sm:$0xf]
      %v343 = vld [vmem:[%s341 + $0x4] sm:$0xf]
      %v344 = vld [vmem:[%s341 + $0x8] sm:$0xf]
      %v345 = vld [vmem:[%s341 + $0xc] sm:$0xf]
      %v346 = vld [vmem:[%s341 + $0x10] sm:$0xf]
      %v347 = vld [vmem:[%s341 + $0x14] sm:$0xf]
      %v348 = vld [vmem:[%s341 + $0x18] sm:$0xf]
      %v349 = vld [vmem:[%s341 + $0x1c] sm:$0xf]
      %v350 = vld [vmem:[%s341 + $0x20] sm:$0xf]
      %v351 = vld [vmem:[%s341 + $0x24] sm:$0xf]
      %v352 = vld [vmem:[%s341 + $0x28] sm:$0xf]
      %v353 = vld [vmem:[%s341 + $0x2c] sm:$0xf]
      %v354 = vld [vmem:[%s341 + $0x30] sm:$0xf]
      %v355 = vld [vmem:[%s341 + $0x34] sm:$0xf]
      %v356 = vld [vmem:[%s341 + $0x38] sm:$0xf]
      %v357 = vld [vmem:[%s341 + $0x3c] sm:$0xf]
      %v374 = vunpack.c.l.b16 %v342
      %v375 = vunpack.c.l.b16 %v343
      %v376 = vunpack.c.l.b16 %v344
      %v377 = vunpack.c.l.b16 %v345
      %v378 = vunpack.c.l.b16 %v346
      %v379 = vunpack.c.l.b16 %v347
      %v380 = vunpack.c.l.b16 %v348
      %v381 = vunpack.c.l.b16 %v349
      %v382 = vunpack.c.l.b16 %v350
      %v383 = vunpack.c.l.b16 %v351
      %v384 = vunpack.c.l.b16 %v352
      %v385 = vunpack.c.l.b16 %v353
      %v386 = vunpack.c.l.b16 %v354
      %v387 = vunpack.c.l.b16 %v355
      %v388 = vunpack.c.l.b16 %v356
      %v389 = vunpack.c.l.b16 %v357
      %v390 = vpack.c.b16 %v375, %v374
      %v391 = vpack.c.b16 %v377, %v376
      %v392 = vpack.c.b16 %v379, %v378
      %v393 = vpack.c.b16 %v381, %v380
      %v394 = vpack.c.b16 %v383, %v382
      %v395 = vpack.c.b16 %v385, %v384
      %v396 = vpack.c.b16 %v387, %v386
      %v397 = vpack.c.b16 %v389, %v388
      %406 = vmatpush.bf16.msra.mxu0 %v397
      %407 = vmatpush.bf16.msra.mxu0 %v396
      %408 = vmatpush.bf16.msra.mxu0 %v395
      %409 = vmatpush.bf16.msra.mxu0 %v394
      %410 = vmatpush.bf16.msra.mxu0 %v393
      %411 = vmatpush.bf16.msra.mxu0 %v392
      %412 = vmatpush.bf16.msra.mxu0 %v391
      %413 = vmatpush.bf16.msra.mxu0 %v390
      %414 = vmatmul.bf16.gmra.mxu0 %v340
      %v415 = vpop.f32.mrf.mxu0
      %v416 = vadd.f32 0.0, %v415
      %v417 = vpop.f32.mrf.mxu0
      %418 = vdwg.mxu0
      %v419 = vadd.f32 %v336, %v416
      %s420 = scalar_lea.vmem %s1, 192
      %v421 = vld [vmem:[%s420] sm:$0xf]
      %v422 = vld [vmem:[%s420 + $0x4] sm:$0xf]
      %v423 = vld [vmem:[%s420 + $0x8] sm:$0xf]
      %v424 = vld [vmem:[%s420 + $0xc] sm:$0xf]
      %v425 = vld [vmem:[%s420 + $0x10] sm:$0xf]
      %v426 = vld [vmem:[%s420 + $0x14] sm:$0xf]
      %v427 = vld [vmem:[%s420 + $0x18] sm:$0xf]
      %v428 = vld [vmem:[%s420 + $0x1c] sm:$0xf]
      %v429 = vld [vmem:[%s420 + $0x20] sm:$0xf]
      %v430 = vld [vmem:[%s420 + $0x24] sm:$0xf]
      %v431 = vld [vmem:[%s420 + $0x28] sm:$0xf]
      %v432 = vld [vmem:[%s420 + $0x2c] sm:$0xf]
      %v433 = vld [vmem:[%s420 + $0x30] sm:$0xf]
      %v434 = vld [vmem:[%s420 + $0x34] sm:$0xf]
      %v435 = vld [vmem:[%s420 + $0x38] sm:$0xf]
      %v436 = vld [vmem:[%s420 + $0x3c] sm:$0xf]
      %v438 = vunpack.c.l.b16 %v340
      %v439 = vpack.c.b16 %v438, %v438
      %v441 = vshrl.u32 %v439, 16
      %v443 = vshll.u32 %v439, 16
      %v445 = vrot.slane %v443, 1
      %v446 = vor.u32 %v441, %v445
      %v464 = vunpack.c.l.b16 %v421
      %v465 = vunpack.c.l.b16 %v422
      %v466 = vunpack.c.l.b16 %v423
      %v467 = vunpack.c.l.b16 %v424
      %v468 = vunpack.c.l.b16 %v425
      %v469 = vunpack.c.l.b16 %v426
      %v470 = vunpack.c.l.b16 %v427
      %v471 = vunpack.c.l.b16 %v428
      %v472 = vunpack.c.l.b16 %v429
      %v473 = vunpack.c.l.b16 %v430
      %v474 = vunpack.c.l.b16 %v431
      %v475 = vunpack.c.l.b16 %v432
      %v476 = vunpack.c.l.b16 %v433
      %v477 = vunpack.c.l.b16 %v434
      %v478 = vunpack.c.l.b16 %v435
      %v479 = vunpack.c.l.b16 %v436
      %v480 = vpack.c.b16 %v465, %v464
      %v481 = vpack.c.b16 %v467, %v466
      %v482 = vpack.c.b16 %v469, %v468
      %v483 = vpack.c.b16 %v471, %v470
      %v484 = vpack.c.b16 %v473, %v472
      %v485 = vpack.c.b16 %v475, %v474
      %v486 = vpack.c.b16 %v477, %v476
      %v487 = vpack.c.b16 %v479, %v478
      %496 = vmatpush.bf16.msra.mxu0 %v487
      %497 = vmatpush.bf16.msra.mxu0 %v486
      %498 = vmatpush.bf16.msra.mxu0 %v485
      %499 = vmatpush.bf16.msra.mxu0 %v484
      %500 = vmatpush.bf16.msra.mxu0 %v483
      %501 = vmatpush.bf16.msra.mxu0 %v482
      %502 = vmatpush.bf16.msra.mxu0 %v481
      %503 = vmatpush.bf16.msra.mxu0 %v480
      %504 = vmatmul.bf16.gmra.mxu0 %v446
      %v505 = vpop.f32.mrf.mxu0
      %v506 = vadd.f32 0.0, %v505
      %v507 = vpop.f32.mrf.mxu0
      %508 = vdwg.mxu0
      %v509 = vadd.f32 %v419, %v506
      %v511 = vperm.slane %v171, 0
      %v513 = vadd.f32 %v509, %v511
      %v514 = vsub.f32 0.0, %v513
      %v515 = vmul.f32 %v514, 1.442695
      %v516 = vpow.pop %v515
      %v517 = vadd.f32 %v516, 1.0
      %v518 = vrcp.pop %v517
      %v519 = vmul.f32 %v513, %v518
      %520 = vst [vmem:[%s170] sm:$0xf] %v519
      %v521 = vld [vmem:[%s339] sm:$0x7]
      %v522 = vld [vmem:[%s1] sm:$0xf]
      %v523 = vld [vmem:[%s1 + $0x4] sm:$0xf]
      %v524 = vld [vmem:[%s1 + $0x8] sm:$0xf]
      %v525 = vld [vmem:[%s1 + $0xc] sm:$0xf]
      %v526 = vld [vmem:[%s1 + $0x10] sm:$0xf]
      %v527 = vld [vmem:[%s1 + $0x14] sm:$0xf]
      %v528 = vld [vmem:[%s1 + $0x18] sm:$0xf]
      %v529 = vld [vmem:[%s1 + $0x1c] sm:$0xf]
      %v530 = vld [vmem:[%s1 + $0x20] sm:$0xf]
      %v531 = vld [vmem:[%s1 + $0x24] sm:$0xf]
      %v532 = vld [vmem:[%s1 + $0x28] sm:$0xf]
      %v533 = vld [vmem:[%s1 + $0x2c] sm:$0xf]
      %v534 = vld [vmem:[%s1 + $0x30] sm:$0xf]
      %v535 = vld [vmem:[%s1 + $0x34] sm:$0xf]
      %v536 = vld [vmem:[%s1 + $0x38] sm:$0xf]
      %v537 = vld [vmem:[%s1 + $0x3c] sm:$0xf]
      %v538 = vld [vmem:[%s189] sm:$0xf]
      %v539 = vld [vmem:[%s189 + $0x4] sm:$0xf]
      %v540 = vld [vmem:[%s189 + $0x8] sm:$0xf]
      %v541 = vld [vmem:[%s189 + $0xc] sm:$0xf]
      %v542 = vld [vmem:[%s189 + $0x10] sm:$0xf]
      %v543 = vld [vmem:[%s189 + $0x14] sm:$0xf]
      %v544 = vld [vmem:[%s189 + $0x18] sm:$0xf]
      %v545 = vld [vmem:[%s189 + $0x1c] sm:$0xf]
      %v546 = vld [vmem:[%s189 + $0x20] sm:$0xf]
      %v547 = vld [vmem:[%s189 + $0x24] sm:$0xf]
      %v548 = vld [vmem:[%s189 + $0x28] sm:$0xf]
      %v549 = vld [vmem:[%s189 + $0x2c] sm:$0xf]
      %v550 = vld [vmem:[%s189 + $0x30] sm:$0xf]
      %v551 = vld [vmem:[%s189 + $0x34] sm:$0xf]
      %v552 = vld [vmem:[%s189 + $0x38] sm:$0xf]
      %v553 = vld [vmem:[%s189 + $0x3c] sm:$0xf]
      %v555 = vunpack.c.l.b16 %v521
      %v556 = vpack.c.b16 %v555, %v555
      %v558 = vshrl.u32 %v556, 16
      %v560 = vshll.u32 %v556, 16
      %v562 = vrot.slane %v560, 1
      %v563 = vor.u32 %v558, %v562
      %v581 = vunpack.c.l.b16 %v538
      %v582 = vunpack.c.l.b16 %v539
      %v583 = vunpack.c.l.b16 %v540
      %v584 = vunpack.c.l.b16 %v541
      %v585 = vunpack.c.l.b16 %v542
      %v586 = vunpack.c.l.b16 %v543
      %v587 = vunpack.c.l.b16 %v544
      %v588 = vunpack.c.l.b16 %v545
      %v589 = vunpack.c.l.b16 %v546
      %v590 = vunpack.c.l.b16 %v547
      %v591 = vunpack.c.l.b16 %v548
      %v592 = vunpack.c.l.b16 %v549
      %v593 = vunpack.c.l.b16 %v550
      %v594 = vunpack.c.l.b16 %v551
      %v595 = vunpack.c.l.b16 %v552
      %v596 = vunpack.c.l.b16 %v553
      %v597 = vpack.c.b16 %v582, %v581
      %v598 = vpack.c.b16 %v584, %v583
      %v599 = vpack.c.b16 %v586, %v585
      %v600 = vpack.c.b16 %v588, %v587
      %v601 = vpack.c.b16 %v590, %v589
      %v602 = vpack.c.b16 %v592, %v591
      %v603 = vpack.c.b16 %v594, %v593
      %v604 = vpack.c.b16 %v596, %v595
      %613 = vmatpush.bf16.msra.mxu0 %v604
      %614 = vmatpush.bf16.msra.mxu0 %v603
      %615 = vmatpush.bf16.msra.mxu0 %v602
      %616 = vmatpush.bf16.msra.mxu0 %v601
      %617 = vmatpush.bf16.msra.mxu0 %v600
      %618 = vmatpush.bf16.msra.mxu0 %v599
      %619 = vmatpush.bf16.msra.mxu0 %v598
      %620 = vmatpush.bf16.msra.mxu0 %v597
      %621 = vmatmul.bf16.gmra.mxu0 %v563
      %v622 = vpop.f32.mrf.mxu0
      %v623 = vadd.f32 0.0, %v622
      %v624 = vpop.f32.mrf.mxu0
      %625 = vdwg.mxu0
      %v642 = vunpack.c.l.b16 %v522
      %v643 = vunpack.c.l.b16 %v523
      %v644 = vunpack.c.l.b16 %v524
      %v645 = vunpack.c.l.b16 %v525
      %v646 = vunpack.c.l.b16 %v526
      %v647 = vunpack.c.l.b16 %v527
      %v648 = vunpack.c.l.b16 %v528
      %v649 = vunpack.c.l.b16 %v529
      %v650 = vunpack.c.l.b16 %v530
      %v651 = vunpack.c.l.b16 %v531
      %v652 = vunpack.c.l.b16 %v532
      %v653 = vunpack.c.l.b16 %v533
      %v654 = vunpack.c.l.b16 %v534
      %v655 = vunpack.c.l.b16 %v535
      %v656 = vunpack.c.l.b16 %v536
      %v657 = vunpack.c.l.b16 %v537
      %v658 = vpack.c.b16 %v643, %v642
      %v659 = vpack.c.b16 %v645, %v644
      %v660 = vpack.c.b16 %v647, %v646
      %v661 = vpack.c.b16 %v649, %v648
      %v662 = vpack.c.b16 %v651, %v650
      %v663 = vpack.c.b16 %v653, %v652
      %v664 = vpack.c.b16 %v655, %v654
      %v665 = vpack.c.b16 %v657, %v656
      %674 = vmatpush.bf16.msra.mxu0 %v665
      %675 = vmatpush.bf16.msra.mxu0 %v664
      %676 = vmatpush.bf16.msra.mxu0 %v663
      %677 = vmatpush.bf16.msra.mxu0 %v662
      %678 = vmatpush.bf16.msra.mxu0 %v661
      %679 = vmatpush.bf16.msra.mxu0 %v660
      %680 = vmatpush.bf16.msra.mxu0 %v659
      %681 = vmatpush.bf16.msra.mxu0 %v658
      %682 = vmatmul.bf16.gmra.mxu0 %v521
      %v683 = vpop.f32.mrf.mxu0
      %v684 = vadd.f32 %v623, %v683
      %v685 = vpop.f32.mrf.mxu0
      %686 = vdwg.mxu0
      %s687 = scalar_lea.vmem %s165, 8
      %v688 = vld [vmem:[%s687] sm:$0x7]
      %v689 = vld [vmem:[%s341] sm:$0xf]
      %v690 = vld [vmem:[%s341 + $0x4] sm:$0xf]
      %v691 = vld [vmem:[%s341 + $0x8] sm:$0xf]
      %v692 = vld [vmem:[%s341 + $0xc] sm:$0xf]
      %v693 = vld [vmem:[%s341 + $0x10] sm:$0xf]
      %v694 = vld [vmem:[%s341 + $0x14] sm:$0xf]
      %v695 = vld [vmem:[%s341 + $0x18] sm:$0xf]
      %v696 = vld [vmem:[%s341 + $0x1c] sm:$0xf]
      %v697 = vld [vmem:[%s341 + $0x20] sm:$0xf]
      %v698 = vld [vmem:[%s341 + $0x24] sm:$0xf]
      %v699 = vld [vmem:[%s341 + $0x28] sm:$0xf]
      %v700 = vld [vmem:[%s341 + $0x2c] sm:$0xf]
      %v701 = vld [vmem:[%s341 + $0x30] sm:$0xf]
      %v702 = vld [vmem:[%s341 + $0x34] sm:$0xf]
      %v703 = vld [vmem:[%s341 + $0x38] sm:$0xf]
      %v704 = vld [vmem:[%s341 + $0x3c] sm:$0xf]
      %v721 = vunpack.c.l.b16 %v689
      %v722 = vunpack.c.l.b16 %v690
      %v723 = vunpack.c.l.b16 %v691
      %v724 = vunpack.c.l.b16 %v692
      %v725 = vunpack.c.l.b16 %v693
      %v726 = vunpack.c.l.b16 %v694
      %v727 = vunpack.c.l.b16 %v695
      %v728 = vunpack.c.l.b16 %v696
      %v729 = vunpack.c.l.b16 %v697
      %v730 = vunpack.c.l.b16 %v698
      %v731 = vunpack.c.l.b16 %v699
      %v732 = vunpack.c.l.b16 %v700
      %v733 = vunpack.c.l.b16 %v701
      %v734 = vunpack.c.l.b16 %v702
      %v735 = vunpack.c.l.b16 %v703
      %v736 = vunpack.c.l.b16 %v704
      %v737 = vpack.c.b16 %v722, %v721
      %v738 = vpack.c.b16 %v724, %v723
      %v739 = vpack.c.b16 %v726, %v725
      %v740 = vpack.c.b16 %v728, %v727
      %v741 = vpack.c.b16 %v730, %v729
      %v742 = vpack.c.b16 %v732, %v731
      %v743 = vpack.c.b16 %v734, %v733
      %v744 = vpack.c.b16 %v736, %v735
      %753 = vmatpush.bf16.msra.mxu0 %v744
      %754 = vmatpush.bf16.msra.mxu0 %v743
      %755 = vmatpush.bf16.msra.mxu0 %v742
      %756 = vmatpush.bf16.msra.mxu0 %v741
      %757 = vmatpush.bf16.msra.mxu0 %v740
      %758 = vmatpush.bf16.msra.mxu0 %v739
      %759 = vmatpush.bf16.msra.mxu0 %v738
      %760 = vmatpush.bf16.msra.mxu0 %v737
      %761 = vmatmul.bf16.gmra.mxu0 %v688
      %v762 = vpop.f32.mrf.mxu0
      %v763 = vadd.f32 0.0, %v762
      %v764 = vpop.f32.mrf.mxu0
      %765 = vdwg.mxu0
      %v766 = vadd.f32 %v684, %v763
      %v767 = vld [vmem:[%s420] sm:$0xf]
      %v768 = vld [vmem:[%s420 + $0x4] sm:$0xf]
      %v769 = vld [vmem:[%s420 + $0x8] sm:$0xf]
      %v770 = vld [vmem:[%s420 + $0xc] sm:$0xf]
      %v771 = vld [vmem:[%s420 + $0x10] sm:$0xf]
      %v772 = vld [vmem:[%s420 + $0x14] sm:$0xf]
      %v773 = vld [vmem:[%s420 + $0x18] sm:$0xf]
      %v774 = vld [vmem:[%s420 + $0x1c] sm:$0xf]
      %v775 = vld [vmem:[%s420 + $0x20] sm:$0xf]
      %v776 = vld [vmem:[%s420 + $0x24] sm:$0xf]
      %v777 = vld [vmem:[%s420 + $0x28] sm:$0xf]
      %v778 = vld [vmem:[%s420 + $0x2c] sm:$0xf]
      %v779 = vld [vmem:[%s420 + $0x30] sm:$0xf]
      %v780 = vld [vmem:[%s420 + $0x34] sm:$0xf]
      %v781 = vld [vmem:[%s420 + $0x38] sm:$0xf]
      %v782 = vld [vmem:[%s420 + $0x3c] sm:$0xf]
      %v784 = vunpack.c.l.b16 %v688
      %v785 = vpack.c.b16 %v784, %v784
      %v787 = vshrl.u32 %v785, 16
      %v789 = vshll.u32 %v785, 16
      %v791 = vrot.slane %v789, 1
      %v792 = vor.u32 %v787, %v791
      %v810 = vunpack.c.l.b16 %v767
      %v811 = vunpack.c.l.b16 %v768
      %v812 = vunpack.c.l.b16 %v769
      %v813 = vunpack.c.l.b16 %v770
      %v814 = vunpack.c.l.b16 %v771
      %v815 = vunpack.c.l.b16 %v772
      %v816 = vunpack.c.l.b16 %v773
      %v817 = vunpack.c.l.b16 %v774
      %v818 = vunpack.c.l.b16 %v775
      %v819 = vunpack.c.l.b16 %v776
      %v820 = vunpack.c.l.b16 %v777
      %v821 = vunpack.c.l.b16 %v778
      %v822 = vunpack.c.l.b16 %v779
      %v823 = vunpack.c.l.b16 %v780
      %v824 = vunpack.c.l.b16 %v781
      %v825 = vunpack.c.l.b16 %v782
      %v826 = vpack.c.b16 %v811, %v810
      %v827 = vpack.c.b16 %v813, %v812
      %v828 = vpack.c.b16 %v815, %v814
      %v829 = vpack.c.b16 %v817, %v816
      %v830 = vpack.c.b16 %v819, %v818
      %v831 = vpack.c.b16 %v821, %v820
      %v832 = vpack.c.b16 %v823, %v822
      %v833 = vpack.c.b16 %v825, %v824
      %842 = vmatpush.bf16.msra.mxu0 %v833
      %843 = vmatpush.bf16.msra.mxu0 %v832
      %844 = vmatpush.bf16.msra.mxu0 %v831
      %845 = vmatpush.bf16.msra.mxu0 %v830
      %846 = vmatpush.bf16.msra.mxu0 %v829
      %847 = vmatpush.bf16.msra.mxu0 %v828
      %848 = vmatpush.bf16.msra.mxu0 %v827
      %849 = vmatpush.bf16.msra.mxu0 %v826
      %850 = vmatmul.bf16.gmra.mxu0 %v792
      %v851 = vpop.f32.mrf.mxu0
      %v852 = vadd.f32 0.0, %v851
      %v853 = vpop.f32.mrf.mxu0
      %854 = vdwg.mxu0
      %v855 = vadd.f32 %v766, %v852
      %v856 = vadd.f32 %v855, %v511
      %v857 = vsub.f32 0.0, %v856
      %v858 = vmul.f32 %v857, 1.442695
      %v859 = vpow.pop %v858
      %v860 = vadd.f32 %v859, 1.0
      %v861 = vrcp.pop %v860
      %v862 = vmul.f32 %v856, %v861
      %s863 = scalar_lea.vmem %s170, 4
      %864 = vst [vmem:[%s863] sm:$0xf] %v862
      %v865 = vld [vmem:[%s687] sm:$0x7]
      %v866 = vld [vmem:[%s1] sm:$0xf]
      %v867 = vld [vmem:[%s1 + $0x4] sm:$0xf]
      %v868 = vld [vmem:[%s1 + $0x8] sm:$0xf]
      %v869 = vld [vmem:[%s1 + $0xc] sm:$0xf]
      %v870 = vld [vmem:[%s1 + $0x10] sm:$0xf]
      %v871 = vld [vmem:[%s1 + $0x14] sm:$0xf]
      %v872 = vld [vmem:[%s1 + $0x18] sm:$0xf]
      %v873 = vld [vmem:[%s1 + $0x1c] sm:$0xf]
      %v874 = vld [vmem:[%s1 + $0x20] sm:$0xf]
      %v875 = vld [vmem:[%s1 + $0x24] sm:$0xf]
      %v876 = vld [vmem:[%s1 + $0x28] sm:$0xf]
      %v877 = vld [vmem:[%s1 + $0x2c] sm:$0xf]
      %v878 = vld [vmem:[%s1 + $0x30] sm:$0xf]
      %v879 = vld [vmem:[%s1 + $0x34] sm:$0xf]
      %v880 = vld [vmem:[%s1 + $0x38] sm:$0xf]
      %v881 = vld [vmem:[%s1 + $0x3c] sm:$0xf]
      %v882 = vld [vmem:[%s189] sm:$0xf]
      %v883 = vld [vmem:[%s189 + $0x4] sm:$0xf]
      %v884 = vld [vmem:[%s189 + $0x8] sm:$0xf]
      %v885 = vld [vmem:[%s189 + $0xc] sm:$0xf]
      %v886 = vld [vmem:[%s189 + $0x10] sm:$0xf]
      %v887 = vld [vmem:[%s189 + $0x14] sm:$0xf]
      %v888 = vld [vmem:[%s189 + $0x18] sm:$0xf]
      %v889 = vld [vmem:[%s189 + $0x1c] sm:$0xf]
      %v890 = vld [vmem:[%s189 + $0x20] sm:$0xf]
      %v891 = vld [vmem:[%s189 + $0x24] sm:$0xf]
      %v892 = vld [vmem:[%s189 + $0x28] sm:$0xf]
      %v893 = vld [vmem:[%s189 + $0x2c] sm:$0xf]
      %v894 = vld [vmem:[%s189 + $0x30] sm:$0xf]
      %v895 = vld [vmem:[%s189 + $0x34] sm:$0xf]
      %v896 = vld [vmem:[%s189 + $0x38] sm:$0xf]
      %v897 = vld [vmem:[%s189 + $0x3c] sm:$0xf]
      %v899 = vunpack.c.l.b16 %v865
      %v900 = vpack.c.b16 %v899, %v899
      %v902 = vshrl.u32 %v900, 16
      %v904 = vshll.u32 %v900, 16
      %v906 = vrot.slane %v904, 1
      %v907 = vor.u32 %v902, %v906
      %v925 = vunpack.c.l.b16 %v882
      %v926 = vunpack.c.l.b16 %v883
      %v927 = vunpack.c.l.b16 %v884
      %v928 = vunpack.c.l.b16 %v885
      %v929 = vunpack.c.l.b16 %v886
      %v930 = vunpack.c.l.b16 %v887
      %v931 = vunpack.c.l.b16 %v888
      %v932 = vunpack.c.l.b16 %v889
      %v933 = vunpack.c.l.b16 %v890
      %v934 = vunpack.c.l.b16 %v891
      %v935 = vunpack.c.l.b16 %v892
      %v936 = vunpack.c.l.b16 %v893
      %v937 = vunpack.c.l.b16 %v894
      %v938 = vunpack.c.l.b16 %v895
      %v939 = vunpack.c.l.b16 %v896
      %v940 = vunpack.c.l.b16 %v897
      %v941 = vpack.c.b16 %v926, %v925
      %v942 = vpack.c.b16 %v928, %v927
      %v943 = vpack.c.b16 %v930, %v929
      %v944 = vpack.c.b16 %v932, %v931
      %v945 = vpack.c.b16 %v934, %v933
      %v946 = vpack.c.b16 %v936, %v935
      %v947 = vpack.c.b16 %v938, %v937
      %v948 = vpack.c.b16 %v940, %v939
      %957 = vmatpush.bf16.msra.mxu0 %v948
      %958 = vmatpush.bf16.msra.mxu0 %v947
      %959 = vmatpush.bf16.msra.mxu0 %v946
      %960 = vmatpush.bf16.msra.mxu0 %v945
      %961 = vmatpush.bf16.msra.mxu0 %v944
      %962 = vmatpush.bf16.msra.mxu0 %v943
      %963 = vmatpush.bf16.msra.mxu0 %v942
      %964 = vmatpush.bf16.msra.mxu0 %v941
      %965 = vmatmul.bf16.gmra.mxu0 %v907
      %v966 = vpop.f32.mrf.mxu0
      %v967 = vadd.f32 0.0, %v966
      %v968 = vpop.f32.mrf.mxu0
      %969 = vdwg.mxu0
      %v986 = vunpack.c.l.b16 %v866
      %v987 = vunpack.c.l.b16 %v867
      %v988 = vunpack.c.l.b16 %v868
      %v989 = vunpack.c.l.b16 %v869
      %v990 = vunpack.c.l.b16 %v870
      %v991 = vunpack.c.l.b16 %v871
      %v992 = vunpack.c.l.b16 %v872
      %v993 = vunpack.c.l.b16 %v873
      %v994 = vunpack.c.l.b16 %v874
      %v995 = vunpack.c.l.b16 %v875
      %v996 = vunpack.c.l.b16 %v876
      %v997 = vunpack.c.l.b16 %v877
      %v998 = vunpack.c.l.b16 %v878
      %v999 = vunpack.c.l.b16 %v879
      %v1000 = vunpack.c.l.b16 %v880
      %v1001 = vunpack.c.l.b16 %v881
      %v1002 = vpack.c.b16 %v987, %v986
      %v1003 = vpack.c.b16 %v989, %v988
      %v1004 = vpack.c.b16 %v991, %v990
      %v1005 = vpack.c.b16 %v993, %v992
      %v1006 = vpack.c.b16 %v995, %v994
      %v1007 = vpack.c.b16 %v997, %v996
      %v1008 = vpack.c.b16 %v999, %v998
      %v1009 = vpack.c.b16 %v1001, %v1000
      %1018 = vmatpush.bf16.msra.mxu0 %v1009
      %1019 = vmatpush.bf16.msra.mxu0 %v1008
      %1020 = vmatpush.bf16.msra.mxu0 %v1007
      %1021 = vmatpush.bf16.msra.mxu0 %v1006
      %1022 = vmatpush.bf16.msra.mxu0 %v1005
      %1023 = vmatpush.bf16.msra.mxu0 %v1004
      %1024 = vmatpush.bf16.msra.mxu0 %v1003
      %1025 = vmatpush.bf16.msra.mxu0 %v1002
      %1026 = vmatmul.bf16.gmra.mxu0 %v865
      %v1027 = vpop.f32.mrf.mxu0
      %v1028 = vadd.f32 %v967, %v1027
      %v1029 = vpop.f32.mrf.mxu0
      %1030 = vdwg.mxu0
      %s1031 = scalar_lea.vmem %s165, 12
      %v1032 = vld [vmem:[%s1031] sm:$0x7]
      %v1033 = vld [vmem:[%s341] sm:$0xf]
      %v1034 = vld [vmem:[%s341 + $0x4] sm:$0xf]
      %v1035 = vld [vmem:[%s341 + $0x8] sm:$0xf]
      %v1036 = vld [vmem:[%s341 + $0xc] sm:$0xf]
      %v1037 = vld [vmem:[%s341 + $0x10] sm:$0xf]
      %v1038 = vld [vmem:[%s341 + $0x14] sm:$0xf]
      %v1039 = vld [vmem:[%s341 + $0x18] sm:$0xf]
      %v1040 = vld [vmem:[%s341 + $0x1c] sm:$0xf]
      %v1041 = vld [vmem:[%s341 + $0x20] sm:$0xf]
      %v1042 = vld [vmem:[%s341 + $0x24] sm:$0xf]
      %v1043 = vld [vmem:[%s341 + $0x28] sm:$0xf]
      %v1044 = vld [vmem:[%s341 + $0x2c] sm:$0xf]
      %v1045 = vld [vmem:[%s341 + $0x30] sm:$0xf]
      %v1046 = vld [vmem:[%s341 + $0x34] sm:$0xf]
      %v1047 = vld [vmem:[%s341 + $0x38] sm:$0xf]
      %v1048 = vld [vmem:[%s341 + $0x3c] sm:$0xf]
      %v1065 = vunpack.c.l.b16 %v1033
      %v1066 = vunpack.c.l.b16 %v1034
      %v1067 = vunpack.c.l.b16 %v1035
      %v1068 = vunpack.c.l.b16 %v1036
      %v1069 = vunpack.c.l.b16 %v1037
      %v1070 = vunpack.c.l.b16 %v1038
      %v1071 = vunpack.c.l.b16 %v1039
      %v1072 = vunpack.c.l.b16 %v1040
      %v1073 = vunpack.c.l.b16 %v1041
      %v1074 = vunpack.c.l.b16 %v1042
      %v1075 = vunpack.c.l.b16 %v1043
      %v1076 = vunpack.c.l.b16 %v1044
      %v1077 = vunpack.c.l.b16 %v1045
      %v1078 = vunpack.c.l.b16 %v1046
      %v1079 = vunpack.c.l.b16 %v1047
      %v1080 = vunpack.c.l.b16 %v1048
      %v1081 = vpack.c.b16 %v1066, %v1065
      %v1082 = vpack.c.b16 %v1068, %v1067
      %v1083 = vpack.c.b16 %v1070, %v1069
      %v1084 = vpack.c.b16 %v1072, %v1071
      %v1085 = vpack.c.b16 %v1074, %v1073
      %v1086 = vpack.c.b16 %v1076, %v1075
      %v1087 = vpack.c.b16 %v1078, %v1077
      %v1088 = vpack.c.b16 %v1080, %v1079
      %1097 = vmatpush.bf16.msra.mxu0 %v1088
      %1098 = vmatpush.bf16.msra.mxu0 %v1087
      %1099 = vmatpush.bf16.msra.mxu0 %v1086
      %1100 = vmatpush.bf16.msra.mxu0 %v1085
      %1101 = vmatpush.bf16.msra.mxu0 %v1084
      %1102 = vmatpush.bf16.msra.mxu0 %v1083
      %1103 = vmatpush.bf16.msra.mxu0 %v1082
      %1104 = vmatpush.bf16.msra.mxu0 %v1081
      %1105 = vmatmul.bf16.gmra.mxu0 %v1032
      %v1106 = vpop.f32.mrf.mxu0
      %v1107 = vadd.f32 0.0, %v1106
      %v1108 = vpop.f32.mrf.mxu0
      %1109 = vdwg.mxu0
      %v1110 = vadd.f32 %v1028, %v1107
      %v1111 = vld [vmem:[%s420] sm:$0xf]
      %v1112 = vld [vmem:[%s420 + $0x4] sm:$0xf]
      %v1113 = vld [vmem:[%s420 + $0x8] sm:$0xf]
      %v1114 = vld [vmem:[%s420 + $0xc] sm:$0xf]
      %v1115 = vld [vmem:[%s420 + $0x10] sm:$0xf]
      %v1116 = vld [vmem:[%s420 + $0x14] sm:$0xf]
      %v1117 = vld [vmem:[%s420 + $0x18] sm:$0xf]
      %v1118 = vld [vmem:[%s420 + $0x1c] sm:$0xf]
      %v1119 = vld [vmem:[%s420 + $0x20] sm:$0xf]
      %v1120 = vld [vmem:[%s420 + $0x24] sm:$0xf]
      %v1121 = vld [vmem:[%s420 + $0x28] sm:$0xf]
      %v1122 = vld [vmem:[%s420 + $0x2c] sm:$0xf]
      %v1123 = vld [vmem:[%s420 + $0x30] sm:$0xf]
      %v1124 = vld [vmem:[%s420 + $0x34] sm:$0xf]
      %v1125 = vld [vmem:[%s420 + $0x38] sm:$0xf]
      %v1126 = vld [vmem:[%s420 + $0x3c] sm:$0xf]
      %v1128 = vunpack.c.l.b16 %v1032
      %v1129 = vpack.c.b16 %v1128, %v1128
      %v1131 = vshrl.u32 %v1129, 16
      %v1133 = vshll.u32 %v1129, 16
      %v1135 = vrot.slane %v1133, 1
      %v1136 = vor.u32 %v1131, %v1135
      %v1154 = vunpack.c.l.b16 %v1111
      %v1155 = vunpack.c.l.b16 %v1112
      %v1156 = vunpack.c.l.b16 %v1113
      %v1157 = vunpack.c.l.b16 %v1114
      %v1158 = vunpack.c.l.b16 %v1115
      %v1159 = vunpack.c.l.b16 %v1116
      %v1160 = vunpack.c.l.b16 %v1117
      %v1161 = vunpack.c.l.b16 %v1118
      %v1162 = vunpack.c.l.b16 %v1119
      %v1163 = vunpack.c.l.b16 %v1120
      %v1164 = vunpack.c.l.b16 %v1121
      %v1165 = vunpack.c.l.b16 %v1122
      %v1166 = vunpack.c.l.b16 %v1123
      %v1167 = vunpack.c.l.b16 %v1124
      %v1168 = vunpack.c.l.b16 %v1125
      %v1169 = vunpack.c.l.b16 %v1126
      %v1170 = vpack.c.b16 %v1155, %v1154
      %v1171 = vpack.c.b16 %v1157, %v1156
      %v1172 = vpack.c.b16 %v1159, %v1158
      %v1173 = vpack.c.b16 %v1161, %v1160
      %v1174 = vpack.c.b16 %v1163, %v1162
      %v1175 = vpack.c.b16 %v1165, %v1164
      %v1176 = vpack.c.b16 %v1167, %v1166
      %v1177 = vpack.c.b16 %v1169, %v1168
      %1186 = vmatpush.bf16.msra.mxu0 %v1177
      %1187 = vmatpush.bf16.msra.mxu0 %v1176
      %1188 = vmatpush.bf16.msra.mxu0 %v1175
      %1189 = vmatpush.bf16.msra.mxu0 %v1174
      %1190 = vmatpush.bf16.msra.mxu0 %v1173
      %1191 = vmatpush.bf16.msra.mxu0 %v1172
      %1192 = vmatpush.bf16.msra.mxu0 %v1171
      %1193 = vmatpush.bf16.msra.mxu0 %v1170
      %1194 = vmatmul.bf16.gmra.mxu0 %v1136
      %v1195 = vpop.f32.mrf.mxu0
      %v1196 = vadd.f32 0.0, %v1195
      %v1197 = vpop.f32.mrf.mxu0
      %1198 = vdwg.mxu0
      %v1199 = vadd.f32 %v1110, %v1196
      %v1200 = vadd.f32 %v1199, %v511
      %v1201 = vsub.f32 0.0, %v1200
      %v1202 = vmul.f32 %v1201, 1.442695
      %v1203 = vpow.pop %v1202
      %v1204 = vadd.f32 %v1203, 1.0
      %v1205 = vrcp.pop %v1204
      %v1206 = vmul.f32 %v1200, %v1205
      %s1207 = scalar_lea.vmem %s170, 8
      %1208 = vst [vmem:[%s1207] sm:$0xf] %v1206
      %v1209 = vld [vmem:[%s1031] sm:$0x7]
      %v1210 = vld [vmem:[%s1] sm:$0xf]
      %v1211 = vld [vmem:[%s1 + $0x4] sm:$0xf]
      %v1212 = vld [vmem:[%s1 + $0x8] sm:$0xf]
      %v1213 = vld [vmem:[%s1 + $0xc] sm:$0xf]
      %v1214 = vld [vmem:[%s1 + $0x10] sm:$0xf]
      %v1215 = vld [vmem:[%s1 + $0x14] sm:$0xf]
      %v1216 = vld [vmem:[%s1 + $0x18] sm:$0xf]
      %v1217 = vld [vmem:[%s1 + $0x1c] sm:$0xf]
      %v1218 = vld [vmem:[%s1 + $0x20] sm:$0xf]
      %v1219 = vld [vmem:[%s1 + $0x24] sm:$0xf]
      %v1220 = vld [vmem:[%s1 + $0x28] sm:$0xf]
      %v1221 = vld [vmem:[%s1 + $0x2c] sm:$0xf]
      %v1222 = vld [vmem:[%s1 + $0x30] sm:$0xf]
      %v1223 = vld [vmem:[%s1 + $0x34] sm:$0xf]
      %v1224 = vld [vmem:[%s1 + $0x38] sm:$0xf]
      %v1225 = vld [vmem:[%s1 + $0x3c] sm:$0xf]
      %v1226 = vld [vmem:[%s189] sm:$0xf]
      %v1227 = vld [vmem:[%s189 + $0x4] sm:$0xf]
      %v1228 = vld [vmem:[%s189 + $0x8] sm:$0xf]
      %v1229 = vld [vmem:[%s189 + $0xc] sm:$0xf]
      %v1230 = vld [vmem:[%s189 + $0x10] sm:$0xf]
      %v1231 = vld [vmem:[%s189 + $0x14] sm:$0xf]
      %v1232 = vld [vmem:[%s189 + $0x18] sm:$0xf]
      %v1233 = vld [vmem:[%s189 + $0x1c] sm:$0xf]
      %v1234 = vld [vmem:[%s189 + $0x20] sm:$0xf]
      %v1235 = vld [vmem:[%s189 + $0x24] sm:$0xf]
      %v1236 = vld [vmem:[%s189 + $0x28] sm:$0xf]
      %v1237 = vld [vmem:[%s189 + $0x2c] sm:$0xf]
      %v1238 = vld [vmem:[%s189 + $0x30] sm:$0xf]
      %v1239 = vld [vmem:[%s189 + $0x34] sm:$0xf]
      %v1240 = vld [vmem:[%s189 + $0x38] sm:$0xf]
      %v1241 = vld [vmem:[%s189 + $0x3c] sm:$0xf]
      %v1243 = vunpack.c.l.b16 %v1209
      %v1244 = vpack.c.b16 %v1243, %v1243
      %v1246 = vshrl.u32 %v1244, 16
      %v1248 = vshll.u32 %v1244, 16
      %v1250 = vrot.slane %v1248, 1
      %v1251 = vor.u32 %v1246, %v1250
      %v1269 = vunpack.c.l.b16 %v1226
      %v1270 = vunpack.c.l.b16 %v1227
      %v1271 = vunpack.c.l.b16 %v1228
      %v1272 = vunpack.c.l.b16 %v1229
      %v1273 = vunpack.c.l.b16 %v1230
      %v1274 = vunpack.c.l.b16 %v1231
      %v1275 = vunpack.c.l.b16 %v1232
      %v1276 = vunpack.c.l.b16 %v1233
      %v1277 = vunpack.c.l.b16 %v1234
      %v1278 = vunpack.c.l.b16 %v1235
      %v1279 = vunpack.c.l.b16 %v1236
      %v1280 = vunpack.c.l.b16 %v1237
      %v1281 = vunpack.c.l.b16 %v1238
      %v1282 = vunpack.c.l.b16 %v1239
      %v1283 = vunpack.c.l.b16 %v1240
      %v1284 = vunpack.c.l.b16 %v1241
      %v1285 = vpack.c.b16 %v1270, %v1269
      %v1286 = vpack.c.b16 %v1272, %v1271
      %v1287 = vpack.c.b16 %v1274, %v1273
      %v1288 = vpack.c.b16 %v1276, %v1275
      %v1289 = vpack.c.b16 %v1278, %v1277
      %v1290 = vpack.c.b16 %v1280, %v1279
      %v1291 = vpack.c.b16 %v1282, %v1281
      %v1292 = vpack.c.b16 %v1284, %v1283
      %1301 = vmatpush.bf16.msra.mxu0 %v1292
      %1302 = vmatpush.bf16.msra.mxu0 %v1291
      %1303 = vmatpush.bf16.msra.mxu0 %v1290
      %1304 = vmatpush.bf16.msra.mxu0 %v1289
      %1305 = vmatpush.bf16.msra.mxu0 %v1288
      %1306 = vmatpush.bf16.msra.mxu0 %v1287
      %1307 = vmatpush.bf16.msra.mxu0 %v1286
      %1308 = vmatpush.bf16.msra.mxu0 %v1285
      %1309 = vmatmul.bf16.gmra.mxu0 %v1251
      %v1310 = vpop.f32.mrf.mxu0
      %v1311 = vadd.f32 0.0, %v1310
      %v1312 = vpop.f32.mrf.mxu0
      %1313 = vdwg.mxu0
      %v1330 = vunpack.c.l.b16 %v1210
      %v1331 = vunpack.c.l.b16 %v1211
      %v1332 = vunpack.c.l.b16 %v1212
      %v1333 = vunpack.c.l.b16 %v1213
      %v1334 = vunpack.c.l.b16 %v1214
      %v1335 = vunpack.c.l.b16 %v1215
      %v1336 = vunpack.c.l.b16 %v1216
      %v1337 = vunpack.c.l.b16 %v1217
      %v1338 = vunpack.c.l.b16 %v1218
      %v1339 = vunpack.c.l.b16 %v1219
      %v1340 = vunpack.c.l.b16 %v1220
      %v1341 = vunpack.c.l.b16 %v1221
      %v1342 = vunpack.c.l.b16 %v1222
      %v1343 = vunpack.c.l.b16 %v1223
      %v1344 = vunpack.c.l.b16 %v1224
      %v1345 = vunpack.c.l.b16 %v1225
      %v1346 = vpack.c.b16 %v1331, %v1330
      %v1347 = vpack.c.b16 %v1333, %v1332
      %v1348 = vpack.c.b16 %v1335, %v1334
      %v1349 = vpack.c.b16 %v1337, %v1336
      %v1350 = vpack.c.b16 %v1339, %v1338
      %v1351 = vpack.c.b16 %v1341, %v1340
      %v1352 = vpack.c.b16 %v1343, %v1342
      %v1353 = vpack.c.b16 %v1345, %v1344
      %1362 = vmatpush.bf16.msra.mxu0 %v1353
      %1363 = vmatpush.bf16.msra.mxu0 %v1352
      %1364 = vmatpush.bf16.msra.mxu0 %v1351
      %1365 = vmatpush.bf16.msra.mxu0 %v1350
      %1366 = vmatpush.bf16.msra.mxu0 %v1349
      %1367 = vmatpush.bf16.msra.mxu0 %v1348
      %1368 = vmatpush.bf16.msra.mxu0 %v1347
      %1369 = vmatpush.bf16.msra.mxu0 %v1346
      %1370 = vmatmul.bf16.gmra.mxu0 %v1209
      %v1371 = vpop.f32.mrf.mxu0
      %v1372 = vadd.f32 %v1311, %v1371
      %v1373 = vpop.f32.mrf.mxu0
      %1374 = vdwg.mxu0
      %s1375 = scalar_lea.vmem %s165, 16
      %v1376 = vld [vmem:[%s1375] sm:$0x7]
      %v1377 = vld [vmem:[%s341] sm:$0xf]
      %v1378 = vld [vmem:[%s341 + $0x4] sm:$0xf]
      %v1379 = vld [vmem:[%s341 + $0x8] sm:$0xf]
      %v1380 = vld [vmem:[%s341 + $0xc] sm:$0xf]
      %v1381 = vld [vmem:[%s341 + $0x10] sm:$0xf]
      %v1382 = vld [vmem:[%s341 + $0x14] sm:$0xf]
      %v1383 = vld [vmem:[%s341 + $0x18] sm:$0xf]
      %v1384 = vld [vmem:[%s341 + $0x1c] sm:$0xf]
      %v1385 = vld [vmem:[%s341 + $0x20] sm:$0xf]
      %v1386 = vld [vmem:[%s341 + $0x24] sm:$0xf]
      %v1387 = vld [vmem:[%s341 + $0x28] sm:$0xf]
      %v1388 = vld [vmem:[%s341 + $0x2c] sm:$0xf]
      %v1389 = vld [vmem:[%s341 + $0x30] sm:$0xf]
      %v1390 = vld [vmem:[%s341 + $0x34] sm:$0xf]
      %v1391 = vld [vmem:[%s341 + $0x38] sm:$0xf]
      %v1392 = vld [vmem:[%s341 + $0x3c] sm:$0xf]
      %v1409 = vunpack.c.l.b16 %v1377
      %v1410 = vunpack.c.l.b16 %v1378
      %v1411 = vunpack.c.l.b16 %v1379
      %v1412 = vunpack.c.l.b16 %v1380
      %v1413 = vunpack.c.l.b16 %v1381
      %v1414 = vunpack.c.l.b16 %v1382
      %v1415 = vunpack.c.l.b16 %v1383
      %v1416 = vunpack.c.l.b16 %v1384
      %v1417 = vunpack.c.l.b16 %v1385
      %v1418 = vunpack.c.l.b16 %v1386
      %v1419 = vunpack.c.l.b16 %v1387
      %v1420 = vunpack.c.l.b16 %v1388
      %v1421 = vunpack.c.l.b16 %v1389
      %v1422 = vunpack.c.l.b16 %v1390
      %v1423 = vunpack.c.l.b16 %v1391
      %v1424 = vunpack.c.l.b16 %v1392
      %v1425 = vpack.c.b16 %v1410, %v1409
      %v1426 = vpack.c.b16 %v1412, %v1411
      %v1427 = vpack.c.b16 %v1414, %v1413
      %v1428 = vpack.c.b16 %v1416, %v1415
      %v1429 = vpack.c.b16 %v1418, %v1417
      %v1430 = vpack.c.b16 %v1420, %v1419
      %v1431 = vpack.c.b16 %v1422, %v1421
      %v1432 = vpack.c.b16 %v1424, %v1423
      %1441 = vmatpush.bf16.msra.mxu0 %v1432
      %1442 = vmatpush.bf16.msra.mxu0 %v1431
      %1443 = vmatpush.bf16.msra.mxu0 %v1430
      %1444 = vmatpush.bf16.msra.mxu0 %v1429
      %1445 = vmatpush.bf16.msra.mxu0 %v1428
      %1446 = vmatpush.bf16.msra.mxu0 %v1427
      %1447 = vmatpush.bf16.msra.mxu0 %v1426
      %1448 = vmatpush.bf16.msra.mxu0 %v1425
      %1449 = vmatmul.bf16.gmra.mxu0 %v1376
      %v1450 = vpop.f32.mrf.mxu0
      %v1451 = vadd.f32 0.0, %v1450
      %v1452 = vpop.f32.mrf.mxu0
      %1453 = vdwg.mxu0
      %v1454 = vadd.f32 %v1372, %v1451
      %v1455 = vld [vmem:[%s420] sm:$0xf]
      %v1456 = vld [vmem:[%s420 + $0x4] sm:$0xf]
      %v1457 = vld [vmem:[%s420 + $0x8] sm:$0xf]
      %v1458 = vld [vmem:[%s420 + $0xc] sm:$0xf]
      %v1459 = vld [vmem:[%s420 + $0x10] sm:$0xf]
      %v1460 = vld [vmem:[%s420 + $0x14] sm:$0xf]
      %v1461 = vld [vmem:[%s420 + $0x18] sm:$0xf]
      %v1462 = vld [vmem:[%s420 + $0x1c] sm:$0xf]
      %v1463 = vld [vmem:[%s420 + $0x20] sm:$0xf]
      %v1464 = vld [vmem:[%s420 + $0x24] sm:$0xf]
      %v1465 = vld [vmem:[%s420 + $0x28] sm:$0xf]
      %v1466 = vld [vmem:[%s420 + $0x2c] sm:$0xf]
      %v1467 = vld [vmem:[%s420 + $0x30] sm:$0xf]
      %v1468 = vld [vmem:[%s420 + $0x34] sm:$0xf]
      %v1469 = vld [vmem:[%s420 + $0x38] sm:$0xf]
      %v1470 = vld [vmem:[%s420 + $0x3c] sm:$0xf]
      %v1472 = vunpack.c.l.b16 %v1376
      %v1473 = vpack.c.b16 %v1472, %v1472
      %v1475 = vshrl.u32 %v1473, 16
      %v1477 = vshll.u32 %v1473, 16
      %v1479 = vrot.slane %v1477, 1
      %v1480 = vor.u32 %v1475, %v1479
      %v1498 = vunpack.c.l.b16 %v1455
      %v1499 = vunpack.c.l.b16 %v1456
      %v1500 = vunpack.c.l.b16 %v1457
      %v1501 = vunpack.c.l.b16 %v1458
      %v1502 = vunpack.c.l.b16 %v1459
      %v1503 = vunpack.c.l.b16 %v1460
      %v1504 = vunpack.c.l.b16 %v1461
      %v1505 = vunpack.c.l.b16 %v1462
      %v1506 = vunpack.c.l.b16 %v1463
      %v1507 = vunpack.c.l.b16 %v1464
      %v1508 = vunpack.c.l.b16 %v1465
      %v1509 = vunpack.c.l.b16 %v1466
      %v1510 = vunpack.c.l.b16 %v1467
      %v1511 = vunpack.c.l.b16 %v1468
      %v1512 = vunpack.c.l.b16 %v1469
      %v1513 = vunpack.c.l.b16 %v1470
      %v1514 = vpack.c.b16 %v1499, %v1498
      %v1515 = vpack.c.b16 %v1501, %v1500
      %v1516 = vpack.c.b16 %v1503, %v1502
      %v1517 = vpack.c.b16 %v1505, %v1504
      %v1518 = vpack.c.b16 %v1507, %v1506
      %v1519 = vpack.c.b16 %v1509, %v1508
      %v1520 = vpack.c.b16 %v1511, %v1510
      %v1521 = vpack.c.b16 %v1513, %v1512
      %1530 = vmatpush.bf16.msra.mxu0 %v1521
      %1531 = vmatpush.bf16.msra.mxu0 %v1520
      %1532 = vmatpush.bf16.msra.mxu0 %v1519
      %1533 = vmatpush.bf16.msra.mxu0 %v1518
      %1534 = vmatpush.bf16.msra.mxu0 %v1517
      %1535 = vmatpush.bf16.msra.mxu0 %v1516
      %1536 = vmatpush.bf16.msra.mxu0 %v1515
      %1537 = vmatpush.bf16.msra.mxu0 %v1514
      %1538 = vmatmul.bf16.gmra.mxu0 %v1480
      %v1539 = vpop.f32.mrf.mxu0
      %v1540 = vadd.f32 0.0, %v1539
      %v1541 = vpop.f32.mrf.mxu0
      %1542 = vdwg.mxu0
      %v1543 = vadd.f32 %v1454, %v1540
      %v1544 = vadd.f32 %v1543, %v511
      %v1545 = vsub.f32 0.0, %v1544
      %v1546 = vmul.f32 %v1545, 1.442695
      %v1547 = vpow.pop %v1546
      %v1548 = vadd.f32 %v1547, 1.0
      %v1549 = vrcp.pop %v1548
      %v1550 = vmul.f32 %v1544, %v1549
      %s1551 = scalar_lea.vmem %s170, 12
      %1552 = vst [vmem:[%s1551] sm:$0xf] %v1550
      %p1553 = scmp.lt.s32.totalorder %s14, 1
      %s1554 = scalar_select %p1553, %s14, 1
      %s1555 = smul.addr %s1554, 4
      %s1556 = smul.addr %s1555, 4
      %s1557 = scalar_lea.vmem %s3, %s1556
      // Predicated region
      $region33: #{yolo_wrapper_forward.8} parent=31 // pred_check
        %p1558 = pneg %p100
      $region34: #{yolo_wrapper_forward.8} parent=31 // pred_check_branch
        %1560 = sbr.rel (%p1558) target = $region36
      $region35: #{yolo_wrapper_forward.8} parent=31 // pred_region
        _
      $region36: #{yolo_wrapper_forward.8} parent=31 // pred_fallthru
        _
    $region32: #{yolo_wrapper_forward.8} parent=5 // pred_fallthru
      _
    %p1561 = scmp.le.s32.totalorder 2, %s9
    // Predicated region
    $region37: #{yolo_wrapper_forward.8} parent=5 // pred_check
      %p1562 = pneg %p1561
    $region38: #{yolo_wrapper_forward.8} parent=5 // pred_check_branch
      %1564 = sbr.rel (%p1562) target = $region40
    $region39: #{yolo_wrapper_forward.8} parent=5 // pred_region
      %s1565 = ssub.s32 %s9, 2
      // Predicated region
      $region41: #{yolo_wrapper_forward.8} parent=39 // pred_check
        %p1566 = pneg %p106
      $region42: #{yolo_wrapper_forward.8} parent=39 // pred_check_branch
        %1568 = sbr.rel (%p1566) target = $region44
      $region43: #{yolo_wrapper_forward.8} parent=39 // pred_region
        %p1569 = scmp.lt.s32.totalorder %s15, 1
        %s1570 = scalar_select %p1569, %s15, 1
        %s1571 = smul.addr %s1570, 4
        %s1572 = smul.addr %s1571, 4
        %s1573 = scalar_lea.vmem %s3, %s1572
      $region44: #{yolo_wrapper_forward.8} parent=39 // pred_fallthru
        _
    $region40: #{yolo_wrapper_forward.8} parent=5 // pred_fallthru
      _
  $region6: #{yolo_wrapper_forward.8} parent=0 // loop_footer
    %s13 = sadd.s32 1, %s9
  $region7: #{yolo_wrapper_forward.8} parent=0 // loop_footer_branch
    %8 = sbr.rel target = $region3
  $region8: #{yolo_wrapper_forward.8} parent=0 // loop_exit
    _

// kernel: yolo_wrapper_forward.11
$region0: #{yolo_wrapper_forward.11}
  #allocation0 [shape = 'u32[]', space=smem, size = 0x4, offset = 0x4, fixed_abs, tag = 'smem constant byte address 0x4 - core index']
  #allocation1 [shape = 'u32[72,128]{1,0:T(1,128)}', space=vmem, size = 0x9000, scoped, tag = 'internal scratch']
  %s0 = inlined_call_operand.vmem [shape: f32[2,16,128], index: 0, kind: input, shape index: {}]
  %s1 = inlined_call_operand.vmem [shape: f32[2,4,128], index: 1, kind: input, shape index: {}]
  %s2 = inlined_call_operand.vmem [shape: f32[2,128], index: 2, kind: input, shape index: {}]
  %s3 = inlined_call_operand.vmem [shape: f32[1,128], index: 3, kind: input, shape index: {}]
  %s4 = inlined_call_operand.hbm [shape: f32[2,8,128], index: 4, kind: output, shape index: {}]
  %s5 = sld [smem:[#allocation0]]
  $region49: #{yolo_wrapper_forward.11} parent=0
    _
  %s7 = ssub.s32 1, %s5
  %s8 = scalar_select 0, %s7, %s5
  $region1: #{yolo_wrapper_forward.11} parent=0
    #allocation2 [shape = 'u8[8192]{0}', space=vmem, size = 0x2000, scoped, tag = 'output window, operand 0']
    #allocation3 [shape = 's32[2]{0}', space=sflag, size = 0x8, scoped, tag = 'scoped memory for yolo_wrapper_forward.11']
    %9 = vsyncpa [#allocation3], 0
    %s10 = scalar_lea.sflag [#allocation3], 1
    %11 = vsyncpa %s10, 0
    loop: start=0, step=1, limit=4
    $region2: #{yolo_wrapper_forward.11} parent=1 // loop_pre_header
      _
    $region3: #{yolo_wrapper_forward.11} parent=1 // loop_header
      %s13 = sphi 0, %s17
      %p14 = scmp.ge.s32.totalorder %s13, 4
      %s20 = sphi 0, %s32
      %s21 = sphi 0, %s28
      %s22 = sphi 0, %s20
      %s23 = sphi 0, %s21
      %s24 = sphi 0, %s22
      %s25 = sphi 0, %s23
      %s37 = sphi 0, %s39
      %s40 = sphi 0, %s37
      %s41 = sphi 0, %s40
      %s57 = sphi 0, %s41
      %s65 = sphi 0, %s67
      %s68 = sphi 0, %s65
      %s69 = sphi 0, %s68
      %s85 = sphi 0, %s69
      %s91 = sphi 0, %s93
      %s94 = sphi 0, %s91
      %s95 = sphi 0, %s94
      %s111 = sphi 0, %s95
      %s117 = sphi 0, %s119
      %s120 = sphi 0, %s117
      %s121 = sphi 0, %s120
      %s137 = sphi 0, %s121
      %s145 = sphi 0, %s147
      %s148 = sphi 0, %s145
      %s149 = sphi 0, %s148
      %s165 = sphi 0, %s149
    $region4: #{yolo_wrapper_forward.11} parent=1 // loop_header_branch
      %16 = sbr.rel (%p14) target = $region8
    $region5: #{yolo_wrapper_forward.11} parent=1 // loop_body
      %s18 = ssub.s32 %s13, 1
      %s19 = ssub.s32 %s13, 2
      %s26 = sadd.s32 1, %s21
      %p27 = scmp.ge.s32.totalorder %s26, 1
      %s28 = scalar_select %p27, 0, %s26
      %s29 = sadd.s32 1, %s20
      %s30 = scalar_select %p27, %s29, %s20
      %p31 = scmp.ge.s32.totalorder %s30, 2
      %s32 = scalar_select %p31, 0, %s30
      %s33 = ssub.s32 %s20, %s32
      %s34 = ssub.s32 %s21, %s28
      %s35 = sor.u32 %s33, %s34
      %p36 = scmp.eq.s32.totalorder %s35, 0
      %s38 = sadd.s32 %s37, 1
      %s39 = scalar_select %p36, %s37, %s38
      %p42 = pneg %p36
      %p43 = scmp.eq.s32.totalorder %s13, 1
      %p44 = por %p42, %p43
      %p45 = scmp.ne.s32.totalorder %s37, %s40
      %p46 = scmp.eq.s32.totalorder %s13, 0
      %p47 = por %p45, %p46
      %p48 = scmp.ne.s32.totalorder %s37, %s40
      %p49 = scmp.eq.s32.totalorder %s18, 1
      %p50 = por %p48, %p49
      %p51 = scmp.ne.s32.totalorder %s40, %s41
      %p52 = scmp.eq.s32.totalorder %s18, 0
      %p53 = por %p51, %p52
      %p54 = scmp.ne.s32.totalorder %s40, %s41
      %p55 = scmp.eq.s32.totalorder %s19, 1
      %p56 = por %p54, %p55
      %p58 = scmp.ne.s32.totalorder %s41, %s57
      %p59 = scmp.eq.s32.totalorder %s19, 0
      %p60 = por %p58, %p59
      %s61 = ssub.s32 %s20, %s32
      %s62 = ssub.s32 %s21, %s28
      %s63 = sor.u32 %s61, %s62
      %p64 = scmp.eq.s32.totalorder %s63, 0
      %s66 = sadd.s32 %s65, 1
      %s67 = scalar_select %p64, %s65, %s66
      %p70 = pneg %p64
      %p71 = scmp.eq.s32.totalorder %s13, 1
      %p72 = por %p70, %p71
      %p73 = scmp.ne.s32.totalorder %s65, %s68
      %p74 = scmp.eq.s32.totalorder %s13, 0
      %p75 = por %p73, %p74
      %p76 = scmp.ne.s32.totalorder %s65, %s68
      %p77 = scmp.eq.s32.totalorder %s18, 1
      %p78 = por %p76, %p77
      %p79 = scmp.ne.s32.totalorder %s68, %s69
      %p80 = scmp.eq.s32.totalorder %s18, 0
      %p81 = por %p79, %p80
      %p82 = scmp.ne.s32.totalorder %s68, %s69
      %p83 = scmp.eq.s32.totalorder %s19, 1
      %p84 = por %p82, %p83
      %p86 = scmp.ne.s32.totalorder %s69, %s85
      %p87 = scmp.eq.s32.totalorder %s19, 0
      %p88 = por %p86, %p87
      %s89 = ssub.s32 %s21, %s28
      %p90 = scmp.eq.s32.totalorder %s89, 0
      %s92 = sadd.s32 %s91, 1
      %s93 = scalar_select %p90, %s91, %s92
      %p96 = pneg %p90
      %p97 = scmp.eq.s32.totalorder %s13, 1
      %p98 = por %p96, %p97
      %p99 = scmp.ne.s32.totalorder %s91, %s94
      %p100 = scmp.eq.s32.totalorder %s13, 0
      %p101 = por %p99, %p100
      %p102 = scmp.ne.s32.totalorder %s91, %s94
      %p103 = scmp.eq.s32.totalorder %s18, 1
      %p104 = por %p102, %p103
      %p105 = scmp.ne.s32.totalorder %s94, %s95
      %p106 = scmp.eq.s32.totalorder %s18, 0
      %p107 = por %p105, %p106
      %p108 = scmp.ne.s32.totalorder %s94, %s95
      %p109 = scmp.eq.s32.totalorder %s19, 1
      %p110 = por %p108, %p109
      %p112 = scmp.ne.s32.totalorder %s95, %s111
      %p113 = scmp.eq.s32.totalorder %s19, 0
      %p114 = por %p112, %p113
      %s115 = ssub.s32 %s21, %s28
      %p116 = scmp.eq.s32.totalorder %s115, 0
      %s118 = sadd.s32 %s117, 1
      %s119 = scalar_select %p116, %s117, %s118
      %p122 = pneg %p116
      %p123 = scmp.eq.s32.totalorder %s13, 1
      %p124 = por %p122, %p123
      %p125 = scmp.ne.s32.totalorder %s117, %s120
      %p126 = scmp.eq.s32.totalorder %s13, 0
      %p127 = por %p125, %p126
      %p128 = scmp.ne.s32.totalorder %s117, %s120
      %p129 = scmp.eq.s32.totalorder %s18, 1
      %p130 = por %p128, %p129
      %p131 = scmp.ne.s32.totalorder %s120, %s121
      %p132 = scmp.eq.s32.totalorder %s18, 0
      %p133 = por %p131, %p132
      %p134 = scmp.ne.s32.totalorder %s120, %s121
      %p135 = scmp.eq.s32.totalorder %s19, 1
      %p136 = por %p134, %p135
      %p138 = scmp.ne.s32.totalorder %s121, %s137
      %p139 = scmp.eq.s32.totalorder %s19, 0
      %p140 = por %p138, %p139
      %s141 = ssub.s32 %s20, %s32
      %s142 = ssub.s32 %s21, %s28
      %s143 = sor.u32 %s141, %s142
      %p144 = scmp.eq.s32.totalorder %s143, 0
      %s146 = sadd.s32 %s145, 1
      %s147 = scalar_select %p144, %s145, %s146
      %p150 = pneg %p144
      %p151 = scmp.eq.s32.totalorder %s13, 1
      %p152 = por %p150, %p151
      %p153 = scmp.ne.s32.totalorder %s145, %s148
      %p154 = scmp.eq.s32.totalorder %s13, 0
      %p155 = por %p153, %p154
      %p156 = scmp.ne.s32.totalorder %s145, %s148
      %p157 = scmp.eq.s32.totalorder %s18, 1
      %p158 = por %p156, %p157
      %p159 = scmp.ne.s32.totalorder %s148, %s149
      %p160 = scmp.eq.s32.totalorder %s18, 0
      %p161 = por %p159, %p160
      %p162 = scmp.ne.s32.totalorder %s148, %s149
      %p163 = scmp.eq.s32.totalorder %s19, 1
      %p164 = por %p162, %p163
      %p166 = scmp.ne.s32.totalorder %s149, %s165
      %p167 = scmp.eq.s32.totalorder %s19, 0
      %p168 = por %p166, %p167
      %p169 = scmp.le.s32.totalorder 1, %s13
      %p170 = scmp.lt.s32.totalorder %s13, 3
      %p171 = pnand %p169, %p170
      %p172 = pneg %p171
      // Predicated region
      $region9: #{yolo_wrapper_forward.11} parent=5 // pred_check
        _
      $region10: #{yolo_wrapper_forward.11} parent=5 // pred_check_branch
        %174 = sbr.rel (%p171) target = $region12
      $region11: #{yolo_wrapper_forward.11} parent=5 // pred_region
        %s175 = ssub.s32 %s13, 1
        // Predicated region
        $region13: #{yolo_wrapper_forward.11} parent=11 // pred_check
          %p176 = pneg %p107
        $region14: #{yolo_wrapper_forward.11} parent=11 // pred_check_branch
          %178 = sbr.rel (%p176) target = $region16
        $region15: #{yolo_wrapper_forward.11} parent=11 // pred_region
          %p179 = scmp.lt.s32.totalorder %s23, 0
          %s180 = scalar_select %p179, %s23, 0
          %s181 = smul.addr %s180, 2
          %s182 = scalar_lea.vmem %s2, %s181
        $region16: #{yolo_wrapper_forward.11} parent=11 // pred_fallthru
          _
        // Predicated region
        $region17: #{yolo_wrapper_forward.11} parent=11 // pred_check
          %p183 = pneg %p133
        $region18: #{yolo_wrapper_forward.11} parent=11 // pred_check_branch
          %185 = sbr.rel (%p183) target = $region20
        $region19: #{yolo_wrapper_forward.11} parent=11 // pred_region
          %p186 = scmp.lt.s32.totalorder %s23, 0
          %s187 = scalar_select %p186, %s23, 0
          %s188 = scalar_lea.vmem %s3, %s187
        $region20: #{yolo_wrapper_forward.11} parent=11 // pred_fallthru
          _
      $region12: #{yolo_wrapper_forward.11} parent=5 // pred_fallthru
        _
      %p189 = scmp.lt.s32.totalorder %s13, 2
      // Predicated region
      $region21: #{yolo_wrapper_forward.11} parent=5 // pred_check
        %p190 = pneg %p189
      $region22: #{yolo_wrapper_forward.11} parent=5 // pred_check_branch
        %192 = sbr.rel (%p190) target = $region24
      $region23: #{yolo_wrapper_forward.11} parent=5 // pred_region
        // Predicated region
        $region25: #{yolo_wrapper_forward.11} parent=23 // pred_check
          %p193 = pneg %p47
        $region26: #{yolo_wrapper_forward.11} parent=23 // pred_check_branch
          %195 = sbr.rel (%p193) target = $region28
        $region27: #{yolo_wrapper_forward.11} parent=23 // pred_region
          %p196 = scmp.lt.s32.totalorder %s20, 1
          %s197 = scalar_select %p196, %s20, 1
          %p198 = scmp.lt.s32.totalorder %s21, 0
          %s199 = scalar_select %p198, %s21, 0
          %s200 = smul.addr %s197, 2
          %s201 = sadd.s32 %s199, %s200
          %s202 = smul.addr %s201, 8
          %s203 = scalar_lea.vmem %s0, %s202
        $region28: #{yolo_wrapper_forward.11} parent=23 // pred_fallthru
          _
        // Predicated region
        $region29: #{yolo_wrapper_forward.11} parent=23 // pred_check
          %p204 = pneg %p75
        $region30: #{yolo_wrapper_forward.11} parent=23 // pred_check_branch
          %206 = sbr.rel (%p204) target = $region32
        $region31: #{yolo_wrapper_forward.11} parent=23 // pred_region
          %p207 = scmp.lt.s32.totalorder %s20, 1
          %s208 = scalar_select %p207, %s20, 1
          %p209 = scmp.lt.s32.totalorder %s21, 0
          %s210 = scalar_select %p209, %s21, 0
          %s211 = sadd.s32 %s210, %s208
          %s212 = smul.addr %s211, 4
          %s213 = scalar_lea.vmem %s1, %s212
        $region32: #{yolo_wrapper_forward.11} parent=23 // pred_fallthru
          _
      $region24: #{yolo_wrapper_forward.11} parent=5 // pred_fallthru
        _
      %p214 = scmp.le.s32.totalorder 1, %s13
      %p215 = scmp.lt.s32.totalorder %s13, 3
      %p216 = pnand %p214, %p215
      %p217 = pneg %p216
      // Predicated region
      $region33: #{yolo_wrapper_forward.11} parent=5 // pred_check
        _
      $region34: #{yolo_wrapper_forward.11} parent=5 // pred_check_branch
        %219 = sbr.rel (%p216) target = $region36
      $region35: #{yolo_wrapper_forward.11} parent=5 // pred_region
        %s220 = ssub.s32 %s13, 1
        %p221 = scmp.lt.s32.totalorder %s22, 1
        %s222 = scalar_select %p221, %s22, 1
        %p223 = scmp.lt.s32.totalorder %s23, 0
        %s224 = scalar_select %p223, %s23, 0
        %s225 = smul.addr %s222, 2
        %s226 = sadd.s32 %s224, %s225
        %s227 = smul.addr %s226, 8
        %s228 = scalar_lea.vmem %s0, %s227
        %p229 = pneg %p53
        %p230 = pneg %p50
        %p231 = scmp.lt.s32.totalorder %s22, 1
        %s232 = scalar_select %p231, %s22, 1
        %p233 = scmp.lt.s32.totalorder %s23, 0
        %s234 = scalar_select %p233, %s23, 0
        %s235 = sadd.s32 %s234, %s232
        %s236 = smul.addr %s235, 4
        %s237 = scalar_lea.vmem %s1, %s236
        %p238 = pneg %p81
        %p239 = pneg %p78
        %p240 = scmp.lt.s32.totalorder %s23, 0
        %s241 = scalar_select %p240, %s23, 0
        %s242 = smul.addr %s241, 2
        %s243 = scalar_lea.vmem %s2, %s242
        %p244 = pneg %p107
        %p245 = pneg %p104
        %p246 = scmp.lt.s32.totalorder %s23, 0
        %s247 = scalar_select %p246, %s23, 0
        %s248 = scalar_lea.vmem %s3, %s247
        %p249 = pneg %p133
        %p250 = pneg %p130
        %p251 = pneg %p161
        %p252 = pneg %p158
        %s253 = sand.u32 %s148, 1
        %s254 = scalar_lea.sflag [#allocation3], %s253
        %s255 = sand.u32 %s148, 1
        %s256 = smul.addr %s255, 8
        %s257 = scalar_lea.vmem [#allocation2], %s256
        %p258 = scmp.lt.s32.totalorder %s22, 1
        %s259 = scalar_select %p258, %s22, 1
        %p260 = scmp.lt.s32.totalorder %s23, 0
        %s261 = scalar_select %p260, %s23, 0
        %s262 = smul.addr %s259, 2
        %s263 = sadd.s32 %s261, %s262
        %s264 = smul.addr %s263, 8
        %s265 = scalar_lea.vmem %s0, %s264
        %p266 = scmp.lt.s32.totalorder %s22, 1
        %s267 = scalar_select %p266, %s22, 1
        %p268 = scmp.lt.s32.totalorder %s23, 0
        %s269 = scalar_select %p268, %s23, 0
        %s270 = sadd.s32 %s269, %s267
        %s271 = smul.addr %s270, 4
        %s272 = scalar_lea.vmem %s1, %s271
        %p273 = scmp.lt.s32.totalorder %s23, 0
        %s274 = scalar_select %p273, %s23, 0
        %s275 = smul.addr %s274, 2
        %s276 = scalar_lea.vmem %s2, %s275
        %p277 = scmp.lt.s32.totalorder %s23, 0
        %s278 = scalar_select %p277, %s23, 0
        %s279 = scalar_lea.vmem %s3, %s278
        %v280 = vld [vmem:[%s265] sm:$0xff]
        %v281 = vld [vmem:[%s265 + $0x8] sm:$0xff]
        %v282 = vld [vmem:[%s279] sm:$0x1]
        %v283 = vld [vmem:[%s276] sm:$0x1]
        %v284 = vld [vmem:[%s276 + $0x1] sm:$0x1]
        %v286 = vrot.slane %v280, 1
        %v288 = vmax.f32 %v280, %v286
        %v289 = vrot.slane %v280, 2
        %v291 = vmax.f32 %v288, %v289
        %v292 = vrot.slane %v280, 3
        %v294 = vmax.f32 %v291, %v292
        %v295 = vsub.f32 %v280, %v294
        %v296 = vmul.f32 %v295, 1.442695
        %v297 = vpow.pop %v296
        %v298 = vmul.f32 %v297, 0.0
        %v300 = vrot.slane %v294, 7
        %v302 = vsub.f32 %v280, %v300
        %v303 = vmul.f32 %v302, 1.442695
        %v304 = vpow.pop %v303
        %v306 = vrot.slane %v304, 1
        %v308 = vadd.f32 %v297, %v306
        %v309 = vadd.f32 %v298, %v306
        %v310 = vrot.slane %v294, 6
        %v312 = vsub.f32 %v280, %v310
        %v313 = vmul.f32 %v312, 1.442695
        %v314 = vpow.pop %v313
        %v316 = vrot.slane %v314, 2
        %v318 = vadd.f32 %v308, %v316
        %v319 = vmul.f32 %v314, 2.0
        %v321 = vrot.slane %v319, 2
        %v323 = vadd.f32 %v309, %v321
        %v324 = vrot.slane %v294, 5
        %v326 = vsub.f32 %v280, %v324
        %v327 = vmul.f32 %v326, 1.442695
        %v328 = vpow.pop %v327
        %v330 = vrot.slane %v328, 3
        %v332 = vadd.f32 %v318, %v330
        %v333 = vmul.f32 %v328, 3.0
        %v335 = vrot.slane %v333, 3
        %v337 = vadd.f32 %v323, %v335
        %v338 = vrcp.pop %v332
        %v339 = vmul.f32 %v337, %v338
        %v341 = vrot.slane %v281, 1
        %v343 = vmax.f32 %v281, %v341
        %v344 = vrot.slane %v281, 2
        %v346 = vmax.f32 %v343, %v344
        %v347 = vrot.slane %v281, 3
        %v349 = vmax.f32 %v346, %v347
        %v350 = vsub.f32 %v281, %v349
        %v351 = vmul.f32 %v350, 1.442695
        %v352 = vpow.pop %v351
        %v353 = vmul.f32 %v352, 0.0
        %v355 = vrot.slane %v349, 7
        %v357 = vsub.f32 %v281, %v355
        %v358 = vmul.f32 %v357, 1.442695
        %v359 = vpow.pop %v358
        %v361 = vrot.slane %v359, 1
        %v363 = vadd.f32 %v352, %v361
        %v364 = vadd.f32 %v353, %v361
        %v365 = vrot.slane %v349, 6
        %v367 = vsub.f32 %v281, %v365
        %v368 = vmul.f32 %v367, 1.442695
        %v369 = vpow.pop %v368
        %v371 = vrot.slane %v369, 2
        %v373 = vadd.f32 %v363, %v371
        %v374 = vmul.f32 %v369, 2.0
        %v376 = vrot.slane %v374, 2
        %v378 = vadd.f32 %v364, %v376
        %v379 = vrot.slane %v349, 5
        %v381 = vsub.f32 %v281, %v379
        %v382 = vmul.f32 %v381, 1.442695
        %v383 = vpow.pop %v382
        %v385 = vrot.slane %v383, 3
        %v387 = vadd.f32 %v373, %v385
        %v388 = vmul.f32 %v383, 3.0
        %v390 = vrot.slane %v388, 3
        %v392 = vadd.f32 %v378, %v390
        %v393 = vrcp.pop %v387
        %v394 = vmul.f32 %v392, %v393
        %v395 = vsub.f32 %v283, %v339
        %v397 = vrot.slane %v339, 4
        %v399 = vsub.f32 %v284, %v397
        %v400 = vadd.f32 %v283, %v394
        %v402 = vrot.slane %v394, 4
        %v404 = vadd.f32 %v284, %v402
        %v405 = vadd.f32 %v395, %v400
        %v406 = vmul.f32 %v405, 0.5
        %v407 = vmul.f32 %v406, %v282
        %408 = vst [vmem:[%s257] sm:$0x1] %v407
        %v409 = vadd.f32 %v399, %v404
        %v410 = vmul.f32 %v409, 0.5
        %v411 = vmul.f32 %v410, %v282
        %412 = vst [vmem:[%s257 + $0x1] sm:$0x1] %v411
        %v413 = vsub.f32 %v400, %v395
        %v414 = vmul.f32 %v413, %v282
        %415 = vst [vmem:[%s257 + $0x2] sm:$0x1] %v414
        %v416 = vsub.f32 %v404, %v399
        %v417 = vmul.f32 %v416, %v282
        %418 = vst [vmem:[%s257 + $0x3] sm:$0x1] %v417
        %v419 = vld [vmem:[%s272] sm:$0xf]
        %v420 = vsub.f32 0.0, %v419
        %v421 = vmul.f32 %v420, 1.442695
        %v422 = vpow.pop %v421
        %v423 = vadd.f32 %v422, 1.0
        %v424 = vrcp.pop %v423
        %425 = vst [vmem:[%s257 + $0x4] sm:$0xf] %v424
        %s426 = sand.u32 %s148, 1
        %s427 = scalar_lea.sflag [#allocation3], %s426
        %s428 = sand.u32 %s148, 1
        %s429 = smul.addr %s428, 8
        %s430 = scalar_lea.vmem [#allocation2], %s429
        // Predicated region
        $region37: #{yolo_wrapper_forward.11} parent=35 // pred_check
          %p431 = pneg %p158
        $region38: #{yolo_wrapper_forward.11} parent=35 // pred_check_branch
          %433 = sbr.rel (%p431) target = $region40
        $region39: #{yolo_wrapper_forward.11} parent=35 // pred_region
          %435 = vsyncadd %s427, 0
          %s436 = sadd.s32 %s23, %s22
          %s437 = smul.addr %s436, 8
          %s438 = scalar_lea.hbm %s4, %s437
          %s440 = sshll.u32 %s430, 4
          %s441 = int_to_ptr.vmem [resolvable:$true] %s440
          %s442 = sshll.u32 %s438, 4
          %s443 = int_to_ptr.hbm [resolvable:$true] %s442
          %445 = dma.vmem_to_hbm [thread:$0]  %s441, 128, %s443, %s427
        $region40: #{yolo_wrapper_forward.11} parent=35 // pred_fallthru
          _
      $region36: #{yolo_wrapper_forward.11} parent=5 // pred_fallthru
        _
      %p446 = scmp.le.s32.totalorder 2, %s13
      // Predicated region
      $region41: #{yolo_wrapper_forward.11} parent=5 // pred_check
        %p447 = pneg %p446
      $region42: #{yolo_wrapper_forward.11} parent=5 // pred_check_branch
        %449 = sbr.rel (%p447) target = $region44
      $region43: #{yolo_wrapper_forward.11} parent=5 // pred_region
        %s450 = ssub.s32 %s13, 2
        // Predicated region
        $region45: #{yolo_wrapper_forward.11} parent=43 // pred_check
          %p451 = pneg %p164
        $region46: #{yolo_wrapper_forward.11} parent=43 // pred_check_branch
          %453 = sbr.rel (%p451) target = $region48
        $region47: #{yolo_wrapper_forward.11} parent=43 // pred_region
          %s454 = sand.u32 %s149, 1
          %s455 = scalar_lea.sflag [#allocation3], %s454
          %s456 = sand.u32 %s149, 1
          %s457 = smul.addr %s456, 8
          %s458 = scalar_lea.vmem [#allocation2], %s457
          %460 = dma.done %s455, 128
        $region48: #{yolo_wrapper_forward.11} parent=43 // pred_fallthru
          _
      $region44: #{yolo_wrapper_forward.11} parent=5 // pred_fallthru
        _
    $region6: #{yolo_wrapper_forward.11} parent=1 // loop_footer
      %s17 = sadd.s32 1, %s13
    $region7: #{yolo_wrapper_forward.11} parent=1 // loop_footer_branch
      %12 = sbr.rel target = $region3
    $region8: #{yolo_wrapper_forward.11} parent=1 // loop_exit
      _
    %461 = vsyncpa [#allocation3], 1
    %s462 = scalar_lea.sflag [#allocation3], 1
    %463 = vsyncpa %s462, 1

</llo_original>
